<compile_context>
chip_gen: v6e
topology: v6e:2x2x1
jax: 0.10.0
libtpu: 0.0.40
codegen_flags: <defaults>
</compile_context>

<pallas_src>
import jax
import jax.numpy as jnp
import numpy as np
from jax.experimental import pallas as pl
from jax.experimental.pallas import tpu as pltpu

NEG_SLOPE = 0.2
BN_EPS = 1e-5
KSIZE = 4


# ----------------------------------------------------------------------------
# Static layer configuration
# ----------------------------------------------------------------------------
def _layer_cfgs(channels_img, features_d, batch, image_size):
    chans = [channels_img, features_d, features_d * 2,
             features_d * 4, features_d * 8, 1]
    cfgs, h = [], image_size
    for li in range(5):
        pad = 1 if li < 4 else 0
        ho = (h + 2 * pad - KSIZE) // 2 + 1
        cfgs.append(dict(cin=chans[li], cout=chans[li + 1], n=batch,
                         h=h, w=h, ho=ho, wo=ho, pad=pad,
                         bn=(li in (1, 2, 3)),
                         act="lrelu" if li < 4 else "sigmoid"))
        h = ho
    return cfgs


# ----------------------------------------------------------------------------
# Parameter init: raw f32 params (reference) + kernel-side constants (bf16)
# ----------------------------------------------------------------------------
def init_params(key, cfgs):
    """Per layer kernel constants (built ONCE, bf16 where they feed the MXU):
      bgh : [4, N*Ho, N*H]       0/1 row-gather (block-diag over batch,
                                 zero rows emulate the spatial zero-padding)
      m   : [4, Cin*W, Cout*Wo]  column gather fused with conv weights
      brow: [1, Cout*Wo]         bias broadcast along wo
      BN layers additionally:    gamma [1,Cout], beta_row [1,Cout*Wo],
                                 s [Cout*Wo,Cout], st [Cout,Cout*Wo]
    """
    raw, kargs = {}, []
    keys = jax.random.split(key, 4 * len(cfgs))
    ki = 0
    for li, cfg in enumerate(cfgs):
        cin, cout = cfg["cin"], cfg["cout"]
        H, W, Ho, Wo = cfg["h"], cfg["w"], cfg["ho"], cfg["wo"]
        pad, N = cfg["pad"], cfg["n"]

        w = 0.02 * jax.random.normal(keys[ki], (cout, cin, KSIZE, KSIZE),
                                     jnp.float32); ki += 1
        b = 0.01 * jax.random.normal(keys[ki], (cout,), jnp.float32); ki += 1
        raw[f"w{li + 1}"], raw[f"b{li + 1}"] = w, b
        if cfg["bn"]:
            g = 1.0 + 0.1 * jax.random.normal(keys[ki], (cout,), jnp.float32); ki += 1
            be = 0.1 * jax.random.normal(keys[ki], (cout,), jnp.float32); ki += 1
            raw[f"g{li + 1}"], raw[f"be{li + 1}"] = g, be

        # ---- constant 0/1 gather matrices (numpy, built once at init) -----
        gh = np.zeros((KSIZE, Ho, H), np.float32)
        gw = np.zeros((KSIZE, W, Wo), np.float32)
        for kk in range(KSIZE):
            for o in range(Ho):
                r = 2 * o + kk - pad
                if 0 <= r < H:
                    gh[kk, o, r] = 1.0
            for o in range(Wo):
                c = 2 * o + kk - pad
                if 0 <= c < W:
                    gw[kk, c, o] = 1.0
        bgh = np.zeros((KSIZE, N * Ho, N * H), np.float32)
        for n in range(N):
            bgh[:, n * Ho:(n + 1) * Ho, n * H:(n + 1) * H] = gh
        # M[kh, (cin, w), (cout, wo)] = sum_kw W[cout, cin, kh, kw] * Gw[kw, w, wo]
        # (each entry is either 0 or a single weight value -> bf16-exact scatter)
        m = np.einsum("oiab,bwq->aiwoq", np.asarray(w), gw)
        m = m.reshape(KSIZE, cin * W, cout * Wo)
        brow = np.repeat(np.asarray(b), Wo)[None, :]

        kargs += [jnp.asarray(bgh, jnp.bfloat16),
                  jnp.asarray(m, jnp.bfloat16),
                  jnp.asarray(brow, jnp.float32)]
        if cfg["bn"]:
            s = np.kron(np.eye(cout, dtype=np.float32),
                        np.ones((Wo, 1), np.float32))          # [Cout*Wo, Cout]
            kargs += [jnp.asarray(np.asarray(g)[None, :], jnp.float32),
                      jnp.asarray(np.repeat(np.asarray(be), Wo)[None, :],
                                  jnp.float32),
                      jnp.asarray(s, jnp.float32),
                      jnp.asarray(s.T.copy(), jnp.float32)]
    return raw, tuple(kargs)


# ----------------------------------------------------------------------------
# The fused whole-network Pallas kernel
# ----------------------------------------------------------------------------
def _build_kernel(cfgs):
    n_in = 1 + sum(3 + (4 if c["bn"] else 0) for c in cfgs)

    def kernel(*refs):
        x_ref, o_ref = refs[0], refs[-1]
        h = x_ref[...]                                  # bf16 [(n,h),(cin,w)]
        idx = 1
        for cfg in cfgs:
            bgh_ref, m_ref, brow_ref = refs[idx], refs[idx + 1], refs[idx + 2]
            idx += 3
            # ---- Conv(k=4, s=2) = 8 small MXU matmuls (in-kernel im2col) ---
            z = None
            for kh in range(KSIZE):
                y = jnp.dot(bgh_ref[kh], h,              # exact 0/1 row gather
                            preferred_element_type=jnp.float32)
                t = jnp.dot(y.astype(jnp.bfloat16), m_ref[kh],
                            preferred_element_type=jnp.float32)
                z = t if z is None else z + t
            z = z + brow_ref[...]                        # f32 [(n,ho),(cout,wo)]
            # ---- fused BatchNorm (training-mode batch statistics) ----------
            if cfg["bn"]:
                gamma_ref, beta_ref, s_ref, st_ref = refs[idx:idx + 4]
                idx += 4
                cnt = float(cfg["n"] * cfg["ho"] * cfg["wo"])
                s, st = s_ref[...], st_ref[...]
                mean_c = jnp.dot(jnp.sum(z, axis=0, keepdims=True), s,
                                 preferred_element_type=jnp.float32) * (1.0 / cnt)
                d = z - jnp.dot(mean_c, st, preferred_element_type=jnp.float32)
                var_c = jnp.dot(jnp.sum(d * d, axis=0, keepdims=True), s,
                                preferred_element_type=jnp.float32) * (1.0 / cnt)
                scale_c = gamma_ref[...] * jax.lax.rsqrt(var_c + BN_EPS)
                z = d * jnp.dot(scale_c, st,
                                preferred_element_type=jnp.float32) + beta_ref[...]
            # ---- activation -------------------------------------------------
            if cfg["act"] == "lrelu":
                z = jnp.where(z >= 0.0, z, NEG_SLOPE * z)
                h = z.astype(jnp.bfloat16)               # bf16 feed to next layer
            else:                                        # final Sigmoid layer
                o_ref[...] = 1.0 / (1.0 + jnp.exp(-z))

    return kernel, n_in


def make_forward(cfgs):
    kernel, n_in = _build_kernel(cfgs)
    last = cfgs[-1]
    out_shape = jax.ShapeDtypeStruct(
        (last["n"] * last["ho"], last["cout"] * last["wo"]), jnp.float32)
    vmem = pl.BlockSpec(memory_space=pltpu.MemorySpace.VMEM)
    call = pl.pallas_call(
        kernel,
        out_shape=out_shape,
        in_specs=[vmem] * n_in,       # every operand fully VMEM-resident
        out_specs=vmem,
    )

    @jax.jit
    def forward(x, kargs):
        n, c, hh, ww = x.shape
        # single layout change up front: [(n, h), (cin, w)] slab, bf16
        x2 = jnp.transpose(x, (0, 2, 1, 3)).reshape(n * hh, c * ww)
        y = call(x2.astype(jnp.bfloat16), *kargs)
        return y.reshape(n, 1, 1, 1)                     # NCHW result

    return forward


# ----------------------------------------------------------------------------
# Pure-JAX reference mirroring the PyTorch module (training-mode BN)
# ----------------------------------------------------------------------------
def reference_forward(x, raw):
    def conv(h, w, b, stride, pad):
        y = jax.lax.conv_general_dilated(
            h, w, (stride, stride), [(pad, pad), (pad, pad)],
            dimension_numbers=("NCHW", "OIHW", "NCHW"),
            precision=jax.lax.Precision.HIGHEST)
        return y + b[None, :, None, None]

    h = conv(x, raw["w1"], raw["b1"], 2, 1)
    h = jnp.where(h >= 0, h, NEG_SLOPE * h)
    for l in (2, 3, 4):
        h = conv(h, raw[f"w{l}"], raw[f"b{l}"], 2, 1)
        mean = jnp.mean(h, axis=(0, 2, 3), keepdims=True)
        var = jnp.mean((h - mean) ** 2, axis=(0, 2, 3), keepdims=True)
        h = (h - mean) / jnp.sqrt(var + BN_EPS)
        h = h * raw[f"g{l}"][None, :, None, None] \
              + raw[f"be{l}"][None, :, None, None]
        h = jnp.where(h >= 0, h, NEG_SLOPE * h)
    h = conv(h, raw["w5"], raw["b5"], 2, 0)
    return 1.0 / (1.0 + jnp.exp(-h))


if __name__ == "__main__":
    key = jax.random.PRNGKey(0)
    k_x, k_p = jax.random.split(key)

    # DCGAN-consistent sizes: 64x64 input shrinks 64->32->16->8->4->1
    batch, channels_img, features_d, image_size = 2, 3, 8, 64
    cfgs = _layer_cfgs(channels_img, features_d, batch, image_size)
    raw_params, kernel_args = init_params(k_p, cfgs)
    x = jax.random.normal(k_x, (batch, channels_img, image_size, image_size),
                          jnp.float32)

    forward = make_forward(cfgs)
    out = jax.block_until_ready(forward(x, kernel_args))
    assert out.shape == (batch, 1, 1, 1), out.shape

    ref = jax.block_until_ready(reference_forward(x, raw_params))
    # bf16 weights / inter-layer activations (f32 accumulation) vs f32 reference
    np.testing.assert_allclose(np.asarray(out), np.asarray(ref),
                               rtol=3e-2, atol=3e-2)
    print("KERNEL_OK")
</pallas_src>

<mosaic_0001>
module attributes {stable_mosaic.version = 11 : i64} {
  func.func @kernel(%arg0: memref<128x192xbf16, #tpu.memory_space<vmem>>, %arg1: memref<4x64x128xbf16, #tpu.memory_space<vmem>>, %arg2: memref<4x192x256xbf16, #tpu.memory_space<vmem>>, %arg3: memref<1x256xf32, #tpu.memory_space<vmem>>, %arg4: memref<4x32x64xbf16, #tpu.memory_space<vmem>>, %arg5: memref<4x256x256xbf16, #tpu.memory_space<vmem>>, %arg6: memref<1x256xf32, #tpu.memory_space<vmem>>, %arg7: memref<1x16xf32, #tpu.memory_space<vmem>>, %arg8: memref<1x256xf32, #tpu.memory_space<vmem>>, %arg9: memref<256x16xf32, #tpu.memory_space<vmem>>, %arg10: memref<16x256xf32, #tpu.memory_space<vmem>>, %arg11: memref<4x16x32xbf16, #tpu.memory_space<vmem>>, %arg12: memref<4x256x256xbf16, #tpu.memory_space<vmem>>, %arg13: memref<1x256xf32, #tpu.memory_space<vmem>>, %arg14: memref<1x32xf32, #tpu.memory_space<vmem>>, %arg15: memref<1x256xf32, #tpu.memory_space<vmem>>, %arg16: memref<256x32xf32, #tpu.memory_space<vmem>>, %arg17: memref<32x256xf32, #tpu.memory_space<vmem>>, %arg18: memref<4x8x16xbf16, #tpu.memory_space<vmem>>, %arg19: memref<4x256x256xbf16, #tpu.memory_space<vmem>>, %arg20: memref<1x256xf32, #tpu.memory_space<vmem>>, %arg21: memref<1x64xf32, #tpu.memory_space<vmem>>, %arg22: memref<1x256xf32, #tpu.memory_space<vmem>>, %arg23: memref<256x64xf32, #tpu.memory_space<vmem>>, %arg24: memref<64x256xf32, #tpu.memory_space<vmem>>, %arg25: memref<4x2x8xbf16, #tpu.memory_space<vmem>>, %arg26: memref<4x256x1xbf16, #tpu.memory_space<vmem>>, %arg27: memref<1x1xf32, #tpu.memory_space<vmem>>, %arg28: memref<2x1xf32, #tpu.memory_space<vmem>>) attributes {dimension_semantics = [], scalar_prefetch = 0 : i64, scratch_operands = 0 : i64, tpu.core_type = #tpu.core_type<tc>} {
    %c0 = arith.constant 0 : index
    %c0_0 = arith.constant 0 : index
    %0 = vector.load %arg0[%c0, %c0_0] : memref<128x192xbf16, #tpu.memory_space<vmem>>, vector<128x192xbf16>
    %c0_1 = arith.constant 0 : index
    %c0_2 = arith.constant 0 : index
    %c0_3 = arith.constant 0 : index
    %1 = vector.load %arg1[%c0_1, %c0_2, %c0_3] : memref<4x64x128xbf16, #tpu.memory_space<vmem>>, vector<1x64x128xbf16>
    %2 = vector.shape_cast %1 : vector<1x64x128xbf16> to vector<64x128xbf16>
    %cst = arith.constant dense<0.000000e+00> : vector<64x192xf32>
    %3 = tpu.matmul %2, %0, %cst {dimension_numbers = #tpu.dot_dimension_numbers<[1], [0], [0], [1], [0, 0, 1, 1], [], []>} : vector<64x128xbf16>, vector<128x192xbf16>, vector<64x192xf32> -> vector<64x192xf32>
    %4 = arith.truncf %3 : vector<64x192xf32> to vector<64x192xbf16>
    %c0_4 = arith.constant 0 : index
    %c0_5 = arith.constant 0 : index
    %c0_6 = arith.constant 0 : index
    %5 = vector.load %arg2[%c0_4, %c0_5, %c0_6] : memref<4x192x256xbf16, #tpu.memory_space<vmem>>, vector<1x192x256xbf16>
    %6 = vector.shape_cast %5 : vector<1x192x256xbf16> to vector<192x256xbf16>
    %cst_7 = arith.constant dense<0.000000e+00> : vector<64x256xf32>
    %7 = tpu.matmul %4, %6, %cst_7 {dimension_numbers = #tpu.dot_dimension_numbers<[1], [0], [0], [1], [0, 0, 1, 1], [], []>} : vector<64x192xbf16>, vector<192x256xbf16>, vector<64x256xf32> -> vector<64x256xf32>
    %c1 = arith.constant 1 : index
    %c0_8 = arith.constant 0 : index
    %c0_9 = arith.constant 0 : index
    %8 = vector.load %arg1[%c1, %c0_8, %c0_9] : memref<4x64x128xbf16, #tpu.memory_space<vmem>>, vector<1x64x128xbf16>
    %9 = vector.shape_cast %8 : vector<1x64x128xbf16> to vector<64x128xbf16>
    %cst_10 = arith.constant dense<0.000000e+00> : vector<64x192xf32>
    %10 = tpu.matmul %9, %0, %cst_10 {dimension_numbers = #tpu.dot_dimension_numbers<[1], [0], [0], [1], [0, 0, 1, 1], [], []>} : vector<64x128xbf16>, vector<128x192xbf16>, vector<64x192xf32> -> vector<64x192xf32>
    %11 = arith.truncf %10 : vector<64x192xf32> to vector<64x192xbf16>
    %c1_11 = arith.constant 1 : index
    %c0_12 = arith.constant 0 : index
    %c0_13 = arith.constant 0 : index
    %12 = vector.load %arg2[%c1_11, %c0_12, %c0_13] : memref<4x192x256xbf16, #tpu.memory_space<vmem>>, vector<1x192x256xbf16>
    %13 = vector.shape_cast %12 : vector<1x192x256xbf16> to vector<192x256xbf16>
    %cst_14 = arith.constant dense<0.000000e+00> : vector<64x256xf32>
    %14 = tpu.matmul %11, %13, %cst_14 {dimension_numbers = #tpu.dot_dimension_numbers<[1], [0], [0], [1], [0, 0, 1, 1], [], []>} : vector<64x192xbf16>, vector<192x256xbf16>, vector<64x256xf32> -> vector<64x256xf32>
    %15 = arith.addf %7, %14 : vector<64x256xf32>
    %c2 = arith.constant 2 : index
    %c0_15 = arith.constant 0 : index
    %c0_16 = arith.constant 0 : index
    %16 = vector.load %arg1[%c2, %c0_15, %c0_16] : memref<4x64x128xbf16, #tpu.memory_space<vmem>>, vector<1x64x128xbf16>
    %17 = vector.shape_cast %16 : vector<1x64x128xbf16> to vector<64x128xbf16>
    %cst_17 = arith.constant dense<0.000000e+00> : vector<64x192xf32>
    %18 = tpu.matmul %17, %0, %cst_17 {dimension_numbers = #tpu.dot_dimension_numbers<[1], [0], [0], [1], [0, 0, 1, 1], [], []>} : vector<64x128xbf16>, vector<128x192xbf16>, vector<64x192xf32> -> vector<64x192xf32>
    %19 = arith.truncf %18 : vector<64x192xf32> to vector<64x192xbf16>
    %c2_18 = arith.constant 2 : index
    %c0_19 = arith.constant 0 : index
    %c0_20 = arith.constant 0 : index
    %20 = vector.load %arg2[%c2_18, %c0_19, %c0_20] : memref<4x192x256xbf16, #tpu.memory_space<vmem>>, vector<1x192x256xbf16>
    %21 = vector.shape_cast %20 : vector<1x192x256xbf16> to vector<192x256xbf16>
    %cst_21 = arith.constant dense<0.000000e+00> : vector<64x256xf32>
    %22 = tpu.matmul %19, %21, %cst_21 {dimension_numbers = #tpu.dot_dimension_numbers<[1], [0], [0], [1], [0, 0, 1, 1], [], []>} : vector<64x192xbf16>, vector<192x256xbf16>, vector<64x256xf32> -> vector<64x256xf32>
    %23 = arith.addf %15, %22 : vector<64x256xf32>
    %c3 = arith.constant 3 : index
    %c0_22 = arith.constant 0 : index
    %c0_23 = arith.constant 0 : index
    %24 = vector.load %arg1[%c3, %c0_22, %c0_23] : memref<4x64x128xbf16, #tpu.memory_space<vmem>>, vector<1x64x128xbf16>
    %25 = vector.shape_cast %24 : vector<1x64x128xbf16> to vector<64x128xbf16>
    %cst_24 = arith.constant dense<0.000000e+00> : vector<64x192xf32>
    %26 = tpu.matmul %25, %0, %cst_24 {dimension_numbers = #tpu.dot_dimension_numbers<[1], [0], [0], [1], [0, 0, 1, 1], [], []>} : vector<64x128xbf16>, vector<128x192xbf16>, vector<64x192xf32> -> vector<64x192xf32>
    %27 = arith.truncf %26 : vector<64x192xf32> to vector<64x192xbf16>
    %c3_25 = arith.constant 3 : index
    %c0_26 = arith.constant 0 : index
    %c0_27 = arith.constant 0 : index
    %28 = vector.load %arg2[%c3_25, %c0_26, %c0_27] : memref<4x192x256xbf16, #tpu.memory_space<vmem>>, vector<1x192x256xbf16>
    %29 = vector.shape_cast %28 : vector<1x192x256xbf16> to vector<192x256xbf16>
    %cst_28 = arith.constant dense<0.000000e+00> : vector<64x256xf32>
    %30 = tpu.matmul %27, %29, %cst_28 {dimension_numbers = #tpu.dot_dimension_numbers<[1], [0], [0], [1], [0, 0, 1, 1], [], []>} : vector<64x192xbf16>, vector<192x256xbf16>, vector<64x256xf32> -> vector<64x256xf32>
    %31 = arith.addf %23, %30 : vector<64x256xf32>
    %c0_29 = arith.constant 0 : index
    %c0_30 = arith.constant 0 : index
    %32 = vector.load %arg3[%c0_29, %c0_30] : memref<1x256xf32, #tpu.memory_space<vmem>>, vector<1x256xf32>
    %33 = vector.broadcast %32 : vector<1x256xf32> to vector<64x256xf32>
    %34 = arith.addf %31, %33 : vector<64x256xf32>
    %cst_31 = arith.constant 0.000000e+00 : f32
    %35 = vector.broadcast %cst_31 : f32 to vector<64x256xf32>
    %36 = arith.cmpf oge, %34, %35 : vector<64x256xf32>
    %cst_32 = arith.constant 2.000000e-01 : f32
    %37 = vector.broadcast %cst_32 : f32 to vector<64x256xf32>
    %38 = arith.mulf %37, %34 : vector<64x256xf32>
    %39 = arith.select %36, %34, %38 : vector<64x256xi1>, vector<64x256xf32>
    %40 = arith.truncf %39 : vector<64x256xf32> to vector<64x256xbf16>
    %c0_33 = arith.constant 0 : index
    %c0_34 = arith.constant 0 : index
    %c0_35 = arith.constant 0 : index
    %41 = vector.load %arg4[%c0_33, %c0_34, %c0_35] : memref<4x32x64xbf16, #tpu.memory_space<vmem>>, vector<1x32x64xbf16>
    %42 = vector.shape_cast %41 : vector<1x32x64xbf16> to vector<32x64xbf16>
    %cst_36 = arith.constant dense<0.000000e+00> : vector<32x256xf32>
    %43 = tpu.matmul %42, %40, %cst_36 {dimension_numbers = #tpu.dot_dimension_numbers<[1], [0], [0], [1], [0, 0, 1, 1], [], []>} : vector<32x64xbf16>, vector<64x256xbf16>, vector<32x256xf32> -> vector<32x256xf32>
    %44 = arith.truncf %43 : vector<32x256xf32> to vector<32x256xbf16>
    %c0_37 = arith.constant 0 : index
    %c0_38 = arith.constant 0 : index
    %c0_39 = arith.constant 0 : index
    %45 = vector.load %arg5[%c0_37, %c0_38, %c0_39] : memref<4x256x256xbf16, #tpu.memory_space<vmem>>, vector<1x256x256xbf16>
    %46 = vector.shape_cast %45 : vector<1x256x256xbf16> to vector<256x256xbf16>
    %cst_40 = arith.constant dense<0.000000e+00> : vector<32x256xf32>
    %47 = tpu.matmul %44, %46, %cst_40 {dimension_numbers = #tpu.dot_dimension_numbers<[1], [0], [0], [1], [0, 0, 1, 1], [], []>} : vector<32x256xbf16>, vector<256x256xbf16>, vector<32x256xf32> -> vector<32x256xf32>
    %c1_41 = arith.constant 1 : index
    %c0_42 = arith.constant 0 : index
    %c0_43 = arith.constant 0 : index
    %48 = vector.load %arg4[%c1_41, %c0_42, %c0_43] : memref<4x32x64xbf16, #tpu.memory_space<vmem>>, vector<1x32x64xbf16>
    %49 = vector.shape_cast %48 : vector<1x32x64xbf16> to vector<32x64xbf16>
    %cst_44 = arith.constant dense<0.000000e+00> : vector<32x256xf32>
    %50 = tpu.matmul %49, %40, %cst_44 {dimension_numbers = #tpu.dot_dimension_numbers<[1], [0], [0], [1], [0, 0, 1, 1], [], []>} : vector<32x64xbf16>, vector<64x256xbf16>, vector<32x256xf32> -> vector<32x256xf32>
    %51 = arith.truncf %50 : vector<32x256xf32> to vector<32x256xbf16>
    %c1_45 = arith.constant 1 : index
    %c0_46 = arith.constant 0 : index
    %c0_47 = arith.constant 0 : index
    %52 = vector.load %arg5[%c1_45, %c0_46, %c0_47] : memref<4x256x256xbf16, #tpu.memory_space<vmem>>, vector<1x256x256xbf16>
    %53 = vector.shape_cast %52 : vector<1x256x256xbf16> to vector<256x256xbf16>
    %cst_48 = arith.constant dense<0.000000e+00> : vector<32x256xf32>
    %54 = tpu.matmul %51, %53, %cst_48 {dimension_numbers = #tpu.dot_dimension_numbers<[1], [0], [0], [1], [0, 0, 1, 1], [], []>} : vector<32x256xbf16>, vector<256x256xbf16>, vector<32x256xf32> -> vector<32x256xf32>
    %55 = arith.addf %47, %54 : vector<32x256xf32>
    %c2_49 = arith.constant 2 : index
    %c0_50 = arith.constant 0 : index
    %c0_51 = arith.constant 0 : index
    %56 = vector.load %arg4[%c2_49, %c0_50, %c0_51] : memref<4x32x64xbf16, #tpu.memory_space<vmem>>, vector<1x32x64xbf16>
    %57 = vector.shape_cast %56 : vector<1x32x64xbf16> to vector<32x64xbf16>
    %cst_52 = arith.constant dense<0.000000e+00> : vector<32x256xf32>
    %58 = tpu.matmul %57, %40, %cst_52 {dimension_numbers = #tpu.dot_dimension_numbers<[1], [0], [0], [1], [0, 0, 1, 1], [], []>} : vector<32x64xbf16>, vector<64x256xbf16>, vector<32x256xf32> -> vector<32x256xf32>
    %59 = arith.truncf %58 : vector<32x256xf32> to vector<32x256xbf16>
    %c2_53 = arith.constant 2 : index
    %c0_54 = arith.constant 0 : index
    %c0_55 = arith.constant 0 : index
    %60 = vector.load %arg5[%c2_53, %c0_54, %c0_55] : memref<4x256x256xbf16, #tpu.memory_space<vmem>>, vector<1x256x256xbf16>
    %61 = vector.shape_cast %60 : vector<1x256x256xbf16> to vector<256x256xbf16>
    %cst_56 = arith.constant dense<0.000000e+00> : vector<32x256xf32>
    %62 = tpu.matmul %59, %61, %cst_56 {dimension_numbers = #tpu.dot_dimension_numbers<[1], [0], [0], [1], [0, 0, 1, 1], [], []>} : vector<32x256xbf16>, vector<256x256xbf16>, vector<32x256xf32> -> vector<32x256xf32>
    %63 = arith.addf %55, %62 : vector<32x256xf32>
    %c3_57 = arith.constant 3 : index
    %c0_58 = arith.constant 0 : index
    %c0_59 = arith.constant 0 : index
    %64 = vector.load %arg4[%c3_57, %c0_58, %c0_59] : memref<4x32x64xbf16, #tpu.memory_space<vmem>>, vector<1x32x64xbf16>
    %65 = vector.shape_cast %64 : vector<1x32x64xbf16> to vector<32x64xbf16>
    %cst_60 = arith.constant dense<0.000000e+00> : vector<32x256xf32>
    %66 = tpu.matmul %65, %40, %cst_60 {dimension_numbers = #tpu.dot_dimension_numbers<[1], [0], [0], [1], [0, 0, 1, 1], [], []>} : vector<32x64xbf16>, vector<64x256xbf16>, vector<32x256xf32> -> vector<32x256xf32>
    %67 = arith.truncf %66 : vector<32x256xf32> to vector<32x256xbf16>
    %c3_61 = arith.constant 3 : index
    %c0_62 = arith.constant 0 : index
    %c0_63 = arith.constant 0 : index
    %68 = vector.load %arg5[%c3_61, %c0_62, %c0_63] : memref<4x256x256xbf16, #tpu.memory_space<vmem>>, vector<1x256x256xbf16>
    %69 = vector.shape_cast %68 : vector<1x256x256xbf16> to vector<256x256xbf16>
    %cst_64 = arith.constant dense<0.000000e+00> : vector<32x256xf32>
    %70 = tpu.matmul %67, %69, %cst_64 {dimension_numbers = #tpu.dot_dimension_numbers<[1], [0], [0], [1], [0, 0, 1, 1], [], []>} : vector<32x256xbf16>, vector<256x256xbf16>, vector<32x256xf32> -> vector<32x256xf32>
    %71 = arith.addf %63, %70 : vector<32x256xf32>
    %c0_65 = arith.constant 0 : index
    %c0_66 = arith.constant 0 : index
    %72 = vector.load %arg6[%c0_65, %c0_66] : memref<1x256xf32, #tpu.memory_space<vmem>>, vector<1x256xf32>
    %73 = vector.broadcast %72 : vector<1x256xf32> to vector<32x256xf32>
    %74 = arith.addf %71, %73 : vector<32x256xf32>
    %c0_67 = arith.constant 0 : index
    %c0_68 = arith.constant 0 : index
    %75 = vector.load %arg9[%c0_67, %c0_68] : memref<256x16xf32, #tpu.memory_space<vmem>>, vector<256x16xf32>
    %c0_69 = arith.constant 0 : index
    %c0_70 = arith.constant 0 : index
    %76 = vector.load %arg10[%c0_69, %c0_70] : memref<16x256xf32, #tpu.memory_space<vmem>>, vector<16x256xf32>
    %cst_71 = arith.constant dense<0.000000e+00> : vector<256xf32>
    %77 = vector.multi_reduction <add>, %74, %cst_71 [0] : vector<32x256xf32> to vector<256xf32>
    %78 = vector.shape_cast %77 : vector<256xf32> to vector<1x256xf32>
    %cst_72 = arith.constant dense<0.000000e+00> : vector<1x16xf32>
    %79 = tpu.matmul %78, %75, %cst_72 {dimension_numbers = #tpu.dot_dimension_numbers<[1], [0], [0], [1], [0, 0, 1, 1], [], []>} : vector<1x256xf32>, vector<256x16xf32>, vector<1x16xf32> -> vector<1x16xf32>
    %cst_73 = arith.constant 0.001953125 : f32
    %80 = vector.broadcast %cst_73 : f32 to vector<1x16xf32>
    %81 = arith.mulf %79, %80 : vector<1x16xf32>
    %cst_74 = arith.constant dense<0.000000e+00> : vector<1x256xf32>
    %82 = tpu.matmul %81, %76, %cst_74 {dimension_numbers = #tpu.dot_dimension_numbers<[1], [0], [0], [1], [0, 0, 1, 1], [], []>} : vector<1x16xf32>, vector<16x256xf32>, vector<1x256xf32> -> vector<1x256xf32>
    %83 = vector.broadcast %82 : vector<1x256xf32> to vector<32x256xf32>
    %84 = arith.subf %74, %83 : vector<32x256xf32>
    %85 = arith.mulf %84, %84 : vector<32x256xf32>
    %cst_75 = arith.constant dense<0.000000e+00> : vector<256xf32>
    %86 = vector.multi_reduction <add>, %85, %cst_75 [0] : vector<32x256xf32> to vector<256xf32>
    %87 = vector.shape_cast %86 : vector<256xf32> to vector<1x256xf32>
    %cst_76 = arith.constant dense<0.000000e+00> : vector<1x16xf32>
    %88 = tpu.matmul %87, %75, %cst_76 {dimension_numbers = #tpu.dot_dimension_numbers<[1], [0], [0], [1], [0, 0, 1, 1], [], []>} : vector<1x256xf32>, vector<256x16xf32>, vector<1x16xf32> -> vector<1x16xf32>
    %cst_77 = arith.constant 0.001953125 : f32
    %89 = vector.broadcast %cst_77 : f32 to vector<1x16xf32>
    %90 = arith.mulf %88, %89 : vector<1x16xf32>
    %c0_78 = arith.constant 0 : index
    %c0_79 = arith.constant 0 : index
    %91 = vector.load %arg7[%c0_78, %c0_79] : memref<1x16xf32, #tpu.memory_space<vmem>>, vector<1x16xf32>
    %cst_80 = arith.constant 9.99999974E-6 : f32
    %92 = vector.broadcast %cst_80 : f32 to vector<1x16xf32>
    %93 = arith.addf %90, %92 : vector<1x16xf32>
    %94 = math.rsqrt %93 : vector<1x16xf32>
    %95 = arith.mulf %91, %94 : vector<1x16xf32>
    %cst_81 = arith.constant dense<0.000000e+00> : vector<1x256xf32>
    %96 = tpu.matmul %95, %76, %cst_81 {dimension_numbers = #tpu.dot_dimension_numbers<[1], [0], [0], [1], [0, 0, 1, 1], [], []>} : vector<1x16xf32>, vector<16x256xf32>, vector<1x256xf32> -> vector<1x256xf32>
    %97 = vector.broadcast %96 : vector<1x256xf32> to vector<32x256xf32>
    %98 = arith.mulf %84, %97 : vector<32x256xf32>
    %c0_82 = arith.constant 0 : index
    %c0_83 = arith.constant 0 : index
    %99 = vector.load %arg8[%c0_82, %c0_83] : memref<1x256xf32, #tpu.memory_space<vmem>>, vector<1x256xf32>
    %100 = vector.broadcast %99 : vector<1x256xf32> to vector<32x256xf32>
    %101 = arith.addf %98, %100 : vector<32x256xf32>
    %cst_84 = arith.constant 0.000000e+00 : f32
    %102 = vector.broadcast %cst_84 : f32 to vector<32x256xf32>
    %103 = arith.cmpf oge, %101, %102 : vector<32x256xf32>
    %cst_85 = arith.constant 2.000000e-01 : f32
    %104 = vector.broadcast %cst_85 : f32 to vector<32x256xf32>
    %105 = arith.mulf %104, %101 : vector<32x256xf32>
    %106 = arith.select %103, %101, %105 : vector<32x256xi1>, vector<32x256xf32>
    %107 = arith.truncf %106 : vector<32x256xf32> to vector<32x256xbf16>
    %c0_86 = arith.constant 0 : index
    %c0_87 = arith.constant 0 : index
    %c0_88 = arith.constant 0 : index
    %108 = vector.load %arg11[%c0_86, %c0_87, %c0_88] : memref<4x16x32xbf16, #tpu.memory_space<vmem>>, vector<1x16x32xbf16>
    %109 = vector.shape_cast %108 : vector<1x16x32xbf16> to vector<16x32xbf16>
    %cst_89 = arith.constant dense<0.000000e+00> : vector<16x256xf32>
    %110 = tpu.matmul %109, %107, %cst_89 {dimension_numbers = #tpu.dot_dimension_numbers<[1], [0], [0], [1], [0, 0, 1, 1], [], []>} : vector<16x32xbf16>, vector<32x256xbf16>, vector<16x256xf32> -> vector<16x256xf32>
    %111 = arith.truncf %110 : vector<16x256xf32> to vector<16x256xbf16>
    %c0_90 = arith.constant 0 : index
    %c0_91 = arith.constant 0 : index
    %c0_92 = arith.constant 0 : index
    %112 = vector.load %arg12[%c0_90, %c0_91, %c0_92] : memref<4x256x256xbf16, #tpu.memory_space<vmem>>, vector<1x256x256xbf16>
    %113 = vector.shape_cast %112 : vector<1x256x256xbf16> to vector<256x256xbf16>
    %cst_93 = arith.constant dense<0.000000e+00> : vector<16x256xf32>
    %114 = tpu.matmul %111, %113, %cst_93 {dimension_numbers = #tpu.dot_dimension_numbers<[1], [0], [0], [1], [0, 0, 1, 1], [], []>} : vector<16x256xbf16>, vector<256x256xbf16>, vector<16x256xf32> -> vector<16x256xf32>
    %c1_94 = arith.constant 1 : index
    %c0_95 = arith.constant 0 : index
    %c0_96 = arith.constant 0 : index
    %115 = vector.load %arg11[%c1_94, %c0_95, %c0_96] : memref<4x16x32xbf16, #tpu.memory_space<vmem>>, vector<1x16x32xbf16>
    %116 = vector.shape_cast %115 : vector<1x16x32xbf16> to vector<16x32xbf16>
    %cst_97 = arith.constant dense<0.000000e+00> : vector<16x256xf32>
    %117 = tpu.matmul %116, %107, %cst_97 {dimension_numbers = #tpu.dot_dimension_numbers<[1], [0], [0], [1], [0, 0, 1, 1], [], []>} : vector<16x32xbf16>, vector<32x256xbf16>, vector<16x256xf32> -> vector<16x256xf32>
    %118 = arith.truncf %117 : vector<16x256xf32> to vector<16x256xbf16>
    %c1_98 = arith.constant 1 : index
    %c0_99 = arith.constant 0 : index
    %c0_100 = arith.constant 0 : index
    %119 = vector.load %arg12[%c1_98, %c0_99, %c0_100] : memref<4x256x256xbf16, #tpu.memory_space<vmem>>, vector<1x256x256xbf16>
    %120 = vector.shape_cast %119 : vector<1x256x256xbf16> to vector<256x256xbf16>
    %cst_101 = arith.constant dense<0.000000e+00> : vector<16x256xf32>
    %121 = tpu.matmul %118, %120, %cst_101 {dimension_numbers = #tpu.dot_dimension_numbers<[1], [0], [0], [1], [0, 0, 1, 1], [], []>} : vector<16x256xbf16>, vector<256x256xbf16>, vector<16x256xf32> -> vector<16x256xf32>
    %122 = arith.addf %114, %121 : vector<16x256xf32>
    %c2_102 = arith.constant 2 : index
    %c0_103 = arith.constant 0 : index
    %c0_104 = arith.constant 0 : index
    %123 = vector.load %arg11[%c2_102, %c0_103, %c0_104] : memref<4x16x32xbf16, #tpu.memory_space<vmem>>, vector<1x16x32xbf16>
    %124 = vector.shape_cast %123 : vector<1x16x32xbf16> to vector<16x32xbf16>
    %cst_105 = arith.constant dense<0.000000e+00> : vector<16x256xf32>
    %125 = tpu.matmul %124, %107, %cst_105 {dimension_numbers = #tpu.dot_dimension_numbers<[1], [0], [0], [1], [0, 0, 1, 1], [], []>} : vector<16x32xbf16>, vector<32x256xbf16>, vector<16x256xf32> -> vector<16x256xf32>
    %126 = arith.truncf %125 : vector<16x256xf32> to vector<16x256xbf16>
    %c2_106 = arith.constant 2 : index
    %c0_107 = arith.constant 0 : index
    %c0_108 = arith.constant 0 : index
    %127 = vector.load %arg12[%c2_106, %c0_107, %c0_108] : memref<4x256x256xbf16, #tpu.memory_space<vmem>>, vector<1x256x256xbf16>
    %128 = vector.shape_cast %127 : vector<1x256x256xbf16> to vector<256x256xbf16>
    %cst_109 = arith.constant dense<0.000000e+00> : vector<16x256xf32>
    %129 = tpu.matmul %126, %128, %cst_109 {dimension_numbers = #tpu.dot_dimension_numbers<[1], [0], [0], [1], [0, 0, 1, 1], [], []>} : vector<16x256xbf16>, vector<256x256xbf16>, vector<16x256xf32> -> vector<16x256xf32>
    %130 = arith.addf %122, %129 : vector<16x256xf32>
    %c3_110 = arith.constant 3 : index
    %c0_111 = arith.constant 0 : index
    %c0_112 = arith.constant 0 : index
    %131 = vector.load %arg11[%c3_110, %c0_111, %c0_112] : memref<4x16x32xbf16, #tpu.memory_space<vmem>>, vector<1x16x32xbf16>
    %132 = vector.shape_cast %131 : vector<1x16x32xbf16> to vector<16x32xbf16>
    %cst_113 = arith.constant dense<0.000000e+00> : vector<16x256xf32>
    %133 = tpu.matmul %132, %107, %cst_113 {dimension_numbers = #tpu.dot_dimension_numbers<[1], [0], [0], [1], [0, 0, 1, 1], [], []>} : vector<16x32xbf16>, vector<32x256xbf16>, vector<16x256xf32> -> vector<16x256xf32>
    %134 = arith.truncf %133 : vector<16x256xf32> to vector<16x256xbf16>
    %c3_114 = arith.constant 3 : index
    %c0_115 = arith.constant 0 : index
    %c0_116 = arith.constant 0 : index
    %135 = vector.load %arg12[%c3_114, %c0_115, %c0_116] : memref<4x256x256xbf16, #tpu.memory_space<vmem>>, vector<1x256x256xbf16>
    %136 = vector.shape_cast %135 : vector<1x256x256xbf16> to vector<256x256xbf16>
    %cst_117 = arith.constant dense<0.000000e+00> : vector<16x256xf32>
    %137 = tpu.matmul %134, %136, %cst_117 {dimension_numbers = #tpu.dot_dimension_numbers<[1], [0], [0], [1], [0, 0, 1, 1], [], []>} : vector<16x256xbf16>, vector<256x256xbf16>, vector<16x256xf32> -> vector<16x256xf32>
    %138 = arith.addf %130, %137 : vector<16x256xf32>
    %c0_118 = arith.constant 0 : index
    %c0_119 = arith.constant 0 : index
    %139 = vector.load %arg13[%c0_118, %c0_119] : memref<1x256xf32, #tpu.memory_space<vmem>>, vector<1x256xf32>
    %140 = vector.broadcast %139 : vector<1x256xf32> to vector<16x256xf32>
    %141 = arith.addf %138, %140 : vector<16x256xf32>
    %c0_120 = arith.constant 0 : index
    %c0_121 = arith.constant 0 : index
    %142 = vector.load %arg16[%c0_120, %c0_121] : memref<256x32xf32, #tpu.memory_space<vmem>>, vector<256x32xf32>
    %c0_122 = arith.constant 0 : index
    %c0_123 = arith.constant 0 : index
    %143 = vector.load %arg17[%c0_122, %c0_123] : memref<32x256xf32, #tpu.memory_space<vmem>>, vector<32x256xf32>
    %cst_124 = arith.constant dense<0.000000e+00> : vector<256xf32>
    %144 = vector.multi_reduction <add>, %141, %cst_124 [0] : vector<16x256xf32> to vector<256xf32>
    %145 = vector.shape_cast %144 : vector<256xf32> to vector<1x256xf32>
    %cst_125 = arith.constant dense<0.000000e+00> : vector<1x32xf32>
    %146 = tpu.matmul %145, %142, %cst_125 {dimension_numbers = #tpu.dot_dimension_numbers<[1], [0], [0], [1], [0, 0, 1, 1], [], []>} : vector<1x256xf32>, vector<256x32xf32>, vector<1x32xf32> -> vector<1x32xf32>
    %cst_126 = arith.constant 7.812500e-03 : f32
    %147 = vector.broadcast %cst_126 : f32 to vector<1x32xf32>
    %148 = arith.mulf %146, %147 : vector<1x32xf32>
    %cst_127 = arith.constant dense<0.000000e+00> : vector<1x256xf32>
    %149 = tpu.matmul %148, %143, %cst_127 {dimension_numbers = #tpu.dot_dimension_numbers<[1], [0], [0], [1], [0, 0, 1, 1], [], []>} : vector<1x32xf32>, vector<32x256xf32>, vector<1x256xf32> -> vector<1x256xf32>
    %150 = vector.broadcast %149 : vector<1x256xf32> to vector<16x256xf32>
    %151 = arith.subf %141, %150 : vector<16x256xf32>
    %152 = arith.mulf %151, %151 : vector<16x256xf32>
    %cst_128 = arith.constant dense<0.000000e+00> : vector<256xf32>
    %153 = vector.multi_reduction <add>, %152, %cst_128 [0] : vector<16x256xf32> to vector<256xf32>
    %154 = vector.shape_cast %153 : vector<256xf32> to vector<1x256xf32>
    %cst_129 = arith.constant dense<0.000000e+00> : vector<1x32xf32>
    %155 = tpu.matmul %154, %142, %cst_129 {dimension_numbers = #tpu.dot_dimension_numbers<[1], [0], [0], [1], [0, 0, 1, 1], [], []>} : vector<1x256xf32>, vector<256x32xf32>, vector<1x32xf32> -> vector<1x32xf32>
    %cst_130 = arith.constant 7.812500e-03 : f32
    %156 = vector.broadcast %cst_130 : f32 to vector<1x32xf32>
    %157 = arith.mulf %155, %156 : vector<1x32xf32>
    %c0_131 = arith.constant 0 : index
    %c0_132 = arith.constant 0 : index
    %158 = vector.load %arg14[%c0_131, %c0_132] : memref<1x32xf32, #tpu.memory_space<vmem>>, vector<1x32xf32>
    %cst_133 = arith.constant 9.99999974E-6 : f32
    %159 = vector.broadcast %cst_133 : f32 to vector<1x32xf32>
    %160 = arith.addf %157, %159 : vector<1x32xf32>
    %161 = math.rsqrt %160 : vector<1x32xf32>
    %162 = arith.mulf %158, %161 : vector<1x32xf32>
    %cst_134 = arith.constant dense<0.000000e+00> : vector<1x256xf32>
    %163 = tpu.matmul %162, %143, %cst_134 {dimension_numbers = #tpu.dot_dimension_numbers<[1], [0], [0], [1], [0, 0, 1, 1], [], []>} : vector<1x32xf32>, vector<32x256xf32>, vector<1x256xf32> -> vector<1x256xf32>
    %164 = vector.broadcast %163 : vector<1x256xf32> to vector<16x256xf32>
    %165 = arith.mulf %151, %164 : vector<16x256xf32>
    %c0_135 = arith.constant 0 : index
    %c0_136 = arith.constant 0 : index
    %166 = vector.load %arg15[%c0_135, %c0_136] : memref<1x256xf32, #tpu.memory_space<vmem>>, vector<1x256xf32>
    %167 = vector.broadcast %166 : vector<1x256xf32> to vector<16x256xf32>
    %168 = arith.addf %165, %167 : vector<16x256xf32>
    %cst_137 = arith.constant 0.000000e+00 : f32
    %169 = vector.broadcast %cst_137 : f32 to vector<16x256xf32>
    %170 = arith.cmpf oge, %168, %169 : vector<16x256xf32>
    %cst_138 = arith.constant 2.000000e-01 : f32
    %171 = vector.broadcast %cst_138 : f32 to vector<16x256xf32>
    %172 = arith.mulf %171, %168 : vector<16x256xf32>
    %173 = arith.select %170, %168, %172 : vector<16x256xi1>, vector<16x256xf32>
    %174 = arith.truncf %173 : vector<16x256xf32> to vector<16x256xbf16>
    %c0_139 = arith.constant 0 : index
    %c0_140 = arith.constant 0 : index
    %c0_141 = arith.constant 0 : index
    %175 = vector.load %arg18[%c0_139, %c0_140, %c0_141] : memref<4x8x16xbf16, #tpu.memory_space<vmem>>, vector<1x8x16xbf16>
    %176 = vector.shape_cast %175 : vector<1x8x16xbf16> to vector<8x16xbf16>
    %cst_142 = arith.constant dense<0.000000e+00> : vector<8x256xf32>
    %177 = tpu.matmul %176, %174, %cst_142 {dimension_numbers = #tpu.dot_dimension_numbers<[1], [0], [0], [1], [0, 0, 1, 1], [], []>} : vector<8x16xbf16>, vector<16x256xbf16>, vector<8x256xf32> -> vector<8x256xf32>
    %178 = arith.truncf %177 : vector<8x256xf32> to vector<8x256xbf16>
    %c0_143 = arith.constant 0 : index
    %c0_144 = arith.constant 0 : index
    %c0_145 = arith.constant 0 : index
    %179 = vector.load %arg19[%c0_143, %c0_144, %c0_145] : memref<4x256x256xbf16, #tpu.memory_space<vmem>>, vector<1x256x256xbf16>
    %180 = vector.shape_cast %179 : vector<1x256x256xbf16> to vector<256x256xbf16>
    %cst_146 = arith.constant dense<0.000000e+00> : vector<8x256xf32>
    %181 = tpu.matmul %178, %180, %cst_146 {dimension_numbers = #tpu.dot_dimension_numbers<[1], [0], [0], [1], [0, 0, 1, 1], [], []>} : vector<8x256xbf16>, vector<256x256xbf16>, vector<8x256xf32> -> vector<8x256xf32>
    %c1_147 = arith.constant 1 : index
    %c0_148 = arith.constant 0 : index
    %c0_149 = arith.constant 0 : index
    %182 = vector.load %arg18[%c1_147, %c0_148, %c0_149] : memref<4x8x16xbf16, #tpu.memory_space<vmem>>, vector<1x8x16xbf16>
    %183 = vector.shape_cast %182 : vector<1x8x16xbf16> to vector<8x16xbf16>
    %cst_150 = arith.constant dense<0.000000e+00> : vector<8x256xf32>
    %184 = tpu.matmul %183, %174, %cst_150 {dimension_numbers = #tpu.dot_dimension_numbers<[1], [0], [0], [1], [0, 0, 1, 1], [], []>} : vector<8x16xbf16>, vector<16x256xbf16>, vector<8x256xf32> -> vector<8x256xf32>
    %185 = arith.truncf %184 : vector<8x256xf32> to vector<8x256xbf16>
    %c1_151 = arith.constant 1 : index
    %c0_152 = arith.constant 0 : index
    %c0_153 = arith.constant 0 : index
    %186 = vector.load %arg19[%c1_151, %c0_152, %c0_153] : memref<4x256x256xbf16, #tpu.memory_space<vmem>>, vector<1x256x256xbf16>
    %187 = vector.shape_cast %186 : vector<1x256x256xbf16> to vector<256x256xbf16>
    %cst_154 = arith.constant dense<0.000000e+00> : vector<8x256xf32>
    %188 = tpu.matmul %185, %187, %cst_154 {dimension_numbers = #tpu.dot_dimension_numbers<[1], [0], [0], [1], [0, 0, 1, 1], [], []>} : vector<8x256xbf16>, vector<256x256xbf16>, vector<8x256xf32> -> vector<8x256xf32>
    %189 = arith.addf %181, %188 : vector<8x256xf32>
    %c2_155 = arith.constant 2 : index
    %c0_156 = arith.constant 0 : index
    %c0_157 = arith.constant 0 : index
    %190 = vector.load %arg18[%c2_155, %c0_156, %c0_157] : memref<4x8x16xbf16, #tpu.memory_space<vmem>>, vector<1x8x16xbf16>
    %191 = vector.shape_cast %190 : vector<1x8x16xbf16> to vector<8x16xbf16>
    %cst_158 = arith.constant dense<0.000000e+00> : vector<8x256xf32>
    %192 = tpu.matmul %191, %174, %cst_158 {dimension_numbers = #tpu.dot_dimension_numbers<[1], [0], [0], [1], [0, 0, 1, 1], [], []>} : vector<8x16xbf16>, vector<16x256xbf16>, vector<8x256xf32> -> vector<8x256xf32>
    %193 = arith.truncf %192 : vector<8x256xf32> to vector<8x256xbf16>
    %c2_159 = arith.constant 2 : index
    %c0_160 = arith.constant 0 : index
    %c0_161 = arith.constant 0 : index
    %194 = vector.load %arg19[%c2_159, %c0_160, %c0_161] : memref<4x256x256xbf16, #tpu.memory_space<vmem>>, vector<1x256x256xbf16>
    %195 = vector.shape_cast %194 : vector<1x256x256xbf16> to vector<256x256xbf16>
    %cst_162 = arith.constant dense<0.000000e+00> : vector<8x256xf32>
    %196 = tpu.matmul %193, %195, %cst_162 {dimension_numbers = #tpu.dot_dimension_numbers<[1], [0], [0], [1], [0, 0, 1, 1], [], []>} : vector<8x256xbf16>, vector<256x256xbf16>, vector<8x256xf32> -> vector<8x256xf32>
    %197 = arith.addf %189, %196 : vector<8x256xf32>
    %c3_163 = arith.constant 3 : index
    %c0_164 = arith.constant 0 : index
    %c0_165 = arith.constant 0 : index
    %198 = vector.load %arg18[%c3_163, %c0_164, %c0_165] : memref<4x8x16xbf16, #tpu.memory_space<vmem>>, vector<1x8x16xbf16>
    %199 = vector.shape_cast %198 : vector<1x8x16xbf16> to vector<8x16xbf16>
    %cst_166 = arith.constant dense<0.000000e+00> : vector<8x256xf32>
    %200 = tpu.matmul %199, %174, %cst_166 {dimension_numbers = #tpu.dot_dimension_numbers<[1], [0], [0], [1], [0, 0, 1, 1], [], []>} : vector<8x16xbf16>, vector<16x256xbf16>, vector<8x256xf32> -> vector<8x256xf32>
    %201 = arith.truncf %200 : vector<8x256xf32> to vector<8x256xbf16>
    %c3_167 = arith.constant 3 : index
    %c0_168 = arith.constant 0 : index
    %c0_169 = arith.constant 0 : index
    %202 = vector.load %arg19[%c3_167, %c0_168, %c0_169] : memref<4x256x256xbf16, #tpu.memory_space<vmem>>, vector<1x256x256xbf16>
    %203 = vector.shape_cast %202 : vector<1x256x256xbf16> to vector<256x256xbf16>
    %cst_170 = arith.constant dense<0.000000e+00> : vector<8x256xf32>
    %204 = tpu.matmul %201, %203, %cst_170 {dimension_numbers = #tpu.dot_dimension_numbers<[1], [0], [0], [1], [0, 0, 1, 1], [], []>} : vector<8x256xbf16>, vector<256x256xbf16>, vector<8x256xf32> -> vector<8x256xf32>
    %205 = arith.addf %197, %204 : vector<8x256xf32>
    %c0_171 = arith.constant 0 : index
    %c0_172 = arith.constant 0 : index
    %206 = vector.load %arg20[%c0_171, %c0_172] : memref<1x256xf32, #tpu.memory_space<vmem>>, vector<1x256xf32>
    %207 = vector.broadcast %206 : vector<1x256xf32> to vector<8x256xf32>
    %208 = arith.addf %205, %207 : vector<8x256xf32>
    %c0_173 = arith.constant 0 : index
    %c0_174 = arith.constant 0 : index
    %209 = vector.load %arg23[%c0_173, %c0_174] : memref<256x64xf32, #tpu.memory_space<vmem>>, vector<256x64xf32>
    %c0_175 = arith.constant 0 : index
    %c0_176 = arith.constant 0 : index
    %210 = vector.load %arg24[%c0_175, %c0_176] : memref<64x256xf32, #tpu.memory_space<vmem>>, vector<64x256xf32>
    %cst_177 = arith.constant dense<0.000000e+00> : vector<256xf32>
    %211 = vector.multi_reduction <add>, %208, %cst_177 [0] : vector<8x256xf32> to vector<256xf32>
    %212 = vector.shape_cast %211 : vector<256xf32> to vector<1x256xf32>
    %cst_178 = arith.constant dense<0.000000e+00> : vector<1x64xf32>
    %213 = tpu.matmul %212, %209, %cst_178 {dimension_numbers = #tpu.dot_dimension_numbers<[1], [0], [0], [1], [0, 0, 1, 1], [], []>} : vector<1x256xf32>, vector<256x64xf32>, vector<1x64xf32> -> vector<1x64xf32>
    %cst_179 = arith.constant 3.125000e-02 : f32
    %214 = vector.broadcast %cst_179 : f32 to vector<1x64xf32>
    %215 = arith.mulf %213, %214 : vector<1x64xf32>
    %cst_180 = arith.constant dense<0.000000e+00> : vector<1x256xf32>
    %216 = tpu.matmul %215, %210, %cst_180 {dimension_numbers = #tpu.dot_dimension_numbers<[1], [0], [0], [1], [0, 0, 1, 1], [], []>} : vector<1x64xf32>, vector<64x256xf32>, vector<1x256xf32> -> vector<1x256xf32>
    %217 = vector.broadcast %216 : vector<1x256xf32> to vector<8x256xf32>
    %218 = arith.subf %208, %217 : vector<8x256xf32>
    %219 = arith.mulf %218, %218 : vector<8x256xf32>
    %cst_181 = arith.constant dense<0.000000e+00> : vector<256xf32>
    %220 = vector.multi_reduction <add>, %219, %cst_181 [0] : vector<8x256xf32> to vector<256xf32>
    %221 = vector.shape_cast %220 : vector<256xf32> to vector<1x256xf32>
    %cst_182 = arith.constant dense<0.000000e+00> : vector<1x64xf32>
    %222 = tpu.matmul %221, %209, %cst_182 {dimension_numbers = #tpu.dot_dimension_numbers<[1], [0], [0], [1], [0, 0, 1, 1], [], []>} : vector<1x256xf32>, vector<256x64xf32>, vector<1x64xf32> -> vector<1x64xf32>
    %cst_183 = arith.constant 3.125000e-02 : f32
    %223 = vector.broadcast %cst_183 : f32 to vector<1x64xf32>
    %224 = arith.mulf %222, %223 : vector<1x64xf32>
    %c0_184 = arith.constant 0 : index
    %c0_185 = arith.constant 0 : index
    %225 = vector.load %arg21[%c0_184, %c0_185] : memref<1x64xf32, #tpu.memory_space<vmem>>, vector<1x64xf32>
    %cst_186 = arith.constant 9.99999974E-6 : f32
    %226 = vector.broadcast %cst_186 : f32 to vector<1x64xf32>
    %227 = arith.addf %224, %226 : vector<1x64xf32>
    %228 = math.rsqrt %227 : vector<1x64xf32>
    %229 = arith.mulf %225, %228 : vector<1x64xf32>
    %cst_187 = arith.constant dense<0.000000e+00> : vector<1x256xf32>
    %230 = tpu.matmul %229, %210, %cst_187 {dimension_numbers = #tpu.dot_dimension_numbers<[1], [0], [0], [1], [0, 0, 1, 1], [], []>} : vector<1x64xf32>, vector<64x256xf32>, vector<1x256xf32> -> vector<1x256xf32>
    %231 = vector.broadcast %230 : vector<1x256xf32> to vector<8x256xf32>
    %232 = arith.mulf %218, %231 : vector<8x256xf32>
    %c0_188 = arith.constant 0 : index
    %c0_189 = arith.constant 0 : index
    %233 = vector.load %arg22[%c0_188, %c0_189] : memref<1x256xf32, #tpu.memory_space<vmem>>, vector<1x256xf32>
    %234 = vector.broadcast %233 : vector<1x256xf32> to vector<8x256xf32>
    %235 = arith.addf %232, %234 : vector<8x256xf32>
    %cst_190 = arith.constant 0.000000e+00 : f32
    %236 = vector.broadcast %cst_190 : f32 to vector<8x256xf32>
    %237 = arith.cmpf oge, %235, %236 : vector<8x256xf32>
    %cst_191 = arith.constant 2.000000e-01 : f32
    %238 = vector.broadcast %cst_191 : f32 to vector<8x256xf32>
    %239 = arith.mulf %238, %235 : vector<8x256xf32>
    %240 = arith.select %237, %235, %239 : vector<8x256xi1>, vector<8x256xf32>
    %241 = arith.truncf %240 : vector<8x256xf32> to vector<8x256xbf16>
    %c0_192 = arith.constant 0 : index
    %c0_193 = arith.constant 0 : index
    %c0_194 = arith.constant 0 : index
    %242 = vector.load %arg25[%c0_192, %c0_193, %c0_194] : memref<4x2x8xbf16, #tpu.memory_space<vmem>>, vector<1x2x8xbf16>
    %243 = vector.shape_cast %242 : vector<1x2x8xbf16> to vector<2x8xbf16>
    %cst_195 = arith.constant dense<0.000000e+00> : vector<2x256xf32>
    %244 = tpu.matmul %243, %241, %cst_195 {dimension_numbers = #tpu.dot_dimension_numbers<[1], [0], [0], [1], [0, 0, 1, 1], [], []>} : vector<2x8xbf16>, vector<8x256xbf16>, vector<2x256xf32> -> vector<2x256xf32>
    %245 = arith.truncf %244 : vector<2x256xf32> to vector<2x256xbf16>
    %c0_196 = arith.constant 0 : index
    %c0_197 = arith.constant 0 : index
    %c0_198 = arith.constant 0 : index
    %246 = vector.load %arg26[%c0_196, %c0_197, %c0_198] : memref<4x256x1xbf16, #tpu.memory_space<vmem>>, vector<1x256x1xbf16>
    %247 = vector.shape_cast %246 : vector<1x256x1xbf16> to vector<256x1xbf16>
    %cst_199 = arith.constant dense<0.000000e+00> : vector<2x1xf32>
    %248 = tpu.matmul %245, %247, %cst_199 {dimension_numbers = #tpu.dot_dimension_numbers<[1], [0], [0], [1], [0, 0, 1, 1], [], []>} : vector<2x256xbf16>, vector<256x1xbf16>, vector<2x1xf32> -> vector<2x1xf32>
    %c1_200 = arith.constant 1 : index
    %c0_201 = arith.constant 0 : index
    %c0_202 = arith.constant 0 : index
    %249 = vector.load %arg25[%c1_200, %c0_201, %c0_202] : memref<4x2x8xbf16, #tpu.memory_space<vmem>>, vector<1x2x8xbf16>
    %250 = vector.shape_cast %249 : vector<1x2x8xbf16> to vector<2x8xbf16>
    %cst_203 = arith.constant dense<0.000000e+00> : vector<2x256xf32>
    %251 = tpu.matmul %250, %241, %cst_203 {dimension_numbers = #tpu.dot_dimension_numbers<[1], [0], [0], [1], [0, 0, 1, 1], [], []>} : vector<2x8xbf16>, vector<8x256xbf16>, vector<2x256xf32> -> vector<2x256xf32>
    %252 = arith.truncf %251 : vector<2x256xf32> to vector<2x256xbf16>
    %c1_204 = arith.constant 1 : index
    %c0_205 = arith.constant 0 : index
    %c0_206 = arith.constant 0 : index
    %253 = vector.load %arg26[%c1_204, %c0_205, %c0_206] : memref<4x256x1xbf16, #tpu.memory_space<vmem>>, vector<1x256x1xbf16>
    %254 = vector.shape_cast %253 : vector<1x256x1xbf16> to vector<256x1xbf16>
    %cst_207 = arith.constant dense<0.000000e+00> : vector<2x1xf32>
    %255 = tpu.matmul %252, %254, %cst_207 {dimension_numbers = #tpu.dot_dimension_numbers<[1], [0], [0], [1], [0, 0, 1, 1], [], []>} : vector<2x256xbf16>, vector<256x1xbf16>, vector<2x1xf32> -> vector<2x1xf32>
    %256 = arith.addf %248, %255 : vector<2x1xf32>
    %c2_208 = arith.constant 2 : index
    %c0_209 = arith.constant 0 : index
    %c0_210 = arith.constant 0 : index
    %257 = vector.load %arg25[%c2_208, %c0_209, %c0_210] : memref<4x2x8xbf16, #tpu.memory_space<vmem>>, vector<1x2x8xbf16>
    %258 = vector.shape_cast %257 : vector<1x2x8xbf16> to vector<2x8xbf16>
    %cst_211 = arith.constant dense<0.000000e+00> : vector<2x256xf32>
    %259 = tpu.matmul %258, %241, %cst_211 {dimension_numbers = #tpu.dot_dimension_numbers<[1], [0], [0], [1], [0, 0, 1, 1], [], []>} : vector<2x8xbf16>, vector<8x256xbf16>, vector<2x256xf32> -> vector<2x256xf32>
    %260 = arith.truncf %259 : vector<2x256xf32> to vector<2x256xbf16>
    %c2_212 = arith.constant 2 : index
    %c0_213 = arith.constant 0 : index
    %c0_214 = arith.constant 0 : index
    %261 = vector.load %arg26[%c2_212, %c0_213, %c0_214] : memref<4x256x1xbf16, #tpu.memory_space<vmem>>, vector<1x256x1xbf16>
    %262 = vector.shape_cast %261 : vector<1x256x1xbf16> to vector<256x1xbf16>
    %cst_215 = arith.constant dense<0.000000e+00> : vector<2x1xf32>
    %263 = tpu.matmul %260, %262, %cst_215 {dimension_numbers = #tpu.dot_dimension_numbers<[1], [0], [0], [1], [0, 0, 1, 1], [], []>} : vector<2x256xbf16>, vector<256x1xbf16>, vector<2x1xf32> -> vector<2x1xf32>
    %264 = arith.addf %256, %263 : vector<2x1xf32>
    %c3_216 = arith.constant 3 : index
    %c0_217 = arith.constant 0 : index
    %c0_218 = arith.constant 0 : index
    %265 = vector.load %arg25[%c3_216, %c0_217, %c0_218] : memref<4x2x8xbf16, #tpu.memory_space<vmem>>, vector<1x2x8xbf16>
    %266 = vector.shape_cast %265 : vector<1x2x8xbf16> to vector<2x8xbf16>
    %cst_219 = arith.constant dense<0.000000e+00> : vector<2x256xf32>
    %267 = tpu.matmul %266, %241, %cst_219 {dimension_numbers = #tpu.dot_dimension_numbers<[1], [0], [0], [1], [0, 0, 1, 1], [], []>} : vector<2x8xbf16>, vector<8x256xbf16>, vector<2x256xf32> -> vector<2x256xf32>
    %268 = arith.truncf %267 : vector<2x256xf32> to vector<2x256xbf16>
    %c3_220 = arith.constant 3 : index
    %c0_221 = arith.constant 0 : index
    %c0_222 = arith.constant 0 : index
    %269 = vector.load %arg26[%c3_220, %c0_221, %c0_222] : memref<4x256x1xbf16, #tpu.memory_space<vmem>>, vector<1x256x1xbf16>
    %270 = vector.shape_cast %269 : vector<1x256x1xbf16> to vector<256x1xbf16>
    %cst_223 = arith.constant dense<0.000000e+00> : vector<2x1xf32>
    %271 = tpu.matmul %268, %270, %cst_223 {dimension_numbers = #tpu.dot_dimension_numbers<[1], [0], [0], [1], [0, 0, 1, 1], [], []>} : vector<2x256xbf16>, vector<256x1xbf16>, vector<2x1xf32> -> vector<2x1xf32>
    %272 = arith.addf %264, %271 : vector<2x1xf32>
    %c0_224 = arith.constant 0 : index
    %c0_225 = arith.constant 0 : index
    %273 = vector.load %arg27[%c0_224, %c0_225] : memref<1x1xf32, #tpu.memory_space<vmem>>, vector<1x1xf32>
    %274 = vector.broadcast %273 : vector<1x1xf32> to vector<2x1xf32>
    %275 = arith.addf %272, %274 : vector<2x1xf32>
    %cst_226 = arith.constant 0.000000e+00 : f32
    %276 = vector.broadcast %cst_226 : f32 to vector<2x1xf32>
    %277 = arith.subf %276, %275 : vector<2x1xf32>
    %278 = math.exp %277 : vector<2x1xf32>
    %cst_227 = arith.constant 1.000000e+00 : f32
    %279 = vector.broadcast %cst_227 : f32 to vector<2x1xf32>
    %280 = arith.addf %279, %278 : vector<2x1xf32>
    %cst_228 = arith.constant 1.000000e+00 : f32
    %281 = vector.broadcast %cst_228 : f32 to vector<2x1xf32>
    %282 = arith.divf %281, %280 : vector<2x1xf32>
    %c0_229 = arith.constant 0 : index
    %c0_230 = arith.constant 0 : index
    %283 = vector.load %arg28[%c0_229, %c0_230] : memref<2x1xf32, #tpu.memory_space<vmem>>, vector<2x1xf32>
    tpu.vector_store %arg28[%c0_229, %c0_230], %282 {strides = array<i32>} : memref<2x1xf32, #tpu.memory_space<vmem>>, vector<2x1xf32>,
    return
  }
}

</mosaic_0001>

<llo_original>
// kernel: forward.1
$region0: #{forward.1}
  #allocation0 [shape = 'u32[]', space=smem, size = 0x4, offset = 0x4, fixed_abs, tag = 'smem constant byte address 0x4 - core index']
  #allocation1 [shape = 'u32[144,128]{1,0:T(1,128)}', space=vmem, size = 0x12000, scoped, tag = 'internal scratch']
  #allocation2 [shape = 'f32[1,1]{1,0:T(1,128)S(1)}', space=vmem, size = 0x200, scoped, tag = 'scoped memory for forward.1']
  %s0 = inlined_call_operand.vmem [shape: bf16[128,192], index: 0, kind: input, shape index: {}]
  %s1 = inlined_call_operand.hbm [shape: bf16[4,64,128], index: 1, kind: input, shape index: {}]
  %s2 = inlined_call_operand.vmem [shape: bf16[4,192,256], index: 2, kind: input, shape index: {}]
  %s3 = inlined_call_operand.hbm [shape: f32[1,256], index: 3, kind: input, shape index: {}]
  %s4 = inlined_call_operand.hbm [shape: bf16[4,32,64], index: 4, kind: input, shape index: {}]
  %s5 = inlined_call_operand.vmem [shape: bf16[4,256,256], index: 5, kind: input, shape index: {}]
  %s6 = inlined_call_operand.hbm [shape: f32[1,256], index: 6, kind: input, shape index: {}]
  %s7 = inlined_call_operand.hbm [shape: f32[1,16], index: 7, kind: input, shape index: {}]
  %s8 = inlined_call_operand.hbm [shape: f32[1,256], index: 8, kind: input, shape index: {}]
  %s9 = inlined_call_operand.vmem [shape: f32[256,16], index: 9, kind: input, shape index: {}]
  %s10 = inlined_call_operand.hbm [shape: f32[16,256], index: 10, kind: input, shape index: {}]
  %s11 = inlined_call_operand.hbm [shape: bf16[4,16,32], index: 11, kind: input, shape index: {}]
  %s12 = inlined_call_operand.vmem [shape: bf16[4,256,256], index: 12, kind: input, shape index: {}]
  %s13 = inlined_call_operand.hbm [shape: f32[1,256], index: 13, kind: input, shape index: {}]
  %s14 = inlined_call_operand.hbm [shape: f32[1,32], index: 14, kind: input, shape index: {}]
  %s15 = inlined_call_operand.hbm [shape: f32[1,256], index: 15, kind: input, shape index: {}]
  %s16 = inlined_call_operand.vmem [shape: f32[256,32], index: 16, kind: input, shape index: {}]
  %s17 = inlined_call_operand.hbm [shape: f32[32,256], index: 17, kind: input, shape index: {}]
  %s18 = inlined_call_operand.vmem [shape: bf16[4,8,16], index: 18, kind: input, shape index: {}]
  %s19 = inlined_call_operand.hbm [shape: bf16[4,256,256], index: 19, kind: input, shape index: {}]
  %s20 = inlined_call_operand.hbm [shape: f32[1,256], index: 20, kind: input, shape index: {}]
  %s21 = inlined_call_operand.hbm [shape: f32[1,64], index: 21, kind: input, shape index: {}]
  %s22 = inlined_call_operand.hbm [shape: f32[1,256], index: 22, kind: input, shape index: {}]
  %s23 = inlined_call_operand.vmem [shape: f32[256,64], index: 23, kind: input, shape index: {}]
  %s24 = inlined_call_operand.hbm [shape: f32[64,256], index: 24, kind: input, shape index: {}]
  %s25 = inlined_call_operand.hbm [shape: bf16[4,2,8], index: 25, kind: input, shape index: {}]
  %s26 = inlined_call_operand.vmem [shape: bf16[4,256,1], index: 26, kind: input, shape index: {}]
  %s27 = inlined_call_operand.<no memory space> [shape: f32[1,1], index: 27, kind: input, shape index: {}]
  %s28 = inlined_call_operand.vmem [shape: f32[2,1], index: 28, kind: output, shape index: {}]
  %s29 = sld [smem:[#allocation0]]
  $region194: #{forward.1} parent=0
    _
  %s31 = ssub.s32 1, %s29
  %s32 = scalar_select 0, %s31, %s29
  %v33 = vstv %s27
  %34 = vst [vmem:[#allocation2] sm:$0x1] %v33
  $region1: #{forward.1} parent=0
    #allocation3 [shape = 'u8[65536]{0}', space=vmem, size = 0x10000, scoped, tag = 'input window, operand 1, single buffered']
    #allocation4 [shape = 's32[1]{0}', space=sflag, size = 0x4, scoped, tag = 'scoped memory for forward.1']
    #allocation5 [shape = 'u8[1024]{0}', space=vmem, size = 0x400, scoped, tag = 'input window, operand 3, single buffered']
    #allocation6 [shape = 's32[1]{0}', space=sflag, size = 0x4, scoped, tag = 'scoped memory for forward.1']
    #allocation7 [shape = 'u8[32768]{0}', space=vmem, size = 0x8000, scoped, tag = 'input window, operand 4, single buffered']
    #allocation8 [shape = 'u8[1024]{0}', space=vmem, size = 0x400, scoped, tag = 'input window, operand 6, single buffered']
    #allocation9 [shape = 's32[1]{0}', space=sflag, size = 0x4, scoped, tag = 'scoped memory for forward.1']
    #allocation10 [shape = 'u8[512]{0}', space=vmem, size = 0x400, scoped, tag = 'input window, operand 7, single buffered']
    #allocation11 [shape = 'u8[1024]{0}', space=vmem, size = 0x400, scoped, tag = 'input window, operand 8, single buffered']
    #allocation12 [shape = 's32[1]{0}', space=sflag, size = 0x4, scoped, tag = 'scoped memory for forward.1']
    #allocation13 [shape = 'u8[16384]{0}', space=vmem, size = 0x4000, scoped, tag = 'input window, operand 10, single buffered']
    #allocation14 [shape = 'u8[16384]{0}', space=vmem, size = 0x4000, scoped, tag = 'input window, operand 11, single buffered']
    #allocation15 [shape = 's32[1]{0}', space=sflag, size = 0x4, scoped, tag = 'scoped memory for forward.1']
    #allocation16 [shape = 'u8[1024]{0}', space=vmem, size = 0x400, scoped, tag = 'input window, operand 13, single buffered']
    #allocation17 [shape = 'u8[512]{0}', space=vmem, size = 0x400, scoped, tag = 'input window, operand 14, single buffered']
    #allocation18 [shape = 's32[1]{0}', space=sflag, size = 0x4, scoped, tag = 'scoped memory for forward.1']
    #allocation19 [shape = 'u8[1024]{0}', space=vmem, size = 0x400, scoped, tag = 'input window, operand 15, single buffered']
    #allocation20 [shape = 'u8[32768]{0}', space=vmem, size = 0x8000, scoped, tag = 'input window, operand 17, single buffered']
    #allocation21 [shape = 's32[1]{0}', space=sflag, size = 0x4, scoped, tag = 'scoped memory for forward.1']
    #allocation22 [shape = 'u8[524288]{0}', space=vmem, size = 0x80000, scoped, tag = 'input window, operand 19, single buffered']
    #allocation23 [shape = 'u8[1024]{0}', space=vmem, size = 0x400, scoped, tag = 'input window, operand 20, single buffered']
    #allocation24 [shape = 's32[1]{0}', space=sflag, size = 0x4, scoped, tag = 'scoped memory for forward.1']
    #allocation25 [shape = 'u8[512]{0}', space=vmem, size = 0x400, scoped, tag = 'input window, operand 21, single buffered']
    #allocation26 [shape = 'u8[1024]{0}', space=vmem, size = 0x400, scoped, tag = 'input window, operand 22, single buffered']
    #allocation27 [shape = 's32[1]{0}', space=sflag, size = 0x4, scoped, tag = 'scoped memory for forward.1']
    #allocation28 [shape = 'u8[65536]{0}', space=vmem, size = 0x10000, scoped, tag = 'input window, operand 24, single buffered']
    #allocation29 [shape = 'u8[2048]{0}', space=vmem, size = 0x800, scoped, tag = 'input window, operand 25, single buffered']
    #allocation30 [shape = 's32[1]{0}', space=sflag, size = 0x4, scoped, tag = 'scoped memory for forward.1']
    %35 = vsyncpa [#allocation4], 0
    %36 = vsyncpa [#allocation6], 0
    %37 = vsyncpa [#allocation9], 0
    %38 = vsyncpa [#allocation12], 0
    %39 = vsyncpa [#allocation15], 0
    %40 = vsyncpa [#allocation18], 0
    %41 = vsyncpa [#allocation21], 0
    %42 = vsyncpa [#allocation24], 0
    %43 = vsyncpa [#allocation27], 0
    %44 = vsyncpa [#allocation30], 0
    // Predicated region
    $region2: #{forward.1} parent=1 // pred_check
      _
    $region3: #{forward.1} parent=1 // pred_check_branch
      %46 = sbr.rel (0) target = $region5
    $region4: #{forward.1} parent=1 // pred_region
      _
    $region5: #{forward.1} parent=1 // pred_fallthru
      _
    // Predicated region
    $region6: #{forward.1} parent=1 // pred_check
      _
    $region7: #{forward.1} parent=1 // pred_check_branch
      %48 = sbr.rel (0) target = $region9
    $region8: #{forward.1} parent=1 // pred_region
      %s50 = ssub.s32 2048, 2048
      %51 = vsyncadd [#allocation4], %s50
      %s52 = sshll.u32 [#allocation3], 4
      %s53 = int_to_ptr.vmem [resolvable:$true] %s52
      %58 = dma.hbm_to_vmem [thread:$0]  %s1, 2048, %s53, [#allocation4], 64, 64, 4
    $region9: #{forward.1} parent=1 // pred_fallthru
      _
    // Predicated region
    $region10: #{forward.1} parent=1 // pred_check
      _
    $region11: #{forward.1} parent=1 // pred_check_branch
      %60 = sbr.rel (0) target = $region13
    $region12: #{forward.1} parent=1 // pred_region
      _
    $region13: #{forward.1} parent=1 // pred_fallthru
      _
    // Predicated region
    $region14: #{forward.1} parent=1 // pred_check
      _
    $region15: #{forward.1} parent=1 // pred_check_branch
      %62 = sbr.rel (0) target = $region17
    $region16: #{forward.1} parent=1 // pred_region
      %s64 = ssub.s32 32, 32
      %65 = vsyncadd [#allocation6], %s64
      %s67 = sshll.u32 [#allocation5], 4
      %s68 = int_to_ptr.vmem [resolvable:$true] %s67
      %70 = dma.hbm_to_vmem [thread:$0]  %s3, 32, %s68, [#allocation6]
    $region17: #{forward.1} parent=1 // pred_fallthru
      _
    // Predicated region
    $region18: #{forward.1} parent=1 // pred_check
      _
    $region19: #{forward.1} parent=1 // pred_check_branch
      %72 = sbr.rel (0) target = $region21
    $region20: #{forward.1} parent=1 // pred_region
      %s74 = ssub.s32 1024, 1024
      %75 = vsyncadd [#allocation6], %s74
      %s76 = sshll.u32 [#allocation7], 4
      %s77 = int_to_ptr.vmem [resolvable:$true] %s76
      %82 = dma.hbm_to_vmem [thread:$0]  %s4, 1024, %s77, [#allocation6], 64, 64, 4
    $region21: #{forward.1} parent=1 // pred_fallthru
      _
    // Predicated region
    $region22: #{forward.1} parent=1 // pred_check
      _
    $region23: #{forward.1} parent=1 // pred_check_branch
      %84 = sbr.rel (0) target = $region25
    $region24: #{forward.1} parent=1 // pred_region
      _
    $region25: #{forward.1} parent=1 // pred_fallthru
      _
    // Predicated region
    $region26: #{forward.1} parent=1 // pred_check
      _
    $region27: #{forward.1} parent=1 // pred_check_branch
      %86 = sbr.rel (0) target = $region29
    $region28: #{forward.1} parent=1 // pred_region
      %s88 = ssub.s32 32, 32
      %89 = vsyncadd [#allocation9], %s88
      %s91 = sshll.u32 [#allocation8], 4
      %s92 = int_to_ptr.vmem [resolvable:$true] %s91
      %94 = dma.hbm_to_vmem [thread:$0]  %s6, 32, %s92, [#allocation9]
    $region29: #{forward.1} parent=1 // pred_fallthru
      _
    // Predicated region
    $region30: #{forward.1} parent=1 // pred_check
      _
    $region31: #{forward.1} parent=1 // pred_check_branch
      %96 = sbr.rel (0) target = $region33
    $region32: #{forward.1} parent=1 // pred_region
      %s98 = ssub.s32 16, 16
      %99 = vsyncadd [#allocation9], %s98
      %s101 = sshll.u32 [#allocation10], 4
      %s102 = int_to_ptr.vmem [resolvable:$true] %s101
      %104 = dma.hbm_to_vmem [thread:$0]  %s7, 16, %s102, [#allocation9]
    $region33: #{forward.1} parent=1 // pred_fallthru
      _
    // Predicated region
    $region34: #{forward.1} parent=1 // pred_check
      _
    $region35: #{forward.1} parent=1 // pred_check_branch
      %106 = sbr.rel (0) target = $region37
    $region36: #{forward.1} parent=1 // pred_region
      %s108 = ssub.s32 32, 32
      %109 = vsyncadd [#allocation12], %s108
      %s111 = sshll.u32 [#allocation11], 4
      %s112 = int_to_ptr.vmem [resolvable:$true] %s111
      %114 = dma.hbm_to_vmem [thread:$0]  %s8, 32, %s112, [#allocation12]
    $region37: #{forward.1} parent=1 // pred_fallthru
      _
    // Predicated region
    $region38: #{forward.1} parent=1 // pred_check
      _
    $region39: #{forward.1} parent=1 // pred_check_branch
      %116 = sbr.rel (0) target = $region41
    $region40: #{forward.1} parent=1 // pred_region
      _
    $region41: #{forward.1} parent=1 // pred_fallthru
      _
    // Predicated region
    $region42: #{forward.1} parent=1 // pred_check
      _
    $region43: #{forward.1} parent=1 // pred_check_branch
      %118 = sbr.rel (0) target = $region45
    $region44: #{forward.1} parent=1 // pred_region
      %s120 = ssub.s32 512, 512
      %121 = vsyncadd [#allocation12], %s120
      %s122 = sshll.u32 [#allocation13], 4
      %s123 = int_to_ptr.vmem [resolvable:$true] %s122
      %128 = dma.hbm_to_vmem [thread:$0]  %s10, 512, %s123, [#allocation12], 256, 256, 16
    $region45: #{forward.1} parent=1 // pred_fallthru
      _
    // Predicated region
    $region46: #{forward.1} parent=1 // pred_check
      _
    $region47: #{forward.1} parent=1 // pred_check_branch
      %130 = sbr.rel (0) target = $region49
    $region48: #{forward.1} parent=1 // pred_region
      %s132 = ssub.s32 512, 512
      %133 = vsyncadd [#allocation15], %s132
      %s134 = sshll.u32 [#allocation14], 4
      %s135 = int_to_ptr.vmem [resolvable:$true] %s134
      %140 = dma.hbm_to_vmem [thread:$0]  %s11, 512, %s135, [#allocation15], 64, 64, 4
    $region49: #{forward.1} parent=1 // pred_fallthru
      _
    // Predicated region
    $region50: #{forward.1} parent=1 // pred_check
      _
    $region51: #{forward.1} parent=1 // pred_check_branch
      %142 = sbr.rel (0) target = $region53
    $region52: #{forward.1} parent=1 // pred_region
      _
    $region53: #{forward.1} parent=1 // pred_fallthru
      _
    // Predicated region
    $region54: #{forward.1} parent=1 // pred_check
      _
    $region55: #{forward.1} parent=1 // pred_check_branch
      %144 = sbr.rel (0) target = $region57
    $region56: #{forward.1} parent=1 // pred_region
      %s146 = ssub.s32 32, 32
      %147 = vsyncadd [#allocation15], %s146
      %s149 = sshll.u32 [#allocation16], 4
      %s150 = int_to_ptr.vmem [resolvable:$true] %s149
      %152 = dma.hbm_to_vmem [thread:$0]  %s13, 32, %s150, [#allocation15]
    $region57: #{forward.1} parent=1 // pred_fallthru
      _
    // Predicated region
    $region58: #{forward.1} parent=1 // pred_check
      _
    $region59: #{forward.1} parent=1 // pred_check_branch
      %154 = sbr.rel (0) target = $region61
    $region60: #{forward.1} parent=1 // pred_region
      %s156 = ssub.s32 16, 16
      %157 = vsyncadd [#allocation18], %s156
      %s159 = sshll.u32 [#allocation17], 4
      %s160 = int_to_ptr.vmem [resolvable:$true] %s159
      %162 = dma.hbm_to_vmem [thread:$0]  %s14, 16, %s160, [#allocation18]
    $region61: #{forward.1} parent=1 // pred_fallthru
      _
    // Predicated region
    $region62: #{forward.1} parent=1 // pred_check
      _
    $region63: #{forward.1} parent=1 // pred_check_branch
      %164 = sbr.rel (0) target = $region65
    $region64: #{forward.1} parent=1 // pred_region
      %s166 = ssub.s32 32, 32
      %167 = vsyncadd [#allocation18], %s166
      %s169 = sshll.u32 [#allocation19], 4
      %s170 = int_to_ptr.vmem [resolvable:$true] %s169
      %172 = dma.hbm_to_vmem [thread:$0]  %s15, 32, %s170, [#allocation18]
    $region65: #{forward.1} parent=1 // pred_fallthru
      _
    // Predicated region
    $region66: #{forward.1} parent=1 // pred_check
      _
    $region67: #{forward.1} parent=1 // pred_check_branch
      %174 = sbr.rel (0) target = $region69
    $region68: #{forward.1} parent=1 // pred_region
      _
    $region69: #{forward.1} parent=1 // pred_fallthru
      _
    // Predicated region
    $region70: #{forward.1} parent=1 // pred_check
      _
    $region71: #{forward.1} parent=1 // pred_check_branch
      %176 = sbr.rel (0) target = $region73
    $region72: #{forward.1} parent=1 // pred_region
      %s178 = ssub.s32 1024, 1024
      %179 = vsyncadd [#allocation21], %s178
      %s180 = sshll.u32 [#allocation20], 4
      %s181 = int_to_ptr.vmem [resolvable:$true] %s180
      %186 = dma.hbm_to_vmem [thread:$0]  %s17, 1024, %s181, [#allocation21], 256, 256, 16
    $region73: #{forward.1} parent=1 // pred_fallthru
      _
    // Predicated region
    $region74: #{forward.1} parent=1 // pred_check
      _
    $region75: #{forward.1} parent=1 // pred_check_branch
      %188 = sbr.rel (0) target = $region77
    $region76: #{forward.1} parent=1 // pred_region
      _
    $region77: #{forward.1} parent=1 // pred_fallthru
      _
    // Predicated region
    $region78: #{forward.1} parent=1 // pred_check
      _
    $region79: #{forward.1} parent=1 // pred_check_branch
      %190 = sbr.rel (0) target = $region81
    $region80: #{forward.1} parent=1 // pred_region
      %s192 = ssub.s32 16384, 16384
      %193 = vsyncadd [#allocation21], %s192
      %s194 = sshll.u32 [#allocation22], 4
      %s195 = int_to_ptr.vmem [resolvable:$true] %s194
      %200 = dma.hbm_to_vmem [thread:$0]  %s19, 16384, %s195, [#allocation21], 128, 128, 8
    $region81: #{forward.1} parent=1 // pred_fallthru
      _
    // Predicated region
    $region82: #{forward.1} parent=1 // pred_check
      _
    $region83: #{forward.1} parent=1 // pred_check_branch
      %202 = sbr.rel (0) target = $region85
    $region84: #{forward.1} parent=1 // pred_region
      %s204 = ssub.s32 32, 32
      %205 = vsyncadd [#allocation24], %s204
      %s207 = sshll.u32 [#allocation23], 4
      %s208 = int_to_ptr.vmem [resolvable:$true] %s207
      %210 = dma.hbm_to_vmem [thread:$0]  %s20, 32, %s208, [#allocation24]
    $region85: #{forward.1} parent=1 // pred_fallthru
      _
    // Predicated region
    $region86: #{forward.1} parent=1 // pred_check
      _
    $region87: #{forward.1} parent=1 // pred_check_branch
      %212 = sbr.rel (0) target = $region89
    $region88: #{forward.1} parent=1 // pred_region
      %s214 = ssub.s32 16, 16
      %215 = vsyncadd [#allocation24], %s214
      %s217 = sshll.u32 [#allocation25], 4
      %s218 = int_to_ptr.vmem [resolvable:$true] %s217
      %220 = dma.hbm_to_vmem [thread:$0]  %s21, 16, %s218, [#allocation24]
    $region89: #{forward.1} parent=1 // pred_fallthru
      _
    // Predicated region
    $region90: #{forward.1} parent=1 // pred_check
      _
    $region91: #{forward.1} parent=1 // pred_check_branch
      %222 = sbr.rel (0) target = $region93
    $region92: #{forward.1} parent=1 // pred_region
      %s224 = ssub.s32 32, 32
      %225 = vsyncadd [#allocation27], %s224
      %s227 = sshll.u32 [#allocation26], 4
      %s228 = int_to_ptr.vmem [resolvable:$true] %s227
      %230 = dma.hbm_to_vmem [thread:$0]  %s22, 32, %s228, [#allocation27]
    $region93: #{forward.1} parent=1 // pred_fallthru
      _
    // Predicated region
    $region94: #{forward.1} parent=1 // pred_check
      _
    $region95: #{forward.1} parent=1 // pred_check_branch
      %232 = sbr.rel (0) target = $region97
    $region96: #{forward.1} parent=1 // pred_region
      _
    $region97: #{forward.1} parent=1 // pred_fallthru
      _
    // Predicated region
    $region98: #{forward.1} parent=1 // pred_check
      _
    $region99: #{forward.1} parent=1 // pred_check_branch
      %234 = sbr.rel (0) target = $region101
    $region100: #{forward.1} parent=1 // pred_region
      %s236 = ssub.s32 2048, 2048
      %237 = vsyncadd [#allocation27], %s236
      %s238 = sshll.u32 [#allocation28], 4
      %s239 = int_to_ptr.vmem [resolvable:$true] %s238
      %244 = dma.hbm_to_vmem [thread:$0]  %s24, 2048, %s239, [#allocation27], 256, 256, 16
    $region101: #{forward.1} parent=1 // pred_fallthru
      _
    // Predicated region
    $region102: #{forward.1} parent=1 // pred_check
      _
    $region103: #{forward.1} parent=1 // pred_check_branch
      %246 = sbr.rel (0) target = $region105
    $region104: #{forward.1} parent=1 // pred_region
      %s248 = ssub.s32 64, 64
      %249 = vsyncadd [#allocation30], %s248
      %s250 = sshll.u32 [#allocation29], 4
      %s251 = int_to_ptr.vmem [resolvable:$true] %s250
      %256 = dma.hbm_to_vmem [thread:$0]  %s25, 64, %s251, [#allocation30], 16, 16, 1
    $region105: #{forward.1} parent=1 // pred_fallthru
      _
    // Predicated region
    $region106: #{forward.1} parent=1 // pred_check
      _
    $region107: #{forward.1} parent=1 // pred_check_branch
      %258 = sbr.rel (0) target = $region109
    $region108: #{forward.1} parent=1 // pred_region
      _
    $region109: #{forward.1} parent=1 // pred_fallthru
      _
    // Predicated region
    $region110: #{forward.1} parent=1 // pred_check
      _
    $region111: #{forward.1} parent=1 // pred_check_branch
      %260 = sbr.rel (0) target = $region113
    $region112: #{forward.1} parent=1 // pred_region
      _
    $region113: #{forward.1} parent=1 // pred_fallthru
      _
    // Predicated region
    $region114: #{forward.1} parent=1 // pred_check
      _
    $region115: #{forward.1} parent=1 // pred_check_branch
      %262 = sbr.rel (0) target = $region117
    $region116: #{forward.1} parent=1 // pred_region
      %263 = dma.done [#allocation4], 2048
    $region117: #{forward.1} parent=1 // pred_fallthru
      _
    // Predicated region
    $region118: #{forward.1} parent=1 // pred_check
      _
    $region119: #{forward.1} parent=1 // pred_check_branch
      %265 = sbr.rel (0) target = $region121
    $region120: #{forward.1} parent=1 // pred_region
      %266 = dma.done [#allocation6], 32
    $region121: #{forward.1} parent=1 // pred_fallthru
      _
    // Predicated region
    $region122: #{forward.1} parent=1 // pred_check
      _
    $region123: #{forward.1} parent=1 // pred_check_branch
      %268 = sbr.rel (0) target = $region125
    $region124: #{forward.1} parent=1 // pred_region
      %269 = dma.done [#allocation6], 1024
    $region125: #{forward.1} parent=1 // pred_fallthru
      _
    // Predicated region
    $region126: #{forward.1} parent=1 // pred_check
      _
    $region127: #{forward.1} parent=1 // pred_check_branch
      %271 = sbr.rel (0) target = $region129
    $region128: #{forward.1} parent=1 // pred_region
      %272 = dma.done [#allocation9], 32
    $region129: #{forward.1} parent=1 // pred_fallthru
      _
    // Predicated region
    $region130: #{forward.1} parent=1 // pred_check
      _
    $region131: #{forward.1} parent=1 // pred_check_branch
      %274 = sbr.rel (0) target = $region133
    $region132: #{forward.1} parent=1 // pred_region
      %275 = dma.done [#allocation9], 16
    $region133: #{forward.1} parent=1 // pred_fallthru
      _
    // Predicated region
    $region134: #{forward.1} parent=1 // pred_check
      _
    $region135: #{forward.1} parent=1 // pred_check_branch
      %277 = sbr.rel (0) target = $region137
    $region136: #{forward.1} parent=1 // pred_region
      %278 = dma.done [#allocation12], 32
    $region137: #{forward.1} parent=1 // pred_fallthru
      _
    // Predicated region
    $region138: #{forward.1} parent=1 // pred_check
      _
    $region139: #{forward.1} parent=1 // pred_check_branch
      %280 = sbr.rel (0) target = $region141
    $region140: #{forward.1} parent=1 // pred_region
      %281 = dma.done [#allocation12], 512
    $region141: #{forward.1} parent=1 // pred_fallthru
      _
    // Predicated region
    $region142: #{forward.1} parent=1 // pred_check
      _
    $region143: #{forward.1} parent=1 // pred_check_branch
      %283 = sbr.rel (0) target = $region145
    $region144: #{forward.1} parent=1 // pred_region
      %284 = dma.done [#allocation15], 512
    $region145: #{forward.1} parent=1 // pred_fallthru
      _
    // Predicated region
    $region146: #{forward.1} parent=1 // pred_check
      _
    $region147: #{forward.1} parent=1 // pred_check_branch
      %286 = sbr.rel (0) target = $region149
    $region148: #{forward.1} parent=1 // pred_region
      %287 = dma.done [#allocation15], 32
    $region149: #{forward.1} parent=1 // pred_fallthru
      _
    // Predicated region
    $region150: #{forward.1} parent=1 // pred_check
      _
    $region151: #{forward.1} parent=1 // pred_check_branch
      %289 = sbr.rel (0) target = $region153
    $region152: #{forward.1} parent=1 // pred_region
      %290 = dma.done [#allocation18], 16
    $region153: #{forward.1} parent=1 // pred_fallthru
      _
    // Predicated region
    $region154: #{forward.1} parent=1 // pred_check
      _
    $region155: #{forward.1} parent=1 // pred_check_branch
      %292 = sbr.rel (0) target = $region157
    $region156: #{forward.1} parent=1 // pred_region
      %293 = dma.done [#allocation18], 32
    $region157: #{forward.1} parent=1 // pred_fallthru
      _
    // Predicated region
    $region158: #{forward.1} parent=1 // pred_check
      _
    $region159: #{forward.1} parent=1 // pred_check_branch
      %295 = sbr.rel (0) target = $region161
    $region160: #{forward.1} parent=1 // pred_region
      %296 = dma.done [#allocation21], 1024
    $region161: #{forward.1} parent=1 // pred_fallthru
      _
    // Predicated region
    $region162: #{forward.1} parent=1 // pred_check
      _
    $region163: #{forward.1} parent=1 // pred_check_branch
      %298 = sbr.rel (0) target = $region165
    $region164: #{forward.1} parent=1 // pred_region
      %299 = dma.done [#allocation21], 16384
    $region165: #{forward.1} parent=1 // pred_fallthru
      _
    // Predicated region
    $region166: #{forward.1} parent=1 // pred_check
      _
    $region167: #{forward.1} parent=1 // pred_check_branch
      %301 = sbr.rel (0) target = $region169
    $region168: #{forward.1} parent=1 // pred_region
      %302 = dma.done [#allocation24], 32
    $region169: #{forward.1} parent=1 // pred_fallthru
      _
    // Predicated region
    $region170: #{forward.1} parent=1 // pred_check
      _
    $region171: #{forward.1} parent=1 // pred_check_branch
      %304 = sbr.rel (0) target = $region173
    $region172: #{forward.1} parent=1 // pred_region
      %305 = dma.done [#allocation24], 16
    $region173: #{forward.1} parent=1 // pred_fallthru
      _
    // Predicated region
    $region174: #{forward.1} parent=1 // pred_check
      _
    $region175: #{forward.1} parent=1 // pred_check_branch
      %307 = sbr.rel (0) target = $region177
    $region176: #{forward.1} parent=1 // pred_region
      %308 = dma.done [#allocation27], 32
    $region177: #{forward.1} parent=1 // pred_fallthru
      _
    // Predicated region
    $region178: #{forward.1} parent=1 // pred_check
      _
    $region179: #{forward.1} parent=1 // pred_check_branch
      %310 = sbr.rel (0) target = $region181
    $region180: #{forward.1} parent=1 // pred_region
      %311 = dma.done [#allocation27], 2048
    $region181: #{forward.1} parent=1 // pred_fallthru
      _
    // Predicated region
    $region182: #{forward.1} parent=1 // pred_check
      _
    $region183: #{forward.1} parent=1 // pred_check_branch
      %313 = sbr.rel (0) target = $region185
    $region184: #{forward.1} parent=1 // pred_region
      %314 = dma.done [#allocation30], 64
    $region185: #{forward.1} parent=1 // pred_fallthru
      _
    %v316 = vld [vmem:[%s0] sm:$0xff]
    %v317 = vld [vmem:[%s0 + $0x8] sm:$0xff]
    %v318 = vld [vmem:[%s0 + $0x10] sm:$0xff]
    %v319 = vld [vmem:[%s0 + $0x18] sm:$0xff]
    %v320 = vld [vmem:[%s0 + $0x20] sm:$0xff]
    %v321 = vld [vmem:[%s0 + $0x28] sm:$0xff]
    %v322 = vld [vmem:[%s0 + $0x30] sm:$0xff]
    %v323 = vld [vmem:[%s0 + $0x38] sm:$0xff]
    %v324 = vld [vmem:[%s0 + $0x40] sm:$0xff]
    %v325 = vld [vmem:[%s0 + $0x48] sm:$0xff]
    %v326 = vld [vmem:[%s0 + $0x50] sm:$0xff]
    %v327 = vld [vmem:[%s0 + $0x58] sm:$0xff]
    %v328 = vld [vmem:[%s0 + $0x60] sm:$0xff]
    %v329 = vld [vmem:[%s0 + $0x68] sm:$0xff]
    %v330 = vld [vmem:[%s0 + $0x70] sm:$0xff]
    %v331 = vld [vmem:[%s0 + $0x78] sm:$0xff]
    %v332 = vld [vmem:[#allocation3] sm:$0xf]
    %v333 = vld [vmem:[#allocation3 + $0x4] sm:$0xf]
    %v334 = vld [vmem:[#allocation3 + $0x8] sm:$0xf]
    %v335 = vld [vmem:[#allocation3 + $0xc] sm:$0xf]
    %v336 = vld [vmem:[#allocation3 + $0x10] sm:$0xf]
    %v337 = vld [vmem:[#allocation3 + $0x14] sm:$0xf]
    %v338 = vld [vmem:[#allocation3 + $0x18] sm:$0xf]
    %v339 = vld [vmem:[#allocation3 + $0x1c] sm:$0xf]
    %v348 = vunpack.c.l.b16 %v332
    %v349 = vunpack.c.l.b16 %v333
    %v350 = vunpack.c.l.b16 %v334
    %v351 = vunpack.c.l.b16 %v335
    %v352 = vunpack.c.l.b16 %v336
    %v353 = vunpack.c.l.b16 %v337
    %v354 = vunpack.c.l.b16 %v338
    %v355 = vunpack.c.l.b16 %v339
    %v356 = vpack.c.b16 %v349, %v348
    %v357 = vpack.c.b16 %v351, %v350
    %v358 = vpack.c.b16 %v353, %v352
    %v359 = vpack.c.b16 %v355, %v354
    %v380 = vunpack.c.l.b16 %v316
    %v381 = vunpack.c.h.b16 %v316
    %v382 = vunpack.c.l.b16 %v317
    %v383 = vunpack.c.h.b16 %v317
    %v384 = vunpack.c.l.b16 %v318
    %v385 = vunpack.c.h.b16 %v318
    %v386 = vunpack.c.l.b16 %v319
    %v387 = vunpack.c.h.b16 %v319
    %v388 = vunpack.c.l.b16 %v320
    %v389 = vunpack.c.h.b16 %v320
    %v390 = vunpack.c.l.b16 %v321
    %v391 = vunpack.c.h.b16 %v321
    %v392 = vunpack.c.l.b16 %v322
    %v393 = vunpack.c.h.b16 %v322
    %v394 = vunpack.c.l.b16 %v323
    %v395 = vunpack.c.h.b16 %v323
    %v396 = vunpack.c.l.b16 %v324
    %v397 = vunpack.c.h.b16 %v324
    %v398 = vunpack.c.l.b16 %v325
    %v399 = vunpack.c.h.b16 %v325
    %v400 = vunpack.c.l.b16 %v326
    %v401 = vunpack.c.h.b16 %v326
    %v402 = vunpack.c.l.b16 %v327
    %v403 = vunpack.c.h.b16 %v327
    %v404 = vunpack.c.l.b16 %v328
    %v405 = vunpack.c.h.b16 %v328
    %v406 = vunpack.c.l.b16 %v329
    %v407 = vunpack.c.h.b16 %v329
    %v408 = vunpack.c.l.b16 %v330
    %v409 = vunpack.c.h.b16 %v330
    %v410 = vunpack.c.l.b16 %v331
    %v411 = vunpack.c.h.b16 %v331
    %v412 = vpack.c.b16 %v382, %v380
    %v413 = vpack.c.b16 %v383, %v381
    %v414 = vpack.c.b16 %v386, %v384
    %v415 = vpack.c.b16 %v387, %v385
    %v416 = vpack.c.b16 %v390, %v388
    %v417 = vpack.c.b16 %v391, %v389
    %v418 = vpack.c.b16 %v394, %v392
    %v419 = vpack.c.b16 %v395, %v393
    %v420 = vpack.c.b16 %v398, %v396
    %v421 = vpack.c.b16 %v399, %v397
    %v422 = vpack.c.b16 %v402, %v400
    %v423 = vpack.c.b16 %v403, %v401
    %v424 = vpack.c.b16 %v406, %v404
    %v425 = vpack.c.b16 %v407, %v405
    %v426 = vpack.c.b16 %v410, %v408
    %v427 = vpack.c.b16 %v411, %v409
    %444 = vmatprep.subr.bf16.mxu0 %v427
    %445 = vmatpush1.bf16.msra.mxu0 %v426
    %446 = vmatprep.subr.bf16.mxu0 %v425
    %447 = vmatpush1.bf16.msra.mxu0 %v424
    %448 = vmatprep.subr.bf16.mxu0 %v423
    %449 = vmatpush1.bf16.msra.mxu0 %v422
    %450 = vmatprep.subr.bf16.mxu0 %v421
    %451 = vmatpush1.bf16.msra.mxu0 %v420
    %452 = vmatprep.subr.bf16.mxu0 %v419
    %453 = vmatpush1.bf16.msra.mxu0 %v418
    %454 = vmatprep.subr.bf16.mxu0 %v417
    %455 = vmatpush1.bf16.msra.mxu0 %v416
    %456 = vmatprep.subr.bf16.mxu0 %v415
    %457 = vmatpush1.bf16.msra.mxu0 %v414
    %458 = vmatprep.subr.bf16.mxu0 %v413
    %459 = vmatpush1.bf16.msra.mxu0 %v412
    %460 = vmatprep.subr.bf16.mxu0 0
    %461 = vmatpush2.bf16.msra.mxu0 0
    %462 = vmatprep.subr.bf16.mxu0 0
    %463 = vmatpush2.bf16.msra.mxu0 0
    %464 = vmatprep.subr.bf16.mxu0 0
    %465 = vmatpush2.bf16.msra.mxu0 0
    %466 = vmatprep.subr.bf16.mxu0 0
    %467 = vmatpush2.bf16.msra.mxu0 0
    %468 = vmatprep.subr.bf16.mxu0 0
    %469 = vmatpush2.bf16.msra.mxu0 0
    %470 = vmatprep.subr.bf16.mxu0 0
    %471 = vmatpush2.bf16.msra.mxu0 0
    %472 = vmatprep.subr.bf16.mxu0 0
    %473 = vmatpush2.bf16.msra.mxu0 0
    %474 = vmatprep.subr.bf16.mxu0 0
    %475 = vmatpush2.bf16.msra.mxu0 0
    %476 = vmatprep.mubr.bf16.mxu0 0
    %477 = vmatmul.mubr.bf16.gmra.mxu0 %v356
    %v478 = vpop.f32.mrf.mxu0
    %v479 = vadd.f32 0.0, %v478
    %v480 = vpop.f32.mrf.mxu0
    %v481 = vadd.f32 0.0, %v480
    %v482 = vpop.f32.mrf.mxu0
    %v483 = vadd.f32 0.0, %v482
    %v484 = vpop.f32.mrf.mxu0
    %v485 = vadd.f32 0.0, %v484
    %486 = vmatprep.mubr.bf16.mxu0 0
    %487 = vmatmul.mubr.bf16.gmra.mxu0 %v357
    %v488 = vpop.f32.mrf.mxu0
    %v489 = vadd.f32 0.0, %v488
    %v490 = vpop.f32.mrf.mxu0
    %v491 = vadd.f32 0.0, %v490
    %v492 = vpop.f32.mrf.mxu0
    %v493 = vadd.f32 0.0, %v492
    %v494 = vpop.f32.mrf.mxu0
    %v495 = vadd.f32 0.0, %v494
    %496 = vmatprep.mubr.bf16.mxu0 0
    %497 = vmatmul.mubr.bf16.gmra.mxu0 %v358
    %v498 = vpop.f32.mrf.mxu0
    %v499 = vadd.f32 0.0, %v498
    %v500 = vpop.f32.mrf.mxu0
    %v501 = vadd.f32 0.0, %v500
    %v502 = vpop.f32.mrf.mxu0
    %v503 = vadd.f32 0.0, %v502
    %v504 = vpop.f32.mrf.mxu0
    %v505 = vadd.f32 0.0, %v504
    %506 = vmatprep.mubr.bf16.mxu0 0
    %507 = vmatmul.mubr.bf16.gmra.mxu0 %v359
    %v508 = vpop.f32.mrf.mxu0
    %v509 = vadd.f32 0.0, %v508
    %v510 = vpop.f32.mrf.mxu0
    %v511 = vadd.f32 0.0, %v510
    %v512 = vpop.f32.mrf.mxu0
    %v513 = vadd.f32 0.0, %v512
    %v514 = vpop.f32.mrf.mxu0
    %v515 = vadd.f32 0.0, %v514
    %516 = vdwg.mxu0
    %v517 = vpack.c.bf16 %v483, %v479
    %v518 = vpack.c.bf16 %v485, %v481
    %v519 = vpack.c.bf16 %v493, %v489
    %v520 = vpack.c.bf16 %v495, %v491
    %v521 = vpack.c.bf16 %v503, %v499
    %v522 = vpack.c.bf16 %v505, %v501
    %v523 = vpack.c.bf16 %v513, %v509
    %v524 = vpack.c.bf16 %v515, %v511
    %v525 = vld [vmem:[%s2] sm:$0xff]
    %v526 = vld [vmem:[%s2 + $0x8] sm:$0xff]
    %v527 = vld [vmem:[%s2 + $0x10] sm:$0xff]
    %v528 = vld [vmem:[%s2 + $0x18] sm:$0xff]
    %v529 = vld [vmem:[%s2 + $0x20] sm:$0xff]
    %v530 = vld [vmem:[%s2 + $0x28] sm:$0xff]
    %v531 = vld [vmem:[%s2 + $0x30] sm:$0xff]
    %v532 = vld [vmem:[%s2 + $0x38] sm:$0xff]
    %v533 = vld [vmem:[%s2 + $0x40] sm:$0xff]
    %v534 = vld [vmem:[%s2 + $0x48] sm:$0xff]
    %v535 = vld [vmem:[%s2 + $0x50] sm:$0xff]
    %v536 = vld [vmem:[%s2 + $0x58] sm:$0xff]
    %v537 = vld [vmem:[%s2 + $0x60] sm:$0xff]
    %v538 = vld [vmem:[%s2 + $0x68] sm:$0xff]
    %v539 = vld [vmem:[%s2 + $0x70] sm:$0xff]
    %v540 = vld [vmem:[%s2 + $0x78] sm:$0xff]
    %v541 = vld [vmem:[%s2 + $0x80] sm:$0xff]
    %v542 = vld [vmem:[%s2 + $0x88] sm:$0xff]
    %v543 = vld [vmem:[%s2 + $0x90] sm:$0xff]
    %v544 = vld [vmem:[%s2 + $0x98] sm:$0xff]
    %v545 = vld [vmem:[%s2 + $0xa0] sm:$0xff]
    %v546 = vld [vmem:[%s2 + $0xa8] sm:$0xff]
    %v547 = vld [vmem:[%s2 + $0xb0] sm:$0xff]
    %v548 = vld [vmem:[%s2 + $0xb8] sm:$0xff]
    %s549 = scalar_lea.vmem [#allocation3], 32
    %v550 = vld [vmem:[%s549] sm:$0xf]
    %v551 = vld [vmem:[%s549 + $0x4] sm:$0xf]
    %v552 = vld [vmem:[%s549 + $0x8] sm:$0xf]
    %v553 = vld [vmem:[%s549 + $0xc] sm:$0xf]
    %v554 = vld [vmem:[%s549 + $0x10] sm:$0xf]
    %v555 = vld [vmem:[%s549 + $0x14] sm:$0xf]
    %v556 = vld [vmem:[%s549 + $0x18] sm:$0xf]
    %v557 = vld [vmem:[%s549 + $0x1c] sm:$0xf]
    %v566 = vunpack.c.l.b16 %v550
    %v567 = vunpack.c.l.b16 %v551
    %v568 = vunpack.c.l.b16 %v552
    %v569 = vunpack.c.l.b16 %v553
    %v570 = vunpack.c.l.b16 %v554
    %v571 = vunpack.c.l.b16 %v555
    %v572 = vunpack.c.l.b16 %v556
    %v573 = vunpack.c.l.b16 %v557
    %v574 = vpack.c.b16 %v567, %v566
    %v575 = vpack.c.b16 %v569, %v568
    %v576 = vpack.c.b16 %v571, %v570
    %v577 = vpack.c.b16 %v573, %v572
    %582 = vmatprep.subr.bf16.mxu0 %v427
    %583 = vmatpush1.bf16.msra.mxu0 %v426
    %584 = vmatprep.subr.bf16.mxu0 %v425
    %585 = vmatpush1.bf16.msra.mxu0 %v424
    %586 = vmatprep.subr.bf16.mxu0 %v423
    %587 = vmatpush1.bf16.msra.mxu0 %v422
    %588 = vmatprep.subr.bf16.mxu0 %v421
    %589 = vmatpush1.bf16.msra.mxu0 %v420
    %590 = vmatprep.subr.bf16.mxu0 %v419
    %591 = vmatpush1.bf16.msra.mxu0 %v418
    %592 = vmatprep.subr.bf16.mxu0 %v417
    %593 = vmatpush1.bf16.msra.mxu0 %v416
    %594 = vmatprep.subr.bf16.mxu0 %v415
    %595 = vmatpush1.bf16.msra.mxu0 %v414
    %596 = vmatprep.subr.bf16.mxu0 %v413
    %597 = vmatpush1.bf16.msra.mxu0 %v412
    %598 = vmatprep.subr.bf16.mxu0 0
    %599 = vmatpush2.bf16.msra.mxu0 0
    %600 = vmatprep.subr.bf16.mxu0 0
    %601 = vmatpush2.bf16.msra.mxu0 0
    %602 = vmatprep.subr.bf16.mxu0 0
    %603 = vmatpush2.bf16.msra.mxu0 0
    %604 = vmatprep.subr.bf16.mxu0 0
    %605 = vmatpush2.bf16.msra.mxu0 0
    %606 = vmatprep.subr.bf16.mxu0 0
    %607 = vmatpush2.bf16.msra.mxu0 0
    %608 = vmatprep.subr.bf16.mxu0 0
    %609 = vmatpush2.bf16.msra.mxu0 0
    %610 = vmatprep.subr.bf16.mxu0 0
    %611 = vmatpush2.bf16.msra.mxu0 0
    %612 = vmatprep.subr.bf16.mxu0 0
    %613 = vmatpush2.bf16.msra.mxu0 0
    %614 = vmatprep.mubr.bf16.mxu0 0
    %615 = vmatmul.mubr.bf16.gmra.mxu0 %v574
    %v616 = vpop.f32.mrf.mxu0
    %v617 = vadd.f32 0.0, %v616
    %v618 = vpop.f32.mrf.mxu0
    %v619 = vadd.f32 0.0, %v618
    %v620 = vpop.f32.mrf.mxu0
    %v621 = vadd.f32 0.0, %v620
    %v622 = vpop.f32.mrf.mxu0
    %v623 = vadd.f32 0.0, %v622
    %624 = vmatprep.mubr.bf16.mxu0 0
    %625 = vmatmul.mubr.bf16.gmra.mxu0 %v575
    %v626 = vpop.f32.mrf.mxu0
    %v627 = vadd.f32 0.0, %v626
    %v628 = vpop.f32.mrf.mxu0
    %v629 = vadd.f32 0.0, %v628
    %v630 = vpop.f32.mrf.mxu0
    %v631 = vadd.f32 0.0, %v630
    %v632 = vpop.f32.mrf.mxu0
    %v633 = vadd.f32 0.0, %v632
    %634 = vmatprep.mubr.bf16.mxu0 0
    %635 = vmatmul.mubr.bf16.gmra.mxu0 %v576
    %v636 = vpop.f32.mrf.mxu0
    %v637 = vadd.f32 0.0, %v636
    %v638 = vpop.f32.mrf.mxu0
    %v639 = vadd.f32 0.0, %v638
    %v640 = vpop.f32.mrf.mxu0
    %v641 = vadd.f32 0.0, %v640
    %v642 = vpop.f32.mrf.mxu0
    %v643 = vadd.f32 0.0, %v642
    %644 = vmatprep.mubr.bf16.mxu0 0
    %645 = vmatmul.mubr.bf16.gmra.mxu0 %v577
    %v646 = vpop.f32.mrf.mxu0
    %v647 = vadd.f32 0.0, %v646
    %v648 = vpop.f32.mrf.mxu0
    %v649 = vadd.f32 0.0, %v648
    %v650 = vpop.f32.mrf.mxu0
    %v651 = vadd.f32 0.0, %v650
    %v652 = vpop.f32.mrf.mxu0
    %v653 = vadd.f32 0.0, %v652
    %654 = vdwg.mxu0
    %v655 = vpack.c.bf16 %v621, %v617
    %v656 = vpack.c.bf16 %v623, %v619
    %v657 = vpack.c.bf16 %v631, %v627
    %v658 = vpack.c.bf16 %v633, %v629
    %v659 = vpack.c.bf16 %v641, %v637
    %v660 = vpack.c.bf16 %v643, %v639
    %v661 = vpack.c.bf16 %v651, %v647
    %v662 = vpack.c.bf16 %v653, %v649
    %s663 = scalar_lea.vmem %s2, 192
    %v664 = vld [vmem:[%s663] sm:$0xff]
    %v665 = vld [vmem:[%s663 + $0x8] sm:$0xff]
    %v666 = vld [vmem:[%s663 + $0x10] sm:$0xff]
    %v667 = vld [vmem:[%s663 + $0x18] sm:$0xff]
    %v668 = vld [vmem:[%s663 + $0x20] sm:$0xff]
    %v669 = vld [vmem:[%s663 + $0x28] sm:$0xff]
    %v670 = vld [vmem:[%s663 + $0x30] sm:$0xff]
    %v671 = vld [vmem:[%s663 + $0x38] sm:$0xff]
    %v672 = vld [vmem:[%s663 + $0x40] sm:$0xff]
    %v673 = vld [vmem:[%s663 + $0x48] sm:$0xff]
    %v674 = vld [vmem:[%s663 + $0x50] sm:$0xff]
    %v675 = vld [vmem:[%s663 + $0x58] sm:$0xff]
    %v676 = vld [vmem:[%s663 + $0x60] sm:$0xff]
    %v677 = vld [vmem:[%s663 + $0x68] sm:$0xff]
    %v678 = vld [vmem:[%s663 + $0x70] sm:$0xff]
    %v679 = vld [vmem:[%s663 + $0x78] sm:$0xff]
    %v680 = vld [vmem:[%s663 + $0x80] sm:$0xff]
    %v681 = vld [vmem:[%s663 + $0x88] sm:$0xff]
    %v682 = vld [vmem:[%s663 + $0x90] sm:$0xff]
    %v683 = vld [vmem:[%s663 + $0x98] sm:$0xff]
    %v684 = vld [vmem:[%s663 + $0xa0] sm:$0xff]
    %v685 = vld [vmem:[%s663 + $0xa8] sm:$0xff]
    %v686 = vld [vmem:[%s663 + $0xb0] sm:$0xff]
    %v687 = vld [vmem:[%s663 + $0xb8] sm:$0xff]
    %v712 = vunpack.c.l.b16 %v664
    %v713 = vunpack.c.h.b16 %v664
    %v714 = vunpack.c.l.b16 %v665
    %v715 = vunpack.c.h.b16 %v665
    %v716 = vunpack.c.l.b16 %v666
    %v717 = vunpack.c.h.b16 %v666
    %v718 = vunpack.c.l.b16 %v667
    %v719 = vunpack.c.h.b16 %v667
    %v720 = vunpack.c.l.b16 %v668
    %v721 = vunpack.c.h.b16 %v668
    %v722 = vunpack.c.l.b16 %v669
    %v723 = vunpack.c.h.b16 %v669
    %v724 = vunpack.c.l.b16 %v670
    %v725 = vunpack.c.h.b16 %v670
    %v726 = vunpack.c.l.b16 %v671
    %v727 = vunpack.c.h.b16 %v671
    %v728 = vunpack.c.l.b16 %v672
    %v729 = vunpack.c.h.b16 %v672
    %v730 = vunpack.c.l.b16 %v673
    %v731 = vunpack.c.h.b16 %v673
    %v732 = vunpack.c.l.b16 %v674
    %v733 = vunpack.c.h.b16 %v674
    %v734 = vunpack.c.l.b16 %v675
    %v735 = vunpack.c.h.b16 %v675
    %v736 = vunpack.c.l.b16 %v676
    %v737 = vunpack.c.h.b16 %v676
    %v738 = vunpack.c.l.b16 %v677
    %v739 = vunpack.c.h.b16 %v677
    %v740 = vunpack.c.l.b16 %v678
    %v741 = vunpack.c.h.b16 %v678
    %v742 = vunpack.c.l.b16 %v679
    %v743 = vunpack.c.h.b16 %v679
    %v744 = vunpack.c.l.b16 %v680
    %v745 = vunpack.c.h.b16 %v680
    %v746 = vunpack.c.l.b16 %v681
    %v747 = vunpack.c.h.b16 %v681
    %v748 = vunpack.c.l.b16 %v682
    %v749 = vunpack.c.h.b16 %v682
    %v750 = vunpack.c.l.b16 %v683
    %v751 = vunpack.c.h.b16 %v683
    %v752 = vunpack.c.l.b16 %v684
    %v753 = vunpack.c.h.b16 %v684
    %v754 = vunpack.c.l.b16 %v685
    %v755 = vunpack.c.h.b16 %v685
    %v756 = vunpack.c.l.b16 %v686
    %v757 = vunpack.c.h.b16 %v686
    %v758 = vunpack.c.l.b16 %v687
    %v759 = vunpack.c.h.b16 %v687
    %v760 = vpack.c.b16 %v714, %v712
    %v761 = vpack.c.b16 %v715, %v713
    %v762 = vpack.c.b16 %v718, %v716
    %v763 = vpack.c.b16 %v719, %v717
    %v764 = vpack.c.b16 %v722, %v720
    %v765 = vpack.c.b16 %v723, %v721
    %v766 = vpack.c.b16 %v726, %v724
    %v767 = vpack.c.b16 %v727, %v725
    %v768 = vpack.c.b16 %v730, %v728
    %v769 = vpack.c.b16 %v731, %v729
    %v770 = vpack.c.b16 %v734, %v732
    %v771 = vpack.c.b16 %v735, %v733
    %v772 = vpack.c.b16 %v738, %v736
    %v773 = vpack.c.b16 %v739, %v737
    %v774 = vpack.c.b16 %v742, %v740
    %v775 = vpack.c.b16 %v743, %v741
    %v776 = vpack.c.b16 %v746, %v744
    %v777 = vpack.c.b16 %v747, %v745
    %v778 = vpack.c.b16 %v750, %v748
    %v779 = vpack.c.b16 %v751, %v749
    %v780 = vpack.c.b16 %v754, %v752
    %v781 = vpack.c.b16 %v755, %v753
    %v782 = vpack.c.b16 %v758, %v756
    %v783 = vpack.c.b16 %v759, %v757
    %vm808 = vcmask 523264
    %v810 = vsel %vm808, %v656, 0
    %v813 = vsel %vm808, %v658, 0
    %v816 = vsel %vm808, %v660, 0
    %v819 = vsel %vm808, %v662, 0
    %821 = vmatprep.subr.bf16.mxu0 %v775
    %822 = vmatpush1.bf16.msra.mxu0 %v774
    %823 = vmatprep.subr.bf16.mxu0 %v773
    %824 = vmatpush1.bf16.msra.mxu0 %v772
    %825 = vmatprep.subr.bf16.mxu0 %v771
    %826 = vmatpush1.bf16.msra.mxu0 %v770
    %827 = vmatprep.subr.bf16.mxu0 %v769
    %828 = vmatpush1.bf16.msra.mxu0 %v768
    %829 = vmatprep.subr.bf16.mxu0 %v767
    %830 = vmatpush1.bf16.msra.mxu0 %v766
    %831 = vmatprep.subr.bf16.mxu0 %v765
    %832 = vmatpush1.bf16.msra.mxu0 %v764
    %833 = vmatprep.subr.bf16.mxu0 %v763
    %834 = vmatpush1.bf16.msra.mxu0 %v762
    %835 = vmatprep.subr.bf16.mxu0 %v761
    %836 = vmatpush1.bf16.msra.mxu0 %v760
    %837 = vmatprep.subr.bf16.mxu0 0
    %838 = vmatpush2.bf16.msra.mxu0 0
    %839 = vmatprep.subr.bf16.mxu0 0
    %840 = vmatpush2.bf16.msra.mxu0 0
    %841 = vmatprep.subr.bf16.mxu0 0
    %842 = vmatpush2.bf16.msra.mxu0 0
    %843 = vmatprep.subr.bf16.mxu0 0
    %844 = vmatpush2.bf16.msra.mxu0 0
    %845 = vmatprep.subr.bf16.mxu0 %v783
    %846 = vmatpush2.bf16.msra.mxu0 %v782
    %847 = vmatprep.subr.bf16.mxu0 %v781
    %848 = vmatpush2.bf16.msra.mxu0 %v780
    %849 = vmatprep.subr.bf16.mxu0 %v779
    %850 = vmatpush2.bf16.msra.mxu0 %v778
    %851 = vmatprep.subr.bf16.mxu0 %v777
    %852 = vmatpush2.bf16.msra.mxu0 %v776
    %853 = vmatprep.mubr.bf16.mxu0 %v810
    %854 = vmatmul.mubr.bf16.gmra.mxu0 %v655
    %v855 = vpop.f32.mrf.mxu0
    %v856 = vadd.f32 0.0, %v855
    %v857 = vpop.f32.mrf.mxu0
    %v858 = vadd.f32 0.0, %v857
    %v859 = vpop.f32.mrf.mxu0
    %v860 = vadd.f32 0.0, %v859
    %v861 = vpop.f32.mrf.mxu0
    %v862 = vadd.f32 0.0, %v861
    %863 = vmatprep.mubr.bf16.mxu0 %v813
    %864 = vmatmul.mubr.bf16.gmra.mxu0 %v657
    %v865 = vpop.f32.mrf.mxu0
    %v866 = vadd.f32 0.0, %v865
    %v867 = vpop.f32.mrf.mxu0
    %v868 = vadd.f32 0.0, %v867
    %v869 = vpop.f32.mrf.mxu0
    %v870 = vadd.f32 0.0, %v869
    %v871 = vpop.f32.mrf.mxu0
    %v872 = vadd.f32 0.0, %v871
    %873 = vmatprep.mubr.bf16.mxu0 %v816
    %874 = vmatmul.mubr.bf16.gmra.mxu0 %v659
    %v875 = vpop.f32.mrf.mxu0
    %v876 = vadd.f32 0.0, %v875
    %v877 = vpop.f32.mrf.mxu0
    %v878 = vadd.f32 0.0, %v877
    %v879 = vpop.f32.mrf.mxu0
    %v880 = vadd.f32 0.0, %v879
    %v881 = vpop.f32.mrf.mxu0
    %v882 = vadd.f32 0.0, %v881
    %883 = vmatprep.mubr.bf16.mxu0 %v819
    %884 = vmatmul.mubr.bf16.gmra.mxu0 %v661
    %v885 = vpop.f32.mrf.mxu0
    %v886 = vadd.f32 0.0, %v885
    %v887 = vpop.f32.mrf.mxu0
    %v888 = vadd.f32 0.0, %v887
    %v889 = vpop.f32.mrf.mxu0
    %v890 = vadd.f32 0.0, %v889
    %v891 = vpop.f32.mrf.mxu0
    %v892 = vadd.f32 0.0, %v891
    %893 = vdwg.mxu0
    %v918 = vunpack.c.l.b16 %v525
    %v919 = vunpack.c.h.b16 %v525
    %v920 = vunpack.c.l.b16 %v526
    %v921 = vunpack.c.h.b16 %v526
    %v922 = vunpack.c.l.b16 %v527
    %v923 = vunpack.c.h.b16 %v527
    %v924 = vunpack.c.l.b16 %v528
    %v925 = vunpack.c.h.b16 %v528
    %v926 = vunpack.c.l.b16 %v529
    %v927 = vunpack.c.h.b16 %v529
    %v928 = vunpack.c.l.b16 %v530
    %v929 = vunpack.c.h.b16 %v530
    %v930 = vunpack.c.l.b16 %v531
    %v931 = vunpack.c.h.b16 %v531
    %v932 = vunpack.c.l.b16 %v532
    %v933 = vunpack.c.h.b16 %v532
    %v934 = vunpack.c.l.b16 %v533
    %v935 = vunpack.c.h.b16 %v533
    %v936 = vunpack.c.l.b16 %v534
    %v937 = vunpack.c.h.b16 %v534
    %v938 = vunpack.c.l.b16 %v535
    %v939 = vunpack.c.h.b16 %v535
    %v940 = vunpack.c.l.b16 %v536
    %v941 = vunpack.c.h.b16 %v536
    %v942 = vunpack.c.l.b16 %v537
    %v943 = vunpack.c.h.b16 %v537
    %v944 = vunpack.c.l.b16 %v538
    %v945 = vunpack.c.h.b16 %v538
    %v946 = vunpack.c.l.b16 %v539
    %v947 = vunpack.c.h.b16 %v539
    %v948 = vunpack.c.l.b16 %v540
    %v949 = vunpack.c.h.b16 %v540
    %v950 = vunpack.c.l.b16 %v541
    %v951 = vunpack.c.h.b16 %v541
    %v952 = vunpack.c.l.b16 %v542
    %v953 = vunpack.c.h.b16 %v542
    %v954 = vunpack.c.l.b16 %v543
    %v955 = vunpack.c.h.b16 %v543
    %v956 = vunpack.c.l.b16 %v544
    %v957 = vunpack.c.h.b16 %v544
    %v958 = vunpack.c.l.b16 %v545
    %v959 = vunpack.c.h.b16 %v545
    %v960 = vunpack.c.l.b16 %v546
    %v961 = vunpack.c.h.b16 %v546
    %v962 = vunpack.c.l.b16 %v547
    %v963 = vunpack.c.h.b16 %v547
    %v964 = vunpack.c.l.b16 %v548
    %v965 = vunpack.c.h.b16 %v548
    %v966 = vpack.c.b16 %v920, %v918
    %v967 = vpack.c.b16 %v921, %v919
    %v968 = vpack.c.b16 %v924, %v922
    %v969 = vpack.c.b16 %v925, %v923
    %v970 = vpack.c.b16 %v928, %v926
    %v971 = vpack.c.b16 %v929, %v927
    %v972 = vpack.c.b16 %v932, %v930
    %v973 = vpack.c.b16 %v933, %v931
    %v974 = vpack.c.b16 %v936, %v934
    %v975 = vpack.c.b16 %v937, %v935
    %v976 = vpack.c.b16 %v940, %v938
    %v977 = vpack.c.b16 %v941, %v939
    %v978 = vpack.c.b16 %v944, %v942
    %v979 = vpack.c.b16 %v945, %v943
    %v980 = vpack.c.b16 %v948, %v946
    %v981 = vpack.c.b16 %v949, %v947
    %v982 = vpack.c.b16 %v952, %v950
    %v983 = vpack.c.b16 %v953, %v951
    %v984 = vpack.c.b16 %v956, %v954
    %v985 = vpack.c.b16 %v957, %v955
    %v986 = vpack.c.b16 %v960, %v958
    %v987 = vpack.c.b16 %v961, %v959
    %v988 = vpack.c.b16 %v964, %v962
    %v989 = vpack.c.b16 %v965, %v963
    %v1015 = vsel %vm808, %v518, 0
    %v1018 = vsel %vm808, %v520, 0
    %v1021 = vsel %vm808, %v522, 0
    %v1024 = vsel %vm808, %v524, 0
    %1026 = vmatprep.subr.bf16.mxu0 %v981
    %1027 = vmatpush1.bf16.msra.mxu0 %v980
    %1028 = vmatprep.subr.bf16.mxu0 %v979
    %1029 = vmatpush1.bf16.msra.mxu0 %v978
    %1030 = vmatprep.subr.bf16.mxu0 %v977
    %1031 = vmatpush1.bf16.msra.mxu0 %v976
    %1032 = vmatprep.subr.bf16.mxu0 %v975
    %1033 = vmatpush1.bf16.msra.mxu0 %v974
    %1034 = vmatprep.subr.bf16.mxu0 %v973
    %1035 = vmatpush1.bf16.msra.mxu0 %v972
    %1036 = vmatprep.subr.bf16.mxu0 %v971
    %1037 = vmatpush1.bf16.msra.mxu0 %v970
    %1038 = vmatprep.subr.bf16.mxu0 %v969
    %1039 = vmatpush1.bf16.msra.mxu0 %v968
    %1040 = vmatprep.subr.bf16.mxu0 %v967
    %1041 = vmatpush1.bf16.msra.mxu0 %v966
    %1042 = vmatprep.subr.bf16.mxu0 0
    %1043 = vmatpush2.bf16.msra.mxu0 0
    %1044 = vmatprep.subr.bf16.mxu0 0
    %1045 = vmatpush2.bf16.msra.mxu0 0
    %1046 = vmatprep.subr.bf16.mxu0 0
    %1047 = vmatpush2.bf16.msra.mxu0 0
    %1048 = vmatprep.subr.bf16.mxu0 0
    %1049 = vmatpush2.bf16.msra.mxu0 0
    %1050 = vmatprep.subr.bf16.mxu0 %v989
    %1051 = vmatpush2.bf16.msra.mxu0 %v988
    %1052 = vmatprep.subr.bf16.mxu0 %v987
    %1053 = vmatpush2.bf16.msra.mxu0 %v986
    %1054 = vmatprep.subr.bf16.mxu0 %v985
    %1055 = vmatpush2.bf16.msra.mxu0 %v984
    %1056 = vmatprep.subr.bf16.mxu0 %v983
    %1057 = vmatpush2.bf16.msra.mxu0 %v982
    %1058 = vmatprep.mubr.bf16.mxu0 %v1015
    %1059 = vmatmul.mubr.bf16.gmra.mxu0 %v517
    %v1060 = vpop.f32.mrf.mxu0
    %v1061 = vadd.f32 %v856, %v1060
    %v1062 = vpop.f32.mrf.mxu0
    %v1063 = vadd.f32 %v858, %v1062
    %v1064 = vpop.f32.mrf.mxu0
    %v1065 = vadd.f32 %v860, %v1064
    %v1066 = vpop.f32.mrf.mxu0
    %v1067 = vadd.f32 %v862, %v1066
    %1068 = vmatprep.mubr.bf16.mxu0 %v1018
    %1069 = vmatmul.mubr.bf16.gmra.mxu0 %v519
    %v1070 = vpop.f32.mrf.mxu0
    %v1071 = vadd.f32 %v866, %v1070
    %v1072 = vpop.f32.mrf.mxu0
    %v1073 = vadd.f32 %v868, %v1072
    %v1074 = vpop.f32.mrf.mxu0
    %v1075 = vadd.f32 %v870, %v1074
    %v1076 = vpop.f32.mrf.mxu0
    %v1077 = vadd.f32 %v872, %v1076
    %1078 = vmatprep.mubr.bf16.mxu0 %v1021
    %1079 = vmatmul.mubr.bf16.gmra.mxu0 %v521
    %v1080 = vpop.f32.mrf.mxu0
    %v1081 = vadd.f32 %v876, %v1080
    %v1082 = vpop.f32.mrf.mxu0
    %v1083 = vadd.f32 %v878, %v1082
    %v1084 = vpop.f32.mrf.mxu0
    %v1085 = vadd.f32 %v880, %v1084
    %v1086 = vpop.f32.mrf.mxu0
    %v1087 = vadd.f32 %v882, %v1086
    %1088 = vmatprep.mubr.bf16.mxu0 %v1024
    %1089 = vmatmul.mubr.bf16.gmra.mxu0 %v523
    %v1090 = vpop.f32.mrf.mxu0
    %v1091 = vadd.f32 %v886, %v1090
    %v1092 = vpop.f32.mrf.mxu0
    %v1093 = vadd.f32 %v888, %v1092
    %v1094 = vpop.f32.mrf.mxu0
    %v1095 = vadd.f32 %v890, %v1094
    %v1096 = vpop.f32.mrf.mxu0
    %v1097 = vadd.f32 %v892, %v1096
    %1098 = vdwg.mxu0
    %s1099 = scalar_lea.vmem [#allocation3], 64
    %v1100 = vld [vmem:[%s1099] sm:$0xf]
    %v1101 = vld [vmem:[%s1099 + $0x4] sm:$0xf]
    %v1102 = vld [vmem:[%s1099 + $0x8] sm:$0xf]
    %v1103 = vld [vmem:[%s1099 + $0xc] sm:$0xf]
    %v1104 = vld [vmem:[%s1099 + $0x10] sm:$0xf]
    %v1105 = vld [vmem:[%s1099 + $0x14] sm:$0xf]
    %v1106 = vld [vmem:[%s1099 + $0x18] sm:$0xf]
    %v1107 = vld [vmem:[%s1099 + $0x1c] sm:$0xf]
    %v1116 = vunpack.c.l.b16 %v1100
    %v1117 = vunpack.c.l.b16 %v1101
    %v1118 = vunpack.c.l.b16 %v1102
    %v1119 = vunpack.c.l.b16 %v1103
    %v1120 = vunpack.c.l.b16 %v1104
    %v1121 = vunpack.c.l.b16 %v1105
    %v1122 = vunpack.c.l.b16 %v1106
    %v1123 = vunpack.c.l.b16 %v1107
    %v1124 = vpack.c.b16 %v1117, %v1116
    %v1125 = vpack.c.b16 %v1119, %v1118
    %v1126 = vpack.c.b16 %v1121, %v1120
    %v1127 = vpack.c.b16 %v1123, %v1122
    %1132 = vmatprep.subr.bf16.mxu0 %v427
    %1133 = vmatpush1.bf16.msra.mxu0 %v426
    %1134 = vmatprep.subr.bf16.mxu0 %v425
    %1135 = vmatpush1.bf16.msra.mxu0 %v424
    %1136 = vmatprep.subr.bf16.mxu0 %v423
    %1137 = vmatpush1.bf16.msra.mxu0 %v422
    %1138 = vmatprep.subr.bf16.mxu0 %v421
    %1139 = vmatpush1.bf16.msra.mxu0 %v420
    %1140 = vmatprep.subr.bf16.mxu0 %v419
    %1141 = vmatpush1.bf16.msra.mxu0 %v418
    %1142 = vmatprep.subr.bf16.mxu0 %v417
    %1143 = vmatpush1.bf16.msra.mxu0 %v416
    %1144 = vmatprep.subr.bf16.mxu0 %v415
    %1145 = vmatpush1.bf16.msra.mxu0 %v414
    %1146 = vmatprep.subr.bf16.mxu0 %v413
    %1147 = vmatpush1.bf16.msra.mxu0 %v412
    %1148 = vmatprep.subr.bf16.mxu0 0
    %1149 = vmatpush2.bf16.msra.mxu0 0
    %1150 = vmatprep.subr.bf16.mxu0 0
    %1151 = vmatpush2.bf16.msra.mxu0 0
    %1152 = vmatprep.subr.bf16.mxu0 0
    %1153 = vmatpush2.bf16.msra.mxu0 0
    %1154 = vmatprep.subr.bf16.mxu0 0
    %1155 = vmatpush2.bf16.msra.mxu0 0
    %1156 = vmatprep.subr.bf16.mxu0 0
    %1157 = vmatpush2.bf16.msra.mxu0 0
    %1158 = vmatprep.subr.bf16.mxu0 0
    %1159 = vmatpush2.bf16.msra.mxu0 0
    %1160 = vmatprep.subr.bf16.mxu0 0
    %1161 = vmatpush2.bf16.msra.mxu0 0
    %1162 = vmatprep.subr.bf16.mxu0 0
    %1163 = vmatpush2.bf16.msra.mxu0 0
    %1164 = vmatprep.mubr.bf16.mxu0 0
    %1165 = vmatmul.mubr.bf16.gmra.mxu0 %v1124
    %v1166 = vpop.f32.mrf.mxu0
    %v1167 = vadd.f32 0.0, %v1166
    %v1168 = vpop.f32.mrf.mxu0
    %v1169 = vadd.f32 0.0, %v1168
    %v1170 = vpop.f32.mrf.mxu0
    %v1171 = vadd.f32 0.0, %v1170
    %v1172 = vpop.f32.mrf.mxu0
    %v1173 = vadd.f32 0.0, %v1172
    %1174 = vmatprep.mubr.bf16.mxu0 0
    %1175 = vmatmul.mubr.bf16.gmra.mxu0 %v1125
    %v1176 = vpop.f32.mrf.mxu0
    %v1177 = vadd.f32 0.0, %v1176
    %v1178 = vpop.f32.mrf.mxu0
    %v1179 = vadd.f32 0.0, %v1178
    %v1180 = vpop.f32.mrf.mxu0
    %v1181 = vadd.f32 0.0, %v1180
    %v1182 = vpop.f32.mrf.mxu0
    %v1183 = vadd.f32 0.0, %v1182
    %1184 = vmatprep.mubr.bf16.mxu0 0
    %1185 = vmatmul.mubr.bf16.gmra.mxu0 %v1126
    %v1186 = vpop.f32.mrf.mxu0
    %v1187 = vadd.f32 0.0, %v1186
    %v1188 = vpop.f32.mrf.mxu0
    %v1189 = vadd.f32 0.0, %v1188
    %v1190 = vpop.f32.mrf.mxu0
    %v1191 = vadd.f32 0.0, %v1190
    %v1192 = vpop.f32.mrf.mxu0
    %v1193 = vadd.f32 0.0, %v1192
    %1194 = vmatprep.mubr.bf16.mxu0 0
    %1195 = vmatmul.mubr.bf16.gmra.mxu0 %v1127
    %v1196 = vpop.f32.mrf.mxu0
    %v1197 = vadd.f32 0.0, %v1196
    %v1198 = vpop.f32.mrf.mxu0
    %v1199 = vadd.f32 0.0, %v1198
    %v1200 = vpop.f32.mrf.mxu0
    %v1201 = vadd.f32 0.0, %v1200
    %v1202 = vpop.f32.mrf.mxu0
    %v1203 = vadd.f32 0.0, %v1202
    %1204 = vdwg.mxu0
    %v1205 = vpack.c.bf16 %v1171, %v1167
    %v1206 = vpack.c.bf16 %v1173, %v1169
    %v1207 = vpack.c.bf16 %v1181, %v1177
    %v1208 = vpack.c.bf16 %v1183, %v1179
    %v1209 = vpack.c.bf16 %v1191, %v1187
    %v1210 = vpack.c.bf16 %v1193, %v1189
    %v1211 = vpack.c.bf16 %v1201, %v1197
    %v1212 = vpack.c.bf16 %v1203, %v1199
    %s1213 = scalar_lea.vmem %s2, 384
    %v1214 = vld [vmem:[%s1213] sm:$0xff]
    %v1215 = vld [vmem:[%s1213 + $0x8] sm:$0xff]
    %v1216 = vld [vmem:[%s1213 + $0x10] sm:$0xff]
    %v1217 = vld [vmem:[%s1213 + $0x18] sm:$0xff]
    %v1218 = vld [vmem:[%s1213 + $0x20] sm:$0xff]
    %v1219 = vld [vmem:[%s1213 + $0x28] sm:$0xff]
    %v1220 = vld [vmem:[%s1213 + $0x30] sm:$0xff]
    %v1221 = vld [vmem:[%s1213 + $0x38] sm:$0xff]
    %v1222 = vld [vmem:[%s1213 + $0x40] sm:$0xff]
    %v1223 = vld [vmem:[%s1213 + $0x48] sm:$0xff]
    %v1224 = vld [vmem:[%s1213 + $0x50] sm:$0xff]
    %v1225 = vld [vmem:[%s1213 + $0x58] sm:$0xff]
    %v1226 = vld [vmem:[%s1213 + $0x60] sm:$0xff]
    %v1227 = vld [vmem:[%s1213 + $0x68] sm:$0xff]
    %v1228 = vld [vmem:[%s1213 + $0x70] sm:$0xff]
    %v1229 = vld [vmem:[%s1213 + $0x78] sm:$0xff]
    %v1230 = vld [vmem:[%s1213 + $0x80] sm:$0xff]
    %v1231 = vld [vmem:[%s1213 + $0x88] sm:$0xff]
    %v1232 = vld [vmem:[%s1213 + $0x90] sm:$0xff]
    %v1233 = vld [vmem:[%s1213 + $0x98] sm:$0xff]
    %v1234 = vld [vmem:[%s1213 + $0xa0] sm:$0xff]
    %v1235 = vld [vmem:[%s1213 + $0xa8] sm:$0xff]
    %v1236 = vld [vmem:[%s1213 + $0xb0] sm:$0xff]
    %v1237 = vld [vmem:[%s1213 + $0xb8] sm:$0xff]
    %v1262 = vunpack.c.l.b16 %v1214
    %v1263 = vunpack.c.h.b16 %v1214
    %v1264 = vunpack.c.l.b16 %v1215
    %v1265 = vunpack.c.h.b16 %v1215
    %v1266 = vunpack.c.l.b16 %v1216
    %v1267 = vunpack.c.h.b16 %v1216
    %v1268 = vunpack.c.l.b16 %v1217
    %v1269 = vunpack.c.h.b16 %v1217
    %v1270 = vunpack.c.l.b16 %v1218
    %v1271 = vunpack.c.h.b16 %v1218
    %v1272 = vunpack.c.l.b16 %v1219
    %v1273 = vunpack.c.h.b16 %v1219
    %v1274 = vunpack.c.l.b16 %v1220
    %v1275 = vunpack.c.h.b16 %v1220
    %v1276 = vunpack.c.l.b16 %v1221
    %v1277 = vunpack.c.h.b16 %v1221
    %v1278 = vunpack.c.l.b16 %v1222
    %v1279 = vunpack.c.h.b16 %v1222
    %v1280 = vunpack.c.l.b16 %v1223
    %v1281 = vunpack.c.h.b16 %v1223
    %v1282 = vunpack.c.l.b16 %v1224
    %v1283 = vunpack.c.h.b16 %v1224
    %v1284 = vunpack.c.l.b16 %v1225
    %v1285 = vunpack.c.h.b16 %v1225
    %v1286 = vunpack.c.l.b16 %v1226
    %v1287 = vunpack.c.h.b16 %v1226
    %v1288 = vunpack.c.l.b16 %v1227
    %v1289 = vunpack.c.h.b16 %v1227
    %v1290 = vunpack.c.l.b16 %v1228
    %v1291 = vunpack.c.h.b16 %v1228
    %v1292 = vunpack.c.l.b16 %v1229
    %v1293 = vunpack.c.h.b16 %v1229
    %v1294 = vunpack.c.l.b16 %v1230
    %v1295 = vunpack.c.h.b16 %v1230
    %v1296 = vunpack.c.l.b16 %v1231
    %v1297 = vunpack.c.h.b16 %v1231
    %v1298 = vunpack.c.l.b16 %v1232
    %v1299 = vunpack.c.h.b16 %v1232
    %v1300 = vunpack.c.l.b16 %v1233
    %v1301 = vunpack.c.h.b16 %v1233
    %v1302 = vunpack.c.l.b16 %v1234
    %v1303 = vunpack.c.h.b16 %v1234
    %v1304 = vunpack.c.l.b16 %v1235
    %v1305 = vunpack.c.h.b16 %v1235
    %v1306 = vunpack.c.l.b16 %v1236
    %v1307 = vunpack.c.h.b16 %v1236
    %v1308 = vunpack.c.l.b16 %v1237
    %v1309 = vunpack.c.h.b16 %v1237
    %v1310 = vpack.c.b16 %v1264, %v1262
    %v1311 = vpack.c.b16 %v1265, %v1263
    %v1312 = vpack.c.b16 %v1268, %v1266
    %v1313 = vpack.c.b16 %v1269, %v1267
    %v1314 = vpack.c.b16 %v1272, %v1270
    %v1315 = vpack.c.b16 %v1273, %v1271
    %v1316 = vpack.c.b16 %v1276, %v1274
    %v1317 = vpack.c.b16 %v1277, %v1275
    %v1318 = vpack.c.b16 %v1280, %v1278
    %v1319 = vpack.c.b16 %v1281, %v1279
    %v1320 = vpack.c.b16 %v1284, %v1282
    %v1321 = vpack.c.b16 %v1285, %v1283
    %v1322 = vpack.c.b16 %v1288, %v1286
    %v1323 = vpack.c.b16 %v1289, %v1287
    %v1324 = vpack.c.b16 %v1292, %v1290
    %v1325 = vpack.c.b16 %v1293, %v1291
    %v1326 = vpack.c.b16 %v1296, %v1294
    %v1327 = vpack.c.b16 %v1297, %v1295
    %v1328 = vpack.c.b16 %v1300, %v1298
    %v1329 = vpack.c.b16 %v1301, %v1299
    %v1330 = vpack.c.b16 %v1304, %v1302
    %v1331 = vpack.c.b16 %v1305, %v1303
    %v1332 = vpack.c.b16 %v1308, %v1306
    %v1333 = vpack.c.b16 %v1309, %v1307
    %v1359 = vsel %vm808, %v1206, 0
    %v1362 = vsel %vm808, %v1208, 0
    %v1365 = vsel %vm808, %v1210, 0
    %v1368 = vsel %vm808, %v1212, 0
    %1370 = vmatprep.subr.bf16.mxu0 %v1325
    %1371 = vmatpush1.bf16.msra.mxu0 %v1324
    %1372 = vmatprep.subr.bf16.mxu0 %v1323
    %1373 = vmatpush1.bf16.msra.mxu0 %v1322
    %1374 = vmatprep.subr.bf16.mxu0 %v1321
    %1375 = vmatpush1.bf16.msra.mxu0 %v1320
    %1376 = vmatprep.subr.bf16.mxu0 %v1319
    %1377 = vmatpush1.bf16.msra.mxu0 %v1318
    %1378 = vmatprep.subr.bf16.mxu0 %v1317
    %1379 = vmatpush1.bf16.msra.mxu0 %v1316
    %1380 = vmatprep.subr.bf16.mxu0 %v1315
    %1381 = vmatpush1.bf16.msra.mxu0 %v1314
    %1382 = vmatprep.subr.bf16.mxu0 %v1313
    %1383 = vmatpush1.bf16.msra.mxu0 %v1312
    %1384 = vmatprep.subr.bf16.mxu0 %v1311
    %1385 = vmatpush1.bf16.msra.mxu0 %v1310
    %1386 = vmatprep.subr.bf16.mxu0 0
    %1387 = vmatpush2.bf16.msra.mxu0 0
    %1388 = vmatprep.subr.bf16.mxu0 0
    %1389 = vmatpush2.bf16.msra.mxu0 0
    %1390 = vmatprep.subr.bf16.mxu0 0
    %1391 = vmatpush2.bf16.msra.mxu0 0
    %1392 = vmatprep.subr.bf16.mxu0 0
    %1393 = vmatpush2.bf16.msra.mxu0 0
    %1394 = vmatprep.subr.bf16.mxu0 %v1333
    %1395 = vmatpush2.bf16.msra.mxu0 %v1332
    %1396 = vmatprep.subr.bf16.mxu0 %v1331
    %1397 = vmatpush2.bf16.msra.mxu0 %v1330
    %1398 = vmatprep.subr.bf16.mxu0 %v1329
    %1399 = vmatpush2.bf16.msra.mxu0 %v1328
    %1400 = vmatprep.subr.bf16.mxu0 %v1327
    %1401 = vmatpush2.bf16.msra.mxu0 %v1326
    %1402 = vmatprep.mubr.bf16.mxu0 %v1359
    %1403 = vmatmul.mubr.bf16.gmra.mxu0 %v1205
    %v1404 = vpop.f32.mrf.mxu0
    %v1405 = vadd.f32 0.0, %v1404
    %v1406 = vpop.f32.mrf.mxu0
    %v1407 = vadd.f32 0.0, %v1406
    %v1408 = vpop.f32.mrf.mxu0
    %v1409 = vadd.f32 0.0, %v1408
    %v1410 = vpop.f32.mrf.mxu0
    %v1411 = vadd.f32 0.0, %v1410
    %1412 = vmatprep.mubr.bf16.mxu0 %v1362
    %1413 = vmatmul.mubr.bf16.gmra.mxu0 %v1207
    %v1414 = vpop.f32.mrf.mxu0
    %v1415 = vadd.f32 0.0, %v1414
    %v1416 = vpop.f32.mrf.mxu0
    %v1417 = vadd.f32 0.0, %v1416
    %v1418 = vpop.f32.mrf.mxu0
    %v1419 = vadd.f32 0.0, %v1418
    %v1420 = vpop.f32.mrf.mxu0
    %v1421 = vadd.f32 0.0, %v1420
    %1422 = vmatprep.mubr.bf16.mxu0 %v1365
    %1423 = vmatmul.mubr.bf16.gmra.mxu0 %v1209
    %v1424 = vpop.f32.mrf.mxu0
    %v1425 = vadd.f32 0.0, %v1424
    %v1426 = vpop.f32.mrf.mxu0
    %v1427 = vadd.f32 0.0, %v1426
    %v1428 = vpop.f32.mrf.mxu0
    %v1429 = vadd.f32 0.0, %v1428
    %v1430 = vpop.f32.mrf.mxu0
    %v1431 = vadd.f32 0.0, %v1430
    %1432 = vmatprep.mubr.bf16.mxu0 %v1368
    %1433 = vmatmul.mubr.bf16.gmra.mxu0 %v1211
    %v1434 = vpop.f32.mrf.mxu0
    %v1435 = vadd.f32 0.0, %v1434
    %v1436 = vpop.f32.mrf.mxu0
    %v1437 = vadd.f32 0.0, %v1436
    %v1438 = vpop.f32.mrf.mxu0
    %v1439 = vadd.f32 0.0, %v1438
    %v1440 = vpop.f32.mrf.mxu0
    %v1441 = vadd.f32 0.0, %v1440
    %1442 = vdwg.mxu0
    %v1443 = vadd.f32 %v1061, %v1405
    %v1444 = vadd.f32 %v1063, %v1407
    %v1445 = vadd.f32 %v1065, %v1409
    %v1446 = vadd.f32 %v1067, %v1411
    %v1447 = vadd.f32 %v1071, %v1415
    %v1448 = vadd.f32 %v1073, %v1417
    %v1449 = vadd.f32 %v1075, %v1419
    %v1450 = vadd.f32 %v1077, %v1421
    %v1451 = vadd.f32 %v1081, %v1425
    %v1452 = vadd.f32 %v1083, %v1427
    %v1453 = vadd.f32 %v1085, %v1429
    %v1454 = vadd.f32 %v1087, %v1431
    %v1455 = vadd.f32 %v1091, %v1435
    %v1456 = vadd.f32 %v1093, %v1437
    %v1457 = vadd.f32 %v1095, %v1439
    %v1458 = vadd.f32 %v1097, %v1441
    %s1459 = scalar_lea.vmem [#allocation3], 96
    %v1460 = vld [vmem:[%s1459] sm:$0xf]
    %v1461 = vld [vmem:[%s1459 + $0x4] sm:$0xf]
    %v1462 = vld [vmem:[%s1459 + $0x8] sm:$0xf]
    %v1463 = vld [vmem:[%s1459 + $0xc] sm:$0xf]
    %v1464 = vld [vmem:[%s1459 + $0x10] sm:$0xf]
    %v1465 = vld [vmem:[%s1459 + $0x14] sm:$0xf]
    %v1466 = vld [vmem:[%s1459 + $0x18] sm:$0xf]
    %v1467 = vld [vmem:[%s1459 + $0x1c] sm:$0xf]
    %v1476 = vunpack.c.l.b16 %v1460
    %v1477 = vunpack.c.l.b16 %v1461
    %v1478 = vunpack.c.l.b16 %v1462
    %v1479 = vunpack.c.l.b16 %v1463
    %v1480 = vunpack.c.l.b16 %v1464
    %v1481 = vunpack.c.l.b16 %v1465
    %v1482 = vunpack.c.l.b16 %v1466
    %v1483 = vunpack.c.l.b16 %v1467
    %v1484 = vpack.c.b16 %v1477, %v1476
    %v1485 = vpack.c.b16 %v1479, %v1478
    %v1486 = vpack.c.b16 %v1481, %v1480
    %v1487 = vpack.c.b16 %v1483, %v1482
    %1492 = vmatprep.subr.bf16.mxu0 %v427
    %1493 = vmatpush1.bf16.msra.mxu0 %v426
    %1494 = vmatprep.subr.bf16.mxu0 %v425
    %1495 = vmatpush1.bf16.msra.mxu0 %v424
    %1496 = vmatprep.subr.bf16.mxu0 %v423
    %1497 = vmatpush1.bf16.msra.mxu0 %v422
    %1498 = vmatprep.subr.bf16.mxu0 %v421
    %1499 = vmatpush1.bf16.msra.mxu0 %v420
    %1500 = vmatprep.subr.bf16.mxu0 %v419
    %1501 = vmatpush1.bf16.msra.mxu0 %v418
    %1502 = vmatprep.subr.bf16.mxu0 %v417
    %1503 = vmatpush1.bf16.msra.mxu0 %v416
    %1504 = vmatprep.subr.bf16.mxu0 %v415
    %1505 = vmatpush1.bf16.msra.mxu0 %v414
    %1506 = vmatprep.subr.bf16.mxu0 %v413
    %1507 = vmatpush1.bf16.msra.mxu0 %v412
    %1508 = vmatprep.subr.bf16.mxu0 0
    %1509 = vmatpush2.bf16.msra.mxu0 0
    %1510 = vmatprep.subr.bf16.mxu0 0
    %1511 = vmatpush2.bf16.msra.mxu0 0
    %1512 = vmatprep.subr.bf16.mxu0 0
    %1513 = vmatpush2.bf16.msra.mxu0 0
    %1514 = vmatprep.subr.bf16.mxu0 0
    %1515 = vmatpush2.bf16.msra.mxu0 0
    %1516 = vmatprep.subr.bf16.mxu0 0
    %1517 = vmatpush2.bf16.msra.mxu0 0
    %1518 = vmatprep.subr.bf16.mxu0 0
    %1519 = vmatpush2.bf16.msra.mxu0 0
    %1520 = vmatprep.subr.bf16.mxu0 0
    %1521 = vmatpush2.bf16.msra.mxu0 0
    %1522 = vmatprep.subr.bf16.mxu0 0
    %1523 = vmatpush2.bf16.msra.mxu0 0
    %1524 = vmatprep.mubr.bf16.mxu0 0
    %1525 = vmatmul.mubr.bf16.gmra.mxu0 %v1484
    %v1526 = vpop.f32.mrf.mxu0
    %v1527 = vadd.f32 0.0, %v1526
    %v1528 = vpop.f32.mrf.mxu0
    %v1529 = vadd.f32 0.0, %v1528
    %v1530 = vpop.f32.mrf.mxu0
    %v1531 = vadd.f32 0.0, %v1530
    %v1532 = vpop.f32.mrf.mxu0
    %v1533 = vadd.f32 0.0, %v1532
    %1534 = vmatprep.mubr.bf16.mxu0 0
    %1535 = vmatmul.mubr.bf16.gmra.mxu0 %v1485
    %v1536 = vpop.f32.mrf.mxu0
    %v1537 = vadd.f32 0.0, %v1536
    %v1538 = vpop.f32.mrf.mxu0
    %v1539 = vadd.f32 0.0, %v1538
    %v1540 = vpop.f32.mrf.mxu0
    %v1541 = vadd.f32 0.0, %v1540
    %v1542 = vpop.f32.mrf.mxu0
    %v1543 = vadd.f32 0.0, %v1542
    %1544 = vmatprep.mubr.bf16.mxu0 0
    %1545 = vmatmul.mubr.bf16.gmra.mxu0 %v1486
    %v1546 = vpop.f32.mrf.mxu0
    %v1547 = vadd.f32 0.0, %v1546
    %v1548 = vpop.f32.mrf.mxu0
    %v1549 = vadd.f32 0.0, %v1548
    %v1550 = vpop.f32.mrf.mxu0
    %v1551 = vadd.f32 0.0, %v1550
    %v1552 = vpop.f32.mrf.mxu0
    %v1553 = vadd.f32 0.0, %v1552
    %1554 = vmatprep.mubr.bf16.mxu0 0
    %1555 = vmatmul.mubr.bf16.gmra.mxu0 %v1487
    %v1556 = vpop.f32.mrf.mxu0
    %v1557 = vadd.f32 0.0, %v1556
    %v1558 = vpop.f32.mrf.mxu0
    %v1559 = vadd.f32 0.0, %v1558
    %v1560 = vpop.f32.mrf.mxu0
    %v1561 = vadd.f32 0.0, %v1560
    %v1562 = vpop.f32.mrf.mxu0
    %v1563 = vadd.f32 0.0, %v1562
    %1564 = vdwg.mxu0
    %v1565 = vpack.c.bf16 %v1531, %v1527
    %v1566 = vpack.c.bf16 %v1533, %v1529
    %v1567 = vpack.c.bf16 %v1541, %v1537
    %v1568 = vpack.c.bf16 %v1543, %v1539
    %v1569 = vpack.c.bf16 %v1551, %v1547
    %v1570 = vpack.c.bf16 %v1553, %v1549
    %v1571 = vpack.c.bf16 %v1561, %v1557
    %v1572 = vpack.c.bf16 %v1563, %v1559
    %s1573 = scalar_lea.vmem %s2, 576
    %v1574 = vld [vmem:[%s1573] sm:$0xff]
    %v1575 = vld [vmem:[%s1573 + $0x8] sm:$0xff]
    %v1576 = vld [vmem:[%s1573 + $0x10] sm:$0xff]
    %v1577 = vld [vmem:[%s1573 + $0x18] sm:$0xff]
    %v1578 = vld [vmem:[%s1573 + $0x20] sm:$0xff]
    %v1579 = vld [vmem:[%s1573 + $0x28] sm:$0xff]
    %v1580 = vld [vmem:[%s1573 + $0x30] sm:$0xff]
    %v1581 = vld [vmem:[%s1573 + $0x38] sm:$0xff]
    %v1582 = vld [vmem:[%s1573 + $0x40] sm:$0xff]
    %v1583 = vld [vmem:[%s1573 + $0x48] sm:$0xff]
    %v1584 = vld [vmem:[%s1573 + $0x50] sm:$0xff]
    %v1585 = vld [vmem:[%s1573 + $0x58] sm:$0xff]
    %v1586 = vld [vmem:[%s1573 + $0x60] sm:$0xff]
    %v1587 = vld [vmem:[%s1573 + $0x68] sm:$0xff]
    %v1588 = vld [vmem:[%s1573 + $0x70] sm:$0xff]
    %v1589 = vld [vmem:[%s1573 + $0x78] sm:$0xff]
    %v1590 = vld [vmem:[%s1573 + $0x80] sm:$0xff]
    %v1591 = vld [vmem:[%s1573 + $0x88] sm:$0xff]
    %v1592 = vld [vmem:[%s1573 + $0x90] sm:$0xff]
    %v1593 = vld [vmem:[%s1573 + $0x98] sm:$0xff]
    %v1594 = vld [vmem:[%s1573 + $0xa0] sm:$0xff]
    %v1595 = vld [vmem:[%s1573 + $0xa8] sm:$0xff]
    %v1596 = vld [vmem:[%s1573 + $0xb0] sm:$0xff]
    %v1597 = vld [vmem:[%s1573 + $0xb8] sm:$0xff]
    %v1622 = vunpack.c.l.b16 %v1574
    %v1623 = vunpack.c.h.b16 %v1574
    %v1624 = vunpack.c.l.b16 %v1575
    %v1625 = vunpack.c.h.b16 %v1575
    %v1626 = vunpack.c.l.b16 %v1576
    %v1627 = vunpack.c.h.b16 %v1576
    %v1628 = vunpack.c.l.b16 %v1577
    %v1629 = vunpack.c.h.b16 %v1577
    %v1630 = vunpack.c.l.b16 %v1578
    %v1631 = vunpack.c.h.b16 %v1578
    %v1632 = vunpack.c.l.b16 %v1579
    %v1633 = vunpack.c.h.b16 %v1579
    %v1634 = vunpack.c.l.b16 %v1580
    %v1635 = vunpack.c.h.b16 %v1580
    %v1636 = vunpack.c.l.b16 %v1581
    %v1637 = vunpack.c.h.b16 %v1581
    %v1638 = vunpack.c.l.b16 %v1582
    %v1639 = vunpack.c.h.b16 %v1582
    %v1640 = vunpack.c.l.b16 %v1583
    %v1641 = vunpack.c.h.b16 %v1583
    %v1642 = vunpack.c.l.b16 %v1584
    %v1643 = vunpack.c.h.b16 %v1584
    %v1644 = vunpack.c.l.b16 %v1585
    %v1645 = vunpack.c.h.b16 %v1585
    %v1646 = vunpack.c.l.b16 %v1586
    %v1647 = vunpack.c.h.b16 %v1586
    %v1648 = vunpack.c.l.b16 %v1587
    %v1649 = vunpack.c.h.b16 %v1587
    %v1650 = vunpack.c.l.b16 %v1588
    %v1651 = vunpack.c.h.b16 %v1588
    %v1652 = vunpack.c.l.b16 %v1589
    %v1653 = vunpack.c.h.b16 %v1589
    %v1654 = vunpack.c.l.b16 %v1590
    %v1655 = vunpack.c.h.b16 %v1590
    %v1656 = vunpack.c.l.b16 %v1591
    %v1657 = vunpack.c.h.b16 %v1591
    %v1658 = vunpack.c.l.b16 %v1592
    %v1659 = vunpack.c.h.b16 %v1592
    %v1660 = vunpack.c.l.b16 %v1593
    %v1661 = vunpack.c.h.b16 %v1593
    %v1662 = vunpack.c.l.b16 %v1594
    %v1663 = vunpack.c.h.b16 %v1594
    %v1664 = vunpack.c.l.b16 %v1595
    %v1665 = vunpack.c.h.b16 %v1595
    %v1666 = vunpack.c.l.b16 %v1596
    %v1667 = vunpack.c.h.b16 %v1596
    %v1668 = vunpack.c.l.b16 %v1597
    %v1669 = vunpack.c.h.b16 %v1597
    %v1670 = vpack.c.b16 %v1624, %v1622
    %v1671 = vpack.c.b16 %v1625, %v1623
    %v1672 = vpack.c.b16 %v1628, %v1626
    %v1673 = vpack.c.b16 %v1629, %v1627
    %v1674 = vpack.c.b16 %v1632, %v1630
    %v1675 = vpack.c.b16 %v1633, %v1631
    %v1676 = vpack.c.b16 %v1636, %v1634
    %v1677 = vpack.c.b16 %v1637, %v1635
    %v1678 = vpack.c.b16 %v1640, %v1638
    %v1679 = vpack.c.b16 %v1641, %v1639
    %v1680 = vpack.c.b16 %v1644, %v1642
    %v1681 = vpack.c.b16 %v1645, %v1643
    %v1682 = vpack.c.b16 %v1648, %v1646
    %v1683 = vpack.c.b16 %v1649, %v1647
    %v1684 = vpack.c.b16 %v1652, %v1650
    %v1685 = vpack.c.b16 %v1653, %v1651
    %v1686 = vpack.c.b16 %v1656, %v1654
    %v1687 = vpack.c.b16 %v1657, %v1655
    %v1688 = vpack.c.b16 %v1660, %v1658
    %v1689 = vpack.c.b16 %v1661, %v1659
    %v1690 = vpack.c.b16 %v1664, %v1662
    %v1691 = vpack.c.b16 %v1665, %v1663
    %v1692 = vpack.c.b16 %v1668, %v1666
    %v1693 = vpack.c.b16 %v1669, %v1667
    %v1719 = vsel %vm808, %v1566, 0
    %v1722 = vsel %vm808, %v1568, 0
    %v1725 = vsel %vm808, %v1570, 0
    %v1728 = vsel %vm808, %v1572, 0
    %1730 = vmatprep.subr.bf16.mxu0 %v1685
    %1731 = vmatpush1.bf16.msra.mxu0 %v1684
    %1732 = vmatprep.subr.bf16.mxu0 %v1683
    %1733 = vmatpush1.bf16.msra.mxu0 %v1682
    %1734 = vmatprep.subr.bf16.mxu0 %v1681
    %1735 = vmatpush1.bf16.msra.mxu0 %v1680
    %1736 = vmatprep.subr.bf16.mxu0 %v1679
    %1737 = vmatpush1.bf16.msra.mxu0 %v1678
    %1738 = vmatprep.subr.bf16.mxu0 %v1677
    %1739 = vmatpush1.bf16.msra.mxu0 %v1676
    %1740 = vmatprep.subr.bf16.mxu0 %v1675
    %1741 = vmatpush1.bf16.msra.mxu0 %v1674
    %1742 = vmatprep.subr.bf16.mxu0 %v1673
    %1743 = vmatpush1.bf16.msra.mxu0 %v1672
    %1744 = vmatprep.subr.bf16.mxu0 %v1671
    %1745 = vmatpush1.bf16.msra.mxu0 %v1670
    %1746 = vmatprep.subr.bf16.mxu0 0
    %1747 = vmatpush2.bf16.msra.mxu0 0
    %1748 = vmatprep.subr.bf16.mxu0 0
    %1749 = vmatpush2.bf16.msra.mxu0 0
    %1750 = vmatprep.subr.bf16.mxu0 0
    %1751 = vmatpush2.bf16.msra.mxu0 0
    %1752 = vmatprep.subr.bf16.mxu0 0
    %1753 = vmatpush2.bf16.msra.mxu0 0
    %1754 = vmatprep.subr.bf16.mxu0 %v1693
    %1755 = vmatpush2.bf16.msra.mxu0 %v1692
    %1756 = vmatprep.subr.bf16.mxu0 %v1691
    %1757 = vmatpush2.bf16.msra.mxu0 %v1690
    %1758 = vmatprep.subr.bf16.mxu0 %v1689
    %1759 = vmatpush2.bf16.msra.mxu0 %v1688
    %1760 = vmatprep.subr.bf16.mxu0 %v1687
    %1761 = vmatpush2.bf16.msra.mxu0 %v1686
    %1762 = vmatprep.mubr.bf16.mxu0 %v1719
    %1763 = vmatmul.mubr.bf16.gmra.mxu0 %v1565
    %v1764 = vpop.f32.mrf.mxu0
    %v1765 = vadd.f32 0.0, %v1764
    %v1766 = vpop.f32.mrf.mxu0
    %v1767 = vadd.f32 0.0, %v1766
    %v1768 = vpop.f32.mrf.mxu0
    %v1769 = vadd.f32 0.0, %v1768
    %v1770 = vpop.f32.mrf.mxu0
    %v1771 = vadd.f32 0.0, %v1770
    %1772 = vmatprep.mubr.bf16.mxu0 %v1722
    %1773 = vmatmul.mubr.bf16.gmra.mxu0 %v1567
    %v1774 = vpop.f32.mrf.mxu0
    %v1775 = vadd.f32 0.0, %v1774
    %v1776 = vpop.f32.mrf.mxu0
    %v1777 = vadd.f32 0.0, %v1776
    %v1778 = vpop.f32.mrf.mxu0
    %v1779 = vadd.f32 0.0, %v1778
    %v1780 = vpop.f32.mrf.mxu0
    %v1781 = vadd.f32 0.0, %v1780
    %1782 = vmatprep.mubr.bf16.mxu0 %v1725
    %1783 = vmatmul.mubr.bf16.gmra.mxu0 %v1569
    %v1784 = vpop.f32.mrf.mxu0
    %v1785 = vadd.f32 0.0, %v1784
    %v1786 = vpop.f32.mrf.mxu0
    %v1787 = vadd.f32 0.0, %v1786
    %v1788 = vpop.f32.mrf.mxu0
    %v1789 = vadd.f32 0.0, %v1788
    %v1790 = vpop.f32.mrf.mxu0
    %v1791 = vadd.f32 0.0, %v1790
    %1792 = vmatprep.mubr.bf16.mxu0 %v1728
    %1793 = vmatmul.mubr.bf16.gmra.mxu0 %v1571
    %v1794 = vpop.f32.mrf.mxu0
    %v1795 = vadd.f32 0.0, %v1794
    %v1796 = vpop.f32.mrf.mxu0
    %v1797 = vadd.f32 0.0, %v1796
    %v1798 = vpop.f32.mrf.mxu0
    %v1799 = vadd.f32 0.0, %v1798
    %v1800 = vpop.f32.mrf.mxu0
    %v1801 = vadd.f32 0.0, %v1800
    %1802 = vdwg.mxu0
    %v1803 = vadd.f32 %v1443, %v1765
    %v1804 = vadd.f32 %v1444, %v1767
    %v1805 = vadd.f32 %v1445, %v1769
    %v1806 = vadd.f32 %v1446, %v1771
    %v1807 = vadd.f32 %v1447, %v1775
    %v1808 = vadd.f32 %v1448, %v1777
    %v1809 = vadd.f32 %v1449, %v1779
    %v1810 = vadd.f32 %v1450, %v1781
    %v1811 = vadd.f32 %v1451, %v1785
    %v1812 = vadd.f32 %v1452, %v1787
    %v1813 = vadd.f32 %v1453, %v1789
    %v1814 = vadd.f32 %v1454, %v1791
    %v1815 = vadd.f32 %v1455, %v1795
    %v1816 = vadd.f32 %v1456, %v1797
    %v1817 = vadd.f32 %v1457, %v1799
    %v1818 = vadd.f32 %v1458, %v1801
    %v1819 = vld [vmem:[#allocation5] sm:$0x3]
    %v1821 = vlaneseq
    %v1822 = vshrl.u32 %v1821, 7
    %v1823 = vsub.s32 0, %v1822
    %v1824 = vrot.slane %v1819, %v1823
    %v1825 = vlaneseq
    %v1826 = vshrl.u32 %v1825, 7
    %v1827 = vsub.s32 1, %v1826
    %v1828 = vrot.slane %v1819, %v1827
    %v1831 = vadd.f32 %v1803, %v1824
    %v1832 = vadd.f32 %v1804, %v1828
    %v1833 = vadd.f32 %v1805, %v1824
    %v1834 = vadd.f32 %v1806, %v1828
    %v1835 = vadd.f32 %v1807, %v1824
    %v1836 = vadd.f32 %v1808, %v1828
    %v1837 = vadd.f32 %v1809, %v1824
    %v1838 = vadd.f32 %v1810, %v1828
    %v1839 = vadd.f32 %v1811, %v1824
    %v1840 = vadd.f32 %v1812, %v1828
    %v1841 = vadd.f32 %v1813, %v1824
    %v1842 = vadd.f32 %v1814, %v1828
    %v1843 = vadd.f32 %v1815, %v1824
    %v1844 = vadd.f32 %v1816, %v1828
    %v1845 = vadd.f32 %v1817, %v1824
    %v1846 = vadd.f32 %v1818, %v1828
    %vm1847 = vcmp.ge.f32.partialorder %v1831, 0.0
    %vm1848 = vcmp.ge.f32.partialorder %v1832, 0.0
    %vm1849 = vcmp.ge.f32.partialorder %v1833, 0.0
    %vm1850 = vcmp.ge.f32.partialorder %v1834, 0.0
    %vm1851 = vcmp.ge.f32.partialorder %v1835, 0.0
    %vm1852 = vcmp.ge.f32.partialorder %v1836, 0.0
    %vm1853 = vcmp.ge.f32.partialorder %v1837, 0.0
    %vm1854 = vcmp.ge.f32.partialorder %v1838, 0.0
    %vm1855 = vcmp.ge.f32.partialorder %v1839, 0.0
    %vm1856 = vcmp.ge.f32.partialorder %v1840, 0.0
    %vm1857 = vcmp.ge.f32.partialorder %v1841, 0.0
    %vm1858 = vcmp.ge.f32.partialorder %v1842, 0.0
    %vm1859 = vcmp.ge.f32.partialorder %v1843, 0.0
    %vm1860 = vcmp.ge.f32.partialorder %v1844, 0.0
    %vm1861 = vcmp.ge.f32.partialorder %v1845, 0.0
    %vm1862 = vcmp.ge.f32.partialorder %v1846, 0.0
    %v1863 = vmul.f32 %v1831, 0.2
    %v1864 = vmul.f32 %v1832, 0.2
    %v1865 = vmul.f32 %v1833, 0.2
    %v1866 = vmul.f32 %v1834, 0.2
    %v1867 = vmul.f32 %v1835, 0.2
    %v1868 = vmul.f32 %v1836, 0.2
    %v1869 = vmul.f32 %v1837, 0.2
    %v1870 = vmul.f32 %v1838, 0.2
    %v1871 = vmul.f32 %v1839, 0.2
    %v1872 = vmul.f32 %v1840, 0.2
    %v1873 = vmul.f32 %v1841, 0.2
    %v1874 = vmul.f32 %v1842, 0.2
    %v1875 = vmul.f32 %v1843, 0.2
    %v1876 = vmul.f32 %v1844, 0.2
    %v1877 = vmul.f32 %v1845, 0.2
    %v1878 = vmul.f32 %v1846, 0.2
    %v1879 = vsel %vm1847, %v1831, %v1863
    %v1880 = vsel %vm1848, %v1832, %v1864
    %v1881 = vsel %vm1849, %v1833, %v1865
    %v1882 = vsel %vm1850, %v1834, %v1866
    %v1883 = vsel %vm1851, %v1835, %v1867
    %v1884 = vsel %vm1852, %v1836, %v1868
    %v1885 = vsel %vm1853, %v1837, %v1869
    %v1886 = vsel %vm1854, %v1838, %v1870
    %v1887 = vsel %vm1855, %v1839, %v1871
    %v1888 = vsel %vm1856, %v1840, %v1872
    %v1889 = vsel %vm1857, %v1841, %v1873
    %v1890 = vsel %vm1858, %v1842, %v1874
    %v1891 = vsel %vm1859, %v1843, %v1875
    %v1892 = vsel %vm1860, %v1844, %v1876
    %v1893 = vsel %vm1861, %v1845, %v1877
    %v1894 = vsel %vm1862, %v1846, %v1878
    %v1895 = vpack.c.bf16 %v1881, %v1879
    %v1896 = vpack.c.bf16 %v1882, %v1880
    %v1897 = vpack.c.bf16 %v1885, %v1883
    %v1898 = vpack.c.bf16 %v1886, %v1884
    %v1899 = vpack.c.bf16 %v1889, %v1887
    %v1900 = vpack.c.bf16 %v1890, %v1888
    %v1901 = vpack.c.bf16 %v1893, %v1891
    %v1902 = vpack.c.bf16 %v1894, %v1892
    %v1903 = vld [vmem:[#allocation7] sm:$0xf]
    %v1904 = vld [vmem:[#allocation7 + $0x4] sm:$0xf]
    %v1905 = vld [vmem:[#allocation7 + $0x8] sm:$0xf]
    %v1906 = vld [vmem:[#allocation7 + $0xc] sm:$0xf]
    %v1911 = vunpack.c.l.b16 %v1903
    %v1912 = vunpack.c.l.b16 %v1904
    %v1913 = vunpack.c.l.b16 %v1905
    %v1914 = vunpack.c.l.b16 %v1906
    %v1915 = vpack.c.b16 %v1912, %v1911
    %v1916 = vpack.c.b16 %v1914, %v1913
    %v1918 = vsel %vm808, %v1915, 0
    %v1921 = vsel %vm808, %v1916, 0
    %1923 = vmatprep.subr.bf16.mxu0 0
    %1924 = vmatpush1.bf16.msra.mxu0 0
    %1925 = vmatprep.subr.bf16.mxu0 0
    %1926 = vmatpush1.bf16.msra.mxu0 0
    %1927 = vmatprep.subr.bf16.mxu0 0
    %1928 = vmatpush1.bf16.msra.mxu0 0
    %1929 = vmatprep.subr.bf16.mxu0 0
    %1930 = vmatpush1.bf16.msra.mxu0 0
    %1931 = vmatprep.subr.bf16.mxu0 %v1902
    %1932 = vmatpush1.bf16.msra.mxu0 %v1901
    %1933 = vmatprep.subr.bf16.mxu0 %v1900
    %1934 = vmatpush1.bf16.msra.mxu0 %v1899
    %1935 = vmatprep.subr.bf16.mxu0 %v1898
    %1936 = vmatpush1.bf16.msra.mxu0 %v1897
    %1937 = vmatprep.subr.bf16.mxu0 %v1896
    %1938 = vmatpush1.bf16.msra.mxu0 %v1895
    %1939 = vmatprep.subr.bf16.mxu0 0
    %1940 = vmatpush2.bf16.msra.mxu0 0
    %1941 = vmatprep.subr.bf16.mxu0 0
    %1942 = vmatpush2.bf16.msra.mxu0 0
    %1943 = vmatprep.subr.bf16.mxu0 0
    %1944 = vmatpush2.bf16.msra.mxu0 0
    %1945 = vmatprep.subr.bf16.mxu0 0
    %1946 = vmatpush2.bf16.msra.mxu0 0
    %1947 = vmatprep.subr.bf16.mxu0 0
    %1948 = vmatpush2.bf16.msra.mxu0 0
    %1949 = vmatprep.subr.bf16.mxu0 0
    %1950 = vmatpush2.bf16.msra.mxu0 0
    %1951 = vmatprep.subr.bf16.mxu0 0
    %1952 = vmatpush2.bf16.msra.mxu0 0
    %1953 = vmatprep.subr.bf16.mxu0 0
    %1954 = vmatpush2.bf16.msra.mxu0 0
    %1955 = vmatprep.mubr.bf16.mxu0 0
    %1956 = vmatmul.mubr.bf16.gmra.mxu0 %v1918
    %v1957 = vpop.f32.mrf.mxu0
    %v1958 = vadd.f32 0.0, %v1957
    %v1959 = vpop.f32.mrf.mxu0
    %v1960 = vadd.f32 0.0, %v1959
    %v1961 = vpop.f32.mrf.mxu0
    %v1962 = vadd.f32 0.0, %v1961
    %v1963 = vpop.f32.mrf.mxu0
    %v1964 = vadd.f32 0.0, %v1963
    %1965 = vmatprep.mubr.bf16.mxu0 0
    %1966 = vmatmul.mubr.bf16.gmra.mxu0 %v1921
    %v1967 = vpop.f32.mrf.mxu0
    %v1968 = vadd.f32 0.0, %v1967
    %v1969 = vpop.f32.mrf.mxu0
    %v1970 = vadd.f32 0.0, %v1969
    %v1971 = vpop.f32.mrf.mxu0
    %v1972 = vadd.f32 0.0, %v1971
    %v1973 = vpop.f32.mrf.mxu0
    %v1974 = vadd.f32 0.0, %v1973
    %1975 = vdwg.mxu0
    %v1976 = vpack.c.bf16 %v1962, %v1958
    %v1977 = vpack.c.bf16 %v1964, %v1960
    %v1978 = vpack.c.bf16 %v1972, %v1968
    %v1979 = vpack.c.bf16 %v1974, %v1970
    %v1980 = vld [vmem:[%s5] sm:$0xff]
    %v1981 = vld [vmem:[%s5 + $0x8] sm:$0xff]
    %v1982 = vld [vmem:[%s5 + $0x10] sm:$0xff]
    %v1983 = vld [vmem:[%s5 + $0x18] sm:$0xff]
    %v1984 = vld [vmem:[%s5 + $0x20] sm:$0xff]
    %v1985 = vld [vmem:[%s5 + $0x28] sm:$0xff]
    %v1986 = vld [vmem:[%s5 + $0x30] sm:$0xff]
    %v1987 = vld [vmem:[%s5 + $0x38] sm:$0xff]
    %v1988 = vld [vmem:[%s5 + $0x40] sm:$0xff]
    %v1989 = vld [vmem:[%s5 + $0x48] sm:$0xff]
    %v1990 = vld [vmem:[%s5 + $0x50] sm:$0xff]
    %v1991 = vld [vmem:[%s5 + $0x58] sm:$0xff]
    %v1992 = vld [vmem:[%s5 + $0x60] sm:$0xff]
    %v1993 = vld [vmem:[%s5 + $0x68] sm:$0xff]
    %v1994 = vld [vmem:[%s5 + $0x70] sm:$0xff]
    %v1995 = vld [vmem:[%s5 + $0x78] sm:$0xff]
    %v1996 = vld [vmem:[%s5 + $0x80] sm:$0xff]
    %v1997 = vld [vmem:[%s5 + $0x88] sm:$0xff]
    %v1998 = vld [vmem:[%s5 + $0x90] sm:$0xff]
    %v1999 = vld [vmem:[%s5 + $0x98] sm:$0xff]
    %v2000 = vld [vmem:[%s5 + $0xa0] sm:$0xff]
    %v2001 = vld [vmem:[%s5 + $0xa8] sm:$0xff]
    %v2002 = vld [vmem:[%s5 + $0xb0] sm:$0xff]
    %v2003 = vld [vmem:[%s5 + $0xb8] sm:$0xff]
    %v2004 = vld [vmem:[%s5 + $0xc0] sm:$0xff]
    %v2005 = vld [vmem:[%s5 + $0xc8] sm:$0xff]
    %v2006 = vld [vmem:[%s5 + $0xd0] sm:$0xff]
    %v2007 = vld [vmem:[%s5 + $0xd8] sm:$0xff]
    %v2008 = vld [vmem:[%s5 + $0xe0] sm:$0xff]
    %v2009 = vld [vmem:[%s5 + $0xe8] sm:$0xff]
    %v2010 = vld [vmem:[%s5 + $0xf0] sm:$0xff]
    %v2011 = vld [vmem:[%s5 + $0xf8] sm:$0xff]
    %s2012 = scalar_lea.vmem [#allocation7], 16
    %v2013 = vld [vmem:[%s2012] sm:$0xf]
    %v2014 = vld [vmem:[%s2012 + $0x4] sm:$0xf]
    %v2015 = vld [vmem:[%s2012 + $0x8] sm:$0xf]
    %v2016 = vld [vmem:[%s2012 + $0xc] sm:$0xf]
    %v2021 = vunpack.c.l.b16 %v2013
    %v2022 = vunpack.c.l.b16 %v2014
    %v2023 = vunpack.c.l.b16 %v2015
    %v2024 = vunpack.c.l.b16 %v2016
    %v2025 = vpack.c.b16 %v2022, %v2021
    %v2026 = vpack.c.b16 %v2024, %v2023
    %v2028 = vsel %vm808, %v2025, 0
    %v2031 = vsel %vm808, %v2026, 0
    %2033 = vmatprep.subr.bf16.mxu0 0
    %2034 = vmatpush1.bf16.msra.mxu0 0
    %2035 = vmatprep.subr.bf16.mxu0 0
    %2036 = vmatpush1.bf16.msra.mxu0 0
    %2037 = vmatprep.subr.bf16.mxu0 0
    %2038 = vmatpush1.bf16.msra.mxu0 0
    %2039 = vmatprep.subr.bf16.mxu0 0
    %2040 = vmatpush1.bf16.msra.mxu0 0
    %2041 = vmatprep.subr.bf16.mxu0 %v1902
    %2042 = vmatpush1.bf16.msra.mxu0 %v1901
    %2043 = vmatprep.subr.bf16.mxu0 %v1900
    %2044 = vmatpush1.bf16.msra.mxu0 %v1899
    %2045 = vmatprep.subr.bf16.mxu0 %v1898
    %2046 = vmatpush1.bf16.msra.mxu0 %v1897
    %2047 = vmatprep.subr.bf16.mxu0 %v1896
    %2048 = vmatpush1.bf16.msra.mxu0 %v1895
    %2049 = vmatprep.subr.bf16.mxu0 0
    %2050 = vmatpush2.bf16.msra.mxu0 0
    %2051 = vmatprep.subr.bf16.mxu0 0
    %2052 = vmatpush2.bf16.msra.mxu0 0
    %2053 = vmatprep.subr.bf16.mxu0 0
    %2054 = vmatpush2.bf16.msra.mxu0 0
    %2055 = vmatprep.subr.bf16.mxu0 0
    %2056 = vmatpush2.bf16.msra.mxu0 0
    %2057 = vmatprep.subr.bf16.mxu0 0
    %2058 = vmatpush2.bf16.msra.mxu0 0
    %2059 = vmatprep.subr.bf16.mxu0 0
    %2060 = vmatpush2.bf16.msra.mxu0 0
    %2061 = vmatprep.subr.bf16.mxu0 0
    %2062 = vmatpush2.bf16.msra.mxu0 0
    %2063 = vmatprep.subr.bf16.mxu0 0
    %2064 = vmatpush2.bf16.msra.mxu0 0
    %2065 = vmatprep.mubr.bf16.mxu0 0
    %2066 = vmatmul.mubr.bf16.gmra.mxu0 %v2028
    %v2067 = vpop.f32.mrf.mxu0
    %v2068 = vadd.f32 0.0, %v2067
    %v2069 = vpop.f32.mrf.mxu0
    %v2070 = vadd.f32 0.0, %v2069
    %v2071 = vpop.f32.mrf.mxu0
    %v2072 = vadd.f32 0.0, %v2071
    %v2073 = vpop.f32.mrf.mxu0
    %v2074 = vadd.f32 0.0, %v2073
    %2075 = vmatprep.mubr.bf16.mxu0 0
    %2076 = vmatmul.mubr.bf16.gmra.mxu0 %v2031
    %v2077 = vpop.f32.mrf.mxu0
    %v2078 = vadd.f32 0.0, %v2077
    %v2079 = vpop.f32.mrf.mxu0
    %v2080 = vadd.f32 0.0, %v2079
    %v2081 = vpop.f32.mrf.mxu0
    %v2082 = vadd.f32 0.0, %v2081
    %v2083 = vpop.f32.mrf.mxu0
    %v2084 = vadd.f32 0.0, %v2083
    %2085 = vdwg.mxu0
    %v2086 = vpack.c.bf16 %v2072, %v2068
    %v2087 = vpack.c.bf16 %v2074, %v2070
    %v2088 = vpack.c.bf16 %v2082, %v2078
    %v2089 = vpack.c.bf16 %v2084, %v2080
    %s2090 = scalar_lea.vmem %s5, 256
    %v2091 = vld [vmem:[%s2090] sm:$0xff]
    %v2092 = vld [vmem:[%s2090 + $0x8] sm:$0xff]
    %v2093 = vld [vmem:[%s2090 + $0x10] sm:$0xff]
    %v2094 = vld [vmem:[%s2090 + $0x18] sm:$0xff]
    %v2095 = vld [vmem:[%s2090 + $0x20] sm:$0xff]
    %v2096 = vld [vmem:[%s2090 + $0x28] sm:$0xff]
    %v2097 = vld [vmem:[%s2090 + $0x30] sm:$0xff]
    %v2098 = vld [vmem:[%s2090 + $0x38] sm:$0xff]
    %v2099 = vld [vmem:[%s2090 + $0x40] sm:$0xff]
    %v2100 = vld [vmem:[%s2090 + $0x48] sm:$0xff]
    %v2101 = vld [vmem:[%s2090 + $0x50] sm:$0xff]
    %v2102 = vld [vmem:[%s2090 + $0x58] sm:$0xff]
    %v2103 = vld [vmem:[%s2090 + $0x60] sm:$0xff]
    %v2104 = vld [vmem:[%s2090 + $0x68] sm:$0xff]
    %v2105 = vld [vmem:[%s2090 + $0x70] sm:$0xff]
    %v2106 = vld [vmem:[%s2090 + $0x78] sm:$0xff]
    %v2107 = vld [vmem:[%s2090 + $0x80] sm:$0xff]
    %v2108 = vld [vmem:[%s2090 + $0x88] sm:$0xff]
    %v2109 = vld [vmem:[%s2090 + $0x90] sm:$0xff]
    %v2110 = vld [vmem:[%s2090 + $0x98] sm:$0xff]
    %v2111 = vld [vmem:[%s2090 + $0xa0] sm:$0xff]
    %v2112 = vld [vmem:[%s2090 + $0xa8] sm:$0xff]
    %v2113 = vld [vmem:[%s2090 + $0xb0] sm:$0xff]
    %v2114 = vld [vmem:[%s2090 + $0xb8] sm:$0xff]
    %v2115 = vld [vmem:[%s2090 + $0xc0] sm:$0xff]
    %v2116 = vld [vmem:[%s2090 + $0xc8] sm:$0xff]
    %v2117 = vld [vmem:[%s2090 + $0xd0] sm:$0xff]
    %v2118 = vld [vmem:[%s2090 + $0xd8] sm:$0xff]
    %v2119 = vld [vmem:[%s2090 + $0xe0] sm:$0xff]
    %v2120 = vld [vmem:[%s2090 + $0xe8] sm:$0xff]
    %v2121 = vld [vmem:[%s2090 + $0xf0] sm:$0xff]
    %v2122 = vld [vmem:[%s2090 + $0xf8] sm:$0xff]
    %v2155 = vunpack.c.l.b16 %v2091
    %v2156 = vunpack.c.h.b16 %v2091
    %v2157 = vunpack.c.l.b16 %v2092
    %v2158 = vunpack.c.h.b16 %v2092
    %v2159 = vunpack.c.l.b16 %v2093
    %v2160 = vunpack.c.h.b16 %v2093
    %v2161 = vunpack.c.l.b16 %v2094
    %v2162 = vunpack.c.h.b16 %v2094
    %v2163 = vunpack.c.l.b16 %v2095
    %v2164 = vunpack.c.h.b16 %v2095
    %v2165 = vunpack.c.l.b16 %v2096
    %v2166 = vunpack.c.h.b16 %v2096
    %v2167 = vunpack.c.l.b16 %v2097
    %v2168 = vunpack.c.h.b16 %v2097
    %v2169 = vunpack.c.l.b16 %v2098
    %v2170 = vunpack.c.h.b16 %v2098
    %v2171 = vunpack.c.l.b16 %v2099
    %v2172 = vunpack.c.h.b16 %v2099
    %v2173 = vunpack.c.l.b16 %v2100
    %v2174 = vunpack.c.h.b16 %v2100
    %v2175 = vunpack.c.l.b16 %v2101
    %v2176 = vunpack.c.h.b16 %v2101
    %v2177 = vunpack.c.l.b16 %v2102
    %v2178 = vunpack.c.h.b16 %v2102
    %v2179 = vunpack.c.l.b16 %v2103
    %v2180 = vunpack.c.h.b16 %v2103
    %v2181 = vunpack.c.l.b16 %v2104
    %v2182 = vunpack.c.h.b16 %v2104
    %v2183 = vunpack.c.l.b16 %v2105
    %v2184 = vunpack.c.h.b16 %v2105
    %v2185 = vunpack.c.l.b16 %v2106
    %v2186 = vunpack.c.h.b16 %v2106
    %v2187 = vunpack.c.l.b16 %v2107
    %v2188 = vunpack.c.h.b16 %v2107
    %v2189 = vunpack.c.l.b16 %v2108
    %v2190 = vunpack.c.h.b16 %v2108
    %v2191 = vunpack.c.l.b16 %v2109
    %v2192 = vunpack.c.h.b16 %v2109
    %v2193 = vunpack.c.l.b16 %v2110
    %v2194 = vunpack.c.h.b16 %v2110
    %v2195 = vunpack.c.l.b16 %v2111
    %v2196 = vunpack.c.h.b16 %v2111
    %v2197 = vunpack.c.l.b16 %v2112
    %v2198 = vunpack.c.h.b16 %v2112
    %v2199 = vunpack.c.l.b16 %v2113
    %v2200 = vunpack.c.h.b16 %v2113
    %v2201 = vunpack.c.l.b16 %v2114
    %v2202 = vunpack.c.h.b16 %v2114
    %v2203 = vunpack.c.l.b16 %v2115
    %v2204 = vunpack.c.h.b16 %v2115
    %v2205 = vunpack.c.l.b16 %v2116
    %v2206 = vunpack.c.h.b16 %v2116
    %v2207 = vunpack.c.l.b16 %v2117
    %v2208 = vunpack.c.h.b16 %v2117
    %v2209 = vunpack.c.l.b16 %v2118
    %v2210 = vunpack.c.h.b16 %v2118
    %v2211 = vunpack.c.l.b16 %v2119
    %v2212 = vunpack.c.h.b16 %v2119
    %v2213 = vunpack.c.l.b16 %v2120
    %v2214 = vunpack.c.h.b16 %v2120
    %v2215 = vunpack.c.l.b16 %v2121
    %v2216 = vunpack.c.h.b16 %v2121
    %v2217 = vunpack.c.l.b16 %v2122
    %v2218 = vunpack.c.h.b16 %v2122
    %v2219 = vpack.c.b16 %v2157, %v2155
    %v2220 = vpack.c.b16 %v2158, %v2156
    %v2221 = vpack.c.b16 %v2161, %v2159
    %v2222 = vpack.c.b16 %v2162, %v2160
    %v2223 = vpack.c.b16 %v2165, %v2163
    %v2224 = vpack.c.b16 %v2166, %v2164
    %v2225 = vpack.c.b16 %v2169, %v2167
    %v2226 = vpack.c.b16 %v2170, %v2168
    %v2227 = vpack.c.b16 %v2173, %v2171
    %v2228 = vpack.c.b16 %v2174, %v2172
    %v2229 = vpack.c.b16 %v2177, %v2175
    %v2230 = vpack.c.b16 %v2178, %v2176
    %v2231 = vpack.c.b16 %v2181, %v2179
    %v2232 = vpack.c.b16 %v2182, %v2180
    %v2233 = vpack.c.b16 %v2185, %v2183
    %v2234 = vpack.c.b16 %v2186, %v2184
    %v2235 = vpack.c.b16 %v2189, %v2187
    %v2236 = vpack.c.b16 %v2190, %v2188
    %v2237 = vpack.c.b16 %v2193, %v2191
    %v2238 = vpack.c.b16 %v2194, %v2192
    %v2239 = vpack.c.b16 %v2197, %v2195
    %v2240 = vpack.c.b16 %v2198, %v2196
    %v2241 = vpack.c.b16 %v2201, %v2199
    %v2242 = vpack.c.b16 %v2202, %v2200
    %v2243 = vpack.c.b16 %v2205, %v2203
    %v2244 = vpack.c.b16 %v2206, %v2204
    %v2245 = vpack.c.b16 %v2209, %v2207
    %v2246 = vpack.c.b16 %v2210, %v2208
    %v2247 = vpack.c.b16 %v2213, %v2211
    %v2248 = vpack.c.b16 %v2214, %v2212
    %v2249 = vpack.c.b16 %v2217, %v2215
    %v2250 = vpack.c.b16 %v2218, %v2216
    %2283 = vmatprep.subr.bf16.mxu0 %v2234
    %2284 = vmatpush1.bf16.msra.mxu0 %v2233
    %2285 = vmatprep.subr.bf16.mxu0 %v2232
    %2286 = vmatpush1.bf16.msra.mxu0 %v2231
    %2287 = vmatprep.subr.bf16.mxu0 %v2230
    %2288 = vmatpush1.bf16.msra.mxu0 %v2229
    %2289 = vmatprep.subr.bf16.mxu0 %v2228
    %2290 = vmatpush1.bf16.msra.mxu0 %v2227
    %2291 = vmatprep.subr.bf16.mxu0 %v2226
    %2292 = vmatpush1.bf16.msra.mxu0 %v2225
    %2293 = vmatprep.subr.bf16.mxu0 %v2224
    %2294 = vmatpush1.bf16.msra.mxu0 %v2223
    %2295 = vmatprep.subr.bf16.mxu0 %v2222
    %2296 = vmatpush1.bf16.msra.mxu0 %v2221
    %2297 = vmatprep.subr.bf16.mxu0 %v2220
    %2298 = vmatpush1.bf16.msra.mxu0 %v2219
    %2299 = vmatprep.subr.bf16.mxu0 %v2250
    %2300 = vmatpush2.bf16.msra.mxu0 %v2249
    %2301 = vmatprep.subr.bf16.mxu0 %v2248
    %2302 = vmatpush2.bf16.msra.mxu0 %v2247
    %2303 = vmatprep.subr.bf16.mxu0 %v2246
    %2304 = vmatpush2.bf16.msra.mxu0 %v2245
    %2305 = vmatprep.subr.bf16.mxu0 %v2244
    %2306 = vmatpush2.bf16.msra.mxu0 %v2243
    %2307 = vmatprep.subr.bf16.mxu0 %v2242
    %2308 = vmatpush2.bf16.msra.mxu0 %v2241
    %2309 = vmatprep.subr.bf16.mxu0 %v2240
    %2310 = vmatpush2.bf16.msra.mxu0 %v2239
    %2311 = vmatprep.subr.bf16.mxu0 %v2238
    %2312 = vmatpush2.bf16.msra.mxu0 %v2237
    %2313 = vmatprep.subr.bf16.mxu0 %v2236
    %2314 = vmatpush2.bf16.msra.mxu0 %v2235
    %2315 = vmatprep.mubr.bf16.mxu0 %v2087
    %2316 = vmatmul.mubr.bf16.gmra.mxu0 %v2086
    %v2317 = vpop.f32.mrf.mxu0
    %v2318 = vadd.f32 0.0, %v2317
    %v2319 = vpop.f32.mrf.mxu0
    %v2320 = vadd.f32 0.0, %v2319
    %v2321 = vpop.f32.mrf.mxu0
    %v2322 = vadd.f32 0.0, %v2321
    %v2323 = vpop.f32.mrf.mxu0
    %v2324 = vadd.f32 0.0, %v2323
    %2325 = vmatprep.mubr.bf16.mxu0 %v2089
    %2326 = vmatmul.mubr.bf16.gmra.mxu0 %v2088
    %v2327 = vpop.f32.mrf.mxu0
    %v2328 = vadd.f32 0.0, %v2327
    %v2329 = vpop.f32.mrf.mxu0
    %v2330 = vadd.f32 0.0, %v2329
    %v2331 = vpop.f32.mrf.mxu0
    %v2332 = vadd.f32 0.0, %v2331
    %v2333 = vpop.f32.mrf.mxu0
    %v2334 = vadd.f32 0.0, %v2333
    %2335 = vdwg.mxu0
    %v2368 = vunpack.c.l.b16 %v1980
    %v2369 = vunpack.c.h.b16 %v1980
    %v2370 = vunpack.c.l.b16 %v1981
    %v2371 = vunpack.c.h.b16 %v1981
    %v2372 = vunpack.c.l.b16 %v1982
    %v2373 = vunpack.c.h.b16 %v1982
    %v2374 = vunpack.c.l.b16 %v1983
    %v2375 = vunpack.c.h.b16 %v1983
    %v2376 = vunpack.c.l.b16 %v1984
    %v2377 = vunpack.c.h.b16 %v1984
    %v2378 = vunpack.c.l.b16 %v1985
    %v2379 = vunpack.c.h.b16 %v1985
    %v2380 = vunpack.c.l.b16 %v1986
    %v2381 = vunpack.c.h.b16 %v1986
    %v2382 = vunpack.c.l.b16 %v1987
    %v2383 = vunpack.c.h.b16 %v1987
    %v2384 = vunpack.c.l.b16 %v1988
    %v2385 = vunpack.c.h.b16 %v1988
    %v2386 = vunpack.c.l.b16 %v1989
    %v2387 = vunpack.c.h.b16 %v1989
    %v2388 = vunpack.c.l.b16 %v1990
    %v2389 = vunpack.c.h.b16 %v1990
    %v2390 = vunpack.c.l.b16 %v1991
    %v2391 = vunpack.c.h.b16 %v1991
    %v2392 = vunpack.c.l.b16 %v1992
    %v2393 = vunpack.c.h.b16 %v1992
    %v2394 = vunpack.c.l.b16 %v1993
    %v2395 = vunpack.c.h.b16 %v1993
    %v2396 = vunpack.c.l.b16 %v1994
    %v2397 = vunpack.c.h.b16 %v1994
    %v2398 = vunpack.c.l.b16 %v1995
    %v2399 = vunpack.c.h.b16 %v1995
    %v2400 = vunpack.c.l.b16 %v1996
    %v2401 = vunpack.c.h.b16 %v1996
    %v2402 = vunpack.c.l.b16 %v1997
    %v2403 = vunpack.c.h.b16 %v1997
    %v2404 = vunpack.c.l.b16 %v1998
    %v2405 = vunpack.c.h.b16 %v1998
    %v2406 = vunpack.c.l.b16 %v1999
    %v2407 = vunpack.c.h.b16 %v1999
    %v2408 = vunpack.c.l.b16 %v2000
    %v2409 = vunpack.c.h.b16 %v2000
    %v2410 = vunpack.c.l.b16 %v2001
    %v2411 = vunpack.c.h.b16 %v2001
    %v2412 = vunpack.c.l.b16 %v2002
    %v2413 = vunpack.c.h.b16 %v2002
    %v2414 = vunpack.c.l.b16 %v2003
    %v2415 = vunpack.c.h.b16 %v2003
    %v2416 = vunpack.c.l.b16 %v2004
    %v2417 = vunpack.c.h.b16 %v2004
    %v2418 = vunpack.c.l.b16 %v2005
    %v2419 = vunpack.c.h.b16 %v2005
    %v2420 = vunpack.c.l.b16 %v2006
    %v2421 = vunpack.c.h.b16 %v2006
    %v2422 = vunpack.c.l.b16 %v2007
    %v2423 = vunpack.c.h.b16 %v2007
    %v2424 = vunpack.c.l.b16 %v2008
    %v2425 = vunpack.c.h.b16 %v2008
    %v2426 = vunpack.c.l.b16 %v2009
    %v2427 = vunpack.c.h.b16 %v2009
    %v2428 = vunpack.c.l.b16 %v2010
    %v2429 = vunpack.c.h.b16 %v2010
    %v2430 = vunpack.c.l.b16 %v2011
    %v2431 = vunpack.c.h.b16 %v2011
    %v2432 = vpack.c.b16 %v2370, %v2368
    %v2433 = vpack.c.b16 %v2371, %v2369
    %v2434 = vpack.c.b16 %v2374, %v2372
    %v2435 = vpack.c.b16 %v2375, %v2373
    %v2436 = vpack.c.b16 %v2378, %v2376
    %v2437 = vpack.c.b16 %v2379, %v2377
    %v2438 = vpack.c.b16 %v2382, %v2380
    %v2439 = vpack.c.b16 %v2383, %v2381
    %v2440 = vpack.c.b16 %v2386, %v2384
    %v2441 = vpack.c.b16 %v2387, %v2385
    %v2442 = vpack.c.b16 %v2390, %v2388
    %v2443 = vpack.c.b16 %v2391, %v2389
    %v2444 = vpack.c.b16 %v2394, %v2392
    %v2445 = vpack.c.b16 %v2395, %v2393
    %v2446 = vpack.c.b16 %v2398, %v2396
    %v2447 = vpack.c.b16 %v2399, %v2397
    %v2448 = vpack.c.b16 %v2402, %v2400
    %v2449 = vpack.c.b16 %v2403, %v2401
    %v2450 = vpack.c.b16 %v2406, %v2404
    %v2451 = vpack.c.b16 %v2407, %v2405
    %v2452 = vpack.c.b16 %v2410, %v2408
    %v2453 = vpack.c.b16 %v2411, %v2409
    %v2454 = vpack.c.b16 %v2414, %v2412
    %v2455 = vpack.c.b16 %v2415, %v2413
    %v2456 = vpack.c.b16 %v2418, %v2416
    %v2457 = vpack.c.b16 %v2419, %v2417
    %v2458 = vpack.c.b16 %v2422, %v2420
    %v2459 = vpack.c.b16 %v2423, %v2421
    %v2460 = vpack.c.b16 %v2426, %v2424
    %v2461 = vpack.c.b16 %v2427, %v2425
    %v2462 = vpack.c.b16 %v2430, %v2428
    %v2463 = vpack.c.b16 %v2431, %v2429
    %2496 = vmatprep.subr.bf16.mxu0 %v2447
    %2497 = vmatpush1.bf16.msra.mxu0 %v2446
    %2498 = vmatprep.subr.bf16.mxu0 %v2445
    %2499 = vmatpush1.bf16.msra.mxu0 %v2444
    %2500 = vmatprep.subr.bf16.mxu0 %v2443
    %2501 = vmatpush1.bf16.msra.mxu0 %v2442
    %2502 = vmatprep.subr.bf16.mxu0 %v2441
    %2503 = vmatpush1.bf16.msra.mxu0 %v2440
    %2504 = vmatprep.subr.bf16.mxu0 %v2439
    %2505 = vmatpush1.bf16.msra.mxu0 %v2438
    %2506 = vmatprep.subr.bf16.mxu0 %v2437
    %2507 = vmatpush1.bf16.msra.mxu0 %v2436
    %2508 = vmatprep.subr.bf16.mxu0 %v2435
    %2509 = vmatpush1.bf16.msra.mxu0 %v2434
    %2510 = vmatprep.subr.bf16.mxu0 %v2433
    %2511 = vmatpush1.bf16.msra.mxu0 %v2432
    %2512 = vmatprep.subr.bf16.mxu0 %v2463
    %2513 = vmatpush2.bf16.msra.mxu0 %v2462
    %2514 = vmatprep.subr.bf16.mxu0 %v2461
    %2515 = vmatpush2.bf16.msra.mxu0 %v2460
    %2516 = vmatprep.subr.bf16.mxu0 %v2459
    %2517 = vmatpush2.bf16.msra.mxu0 %v2458
    %2518 = vmatprep.subr.bf16.mxu0 %v2457
    %2519 = vmatpush2.bf16.msra.mxu0 %v2456
    %2520 = vmatprep.subr.bf16.mxu0 %v2455
    %2521 = vmatpush2.bf16.msra.mxu0 %v2454
    %2522 = vmatprep.subr.bf16.mxu0 %v2453
    %2523 = vmatpush2.bf16.msra.mxu0 %v2452
    %2524 = vmatprep.subr.bf16.mxu0 %v2451
    %2525 = vmatpush2.bf16.msra.mxu0 %v2450
    %2526 = vmatprep.subr.bf16.mxu0 %v2449
    %2527 = vmatpush2.bf16.msra.mxu0 %v2448
    %2528 = vmatprep.mubr.bf16.mxu0 %v1977
    %2529 = vmatmul.mubr.bf16.gmra.mxu0 %v1976
    %v2530 = vpop.f32.mrf.mxu0
    %v2531 = vadd.f32 %v2318, %v2530
    %v2532 = vpop.f32.mrf.mxu0
    %v2533 = vadd.f32 %v2320, %v2532
    %v2534 = vpop.f32.mrf.mxu0
    %v2535 = vadd.f32 %v2322, %v2534
    %v2536 = vpop.f32.mrf.mxu0
    %v2537 = vadd.f32 %v2324, %v2536
    %2538 = vmatprep.mubr.bf16.mxu0 %v1979
    %2539 = vmatmul.mubr.bf16.gmra.mxu0 %v1978
    %v2540 = vpop.f32.mrf.mxu0
    %v2541 = vadd.f32 %v2328, %v2540
    %v2542 = vpop.f32.mrf.mxu0
    %v2543 = vadd.f32 %v2330, %v2542
    %v2544 = vpop.f32.mrf.mxu0
    %v2545 = vadd.f32 %v2332, %v2544
    %v2546 = vpop.f32.mrf.mxu0
    %v2547 = vadd.f32 %v2334, %v2546
    %2548 = vdwg.mxu0
    %s2549 = scalar_lea.vmem [#allocation7], 32
    %v2550 = vld [vmem:[%s2549] sm:$0xf]
    %v2551 = vld [vmem:[%s2549 + $0x4] sm:$0xf]
    %v2552 = vld [vmem:[%s2549 + $0x8] sm:$0xf]
    %v2553 = vld [vmem:[%s2549 + $0xc] sm:$0xf]
    %v2558 = vunpack.c.l.b16 %v2550
    %v2559 = vunpack.c.l.b16 %v2551
    %v2560 = vunpack.c.l.b16 %v2552
    %v2561 = vunpack.c.l.b16 %v2553
    %v2562 = vpack.c.b16 %v2559, %v2558
    %v2563 = vpack.c.b16 %v2561, %v2560
    %v2565 = vsel %vm808, %v2562, 0
    %v2568 = vsel %vm808, %v2563, 0
    %2570 = vmatprep.subr.bf16.mxu0 0
    %2571 = vmatpush1.bf16.msra.mxu0 0
    %2572 = vmatprep.subr.bf16.mxu0 0
    %2573 = vmatpush1.bf16.msra.mxu0 0
    %2574 = vmatprep.subr.bf16.mxu0 0
    %2575 = vmatpush1.bf16.msra.mxu0 0
    %2576 = vmatprep.subr.bf16.mxu0 0
    %2577 = vmatpush1.bf16.msra.mxu0 0
    %2578 = vmatprep.subr.bf16.mxu0 %v1902
    %2579 = vmatpush1.bf16.msra.mxu0 %v1901
    %2580 = vmatprep.subr.bf16.mxu0 %v1900
    %2581 = vmatpush1.bf16.msra.mxu0 %v1899
    %2582 = vmatprep.subr.bf16.mxu0 %v1898
    %2583 = vmatpush1.bf16.msra.mxu0 %v1897
    %2584 = vmatprep.subr.bf16.mxu0 %v1896
    %2585 = vmatpush1.bf16.msra.mxu0 %v1895
    %2586 = vmatprep.subr.bf16.mxu0 0
    %2587 = vmatpush2.bf16.msra.mxu0 0
    %2588 = vmatprep.subr.bf16.mxu0 0
    %2589 = vmatpush2.bf16.msra.mxu0 0
    %2590 = vmatprep.subr.bf16.mxu0 0
    %2591 = vmatpush2.bf16.msra.mxu0 0
    %2592 = vmatprep.subr.bf16.mxu0 0
    %2593 = vmatpush2.bf16.msra.mxu0 0
    %2594 = vmatprep.subr.bf16.mxu0 0
    %2595 = vmatpush2.bf16.msra.mxu0 0
    %2596 = vmatprep.subr.bf16.mxu0 0
    %2597 = vmatpush2.bf16.msra.mxu0 0
    %2598 = vmatprep.subr.bf16.mxu0 0
    %2599 = vmatpush2.bf16.msra.mxu0 0
    %2600 = vmatprep.subr.bf16.mxu0 0
    %2601 = vmatpush2.bf16.msra.mxu0 0
    %2602 = vmatprep.mubr.bf16.mxu0 0
    %2603 = vmatmul.mubr.bf16.gmra.mxu0 %v2565
    %v2604 = vpop.f32.mrf.mxu0
    %v2605 = vadd.f32 0.0, %v2604
    %v2606 = vpop.f32.mrf.mxu0
    %v2607 = vadd.f32 0.0, %v2606
    %v2608 = vpop.f32.mrf.mxu0
    %v2609 = vadd.f32 0.0, %v2608
    %v2610 = vpop.f32.mrf.mxu0
    %v2611 = vadd.f32 0.0, %v2610
    %2612 = vmatprep.mubr.bf16.mxu0 0
    %2613 = vmatmul.mubr.bf16.gmra.mxu0 %v2568
    %v2614 = vpop.f32.mrf.mxu0
    %v2615 = vadd.f32 0.0, %v2614
    %v2616 = vpop.f32.mrf.mxu0
    %v2617 = vadd.f32 0.0, %v2616
    %v2618 = vpop.f32.mrf.mxu0
    %v2619 = vadd.f32 0.0, %v2618
    %v2620 = vpop.f32.mrf.mxu0
    %v2621 = vadd.f32 0.0, %v2620
    %2622 = vdwg.mxu0
    %v2623 = vpack.c.bf16 %v2609, %v2605
    %v2624 = vpack.c.bf16 %v2611, %v2607
    %v2625 = vpack.c.bf16 %v2619, %v2615
    %v2626 = vpack.c.bf16 %v2621, %v2617
    %s2627 = scalar_lea.vmem %s5, 512
    %v2628 = vld [vmem:[%s2627] sm:$0xff]
    %v2629 = vld [vmem:[%s2627 + $0x8] sm:$0xff]
    %v2630 = vld [vmem:[%s2627 + $0x10] sm:$0xff]
    %v2631 = vld [vmem:[%s2627 + $0x18] sm:$0xff]
    %v2632 = vld [vmem:[%s2627 + $0x20] sm:$0xff]
    %v2633 = vld [vmem:[%s2627 + $0x28] sm:$0xff]
    %v2634 = vld [vmem:[%s2627 + $0x30] sm:$0xff]
    %v2635 = vld [vmem:[%s2627 + $0x38] sm:$0xff]
    %v2636 = vld [vmem:[%s2627 + $0x40] sm:$0xff]
    %v2637 = vld [vmem:[%s2627 + $0x48] sm:$0xff]
    %v2638 = vld [vmem:[%s2627 + $0x50] sm:$0xff]
    %v2639 = vld [vmem:[%s2627 + $0x58] sm:$0xff]
    %v2640 = vld [vmem:[%s2627 + $0x60] sm:$0xff]
    %v2641 = vld [vmem:[%s2627 + $0x68] sm:$0xff]
    %v2642 = vld [vmem:[%s2627 + $0x70] sm:$0xff]
    %v2643 = vld [vmem:[%s2627 + $0x78] sm:$0xff]
    %v2644 = vld [vmem:[%s2627 + $0x80] sm:$0xff]
    %v2645 = vld [vmem:[%s2627 + $0x88] sm:$0xff]
    %v2646 = vld [vmem:[%s2627 + $0x90] sm:$0xff]
    %v2647 = vld [vmem:[%s2627 + $0x98] sm:$0xff]
    %v2648 = vld [vmem:[%s2627 + $0xa0] sm:$0xff]
    %v2649 = vld [vmem:[%s2627 + $0xa8] sm:$0xff]
    %v2650 = vld [vmem:[%s2627 + $0xb0] sm:$0xff]
    %v2651 = vld [vmem:[%s2627 + $0xb8] sm:$0xff]
    %v2652 = vld [vmem:[%s2627 + $0xc0] sm:$0xff]
    %v2653 = vld [vmem:[%s2627 + $0xc8] sm:$0xff]
    %v2654 = vld [vmem:[%s2627 + $0xd0] sm:$0xff]
    %v2655 = vld [vmem:[%s2627 + $0xd8] sm:$0xff]
    %v2656 = vld [vmem:[%s2627 + $0xe0] sm:$0xff]
    %v2657 = vld [vmem:[%s2627 + $0xe8] sm:$0xff]
    %v2658 = vld [vmem:[%s2627 + $0xf0] sm:$0xff]
    %v2659 = vld [vmem:[%s2627 + $0xf8] sm:$0xff]
    %v2692 = vunpack.c.l.b16 %v2628
    %v2693 = vunpack.c.h.b16 %v2628
    %v2694 = vunpack.c.l.b16 %v2629
    %v2695 = vunpack.c.h.b16 %v2629
    %v2696 = vunpack.c.l.b16 %v2630
    %v2697 = vunpack.c.h.b16 %v2630
    %v2698 = vunpack.c.l.b16 %v2631
    %v2699 = vunpack.c.h.b16 %v2631
    %v2700 = vunpack.c.l.b16 %v2632
    %v2701 = vunpack.c.h.b16 %v2632
    %v2702 = vunpack.c.l.b16 %v2633
    %v2703 = vunpack.c.h.b16 %v2633
    %v2704 = vunpack.c.l.b16 %v2634
    %v2705 = vunpack.c.h.b16 %v2634
    %v2706 = vunpack.c.l.b16 %v2635
    %v2707 = vunpack.c.h.b16 %v2635
    %v2708 = vunpack.c.l.b16 %v2636
    %v2709 = vunpack.c.h.b16 %v2636
    %v2710 = vunpack.c.l.b16 %v2637
    %v2711 = vunpack.c.h.b16 %v2637
    %v2712 = vunpack.c.l.b16 %v2638
    %v2713 = vunpack.c.h.b16 %v2638
    %v2714 = vunpack.c.l.b16 %v2639
    %v2715 = vunpack.c.h.b16 %v2639
    %v2716 = vunpack.c.l.b16 %v2640
    %v2717 = vunpack.c.h.b16 %v2640
    %v2718 = vunpack.c.l.b16 %v2641
    %v2719 = vunpack.c.h.b16 %v2641
    %v2720 = vunpack.c.l.b16 %v2642
    %v2721 = vunpack.c.h.b16 %v2642
    %v2722 = vunpack.c.l.b16 %v2643
    %v2723 = vunpack.c.h.b16 %v2643
    %v2724 = vunpack.c.l.b16 %v2644
    %v2725 = vunpack.c.h.b16 %v2644
    %v2726 = vunpack.c.l.b16 %v2645
    %v2727 = vunpack.c.h.b16 %v2645
    %v2728 = vunpack.c.l.b16 %v2646
    %v2729 = vunpack.c.h.b16 %v2646
    %v2730 = vunpack.c.l.b16 %v2647
    %v2731 = vunpack.c.h.b16 %v2647
    %v2732 = vunpack.c.l.b16 %v2648
    %v2733 = vunpack.c.h.b16 %v2648
    %v2734 = vunpack.c.l.b16 %v2649
    %v2735 = vunpack.c.h.b16 %v2649
    %v2736 = vunpack.c.l.b16 %v2650
    %v2737 = vunpack.c.h.b16 %v2650
    %v2738 = vunpack.c.l.b16 %v2651
    %v2739 = vunpack.c.h.b16 %v2651
    %v2740 = vunpack.c.l.b16 %v2652
    %v2741 = vunpack.c.h.b16 %v2652
    %v2742 = vunpack.c.l.b16 %v2653
    %v2743 = vunpack.c.h.b16 %v2653
    %v2744 = vunpack.c.l.b16 %v2654
    %v2745 = vunpack.c.h.b16 %v2654
    %v2746 = vunpack.c.l.b16 %v2655
    %v2747 = vunpack.c.h.b16 %v2655
    %v2748 = vunpack.c.l.b16 %v2656
    %v2749 = vunpack.c.h.b16 %v2656
    %v2750 = vunpack.c.l.b16 %v2657
    %v2751 = vunpack.c.h.b16 %v2657
    %v2752 = vunpack.c.l.b16 %v2658
    %v2753 = vunpack.c.h.b16 %v2658
    %v2754 = vunpack.c.l.b16 %v2659
    %v2755 = vunpack.c.h.b16 %v2659
    %v2756 = vpack.c.b16 %v2694, %v2692
    %v2757 = vpack.c.b16 %v2695, %v2693
    %v2758 = vpack.c.b16 %v2698, %v2696
    %v2759 = vpack.c.b16 %v2699, %v2697
    %v2760 = vpack.c.b16 %v2702, %v2700
    %v2761 = vpack.c.b16 %v2703, %v2701
    %v2762 = vpack.c.b16 %v2706, %v2704
    %v2763 = vpack.c.b16 %v2707, %v2705
    %v2764 = vpack.c.b16 %v2710, %v2708
    %v2765 = vpack.c.b16 %v2711, %v2709
    %v2766 = vpack.c.b16 %v2714, %v2712
    %v2767 = vpack.c.b16 %v2715, %v2713
    %v2768 = vpack.c.b16 %v2718, %v2716
    %v2769 = vpack.c.b16 %v2719, %v2717
    %v2770 = vpack.c.b16 %v2722, %v2720
    %v2771 = vpack.c.b16 %v2723, %v2721
    %v2772 = vpack.c.b16 %v2726, %v2724
    %v2773 = vpack.c.b16 %v2727, %v2725
    %v2774 = vpack.c.b16 %v2730, %v2728
    %v2775 = vpack.c.b16 %v2731, %v2729
    %v2776 = vpack.c.b16 %v2734, %v2732
    %v2777 = vpack.c.b16 %v2735, %v2733
    %v2778 = vpack.c.b16 %v2738, %v2736
    %v2779 = vpack.c.b16 %v2739, %v2737
    %v2780 = vpack.c.b16 %v2742, %v2740
    %v2781 = vpack.c.b16 %v2743, %v2741
    %v2782 = vpack.c.b16 %v2746, %v2744
    %v2783 = vpack.c.b16 %v2747, %v2745
    %v2784 = vpack.c.b16 %v2750, %v2748
    %v2785 = vpack.c.b16 %v2751, %v2749
    %v2786 = vpack.c.b16 %v2754, %v2752
    %v2787 = vpack.c.b16 %v2755, %v2753
    %2820 = vmatprep.subr.bf16.mxu0 %v2771
    %2821 = vmatpush1.bf16.msra.mxu0 %v2770
    %2822 = vmatprep.subr.bf16.mxu0 %v2769
    %2823 = vmatpush1.bf16.msra.mxu0 %v2768
    %2824 = vmatprep.subr.bf16.mxu0 %v2767
    %2825 = vmatpush1.bf16.msra.mxu0 %v2766
    %2826 = vmatprep.subr.bf16.mxu0 %v2765
    %2827 = vmatpush1.bf16.msra.mxu0 %v2764
    %2828 = vmatprep.subr.bf16.mxu0 %v2763
    %2829 = vmatpush1.bf16.msra.mxu0 %v2762
    %2830 = vmatprep.subr.bf16.mxu0 %v2761
    %2831 = vmatpush1.bf16.msra.mxu0 %v2760
    %2832 = vmatprep.subr.bf16.mxu0 %v2759
    %2833 = vmatpush1.bf16.msra.mxu0 %v2758
    %2834 = vmatprep.subr.bf16.mxu0 %v2757
    %2835 = vmatpush1.bf16.msra.mxu0 %v2756
    %2836 = vmatprep.subr.bf16.mxu0 %v2787
    %2837 = vmatpush2.bf16.msra.mxu0 %v2786
    %2838 = vmatprep.subr.bf16.mxu0 %v2785
    %2839 = vmatpush2.bf16.msra.mxu0 %v2784
    %2840 = vmatprep.subr.bf16.mxu0 %v2783
    %2841 = vmatpush2.bf16.msra.mxu0 %v2782
    %2842 = vmatprep.subr.bf16.mxu0 %v2781
    %2843 = vmatpush2.bf16.msra.mxu0 %v2780
    %2844 = vmatprep.subr.bf16.mxu0 %v2779
    %2845 = vmatpush2.bf16.msra.mxu0 %v2778
    %2846 = vmatprep.subr.bf16.mxu0 %v2777
    %2847 = vmatpush2.bf16.msra.mxu0 %v2776
    %2848 = vmatprep.subr.bf16.mxu0 %v2775
    %2849 = vmatpush2.bf16.msra.mxu0 %v2774
    %2850 = vmatprep.subr.bf16.mxu0 %v2773
    %2851 = vmatpush2.bf16.msra.mxu0 %v2772
    %2852 = vmatprep.mubr.bf16.mxu0 %v2624
    %2853 = vmatmul.mubr.bf16.gmra.mxu0 %v2623
    %v2854 = vpop.f32.mrf.mxu0
    %v2855 = vadd.f32 0.0, %v2854
    %v2856 = vpop.f32.mrf.mxu0
    %v2857 = vadd.f32 0.0, %v2856
    %v2858 = vpop.f32.mrf.mxu0
    %v2859 = vadd.f32 0.0, %v2858
    %v2860 = vpop.f32.mrf.mxu0
    %v2861 = vadd.f32 0.0, %v2860
    %2862 = vmatprep.mubr.bf16.mxu0 %v2626
    %2863 = vmatmul.mubr.bf16.gmra.mxu0 %v2625
    %v2864 = vpop.f32.mrf.mxu0
    %v2865 = vadd.f32 0.0, %v2864
    %v2866 = vpop.f32.mrf.mxu0
    %v2867 = vadd.f32 0.0, %v2866
    %v2868 = vpop.f32.mrf.mxu0
    %v2869 = vadd.f32 0.0, %v2868
    %v2870 = vpop.f32.mrf.mxu0
    %v2871 = vadd.f32 0.0, %v2870
    %2872 = vdwg.mxu0
    %v2873 = vadd.f32 %v2531, %v2855
    %v2874 = vadd.f32 %v2533, %v2857
    %v2875 = vadd.f32 %v2535, %v2859
    %v2876 = vadd.f32 %v2537, %v2861
    %v2877 = vadd.f32 %v2541, %v2865
    %v2878 = vadd.f32 %v2543, %v2867
    %v2879 = vadd.f32 %v2545, %v2869
    %v2880 = vadd.f32 %v2547, %v2871
    %s2881 = scalar_lea.vmem [#allocation7], 48
    %v2882 = vld [vmem:[%s2881] sm:$0xf]
    %v2883 = vld [vmem:[%s2881 + $0x4] sm:$0xf]
    %v2884 = vld [vmem:[%s2881 + $0x8] sm:$0xf]
    %v2885 = vld [vmem:[%s2881 + $0xc] sm:$0xf]
    %v2890 = vunpack.c.l.b16 %v2882
    %v2891 = vunpack.c.l.b16 %v2883
    %v2892 = vunpack.c.l.b16 %v2884
    %v2893 = vunpack.c.l.b16 %v2885
    %v2894 = vpack.c.b16 %v2891, %v2890
    %v2895 = vpack.c.b16 %v2893, %v2892
    %v2897 = vsel %vm808, %v2894, 0
    %v2900 = vsel %vm808, %v2895, 0
    %2902 = vmatprep.subr.bf16.mxu0 0
    %2903 = vmatpush1.bf16.msra.mxu0 0
    %2904 = vmatprep.subr.bf16.mxu0 0
    %2905 = vmatpush1.bf16.msra.mxu0 0
    %2906 = vmatprep.subr.bf16.mxu0 0
    %2907 = vmatpush1.bf16.msra.mxu0 0
    %2908 = vmatprep.subr.bf16.mxu0 0
    %2909 = vmatpush1.bf16.msra.mxu0 0
    %2910 = vmatprep.subr.bf16.mxu0 %v1902
    %2911 = vmatpush1.bf16.msra.mxu0 %v1901
    %2912 = vmatprep.subr.bf16.mxu0 %v1900
    %2913 = vmatpush1.bf16.msra.mxu0 %v1899
    %2914 = vmatprep.subr.bf16.mxu0 %v1898
    %2915 = vmatpush1.bf16.msra.mxu0 %v1897
    %2916 = vmatprep.subr.bf16.mxu0 %v1896
    %2917 = vmatpush1.bf16.msra.mxu0 %v1895
    %2918 = vmatprep.subr.bf16.mxu0 0
    %2919 = vmatpush2.bf16.msra.mxu0 0
    %2920 = vmatprep.subr.bf16.mxu0 0
    %2921 = vmatpush2.bf16.msra.mxu0 0
    %2922 = vmatprep.subr.bf16.mxu0 0
    %2923 = vmatpush2.bf16.msra.mxu0 0
    %2924 = vmatprep.subr.bf16.mxu0 0
    %2925 = vmatpush2.bf16.msra.mxu0 0
    %2926 = vmatprep.subr.bf16.mxu0 0
    %2927 = vmatpush2.bf16.msra.mxu0 0
    %2928 = vmatprep.subr.bf16.mxu0 0
    %2929 = vmatpush2.bf16.msra.mxu0 0
    %2930 = vmatprep.subr.bf16.mxu0 0
    %2931 = vmatpush2.bf16.msra.mxu0 0
    %2932 = vmatprep.subr.bf16.mxu0 0
    %2933 = vmatpush2.bf16.msra.mxu0 0
    %2934 = vmatprep.mubr.bf16.mxu0 0
    %2935 = vmatmul.mubr.bf16.gmra.mxu0 %v2897
    %v2936 = vpop.f32.mrf.mxu0
    %v2937 = vadd.f32 0.0, %v2936
    %v2938 = vpop.f32.mrf.mxu0
    %v2939 = vadd.f32 0.0, %v2938
    %v2940 = vpop.f32.mrf.mxu0
    %v2941 = vadd.f32 0.0, %v2940
    %v2942 = vpop.f32.mrf.mxu0
    %v2943 = vadd.f32 0.0, %v2942
    %2944 = vmatprep.mubr.bf16.mxu0 0
    %2945 = vmatmul.mubr.bf16.gmra.mxu0 %v2900
    %v2946 = vpop.f32.mrf.mxu0
    %v2947 = vadd.f32 0.0, %v2946
    %v2948 = vpop.f32.mrf.mxu0
    %v2949 = vadd.f32 0.0, %v2948
    %v2950 = vpop.f32.mrf.mxu0
    %v2951 = vadd.f32 0.0, %v2950
    %v2952 = vpop.f32.mrf.mxu0
    %v2953 = vadd.f32 0.0, %v2952
    %2954 = vdwg.mxu0
    %v2955 = vpack.c.bf16 %v2941, %v2937
    %v2956 = vpack.c.bf16 %v2943, %v2939
    %v2957 = vpack.c.bf16 %v2951, %v2947
    %v2958 = vpack.c.bf16 %v2953, %v2949
    %s2959 = scalar_lea.vmem %s5, 768
    %v2960 = vld [vmem:[%s2959] sm:$0xff]
    %v2961 = vld [vmem:[%s2959 + $0x8] sm:$0xff]
    %v2962 = vld [vmem:[%s2959 + $0x10] sm:$0xff]
    %v2963 = vld [vmem:[%s2959 + $0x18] sm:$0xff]
    %v2964 = vld [vmem:[%s2959 + $0x20] sm:$0xff]
    %v2965 = vld [vmem:[%s2959 + $0x28] sm:$0xff]
    %v2966 = vld [vmem:[%s2959 + $0x30] sm:$0xff]
    %v2967 = vld [vmem:[%s2959 + $0x38] sm:$0xff]
    %v2968 = vld [vmem:[%s2959 + $0x40] sm:$0xff]
    %v2969 = vld [vmem:[%s2959 + $0x48] sm:$0xff]
    %v2970 = vld [vmem:[%s2959 + $0x50] sm:$0xff]
    %v2971 = vld [vmem:[%s2959 + $0x58] sm:$0xff]
    %v2972 = vld [vmem:[%s2959 + $0x60] sm:$0xff]
    %v2973 = vld [vmem:[%s2959 + $0x68] sm:$0xff]
    %v2974 = vld [vmem:[%s2959 + $0x70] sm:$0xff]
    %v2975 = vld [vmem:[%s2959 + $0x78] sm:$0xff]
    %v2976 = vld [vmem:[%s2959 + $0x80] sm:$0xff]
    %v2977 = vld [vmem:[%s2959 + $0x88] sm:$0xff]
    %v2978 = vld [vmem:[%s2959 + $0x90] sm:$0xff]
    %v2979 = vld [vmem:[%s2959 + $0x98] sm:$0xff]
    %v2980 = vld [vmem:[%s2959 + $0xa0] sm:$0xff]
    %v2981 = vld [vmem:[%s2959 + $0xa8] sm:$0xff]
    %v2982 = vld [vmem:[%s2959 + $0xb0] sm:$0xff]
    %v2983 = vld [vmem:[%s2959 + $0xb8] sm:$0xff]
    %v2984 = vld [vmem:[%s2959 + $0xc0] sm:$0xff]
    %v2985 = vld [vmem:[%s2959 + $0xc8] sm:$0xff]
    %v2986 = vld [vmem:[%s2959 + $0xd0] sm:$0xff]
    %v2987 = vld [vmem:[%s2959 + $0xd8] sm:$0xff]
    %v2988 = vld [vmem:[%s2959 + $0xe0] sm:$0xff]
    %v2989 = vld [vmem:[%s2959 + $0xe8] sm:$0xff]
    %v2990 = vld [vmem:[%s2959 + $0xf0] sm:$0xff]
    %v2991 = vld [vmem:[%s2959 + $0xf8] sm:$0xff]
    %v3024 = vunpack.c.l.b16 %v2960
    %v3025 = vunpack.c.h.b16 %v2960
    %v3026 = vunpack.c.l.b16 %v2961
    %v3027 = vunpack.c.h.b16 %v2961
    %v3028 = vunpack.c.l.b16 %v2962
    %v3029 = vunpack.c.h.b16 %v2962
    %v3030 = vunpack.c.l.b16 %v2963
    %v3031 = vunpack.c.h.b16 %v2963
    %v3032 = vunpack.c.l.b16 %v2964
    %v3033 = vunpack.c.h.b16 %v2964
    %v3034 = vunpack.c.l.b16 %v2965
    %v3035 = vunpack.c.h.b16 %v2965
    %v3036 = vunpack.c.l.b16 %v2966
    %v3037 = vunpack.c.h.b16 %v2966
    %v3038 = vunpack.c.l.b16 %v2967
    %v3039 = vunpack.c.h.b16 %v2967
    %v3040 = vunpack.c.l.b16 %v2968
    %v3041 = vunpack.c.h.b16 %v2968
    %v3042 = vunpack.c.l.b16 %v2969
    %v3043 = vunpack.c.h.b16 %v2969
    %v3044 = vunpack.c.l.b16 %v2970
    %v3045 = vunpack.c.h.b16 %v2970
    %v3046 = vunpack.c.l.b16 %v2971
    %v3047 = vunpack.c.h.b16 %v2971
    %v3048 = vunpack.c.l.b16 %v2972
    %v3049 = vunpack.c.h.b16 %v2972
    %v3050 = vunpack.c.l.b16 %v2973
    %v3051 = vunpack.c.h.b16 %v2973
    %v3052 = vunpack.c.l.b16 %v2974
    %v3053 = vunpack.c.h.b16 %v2974
    %v3054 = vunpack.c.l.b16 %v2975
    %v3055 = vunpack.c.h.b16 %v2975
    %v3056 = vunpack.c.l.b16 %v2976
    %v3057 = vunpack.c.h.b16 %v2976
    %v3058 = vunpack.c.l.b16 %v2977
    %v3059 = vunpack.c.h.b16 %v2977
    %v3060 = vunpack.c.l.b16 %v2978
    %v3061 = vunpack.c.h.b16 %v2978
    %v3062 = vunpack.c.l.b16 %v2979
    %v3063 = vunpack.c.h.b16 %v2979
    %v3064 = vunpack.c.l.b16 %v2980
    %v3065 = vunpack.c.h.b16 %v2980
    %v3066 = vunpack.c.l.b16 %v2981
    %v3067 = vunpack.c.h.b16 %v2981
    %v3068 = vunpack.c.l.b16 %v2982
    %v3069 = vunpack.c.h.b16 %v2982
    %v3070 = vunpack.c.l.b16 %v2983
    %v3071 = vunpack.c.h.b16 %v2983
    %v3072 = vunpack.c.l.b16 %v2984
    %v3073 = vunpack.c.h.b16 %v2984
    %v3074 = vunpack.c.l.b16 %v2985
    %v3075 = vunpack.c.h.b16 %v2985
    %v3076 = vunpack.c.l.b16 %v2986
    %v3077 = vunpack.c.h.b16 %v2986
    %v3078 = vunpack.c.l.b16 %v2987
    %v3079 = vunpack.c.h.b16 %v2987
    %v3080 = vunpack.c.l.b16 %v2988
    %v3081 = vunpack.c.h.b16 %v2988
    %v3082 = vunpack.c.l.b16 %v2989
    %v3083 = vunpack.c.h.b16 %v2989
    %v3084 = vunpack.c.l.b16 %v2990
    %v3085 = vunpack.c.h.b16 %v2990
    %v3086 = vunpack.c.l.b16 %v2991
    %v3087 = vunpack.c.h.b16 %v2991
    %v3088 = vpack.c.b16 %v3026, %v3024
    %v3089 = vpack.c.b16 %v3027, %v3025
    %v3090 = vpack.c.b16 %v3030, %v3028
    %v3091 = vpack.c.b16 %v3031, %v3029
    %v3092 = vpack.c.b16 %v3034, %v3032
    %v3093 = vpack.c.b16 %v3035, %v3033
    %v3094 = vpack.c.b16 %v3038, %v3036
    %v3095 = vpack.c.b16 %v3039, %v3037
    %v3096 = vpack.c.b16 %v3042, %v3040
    %v3097 = vpack.c.b16 %v3043, %v3041
    %v3098 = vpack.c.b16 %v3046, %v3044
    %v3099 = vpack.c.b16 %v3047, %v3045
    %v3100 = vpack.c.b16 %v3050, %v3048
    %v3101 = vpack.c.b16 %v3051, %v3049
    %v3102 = vpack.c.b16 %v3054, %v3052
    %v3103 = vpack.c.b16 %v3055, %v3053
    %v3104 = vpack.c.b16 %v3058, %v3056
    %v3105 = vpack.c.b16 %v3059, %v3057
    %v3106 = vpack.c.b16 %v3062, %v3060
    %v3107 = vpack.c.b16 %v3063, %v3061
    %v3108 = vpack.c.b16 %v3066, %v3064
    %v3109 = vpack.c.b16 %v3067, %v3065
    %v3110 = vpack.c.b16 %v3070, %v3068
    %v3111 = vpack.c.b16 %v3071, %v3069
    %v3112 = vpack.c.b16 %v3074, %v3072
    %v3113 = vpack.c.b16 %v3075, %v3073
    %v3114 = vpack.c.b16 %v3078, %v3076
    %v3115 = vpack.c.b16 %v3079, %v3077
    %v3116 = vpack.c.b16 %v3082, %v3080
    %v3117 = vpack.c.b16 %v3083, %v3081
    %v3118 = vpack.c.b16 %v3086, %v3084
    %v3119 = vpack.c.b16 %v3087, %v3085
    %3152 = vmatprep.subr.bf16.mxu0 %v3103
    %3153 = vmatpush1.bf16.msra.mxu0 %v3102
    %3154 = vmatprep.subr.bf16.mxu0 %v3101
    %3155 = vmatpush1.bf16.msra.mxu0 %v3100
    %3156 = vmatprep.subr.bf16.mxu0 %v3099
    %3157 = vmatpush1.bf16.msra.mxu0 %v3098
    %3158 = vmatprep.subr.bf16.mxu0 %v3097
    %3159 = vmatpush1.bf16.msra.mxu0 %v3096
    %3160 = vmatprep.subr.bf16.mxu0 %v3095
    %3161 = vmatpush1.bf16.msra.mxu0 %v3094
    %3162 = vmatprep.subr.bf16.mxu0 %v3093
    %3163 = vmatpush1.bf16.msra.mxu0 %v3092
    %3164 = vmatprep.subr.bf16.mxu0 %v3091
    %3165 = vmatpush1.bf16.msra.mxu0 %v3090
    %3166 = vmatprep.subr.bf16.mxu0 %v3089
    %3167 = vmatpush1.bf16.msra.mxu0 %v3088
    %3168 = vmatprep.subr.bf16.mxu0 %v3119
    %3169 = vmatpush2.bf16.msra.mxu0 %v3118
    %3170 = vmatprep.subr.bf16.mxu0 %v3117
    %3171 = vmatpush2.bf16.msra.mxu0 %v3116
    %3172 = vmatprep.subr.bf16.mxu0 %v3115
    %3173 = vmatpush2.bf16.msra.mxu0 %v3114
    %3174 = vmatprep.subr.bf16.mxu0 %v3113
    %3175 = vmatpush2.bf16.msra.mxu0 %v3112
    %3176 = vmatprep.subr.bf16.mxu0 %v3111
    %3177 = vmatpush2.bf16.msra.mxu0 %v3110
    %3178 = vmatprep.subr.bf16.mxu0 %v3109
    %3179 = vmatpush2.bf16.msra.mxu0 %v3108
    %3180 = vmatprep.subr.bf16.mxu0 %v3107
    %3181 = vmatpush2.bf16.msra.mxu0 %v3106
    %3182 = vmatprep.subr.bf16.mxu0 %v3105
    %3183 = vmatpush2.bf16.msra.mxu0 %v3104
    %3184 = vmatprep.mubr.bf16.mxu0 %v2956
    %3185 = vmatmul.mubr.bf16.gmra.mxu0 %v2955
    %v3186 = vpop.f32.mrf.mxu0
    %v3187 = vadd.f32 0.0, %v3186
    %v3188 = vpop.f32.mrf.mxu0
    %v3189 = vadd.f32 0.0, %v3188
    %v3190 = vpop.f32.mrf.mxu0
    %v3191 = vadd.f32 0.0, %v3190
    %v3192 = vpop.f32.mrf.mxu0
    %v3193 = vadd.f32 0.0, %v3192
    %3194 = vmatprep.mubr.bf16.mxu0 %v2958
    %3195 = vmatmul.mubr.bf16.gmra.mxu0 %v2957
    %v3196 = vpop.f32.mrf.mxu0
    %v3197 = vadd.f32 0.0, %v3196
    %v3198 = vpop.f32.mrf.mxu0
    %v3199 = vadd.f32 0.0, %v3198
    %v3200 = vpop.f32.mrf.mxu0
    %v3201 = vadd.f32 0.0, %v3200
    %v3202 = vpop.f32.mrf.mxu0
    %v3203 = vadd.f32 0.0, %v3202
    %3204 = vdwg.mxu0
    %v3205 = vadd.f32 %v2873, %v3187
    %v3206 = vadd.f32 %v2874, %v3189
    %v3207 = vadd.f32 %v2875, %v3191
    %v3208 = vadd.f32 %v2876, %v3193
    %v3209 = vadd.f32 %v2877, %v3197
    %v3210 = vadd.f32 %v2878, %v3199
    %v3211 = vadd.f32 %v2879, %v3201
    %v3212 = vadd.f32 %v2880, %v3203
    %v3213 = vld [vmem:[#allocation8] sm:$0x3]
    %v3215 = vlaneseq
    %v3216 = vshrl.u32 %v3215, 7
    %v3217 = vsub.s32 0, %v3216
    %v3218 = vrot.slane %v3213, %v3217
    %v3219 = vlaneseq
    %v3220 = vshrl.u32 %v3219, 7
    %v3221 = vsub.s32 1, %v3220
    %v3222 = vrot.slane %v3213, %v3221
    %v3225 = vadd.f32 %v3205, %v3218
    %v3226 = vadd.f32 %v3206, %v3222
    %v3227 = vadd.f32 %v3207, %v3218
    %v3228 = vadd.f32 %v3208, %v3222
    %v3229 = vadd.f32 %v3209, %v3218
    %v3230 = vadd.f32 %v3210, %v3222
    %v3231 = vadd.f32 %v3211, %v3218
    %v3232 = vadd.f32 %v3212, %v3222
    %v3233 = vld [vmem:[%s9] sm:$0xff]
    %v3234 = vld [vmem:[%s9 + $0x8] sm:$0xff]
    %v3235 = vld [vmem:[%s9 + $0x10] sm:$0xff]
    %v3236 = vld [vmem:[%s9 + $0x18] sm:$0xff]
    %v3237 = vld [vmem:[%s9 + $0x20] sm:$0xff]
    %v3238 = vld [vmem:[%s9 + $0x28] sm:$0xff]
    %v3239 = vld [vmem:[%s9 + $0x30] sm:$0xff]
    %v3240 = vld [vmem:[%s9 + $0x38] sm:$0xff]
    %v3241 = vld [vmem:[%s9 + $0x40] sm:$0xff]
    %v3242 = vld [vmem:[%s9 + $0x48] sm:$0xff]
    %v3243 = vld [vmem:[%s9 + $0x50] sm:$0xff]
    %v3244 = vld [vmem:[%s9 + $0x58] sm:$0xff]
    %v3245 = vld [vmem:[%s9 + $0x60] sm:$0xff]
    %v3246 = vld [vmem:[%s9 + $0x68] sm:$0xff]
    %v3247 = vld [vmem:[%s9 + $0x70] sm:$0xff]
    %v3248 = vld [vmem:[%s9 + $0x78] sm:$0xff]
    %v3249 = vld [vmem:[%s9 + $0x80] sm:$0xff]
    %v3250 = vld [vmem:[%s9 + $0x88] sm:$0xff]
    %v3251 = vld [vmem:[%s9 + $0x90] sm:$0xff]
    %v3252 = vld [vmem:[%s9 + $0x98] sm:$0xff]
    %v3253 = vld [vmem:[%s9 + $0xa0] sm:$0xff]
    %v3254 = vld [vmem:[%s9 + $0xa8] sm:$0xff]
    %v3255 = vld [vmem:[%s9 + $0xb0] sm:$0xff]
    %v3256 = vld [vmem:[%s9 + $0xb8] sm:$0xff]
    %v3257 = vld [vmem:[%s9 + $0xc0] sm:$0xff]
    %v3258 = vld [vmem:[%s9 + $0xc8] sm:$0xff]
    %v3259 = vld [vmem:[%s9 + $0xd0] sm:$0xff]
    %v3260 = vld [vmem:[%s9 + $0xd8] sm:$0xff]
    %v3261 = vld [vmem:[%s9 + $0xe0] sm:$0xff]
    %v3262 = vld [vmem:[%s9 + $0xe8] sm:$0xff]
    %v3263 = vld [vmem:[%s9 + $0xf0] sm:$0xff]
    %v3264 = vld [vmem:[%s9 + $0xf8] sm:$0xff]
    %v3265 = vld [vmem:[#allocation13] sm:$0xff]
    %v3266 = vld [vmem:[#allocation13 + $0x8] sm:$0xff]
    %v3267 = vld [vmem:[#allocation13 + $0x10] sm:$0xff]
    %v3268 = vld [vmem:[#allocation13 + $0x18] sm:$0xff]
    %v3269 = vadd.f32 %v3225, %v3227
    %v3270 = vadd.f32 %v3269, %v3229
    %v3271 = vadd.f32 %v3270, %v3231
    %v3272 = vrot.slane %v3271, 4
    %v3273 = vadd.f32 %v3271, %v3272
    %v3274 = vrot.slane %v3273, 2
    %v3275 = vadd.f32 %v3273, %v3274
    %v3276 = vrot.slane %v3275, 1
    %v3277 = vadd.f32 %v3275, %v3276
    %v3278 = vadd.f32 %v3226, %v3228
    %v3279 = vadd.f32 %v3278, %v3230
    %v3280 = vadd.f32 %v3279, %v3232
    %v3281 = vrot.slane %v3280, 4
    %v3282 = vadd.f32 %v3280, %v3281
    %v3283 = vrot.slane %v3282, 2
    %v3284 = vadd.f32 %v3282, %v3283
    %v3285 = vrot.slane %v3284, 1
    %v3286 = vadd.f32 %v3284, %v3285
    %3287 = vmatprep.subr.mxu0 0.0
    %3288 = vmatpush1.msra.mxu0 %v3248
    %3289 = vmatprep.subr.mxu0 0.0
    %3290 = vmatpush1.msra.mxu0 %v3247
    %3291 = vmatprep.subr.mxu0 0.0
    %3292 = vmatpush1.msra.mxu0 %v3246
    %3293 = vmatprep.subr.mxu0 0.0
    %3294 = vmatpush1.msra.mxu0 %v3245
    %3295 = vmatprep.subr.mxu0 0.0
    %3296 = vmatpush1.msra.mxu0 %v3244
    %3297 = vmatprep.subr.mxu0 0.0
    %3298 = vmatpush1.msra.mxu0 %v3243
    %3299 = vmatprep.subr.mxu0 0.0
    %3300 = vmatpush1.msra.mxu0 %v3242
    %3301 = vmatprep.subr.mxu0 0.0
    %3302 = vmatpush1.msra.mxu0 %v3241
    %3303 = vmatprep.subr.mxu0 0.0
    %3304 = vmatpush1.msra.mxu0 %v3240
    %3305 = vmatprep.subr.mxu0 0.0
    %3306 = vmatpush1.msra.mxu0 %v3239
    %3307 = vmatprep.subr.mxu0 0.0
    %3308 = vmatpush1.msra.mxu0 %v3238
    %3309 = vmatprep.subr.mxu0 0.0
    %3310 = vmatpush1.msra.mxu0 %v3237
    %3311 = vmatprep.subr.mxu0 0.0
    %3312 = vmatpush1.msra.mxu0 %v3236
    %3313 = vmatprep.subr.mxu0 0.0
    %3314 = vmatpush1.msra.mxu0 %v3235
    %3315 = vmatprep.subr.mxu0 0.0
    %3316 = vmatpush1.msra.mxu0 %v3234
    %3317 = vmatprep.subr.mxu0 0.0
    %3318 = vmatpush1.msra.mxu0 %v3233
    %3319 = vmatprep.subr.mxu0 0.0
    %3320 = vmatpush2.msra.mxu0 %v3264
    %3321 = vmatprep.subr.mxu0 0.0
    %3322 = vmatpush2.msra.mxu0 %v3263
    %3323 = vmatprep.subr.mxu0 0.0
    %3324 = vmatpush2.msra.mxu0 %v3262
    %3325 = vmatprep.subr.mxu0 0.0
    %3326 = vmatpush2.msra.mxu0 %v3261
    %3327 = vmatprep.subr.mxu0 0.0
    %3328 = vmatpush2.msra.mxu0 %v3260
    %3329 = vmatprep.subr.mxu0 0.0
    %3330 = vmatpush2.msra.mxu0 %v3259
    %3331 = vmatprep.subr.mxu0 0.0
    %3332 = vmatpush2.msra.mxu0 %v3258
    %3333 = vmatprep.subr.mxu0 0.0
    %3334 = vmatpush2.msra.mxu0 %v3257
    %3335 = vmatprep.subr.mxu0 0.0
    %3336 = vmatpush2.msra.mxu0 %v3256
    %3337 = vmatprep.subr.mxu0 0.0
    %3338 = vmatpush2.msra.mxu0 %v3255
    %3339 = vmatprep.subr.mxu0 0.0
    %3340 = vmatpush2.msra.mxu0 %v3254
    %3341 = vmatprep.subr.mxu0 0.0
    %3342 = vmatpush2.msra.mxu0 %v3253
    %3343 = vmatprep.subr.mxu0 0.0
    %3344 = vmatpush2.msra.mxu0 %v3252
    %3345 = vmatprep.subr.mxu0 0.0
    %3346 = vmatpush2.msra.mxu0 %v3251
    %3347 = vmatprep.subr.mxu0 0.0
    %3348 = vmatpush2.msra.mxu0 %v3250
    %3349 = vmatprep.subr.mxu0 0.0
    %3350 = vmatpush2.msra.mxu0 %v3249
    %3351 = vmatprep.mubr.f32.mxu0 %v3286
    %3352 = vmatmul.mubr.f32.gmra.mxu0 %v3277
    %v3353 = vpop.f32.mrf.mxu0
    %v3354 = vadd.f32 0.0, %v3353
    %v3355 = vpop.f32.mrf.mxu0
    %3356 = vdwg.mxu0
    %v3357 = vmul.f32 %v3354, 0.001953125
    %vm3358 = vcmask 130048
    %v3360 = vsel %vm3358, %v3357, 0
    %3362 = vmatprep.subr.mxu0 0.0
    %3363 = vmatpush1.msra.mxu0 0.0
    %3364 = vmatprep.subr.mxu0 0.0
    %3365 = vmatpush1.msra.mxu0 0.0
    %3366 = vmatprep.subr.mxu0 0.0
    %3367 = vmatpush1.msra.mxu0 0.0
    %3368 = vmatprep.subr.mxu0 0.0
    %3369 = vmatpush1.msra.mxu0 0.0
    %3370 = vmatprep.subr.mxu0 0.0
    %3371 = vmatpush1.msra.mxu0 0.0
    %3372 = vmatprep.subr.mxu0 0.0
    %3373 = vmatpush1.msra.mxu0 0.0
    %3374 = vmatprep.subr.mxu0 0.0
    %3375 = vmatpush1.msra.mxu0 0.0
    %3376 = vmatprep.subr.mxu0 0.0
    %3377 = vmatpush1.msra.mxu0 0.0
    %3378 = vmatprep.subr.mxu0 0.0
    %3379 = vmatpush1.msra.mxu0 0.0
    %3380 = vmatprep.subr.mxu0 0.0
    %3381 = vmatpush1.msra.mxu0 0.0
    %3382 = vmatprep.subr.mxu0 0.0
    %3383 = vmatpush1.msra.mxu0 0.0
    %3384 = vmatprep.subr.mxu0 0.0
    %3385 = vmatpush1.msra.mxu0 0.0
    %3386 = vmatprep.subr.mxu0 0.0
    %3387 = vmatpush1.msra.mxu0 0.0
    %3388 = vmatprep.subr.mxu0 0.0
    %3389 = vmatpush1.msra.mxu0 0.0
    %3390 = vmatprep.subr.mxu0 %v3268
    %3391 = vmatpush1.msra.mxu0 %v3267
    %3392 = vmatprep.subr.mxu0 %v3266
    %3393 = vmatpush1.msra.mxu0 %v3265
    %3394 = vmatprep.subr.mxu0 0.0
    %3395 = vmatpush2.msra.mxu0 0.0
    %3396 = vmatprep.subr.mxu0 0.0
    %3397 = vmatpush2.msra.mxu0 0.0
    %3398 = vmatprep.subr.mxu0 0.0
    %3399 = vmatpush2.msra.mxu0 0.0
    %3400 = vmatprep.subr.mxu0 0.0
    %3401 = vmatpush2.msra.mxu0 0.0
    %3402 = vmatprep.subr.mxu0 0.0
    %3403 = vmatpush2.msra.mxu0 0.0
    %3404 = vmatprep.subr.mxu0 0.0
    %3405 = vmatpush2.msra.mxu0 0.0
    %3406 = vmatprep.subr.mxu0 0.0
    %3407 = vmatpush2.msra.mxu0 0.0
    %3408 = vmatprep.subr.mxu0 0.0
    %3409 = vmatpush2.msra.mxu0 0.0
    %3410 = vmatprep.subr.mxu0 0.0
    %3411 = vmatpush2.msra.mxu0 0.0
    %3412 = vmatprep.subr.mxu0 0.0
    %3413 = vmatpush2.msra.mxu0 0.0
    %3414 = vmatprep.subr.mxu0 0.0
    %3415 = vmatpush2.msra.mxu0 0.0
    %3416 = vmatprep.subr.mxu0 0.0
    %3417 = vmatpush2.msra.mxu0 0.0
    %3418 = vmatprep.subr.mxu0 0.0
    %3419 = vmatpush2.msra.mxu0 0.0
    %3420 = vmatprep.subr.mxu0 0.0
    %3421 = vmatpush2.msra.mxu0 0.0
    %3422 = vmatprep.subr.mxu0 0.0
    %3423 = vmatpush2.msra.mxu0 0.0
    %3424 = vmatprep.subr.mxu0 0.0
    %3425 = vmatpush2.msra.mxu0 0.0
    %3426 = vmatprep.mubr.f32.mxu0 0.0
    %3427 = vmatmul.mubr.f32.gmra.mxu0 %v3360
    %v3428 = vpop.f32.mrf.mxu0
    %v3429 = vadd.f32 0.0, %v3428
    %v3430 = vpop.f32.mrf.mxu0
    %v3431 = vadd.f32 0.0, %v3430
    %3432 = vdwg.mxu0
    %v3433 = vlaneseq
    %v3434 = vshrl.u32 %v3433, 7
    %v3435 = vsub.s32 0, %v3434
    %v3436 = vrot.slane %v3429, %v3435
    %v3437 = vlaneseq
    %v3438 = vshrl.u32 %v3437, 7
    %v3439 = vsub.s32 0, %v3438
    %v3440 = vrot.slane %v3431, %v3439
    %v3441 = vsub.f32 %v3225, %v3436
    %v3442 = vsub.f32 %v3226, %v3440
    %v3443 = vsub.f32 %v3227, %v3436
    %v3444 = vsub.f32 %v3228, %v3440
    %v3445 = vsub.f32 %v3229, %v3436
    %v3446 = vsub.f32 %v3230, %v3440
    %v3447 = vsub.f32 %v3231, %v3436
    %v3448 = vsub.f32 %v3232, %v3440
    %v3449 = vmul.f32 %v3441, %v3441
    %v3450 = vmul.f32 %v3442, %v3442
    %v3451 = vmul.f32 %v3443, %v3443
    %v3452 = vmul.f32 %v3444, %v3444
    %v3453 = vmul.f32 %v3445, %v3445
    %v3454 = vmul.f32 %v3446, %v3446
    %v3455 = vmul.f32 %v3447, %v3447
    %v3456 = vmul.f32 %v3448, %v3448
    %v3457 = vadd.f32 %v3449, %v3451
    %v3458 = vadd.f32 %v3457, %v3453
    %v3459 = vadd.f32 %v3458, %v3455
    %v3460 = vrot.slane %v3459, 4
    %v3461 = vadd.f32 %v3459, %v3460
    %v3462 = vrot.slane %v3461, 2
    %v3463 = vadd.f32 %v3461, %v3462
    %v3464 = vrot.slane %v3463, 1
    %v3465 = vadd.f32 %v3463, %v3464
    %v3466 = vadd.f32 %v3450, %v3452
    %v3467 = vadd.f32 %v3466, %v3454
    %v3468 = vadd.f32 %v3467, %v3456
    %v3469 = vrot.slane %v3468, 4
    %v3470 = vadd.f32 %v3468, %v3469
    %v3471 = vrot.slane %v3470, 2
    %v3472 = vadd.f32 %v3470, %v3471
    %v3473 = vrot.slane %v3472, 1
    %v3474 = vadd.f32 %v3472, %v3473
    %3475 = vmatprep.subr.mxu0 0.0
    %3476 = vmatpush1.msra.mxu0 %v3248
    %3477 = vmatprep.subr.mxu0 0.0
    %3478 = vmatpush1.msra.mxu0 %v3247
    %3479 = vmatprep.subr.mxu0 0.0
    %3480 = vmatpush1.msra.mxu0 %v3246
    %3481 = vmatprep.subr.mxu0 0.0
    %3482 = vmatpush1.msra.mxu0 %v3245
    %3483 = vmatprep.subr.mxu0 0.0
    %3484 = vmatpush1.msra.mxu0 %v3244
    %3485 = vmatprep.subr.mxu0 0.0
    %3486 = vmatpush1.msra.mxu0 %v3243
    %3487 = vmatprep.subr.mxu0 0.0
    %3488 = vmatpush1.msra.mxu0 %v3242
    %3489 = vmatprep.subr.mxu0 0.0
    %3490 = vmatpush1.msra.mxu0 %v3241
    %3491 = vmatprep.subr.mxu0 0.0
    %3492 = vmatpush1.msra.mxu0 %v3240
    %3493 = vmatprep.subr.mxu0 0.0
    %3494 = vmatpush1.msra.mxu0 %v3239
    %3495 = vmatprep.subr.mxu0 0.0
    %3496 = vmatpush1.msra.mxu0 %v3238
    %3497 = vmatprep.subr.mxu0 0.0
    %3498 = vmatpush1.msra.mxu0 %v3237
    %3499 = vmatprep.subr.mxu0 0.0
    %3500 = vmatpush1.msra.mxu0 %v3236
    %3501 = vmatprep.subr.mxu0 0.0
    %3502 = vmatpush1.msra.mxu0 %v3235
    %3503 = vmatprep.subr.mxu0 0.0
    %3504 = vmatpush1.msra.mxu0 %v3234
    %3505 = vmatprep.subr.mxu0 0.0
    %3506 = vmatpush1.msra.mxu0 %v3233
    %3507 = vmatprep.subr.mxu0 0.0
    %3508 = vmatpush2.msra.mxu0 %v3264
    %3509 = vmatprep.subr.mxu0 0.0
    %3510 = vmatpush2.msra.mxu0 %v3263
    %3511 = vmatprep.subr.mxu0 0.0
    %3512 = vmatpush2.msra.mxu0 %v3262
    %3513 = vmatprep.subr.mxu0 0.0
    %3514 = vmatpush2.msra.mxu0 %v3261
    %3515 = vmatprep.subr.mxu0 0.0
    %3516 = vmatpush2.msra.mxu0 %v3260
    %3517 = vmatprep.subr.mxu0 0.0
    %3518 = vmatpush2.msra.mxu0 %v3259
    %3519 = vmatprep.subr.mxu0 0.0
    %3520 = vmatpush2.msra.mxu0 %v3258
    %3521 = vmatprep.subr.mxu0 0.0
    %3522 = vmatpush2.msra.mxu0 %v3257
    %3523 = vmatprep.subr.mxu0 0.0
    %3524 = vmatpush2.msra.mxu0 %v3256
    %3525 = vmatprep.subr.mxu0 0.0
    %3526 = vmatpush2.msra.mxu0 %v3255
    %3527 = vmatprep.subr.mxu0 0.0
    %3528 = vmatpush2.msra.mxu0 %v3254
    %3529 = vmatprep.subr.mxu0 0.0
    %3530 = vmatpush2.msra.mxu0 %v3253
    %3531 = vmatprep.subr.mxu0 0.0
    %3532 = vmatpush2.msra.mxu0 %v3252
    %3533 = vmatprep.subr.mxu0 0.0
    %3534 = vmatpush2.msra.mxu0 %v3251
    %3535 = vmatprep.subr.mxu0 0.0
    %3536 = vmatpush2.msra.mxu0 %v3250
    %3537 = vmatprep.subr.mxu0 0.0
    %3538 = vmatpush2.msra.mxu0 %v3249
    %3539 = vmatprep.mubr.f32.mxu0 %v3474
    %3540 = vmatmul.mubr.f32.gmra.mxu0 %v3465
    %v3541 = vpop.f32.mrf.mxu0
    %v3542 = vadd.f32 0.0, %v3541
    %v3543 = vpop.f32.mrf.mxu0
    %3544 = vdwg.mxu0
    %v3545 = vmul.f32 %v3542, 0.001953125
    %v3546 = vld [vmem:[#allocation10] sm:$0x1]
    %v3547 = vadd.f32 %v3545, 1e-05
    %v3548 = vrsqrt.pop %v3547
    %v3549 = vmul.f32 %v3546, %v3548
    %v3551 = vsel %vm3358, %v3549, 0
    %3553 = vmatprep.subr.mxu0 0.0
    %3554 = vmatpush1.msra.mxu0 0.0
    %3555 = vmatprep.subr.mxu0 0.0
    %3556 = vmatpush1.msra.mxu0 0.0
    %3557 = vmatprep.subr.mxu0 0.0
    %3558 = vmatpush1.msra.mxu0 0.0
    %3559 = vmatprep.subr.mxu0 0.0
    %3560 = vmatpush1.msra.mxu0 0.0
    %3561 = vmatprep.subr.mxu0 0.0
    %3562 = vmatpush1.msra.mxu0 0.0
    %3563 = vmatprep.subr.mxu0 0.0
    %3564 = vmatpush1.msra.mxu0 0.0
    %3565 = vmatprep.subr.mxu0 0.0
    %3566 = vmatpush1.msra.mxu0 0.0
    %3567 = vmatprep.subr.mxu0 0.0
    %3568 = vmatpush1.msra.mxu0 0.0
    %3569 = vmatprep.subr.mxu0 0.0
    %3570 = vmatpush1.msra.mxu0 0.0
    %3571 = vmatprep.subr.mxu0 0.0
    %3572 = vmatpush1.msra.mxu0 0.0
    %3573 = vmatprep.subr.mxu0 0.0
    %3574 = vmatpush1.msra.mxu0 0.0
    %3575 = vmatprep.subr.mxu0 0.0
    %3576 = vmatpush1.msra.mxu0 0.0
    %3577 = vmatprep.subr.mxu0 0.0
    %3578 = vmatpush1.msra.mxu0 0.0
    %3579 = vmatprep.subr.mxu0 0.0
    %3580 = vmatpush1.msra.mxu0 0.0
    %3581 = vmatprep.subr.mxu0 %v3268
    %3582 = vmatpush1.msra.mxu0 %v3267
    %3583 = vmatprep.subr.mxu0 %v3266
    %3584 = vmatpush1.msra.mxu0 %v3265
    %3585 = vmatprep.subr.mxu0 0.0
    %3586 = vmatpush2.msra.mxu0 0.0
    %3587 = vmatprep.subr.mxu0 0.0
    %3588 = vmatpush2.msra.mxu0 0.0
    %3589 = vmatprep.subr.mxu0 0.0
    %3590 = vmatpush2.msra.mxu0 0.0
    %3591 = vmatprep.subr.mxu0 0.0
    %3592 = vmatpush2.msra.mxu0 0.0
    %3593 = vmatprep.subr.mxu0 0.0
    %3594 = vmatpush2.msra.mxu0 0.0
    %3595 = vmatprep.subr.mxu0 0.0
    %3596 = vmatpush2.msra.mxu0 0.0
    %3597 = vmatprep.subr.mxu0 0.0
    %3598 = vmatpush2.msra.mxu0 0.0
    %3599 = vmatprep.subr.mxu0 0.0
    %3600 = vmatpush2.msra.mxu0 0.0
    %3601 = vmatprep.subr.mxu0 0.0
    %3602 = vmatpush2.msra.mxu0 0.0
    %3603 = vmatprep.subr.mxu0 0.0
    %3604 = vmatpush2.msra.mxu0 0.0
    %3605 = vmatprep.subr.mxu0 0.0
    %3606 = vmatpush2.msra.mxu0 0.0
    %3607 = vmatprep.subr.mxu0 0.0
    %3608 = vmatpush2.msra.mxu0 0.0
    %3609 = vmatprep.subr.mxu0 0.0
    %3610 = vmatpush2.msra.mxu0 0.0
    %3611 = vmatprep.subr.mxu0 0.0
    %3612 = vmatpush2.msra.mxu0 0.0
    %3613 = vmatprep.subr.mxu0 0.0
    %3614 = vmatpush2.msra.mxu0 0.0
    %3615 = vmatprep.subr.mxu0 0.0
    %3616 = vmatpush2.msra.mxu0 0.0
    %3617 = vmatprep.mubr.f32.mxu0 0.0
    %3618 = vmatmul.mubr.f32.gmra.mxu0 %v3551
    %v3619 = vpop.f32.mrf.mxu0
    %v3620 = vadd.f32 0.0, %v3619
    %v3621 = vpop.f32.mrf.mxu0
    %v3622 = vadd.f32 0.0, %v3621
    %3623 = vdwg.mxu0
    %v3624 = vlaneseq
    %v3625 = vshrl.u32 %v3624, 7
    %v3626 = vsub.s32 0, %v3625
    %v3627 = vrot.slane %v3620, %v3626
    %v3628 = vlaneseq
    %v3629 = vshrl.u32 %v3628, 7
    %v3630 = vsub.s32 0, %v3629
    %v3631 = vrot.slane %v3622, %v3630
    %v3632 = vmul.f32 %v3441, %v3627
    %v3633 = vmul.f32 %v3442, %v3631
    %v3634 = vmul.f32 %v3443, %v3627
    %v3635 = vmul.f32 %v3444, %v3631
    %v3636 = vmul.f32 %v3445, %v3627
    %v3637 = vmul.f32 %v3446, %v3631
    %v3638 = vmul.f32 %v3447, %v3627
    %v3639 = vmul.f32 %v3448, %v3631
    %v3640 = vld [vmem:[#allocation11] sm:$0x3]
    %v3642 = vlaneseq
    %v3643 = vshrl.u32 %v3642, 7
    %v3644 = vsub.s32 0, %v3643
    %v3645 = vrot.slane %v3640, %v3644
    %v3646 = vlaneseq
    %v3647 = vshrl.u32 %v3646, 7
    %v3648 = vsub.s32 1, %v3647
    %v3649 = vrot.slane %v3640, %v3648
    %v3652 = vadd.f32 %v3632, %v3645
    %v3653 = vadd.f32 %v3633, %v3649
    %v3654 = vadd.f32 %v3634, %v3645
    %v3655 = vadd.f32 %v3635, %v3649
    %v3656 = vadd.f32 %v3636, %v3645
    %v3657 = vadd.f32 %v3637, %v3649
    %v3658 = vadd.f32 %v3638, %v3645
    %v3659 = vadd.f32 %v3639, %v3649
    %vm3660 = vcmp.ge.f32.partialorder %v3652, 0.0
    %vm3661 = vcmp.ge.f32.partialorder %v3653, 0.0
    %vm3662 = vcmp.ge.f32.partialorder %v3654, 0.0
    %vm3663 = vcmp.ge.f32.partialorder %v3655, 0.0
    %vm3664 = vcmp.ge.f32.partialorder %v3656, 0.0
    %vm3665 = vcmp.ge.f32.partialorder %v3657, 0.0
    %vm3666 = vcmp.ge.f32.partialorder %v3658, 0.0
    %vm3667 = vcmp.ge.f32.partialorder %v3659, 0.0
    %v3668 = vmul.f32 %v3652, 0.2
    %v3669 = vmul.f32 %v3653, 0.2
    %v3670 = vmul.f32 %v3654, 0.2
    %v3671 = vmul.f32 %v3655, 0.2
    %v3672 = vmul.f32 %v3656, 0.2
    %v3673 = vmul.f32 %v3657, 0.2
    %v3674 = vmul.f32 %v3658, 0.2
    %v3675 = vmul.f32 %v3659, 0.2
    %v3676 = vsel %vm3660, %v3652, %v3668
    %v3677 = vsel %vm3661, %v3653, %v3669
    %v3678 = vsel %vm3662, %v3654, %v3670
    %v3679 = vsel %vm3663, %v3655, %v3671
    %v3680 = vsel %vm3664, %v3656, %v3672
    %v3681 = vsel %vm3665, %v3657, %v3673
    %v3682 = vsel %vm3666, %v3658, %v3674
    %v3683 = vsel %vm3667, %v3659, %v3675
    %v3684 = vpack.c.bf16 %v3678, %v3676
    %v3685 = vpack.c.bf16 %v3679, %v3677
    %v3686 = vpack.c.bf16 %v3682, %v3680
    %v3687 = vpack.c.bf16 %v3683, %v3681
    %v3688 = vld [vmem:[#allocation14] sm:$0xf]
    %v3689 = vld [vmem:[#allocation14 + $0x4] sm:$0xf]
    %v3692 = vunpack.c.l.b16 %v3688
    %v3693 = vunpack.c.l.b16 %v3689
    %v3694 = vpack.c.b16 %v3693, %v3692
    %vm3695 = vcmask 261120
    %v3697 = vsel %vm3695, %v3694, 0
    %3699 = vmatprep.subr.bf16.mxu0 0
    %3700 = vmatpush1.bf16.msra.mxu0 0
    %3701 = vmatprep.subr.bf16.mxu0 0
    %3702 = vmatpush1.bf16.msra.mxu0 0
    %3703 = vmatprep.subr.bf16.mxu0 0
    %3704 = vmatpush1.bf16.msra.mxu0 0
    %3705 = vmatprep.subr.bf16.mxu0 0
    %3706 = vmatpush1.bf16.msra.mxu0 0
    %3707 = vmatprep.subr.bf16.mxu0 0
    %3708 = vmatpush1.bf16.msra.mxu0 0
    %3709 = vmatprep.subr.bf16.mxu0 0
    %3710 = vmatpush1.bf16.msra.mxu0 0
    %3711 = vmatprep.subr.bf16.mxu0 %v3687
    %3712 = vmatpush1.bf16.msra.mxu0 %v3686
    %3713 = vmatprep.subr.bf16.mxu0 %v3685
    %3714 = vmatpush1.bf16.msra.mxu0 %v3684
    %3715 = vmatprep.subr.bf16.mxu0 0
    %3716 = vmatpush2.bf16.msra.mxu0 0
    %3717 = vmatprep.subr.bf16.mxu0 0
    %3718 = vmatpush2.bf16.msra.mxu0 0
    %3719 = vmatprep.subr.bf16.mxu0 0
    %3720 = vmatpush2.bf16.msra.mxu0 0
    %3721 = vmatprep.subr.bf16.mxu0 0
    %3722 = vmatpush2.bf16.msra.mxu0 0
    %3723 = vmatprep.subr.bf16.mxu0 0
    %3724 = vmatpush2.bf16.msra.mxu0 0
    %3725 = vmatprep.subr.bf16.mxu0 0
    %3726 = vmatpush2.bf16.msra.mxu0 0
    %3727 = vmatprep.subr.bf16.mxu0 0
    %3728 = vmatpush2.bf16.msra.mxu0 0
    %3729 = vmatprep.subr.bf16.mxu0 0
    %3730 = vmatpush2.bf16.msra.mxu0 0
    %3731 = vmatprep.mubr.bf16.mxu0 0
    %3732 = vmatmul.mubr.bf16.gmra.mxu0 %v3697
    %v3733 = vpop.f32.mrf.mxu0
    %v3734 = vadd.f32 0.0, %v3733
    %v3735 = vpop.f32.mrf.mxu0
    %v3736 = vadd.f32 0.0, %v3735
    %v3737 = vpop.f32.mrf.mxu0
    %v3738 = vadd.f32 0.0, %v3737
    %v3739 = vpop.f32.mrf.mxu0
    %v3740 = vadd.f32 0.0, %v3739
    %3741 = vdwg.mxu0
    %v3742 = vpack.c.bf16 %v3738, %v3734
    %v3743 = vpack.c.bf16 %v3740, %v3736
    %v3744 = vld [vmem:[%s12] sm:$0xff]
    %v3745 = vld [vmem:[%s12 + $0x8] sm:$0xff]
    %v3746 = vld [vmem:[%s12 + $0x10] sm:$0xff]
    %v3747 = vld [vmem:[%s12 + $0x18] sm:$0xff]
    %v3748 = vld [vmem:[%s12 + $0x20] sm:$0xff]
    %v3749 = vld [vmem:[%s12 + $0x28] sm:$0xff]
    %v3750 = vld [vmem:[%s12 + $0x30] sm:$0xff]
    %v3751 = vld [vmem:[%s12 + $0x38] sm:$0xff]
    %v3752 = vld [vmem:[%s12 + $0x40] sm:$0xff]
    %v3753 = vld [vmem:[%s12 + $0x48] sm:$0xff]
    %v3754 = vld [vmem:[%s12 + $0x50] sm:$0xff]
    %v3755 = vld [vmem:[%s12 + $0x58] sm:$0xff]
    %v3756 = vld [vmem:[%s12 + $0x60] sm:$0xff]
    %v3757 = vld [vmem:[%s12 + $0x68] sm:$0xff]
    %v3758 = vld [vmem:[%s12 + $0x70] sm:$0xff]
    %v3759 = vld [vmem:[%s12 + $0x78] sm:$0xff]
    %v3760 = vld [vmem:[%s12 + $0x80] sm:$0xff]
    %v3761 = vld [vmem:[%s12 + $0x88] sm:$0xff]
    %v3762 = vld [vmem:[%s12 + $0x90] sm:$0xff]
    %v3763 = vld [vmem:[%s12 + $0x98] sm:$0xff]
    %v3764 = vld [vmem:[%s12 + $0xa0] sm:$0xff]
    %v3765 = vld [vmem:[%s12 + $0xa8] sm:$0xff]
    %v3766 = vld [vmem:[%s12 + $0xb0] sm:$0xff]
    %v3767 = vld [vmem:[%s12 + $0xb8] sm:$0xff]
    %v3768 = vld [vmem:[%s12 + $0xc0] sm:$0xff]
    %v3769 = vld [vmem:[%s12 + $0xc8] sm:$0xff]
    %v3770 = vld [vmem:[%s12 + $0xd0] sm:$0xff]
    %v3771 = vld [vmem:[%s12 + $0xd8] sm:$0xff]
    %v3772 = vld [vmem:[%s12 + $0xe0] sm:$0xff]
    %v3773 = vld [vmem:[%s12 + $0xe8] sm:$0xff]
    %v3774 = vld [vmem:[%s12 + $0xf0] sm:$0xff]
    %v3775 = vld [vmem:[%s12 + $0xf8] sm:$0xff]
    %s3776 = scalar_lea.vmem [#allocation14], 8
    %v3777 = vld [vmem:[%s3776] sm:$0xf]
    %v3778 = vld [vmem:[%s3776 + $0x4] sm:$0xf]
    %v3781 = vunpack.c.l.b16 %v3777
    %v3782 = vunpack.c.l.b16 %v3778
    %v3783 = vpack.c.b16 %v3782, %v3781
    %v3785 = vsel %vm3695, %v3783, 0
    %3787 = vmatprep.subr.bf16.mxu0 0
    %3788 = vmatpush1.bf16.msra.mxu0 0
    %3789 = vmatprep.subr.bf16.mxu0 0
    %3790 = vmatpush1.bf16.msra.mxu0 0
    %3791 = vmatprep.subr.bf16.mxu0 0
    %3792 = vmatpush1.bf16.msra.mxu0 0
    %3793 = vmatprep.subr.bf16.mxu0 0
    %3794 = vmatpush1.bf16.msra.mxu0 0
    %3795 = vmatprep.subr.bf16.mxu0 0
    %3796 = vmatpush1.bf16.msra.mxu0 0
    %3797 = vmatprep.subr.bf16.mxu0 0
    %3798 = vmatpush1.bf16.msra.mxu0 0
    %3799 = vmatprep.subr.bf16.mxu0 %v3687
    %3800 = vmatpush1.bf16.msra.mxu0 %v3686
    %3801 = vmatprep.subr.bf16.mxu0 %v3685
    %3802 = vmatpush1.bf16.msra.mxu0 %v3684
    %3803 = vmatprep.subr.bf16.mxu0 0
    %3804 = vmatpush2.bf16.msra.mxu0 0
    %3805 = vmatprep.subr.bf16.mxu0 0
    %3806 = vmatpush2.bf16.msra.mxu0 0
    %3807 = vmatprep.subr.bf16.mxu0 0
    %3808 = vmatpush2.bf16.msra.mxu0 0
    %3809 = vmatprep.subr.bf16.mxu0 0
    %3810 = vmatpush2.bf16.msra.mxu0 0
    %3811 = vmatprep.subr.bf16.mxu0 0
    %3812 = vmatpush2.bf16.msra.mxu0 0
    %3813 = vmatprep.subr.bf16.mxu0 0
    %3814 = vmatpush2.bf16.msra.mxu0 0
    %3815 = vmatprep.subr.bf16.mxu0 0
    %3816 = vmatpush2.bf16.msra.mxu0 0
    %3817 = vmatprep.subr.bf16.mxu0 0
    %3818 = vmatpush2.bf16.msra.mxu0 0
    %3819 = vmatprep.mubr.bf16.mxu0 0
    %3820 = vmatmul.mubr.bf16.gmra.mxu0 %v3785
    %v3821 = vpop.f32.mrf.mxu0
    %v3822 = vadd.f32 0.0, %v3821
    %v3823 = vpop.f32.mrf.mxu0
    %v3824 = vadd.f32 0.0, %v3823
    %v3825 = vpop.f32.mrf.mxu0
    %v3826 = vadd.f32 0.0, %v3825
    %v3827 = vpop.f32.mrf.mxu0
    %v3828 = vadd.f32 0.0, %v3827
    %3829 = vdwg.mxu0
    %v3830 = vpack.c.bf16 %v3826, %v3822
    %v3831 = vpack.c.bf16 %v3828, %v3824
    %s3832 = scalar_lea.vmem %s12, 256
    %v3833 = vld [vmem:[%s3832] sm:$0xff]
    %v3834 = vld [vmem:[%s3832 + $0x8] sm:$0xff]
    %v3835 = vld [vmem:[%s3832 + $0x10] sm:$0xff]
    %v3836 = vld [vmem:[%s3832 + $0x18] sm:$0xff]
    %v3837 = vld [vmem:[%s3832 + $0x20] sm:$0xff]
    %v3838 = vld [vmem:[%s3832 + $0x28] sm:$0xff]
    %v3839 = vld [vmem:[%s3832 + $0x30] sm:$0xff]
    %v3840 = vld [vmem:[%s3832 + $0x38] sm:$0xff]
    %v3841 = vld [vmem:[%s3832 + $0x40] sm:$0xff]
    %v3842 = vld [vmem:[%s3832 + $0x48] sm:$0xff]
    %v3843 = vld [vmem:[%s3832 + $0x50] sm:$0xff]
    %v3844 = vld [vmem:[%s3832 + $0x58] sm:$0xff]
    %v3845 = vld [vmem:[%s3832 + $0x60] sm:$0xff]
    %v3846 = vld [vmem:[%s3832 + $0x68] sm:$0xff]
    %v3847 = vld [vmem:[%s3832 + $0x70] sm:$0xff]
    %v3848 = vld [vmem:[%s3832 + $0x78] sm:$0xff]
    %v3849 = vld [vmem:[%s3832 + $0x80] sm:$0xff]
    %v3850 = vld [vmem:[%s3832 + $0x88] sm:$0xff]
    %v3851 = vld [vmem:[%s3832 + $0x90] sm:$0xff]
    %v3852 = vld [vmem:[%s3832 + $0x98] sm:$0xff]
    %v3853 = vld [vmem:[%s3832 + $0xa0] sm:$0xff]
    %v3854 = vld [vmem:[%s3832 + $0xa8] sm:$0xff]
    %v3855 = vld [vmem:[%s3832 + $0xb0] sm:$0xff]
    %v3856 = vld [vmem:[%s3832 + $0xb8] sm:$0xff]
    %v3857 = vld [vmem:[%s3832 + $0xc0] sm:$0xff]
    %v3858 = vld [vmem:[%s3832 + $0xc8] sm:$0xff]
    %v3859 = vld [vmem:[%s3832 + $0xd0] sm:$0xff]
    %v3860 = vld [vmem:[%s3832 + $0xd8] sm:$0xff]
    %v3861 = vld [vmem:[%s3832 + $0xe0] sm:$0xff]
    %v3862 = vld [vmem:[%s3832 + $0xe8] sm:$0xff]
    %v3863 = vld [vmem:[%s3832 + $0xf0] sm:$0xff]
    %v3864 = vld [vmem:[%s3832 + $0xf8] sm:$0xff]
    %v3897 = vunpack.c.l.b16 %v3833
    %v3898 = vunpack.c.h.b16 %v3833
    %v3899 = vunpack.c.l.b16 %v3834
    %v3900 = vunpack.c.h.b16 %v3834
    %v3901 = vunpack.c.l.b16 %v3835
    %v3902 = vunpack.c.h.b16 %v3835
    %v3903 = vunpack.c.l.b16 %v3836
    %v3904 = vunpack.c.h.b16 %v3836
    %v3905 = vunpack.c.l.b16 %v3837
    %v3906 = vunpack.c.h.b16 %v3837
    %v3907 = vunpack.c.l.b16 %v3838
    %v3908 = vunpack.c.h.b16 %v3838
    %v3909 = vunpack.c.l.b16 %v3839
    %v3910 = vunpack.c.h.b16 %v3839
    %v3911 = vunpack.c.l.b16 %v3840
    %v3912 = vunpack.c.h.b16 %v3840
    %v3913 = vunpack.c.l.b16 %v3841
    %v3914 = vunpack.c.h.b16 %v3841
    %v3915 = vunpack.c.l.b16 %v3842
    %v3916 = vunpack.c.h.b16 %v3842
    %v3917 = vunpack.c.l.b16 %v3843
    %v3918 = vunpack.c.h.b16 %v3843
    %v3919 = vunpack.c.l.b16 %v3844
    %v3920 = vunpack.c.h.b16 %v3844
    %v3921 = vunpack.c.l.b16 %v3845
    %v3922 = vunpack.c.h.b16 %v3845
    %v3923 = vunpack.c.l.b16 %v3846
    %v3924 = vunpack.c.h.b16 %v3846
    %v3925 = vunpack.c.l.b16 %v3847
    %v3926 = vunpack.c.h.b16 %v3847
    %v3927 = vunpack.c.l.b16 %v3848
    %v3928 = vunpack.c.h.b16 %v3848
    %v3929 = vunpack.c.l.b16 %v3849
    %v3930 = vunpack.c.h.b16 %v3849
    %v3931 = vunpack.c.l.b16 %v3850
    %v3932 = vunpack.c.h.b16 %v3850
    %v3933 = vunpack.c.l.b16 %v3851
    %v3934 = vunpack.c.h.b16 %v3851
    %v3935 = vunpack.c.l.b16 %v3852
    %v3936 = vunpack.c.h.b16 %v3852
    %v3937 = vunpack.c.l.b16 %v3853
    %v3938 = vunpack.c.h.b16 %v3853
    %v3939 = vunpack.c.l.b16 %v3854
    %v3940 = vunpack.c.h.b16 %v3854
    %v3941 = vunpack.c.l.b16 %v3855
    %v3942 = vunpack.c.h.b16 %v3855
    %v3943 = vunpack.c.l.b16 %v3856
    %v3944 = vunpack.c.h.b16 %v3856
    %v3945 = vunpack.c.l.b16 %v3857
    %v3946 = vunpack.c.h.b16 %v3857
    %v3947 = vunpack.c.l.b16 %v3858
    %v3948 = vunpack.c.h.b16 %v3858
    %v3949 = vunpack.c.l.b16 %v3859
    %v3950 = vunpack.c.h.b16 %v3859
    %v3951 = vunpack.c.l.b16 %v3860
    %v3952 = vunpack.c.h.b16 %v3860
    %v3953 = vunpack.c.l.b16 %v3861
    %v3954 = vunpack.c.h.b16 %v3861
    %v3955 = vunpack.c.l.b16 %v3862
    %v3956 = vunpack.c.h.b16 %v3862
    %v3957 = vunpack.c.l.b16 %v3863
    %v3958 = vunpack.c.h.b16 %v3863
    %v3959 = vunpack.c.l.b16 %v3864
    %v3960 = vunpack.c.h.b16 %v3864
    %v3961 = vpack.c.b16 %v3899, %v3897
    %v3962 = vpack.c.b16 %v3900, %v3898
    %v3963 = vpack.c.b16 %v3903, %v3901
    %v3964 = vpack.c.b16 %v3904, %v3902
    %v3965 = vpack.c.b16 %v3907, %v3905
    %v3966 = vpack.c.b16 %v3908, %v3906
    %v3967 = vpack.c.b16 %v3911, %v3909
    %v3968 = vpack.c.b16 %v3912, %v3910
    %v3969 = vpack.c.b16 %v3915, %v3913
    %v3970 = vpack.c.b16 %v3916, %v3914
    %v3971 = vpack.c.b16 %v3919, %v3917
    %v3972 = vpack.c.b16 %v3920, %v3918
    %v3973 = vpack.c.b16 %v3923, %v3921
    %v3974 = vpack.c.b16 %v3924, %v3922
    %v3975 = vpack.c.b16 %v3927, %v3925
    %v3976 = vpack.c.b16 %v3928, %v3926
    %v3977 = vpack.c.b16 %v3931, %v3929
    %v3978 = vpack.c.b16 %v3932, %v3930
    %v3979 = vpack.c.b16 %v3935, %v3933
    %v3980 = vpack.c.b16 %v3936, %v3934
    %v3981 = vpack.c.b16 %v3939, %v3937
    %v3982 = vpack.c.b16 %v3940, %v3938
    %v3983 = vpack.c.b16 %v3943, %v3941
    %v3984 = vpack.c.b16 %v3944, %v3942
    %v3985 = vpack.c.b16 %v3947, %v3945
    %v3986 = vpack.c.b16 %v3948, %v3946
    %v3987 = vpack.c.b16 %v3951, %v3949
    %v3988 = vpack.c.b16 %v3952, %v3950
    %v3989 = vpack.c.b16 %v3955, %v3953
    %v3990 = vpack.c.b16 %v3956, %v3954
    %v3991 = vpack.c.b16 %v3959, %v3957
    %v3992 = vpack.c.b16 %v3960, %v3958
    %4025 = vmatprep.subr.bf16.mxu0 %v3976
    %4026 = vmatpush1.bf16.msra.mxu0 %v3975
    %4027 = vmatprep.subr.bf16.mxu0 %v3974
    %4028 = vmatpush1.bf16.msra.mxu0 %v3973
    %4029 = vmatprep.subr.bf16.mxu0 %v3972
    %4030 = vmatpush1.bf16.msra.mxu0 %v3971
    %4031 = vmatprep.subr.bf16.mxu0 %v3970
    %4032 = vmatpush1.bf16.msra.mxu0 %v3969
    %4033 = vmatprep.subr.bf16.mxu0 %v3968
    %4034 = vmatpush1.bf16.msra.mxu0 %v3967
    %4035 = vmatprep.subr.bf16.mxu0 %v3966
    %4036 = vmatpush1.bf16.msra.mxu0 %v3965
    %4037 = vmatprep.subr.bf16.mxu0 %v3964
    %4038 = vmatpush1.bf16.msra.mxu0 %v3963
    %4039 = vmatprep.subr.bf16.mxu0 %v3962
    %4040 = vmatpush1.bf16.msra.mxu0 %v3961
    %4041 = vmatprep.subr.bf16.mxu0 %v3992
    %4042 = vmatpush2.bf16.msra.mxu0 %v3991
    %4043 = vmatprep.subr.bf16.mxu0 %v3990
    %4044 = vmatpush2.bf16.msra.mxu0 %v3989
    %4045 = vmatprep.subr.bf16.mxu0 %v3988
    %4046 = vmatpush2.bf16.msra.mxu0 %v3987
    %4047 = vmatprep.subr.bf16.mxu0 %v3986
    %4048 = vmatpush2.bf16.msra.mxu0 %v3985
    %4049 = vmatprep.subr.bf16.mxu0 %v3984
    %4050 = vmatpush2.bf16.msra.mxu0 %v3983
    %4051 = vmatprep.subr.bf16.mxu0 %v3982
    %4052 = vmatpush2.bf16.msra.mxu0 %v3981
    %4053 = vmatprep.subr.bf16.mxu0 %v3980
    %4054 = vmatpush2.bf16.msra.mxu0 %v3979
    %4055 = vmatprep.subr.bf16.mxu0 %v3978
    %4056 = vmatpush2.bf16.msra.mxu0 %v3977
    %4057 = vmatprep.mubr.bf16.mxu0 %v3831
    %4058 = vmatmul.mubr.bf16.gmra.mxu0 %v3830
    %v4059 = vpop.f32.mrf.mxu0
    %v4060 = vadd.f32 0.0, %v4059
    %v4061 = vpop.f32.mrf.mxu0
    %v4062 = vadd.f32 0.0, %v4061
    %v4063 = vpop.f32.mrf.mxu0
    %v4064 = vadd.f32 0.0, %v4063
    %v4065 = vpop.f32.mrf.mxu0
    %v4066 = vadd.f32 0.0, %v4065
    %4067 = vdwg.mxu0
    %v4100 = vunpack.c.l.b16 %v3744
    %v4101 = vunpack.c.h.b16 %v3744
    %v4102 = vunpack.c.l.b16 %v3745
    %v4103 = vunpack.c.h.b16 %v3745
    %v4104 = vunpack.c.l.b16 %v3746
    %v4105 = vunpack.c.h.b16 %v3746
    %v4106 = vunpack.c.l.b16 %v3747
    %v4107 = vunpack.c.h.b16 %v3747
    %v4108 = vunpack.c.l.b16 %v3748
    %v4109 = vunpack.c.h.b16 %v3748
    %v4110 = vunpack.c.l.b16 %v3749
    %v4111 = vunpack.c.h.b16 %v3749
    %v4112 = vunpack.c.l.b16 %v3750
    %v4113 = vunpack.c.h.b16 %v3750
    %v4114 = vunpack.c.l.b16 %v3751
    %v4115 = vunpack.c.h.b16 %v3751
    %v4116 = vunpack.c.l.b16 %v3752
    %v4117 = vunpack.c.h.b16 %v3752
    %v4118 = vunpack.c.l.b16 %v3753
    %v4119 = vunpack.c.h.b16 %v3753
    %v4120 = vunpack.c.l.b16 %v3754
    %v4121 = vunpack.c.h.b16 %v3754
    %v4122 = vunpack.c.l.b16 %v3755
    %v4123 = vunpack.c.h.b16 %v3755
    %v4124 = vunpack.c.l.b16 %v3756
    %v4125 = vunpack.c.h.b16 %v3756
    %v4126 = vunpack.c.l.b16 %v3757
    %v4127 = vunpack.c.h.b16 %v3757
    %v4128 = vunpack.c.l.b16 %v3758
    %v4129 = vunpack.c.h.b16 %v3758
    %v4130 = vunpack.c.l.b16 %v3759
    %v4131 = vunpack.c.h.b16 %v3759
    %v4132 = vunpack.c.l.b16 %v3760
    %v4133 = vunpack.c.h.b16 %v3760
    %v4134 = vunpack.c.l.b16 %v3761
    %v4135 = vunpack.c.h.b16 %v3761
    %v4136 = vunpack.c.l.b16 %v3762
    %v4137 = vunpack.c.h.b16 %v3762
    %v4138 = vunpack.c.l.b16 %v3763
    %v4139 = vunpack.c.h.b16 %v3763
    %v4140 = vunpack.c.l.b16 %v3764
    %v4141 = vunpack.c.h.b16 %v3764
    %v4142 = vunpack.c.l.b16 %v3765
    %v4143 = vunpack.c.h.b16 %v3765
    %v4144 = vunpack.c.l.b16 %v3766
    %v4145 = vunpack.c.h.b16 %v3766
    %v4146 = vunpack.c.l.b16 %v3767
    %v4147 = vunpack.c.h.b16 %v3767
    %v4148 = vunpack.c.l.b16 %v3768
    %v4149 = vunpack.c.h.b16 %v3768
    %v4150 = vunpack.c.l.b16 %v3769
    %v4151 = vunpack.c.h.b16 %v3769
    %v4152 = vunpack.c.l.b16 %v3770
    %v4153 = vunpack.c.h.b16 %v3770
    %v4154 = vunpack.c.l.b16 %v3771
    %v4155 = vunpack.c.h.b16 %v3771
    %v4156 = vunpack.c.l.b16 %v3772
    %v4157 = vunpack.c.h.b16 %v3772
    %v4158 = vunpack.c.l.b16 %v3773
    %v4159 = vunpack.c.h.b16 %v3773
    %v4160 = vunpack.c.l.b16 %v3774
    %v4161 = vunpack.c.h.b16 %v3774
    %v4162 = vunpack.c.l.b16 %v3775
    %v4163 = vunpack.c.h.b16 %v3775
    %v4164 = vpack.c.b16 %v4102, %v4100
    %v4165 = vpack.c.b16 %v4103, %v4101
    %v4166 = vpack.c.b16 %v4106, %v4104
    %v4167 = vpack.c.b16 %v4107, %v4105
    %v4168 = vpack.c.b16 %v4110, %v4108
    %v4169 = vpack.c.b16 %v4111, %v4109
    %v4170 = vpack.c.b16 %v4114, %v4112
    %v4171 = vpack.c.b16 %v4115, %v4113
    %v4172 = vpack.c.b16 %v4118, %v4116
    %v4173 = vpack.c.b16 %v4119, %v4117
    %v4174 = vpack.c.b16 %v4122, %v4120
    %v4175 = vpack.c.b16 %v4123, %v4121
    %v4176 = vpack.c.b16 %v4126, %v4124
    %v4177 = vpack.c.b16 %v4127, %v4125
    %v4178 = vpack.c.b16 %v4130, %v4128
    %v4179 = vpack.c.b16 %v4131, %v4129
    %v4180 = vpack.c.b16 %v4134, %v4132
    %v4181 = vpack.c.b16 %v4135, %v4133
    %v4182 = vpack.c.b16 %v4138, %v4136
    %v4183 = vpack.c.b16 %v4139, %v4137
    %v4184 = vpack.c.b16 %v4142, %v4140
    %v4185 = vpack.c.b16 %v4143, %v4141
    %v4186 = vpack.c.b16 %v4146, %v4144
    %v4187 = vpack.c.b16 %v4147, %v4145
    %v4188 = vpack.c.b16 %v4150, %v4148
    %v4189 = vpack.c.b16 %v4151, %v4149
    %v4190 = vpack.c.b16 %v4154, %v4152
    %v4191 = vpack.c.b16 %v4155, %v4153
    %v4192 = vpack.c.b16 %v4158, %v4156
    %v4193 = vpack.c.b16 %v4159, %v4157
    %v4194 = vpack.c.b16 %v4162, %v4160
    %v4195 = vpack.c.b16 %v4163, %v4161
    %4228 = vmatprep.subr.bf16.mxu0 %v4179
    %4229 = vmatpush1.bf16.msra.mxu0 %v4178
    %4230 = vmatprep.subr.bf16.mxu0 %v4177
    %4231 = vmatpush1.bf16.msra.mxu0 %v4176
    %4232 = vmatprep.subr.bf16.mxu0 %v4175
    %4233 = vmatpush1.bf16.msra.mxu0 %v4174
    %4234 = vmatprep.subr.bf16.mxu0 %v4173
    %4235 = vmatpush1.bf16.msra.mxu0 %v4172
    %4236 = vmatprep.subr.bf16.mxu0 %v4171
    %4237 = vmatpush1.bf16.msra.mxu0 %v4170
    %4238 = vmatprep.subr.bf16.mxu0 %v4169
    %4239 = vmatpush1.bf16.msra.mxu0 %v4168
    %4240 = vmatprep.subr.bf16.mxu0 %v4167
    %4241 = vmatpush1.bf16.msra.mxu0 %v4166
    %4242 = vmatprep.subr.bf16.mxu0 %v4165
    %4243 = vmatpush1.bf16.msra.mxu0 %v4164
    %4244 = vmatprep.subr.bf16.mxu0 %v4195
    %4245 = vmatpush2.bf16.msra.mxu0 %v4194
    %4246 = vmatprep.subr.bf16.mxu0 %v4193
    %4247 = vmatpush2.bf16.msra.mxu0 %v4192
    %4248 = vmatprep.subr.bf16.mxu0 %v4191
    %4249 = vmatpush2.bf16.msra.mxu0 %v4190
    %4250 = vmatprep.subr.bf16.mxu0 %v4189
    %4251 = vmatpush2.bf16.msra.mxu0 %v4188
    %4252 = vmatprep.subr.bf16.mxu0 %v4187
    %4253 = vmatpush2.bf16.msra.mxu0 %v4186
    %4254 = vmatprep.subr.bf16.mxu0 %v4185
    %4255 = vmatpush2.bf16.msra.mxu0 %v4184
    %4256 = vmatprep.subr.bf16.mxu0 %v4183
    %4257 = vmatpush2.bf16.msra.mxu0 %v4182
    %4258 = vmatprep.subr.bf16.mxu0 %v4181
    %4259 = vmatpush2.bf16.msra.mxu0 %v4180
    %4260 = vmatprep.mubr.bf16.mxu0 %v3743
    %4261 = vmatmul.mubr.bf16.gmra.mxu0 %v3742
    %v4262 = vpop.f32.mrf.mxu0
    %v4263 = vadd.f32 %v4060, %v4262
    %v4264 = vpop.f32.mrf.mxu0
    %v4265 = vadd.f32 %v4062, %v4264
    %v4266 = vpop.f32.mrf.mxu0
    %v4267 = vadd.f32 %v4064, %v4266
    %v4268 = vpop.f32.mrf.mxu0
    %v4269 = vadd.f32 %v4066, %v4268
    %4270 = vdwg.mxu0
    %s4271 = scalar_lea.vmem [#allocation14], 16
    %v4272 = vld [vmem:[%s4271] sm:$0xf]
    %v4273 = vld [vmem:[%s4271 + $0x4] sm:$0xf]
    %v4276 = vunpack.c.l.b16 %v4272
    %v4277 = vunpack.c.l.b16 %v4273
    %v4278 = vpack.c.b16 %v4277, %v4276
    %v4280 = vsel %vm3695, %v4278, 0
    %4282 = vmatprep.subr.bf16.mxu0 0
    %4283 = vmatpush1.bf16.msra.mxu0 0
    %4284 = vmatprep.subr.bf16.mxu0 0
    %4285 = vmatpush1.bf16.msra.mxu0 0
    %4286 = vmatprep.subr.bf16.mxu0 0
    %4287 = vmatpush1.bf16.msra.mxu0 0
    %4288 = vmatprep.subr.bf16.mxu0 0
    %4289 = vmatpush1.bf16.msra.mxu0 0
    %4290 = vmatprep.subr.bf16.mxu0 0
    %4291 = vmatpush1.bf16.msra.mxu0 0
    %4292 = vmatprep.subr.bf16.mxu0 0
    %4293 = vmatpush1.bf16.msra.mxu0 0
    %4294 = vmatprep.subr.bf16.mxu0 %v3687
    %4295 = vmatpush1.bf16.msra.mxu0 %v3686
    %4296 = vmatprep.subr.bf16.mxu0 %v3685
    %4297 = vmatpush1.bf16.msra.mxu0 %v3684
    %4298 = vmatprep.subr.bf16.mxu0 0
    %4299 = vmatpush2.bf16.msra.mxu0 0
    %4300 = vmatprep.subr.bf16.mxu0 0
    %4301 = vmatpush2.bf16.msra.mxu0 0
    %4302 = vmatprep.subr.bf16.mxu0 0
    %4303 = vmatpush2.bf16.msra.mxu0 0
    %4304 = vmatprep.subr.bf16.mxu0 0
    %4305 = vmatpush2.bf16.msra.mxu0 0
    %4306 = vmatprep.subr.bf16.mxu0 0
    %4307 = vmatpush2.bf16.msra.mxu0 0
    %4308 = vmatprep.subr.bf16.mxu0 0
    %4309 = vmatpush2.bf16.msra.mxu0 0
    %4310 = vmatprep.subr.bf16.mxu0 0
    %4311 = vmatpush2.bf16.msra.mxu0 0
    %4312 = vmatprep.subr.bf16.mxu0 0
    %4313 = vmatpush2.bf16.msra.mxu0 0
    %4314 = vmatprep.mubr.bf16.mxu0 0
    %4315 = vmatmul.mubr.bf16.gmra.mxu0 %v4280
    %v4316 = vpop.f32.mrf.mxu0
    %v4317 = vadd.f32 0.0, %v4316
    %v4318 = vpop.f32.mrf.mxu0
    %v4319 = vadd.f32 0.0, %v4318
    %v4320 = vpop.f32.mrf.mxu0
    %v4321 = vadd.f32 0.0, %v4320
    %v4322 = vpop.f32.mrf.mxu0
    %v4323 = vadd.f32 0.0, %v4322
    %4324 = vdwg.mxu0
    %v4325 = vpack.c.bf16 %v4321, %v4317
    %v4326 = vpack.c.bf16 %v4323, %v4319
    %s4327 = scalar_lea.vmem %s12, 512
    %v4328 = vld [vmem:[%s4327] sm:$0xff]
    %v4329 = vld [vmem:[%s4327 + $0x8] sm:$0xff]
    %v4330 = vld [vmem:[%s4327 + $0x10] sm:$0xff]
    %v4331 = vld [vmem:[%s4327 + $0x18] sm:$0xff]
    %v4332 = vld [vmem:[%s4327 + $0x20] sm:$0xff]
    %v4333 = vld [vmem:[%s4327 + $0x28] sm:$0xff]
    %v4334 = vld [vmem:[%s4327 + $0x30] sm:$0xff]
    %v4335 = vld [vmem:[%s4327 + $0x38] sm:$0xff]
    %v4336 = vld [vmem:[%s4327 + $0x40] sm:$0xff]
    %v4337 = vld [vmem:[%s4327 + $0x48] sm:$0xff]
    %v4338 = vld [vmem:[%s4327 + $0x50] sm:$0xff]
    %v4339 = vld [vmem:[%s4327 + $0x58] sm:$0xff]
    %v4340 = vld [vmem:[%s4327 + $0x60] sm:$0xff]
    %v4341 = vld [vmem:[%s4327 + $0x68] sm:$0xff]
    %v4342 = vld [vmem:[%s4327 + $0x70] sm:$0xff]
    %v4343 = vld [vmem:[%s4327 + $0x78] sm:$0xff]
    %v4344 = vld [vmem:[%s4327 + $0x80] sm:$0xff]
    %v4345 = vld [vmem:[%s4327 + $0x88] sm:$0xff]
    %v4346 = vld [vmem:[%s4327 + $0x90] sm:$0xff]
    %v4347 = vld [vmem:[%s4327 + $0x98] sm:$0xff]
    %v4348 = vld [vmem:[%s4327 + $0xa0] sm:$0xff]
    %v4349 = vld [vmem:[%s4327 + $0xa8] sm:$0xff]
    %v4350 = vld [vmem:[%s4327 + $0xb0] sm:$0xff]
    %v4351 = vld [vmem:[%s4327 + $0xb8] sm:$0xff]
    %v4352 = vld [vmem:[%s4327 + $0xc0] sm:$0xff]
    %v4353 = vld [vmem:[%s4327 + $0xc8] sm:$0xff]
    %v4354 = vld [vmem:[%s4327 + $0xd0] sm:$0xff]
    %v4355 = vld [vmem:[%s4327 + $0xd8] sm:$0xff]
    %v4356 = vld [vmem:[%s4327 + $0xe0] sm:$0xff]
    %v4357 = vld [vmem:[%s4327 + $0xe8] sm:$0xff]
    %v4358 = vld [vmem:[%s4327 + $0xf0] sm:$0xff]
    %v4359 = vld [vmem:[%s4327 + $0xf8] sm:$0xff]
    %v4392 = vunpack.c.l.b16 %v4328
    %v4393 = vunpack.c.h.b16 %v4328
    %v4394 = vunpack.c.l.b16 %v4329
    %v4395 = vunpack.c.h.b16 %v4329
    %v4396 = vunpack.c.l.b16 %v4330
    %v4397 = vunpack.c.h.b16 %v4330
    %v4398 = vunpack.c.l.b16 %v4331
    %v4399 = vunpack.c.h.b16 %v4331
    %v4400 = vunpack.c.l.b16 %v4332
    %v4401 = vunpack.c.h.b16 %v4332
    %v4402 = vunpack.c.l.b16 %v4333
    %v4403 = vunpack.c.h.b16 %v4333
    %v4404 = vunpack.c.l.b16 %v4334
    %v4405 = vunpack.c.h.b16 %v4334
    %v4406 = vunpack.c.l.b16 %v4335
    %v4407 = vunpack.c.h.b16 %v4335
    %v4408 = vunpack.c.l.b16 %v4336
    %v4409 = vunpack.c.h.b16 %v4336
    %v4410 = vunpack.c.l.b16 %v4337
    %v4411 = vunpack.c.h.b16 %v4337
    %v4412 = vunpack.c.l.b16 %v4338
    %v4413 = vunpack.c.h.b16 %v4338
    %v4414 = vunpack.c.l.b16 %v4339
    %v4415 = vunpack.c.h.b16 %v4339
    %v4416 = vunpack.c.l.b16 %v4340
    %v4417 = vunpack.c.h.b16 %v4340
    %v4418 = vunpack.c.l.b16 %v4341
    %v4419 = vunpack.c.h.b16 %v4341
    %v4420 = vunpack.c.l.b16 %v4342
    %v4421 = vunpack.c.h.b16 %v4342
    %v4422 = vunpack.c.l.b16 %v4343
    %v4423 = vunpack.c.h.b16 %v4343
    %v4424 = vunpack.c.l.b16 %v4344
    %v4425 = vunpack.c.h.b16 %v4344
    %v4426 = vunpack.c.l.b16 %v4345
    %v4427 = vunpack.c.h.b16 %v4345
    %v4428 = vunpack.c.l.b16 %v4346
    %v4429 = vunpack.c.h.b16 %v4346
    %v4430 = vunpack.c.l.b16 %v4347
    %v4431 = vunpack.c.h.b16 %v4347
    %v4432 = vunpack.c.l.b16 %v4348
    %v4433 = vunpack.c.h.b16 %v4348
    %v4434 = vunpack.c.l.b16 %v4349
    %v4435 = vunpack.c.h.b16 %v4349
    %v4436 = vunpack.c.l.b16 %v4350
    %v4437 = vunpack.c.h.b16 %v4350
    %v4438 = vunpack.c.l.b16 %v4351
    %v4439 = vunpack.c.h.b16 %v4351
    %v4440 = vunpack.c.l.b16 %v4352
    %v4441 = vunpack.c.h.b16 %v4352
    %v4442 = vunpack.c.l.b16 %v4353
    %v4443 = vunpack.c.h.b16 %v4353
    %v4444 = vunpack.c.l.b16 %v4354
    %v4445 = vunpack.c.h.b16 %v4354
    %v4446 = vunpack.c.l.b16 %v4355
    %v4447 = vunpack.c.h.b16 %v4355
    %v4448 = vunpack.c.l.b16 %v4356
    %v4449 = vunpack.c.h.b16 %v4356
    %v4450 = vunpack.c.l.b16 %v4357
    %v4451 = vunpack.c.h.b16 %v4357
    %v4452 = vunpack.c.l.b16 %v4358
    %v4453 = vunpack.c.h.b16 %v4358
    %v4454 = vunpack.c.l.b16 %v4359
    %v4455 = vunpack.c.h.b16 %v4359
    %v4456 = vpack.c.b16 %v4394, %v4392
    %v4457 = vpack.c.b16 %v4395, %v4393
    %v4458 = vpack.c.b16 %v4398, %v4396
    %v4459 = vpack.c.b16 %v4399, %v4397
    %v4460 = vpack.c.b16 %v4402, %v4400
    %v4461 = vpack.c.b16 %v4403, %v4401
    %v4462 = vpack.c.b16 %v4406, %v4404
    %v4463 = vpack.c.b16 %v4407, %v4405
    %v4464 = vpack.c.b16 %v4410, %v4408
    %v4465 = vpack.c.b16 %v4411, %v4409
    %v4466 = vpack.c.b16 %v4414, %v4412
    %v4467 = vpack.c.b16 %v4415, %v4413
    %v4468 = vpack.c.b16 %v4418, %v4416
    %v4469 = vpack.c.b16 %v4419, %v4417
    %v4470 = vpack.c.b16 %v4422, %v4420
    %v4471 = vpack.c.b16 %v4423, %v4421
    %v4472 = vpack.c.b16 %v4426, %v4424
    %v4473 = vpack.c.b16 %v4427, %v4425
    %v4474 = vpack.c.b16 %v4430, %v4428
    %v4475 = vpack.c.b16 %v4431, %v4429
    %v4476 = vpack.c.b16 %v4434, %v4432
    %v4477 = vpack.c.b16 %v4435, %v4433
    %v4478 = vpack.c.b16 %v4438, %v4436
    %v4479 = vpack.c.b16 %v4439, %v4437
    %v4480 = vpack.c.b16 %v4442, %v4440
    %v4481 = vpack.c.b16 %v4443, %v4441
    %v4482 = vpack.c.b16 %v4446, %v4444
    %v4483 = vpack.c.b16 %v4447, %v4445
    %v4484 = vpack.c.b16 %v4450, %v4448
    %v4485 = vpack.c.b16 %v4451, %v4449
    %v4486 = vpack.c.b16 %v4454, %v4452
    %v4487 = vpack.c.b16 %v4455, %v4453
    %4520 = vmatprep.subr.bf16.mxu0 %v4471
    %4521 = vmatpush1.bf16.msra.mxu0 %v4470
    %4522 = vmatprep.subr.bf16.mxu0 %v4469
    %4523 = vmatpush1.bf16.msra.mxu0 %v4468
    %4524 = vmatprep.subr.bf16.mxu0 %v4467
    %4525 = vmatpush1.bf16.msra.mxu0 %v4466
    %4526 = vmatprep.subr.bf16.mxu0 %v4465
    %4527 = vmatpush1.bf16.msra.mxu0 %v4464
    %4528 = vmatprep.subr.bf16.mxu0 %v4463
    %4529 = vmatpush1.bf16.msra.mxu0 %v4462
    %4530 = vmatprep.subr.bf16.mxu0 %v4461
    %4531 = vmatpush1.bf16.msra.mxu0 %v4460
    %4532 = vmatprep.subr.bf16.mxu0 %v4459
    %4533 = vmatpush1.bf16.msra.mxu0 %v4458
    %4534 = vmatprep.subr.bf16.mxu0 %v4457
    %4535 = vmatpush1.bf16.msra.mxu0 %v4456
    %4536 = vmatprep.subr.bf16.mxu0 %v4487
    %4537 = vmatpush2.bf16.msra.mxu0 %v4486
    %4538 = vmatprep.subr.bf16.mxu0 %v4485
    %4539 = vmatpush2.bf16.msra.mxu0 %v4484
    %4540 = vmatprep.subr.bf16.mxu0 %v4483
    %4541 = vmatpush2.bf16.msra.mxu0 %v4482
    %4542 = vmatprep.subr.bf16.mxu0 %v4481
    %4543 = vmatpush2.bf16.msra.mxu0 %v4480
    %4544 = vmatprep.subr.bf16.mxu0 %v4479
    %4545 = vmatpush2.bf16.msra.mxu0 %v4478
    %4546 = vmatprep.subr.bf16.mxu0 %v4477
    %4547 = vmatpush2.bf16.msra.mxu0 %v4476
    %4548 = vmatprep.subr.bf16.mxu0 %v4475
    %4549 = vmatpush2.bf16.msra.mxu0 %v4474
    %4550 = vmatprep.subr.bf16.mxu0 %v4473
    %4551 = vmatpush2.bf16.msra.mxu0 %v4472
    %4552 = vmatprep.mubr.bf16.mxu0 %v4326
    %4553 = vmatmul.mubr.bf16.gmra.mxu0 %v4325
    %v4554 = vpop.f32.mrf.mxu0
    %v4555 = vadd.f32 0.0, %v4554
    %v4556 = vpop.f32.mrf.mxu0
    %v4557 = vadd.f32 0.0, %v4556
    %v4558 = vpop.f32.mrf.mxu0
    %v4559 = vadd.f32 0.0, %v4558
    %v4560 = vpop.f32.mrf.mxu0
    %v4561 = vadd.f32 0.0, %v4560
    %4562 = vdwg.mxu0
    %v4563 = vadd.f32 %v4263, %v4555
    %v4564 = vadd.f32 %v4265, %v4557
    %v4565 = vadd.f32 %v4267, %v4559
    %v4566 = vadd.f32 %v4269, %v4561
    %s4567 = scalar_lea.vmem [#allocation14], 24
    %v4568 = vld [vmem:[%s4567] sm:$0xf]
    %v4569 = vld [vmem:[%s4567 + $0x4] sm:$0xf]
    %v4572 = vunpack.c.l.b16 %v4568
    %v4573 = vunpack.c.l.b16 %v4569
    %v4574 = vpack.c.b16 %v4573, %v4572
    %v4576 = vsel %vm3695, %v4574, 0
    %4578 = vmatprep.subr.bf16.mxu0 0
    %4579 = vmatpush1.bf16.msra.mxu0 0
    %4580 = vmatprep.subr.bf16.mxu0 0
    %4581 = vmatpush1.bf16.msra.mxu0 0
    %4582 = vmatprep.subr.bf16.mxu0 0
    %4583 = vmatpush1.bf16.msra.mxu0 0
    %4584 = vmatprep.subr.bf16.mxu0 0
    %4585 = vmatpush1.bf16.msra.mxu0 0
    %4586 = vmatprep.subr.bf16.mxu0 0
    %4587 = vmatpush1.bf16.msra.mxu0 0
    %4588 = vmatprep.subr.bf16.mxu0 0
    %4589 = vmatpush1.bf16.msra.mxu0 0
    %4590 = vmatprep.subr.bf16.mxu0 %v3687
    %4591 = vmatpush1.bf16.msra.mxu0 %v3686
    %4592 = vmatprep.subr.bf16.mxu0 %v3685
    %4593 = vmatpush1.bf16.msra.mxu0 %v3684
    %4594 = vmatprep.subr.bf16.mxu0 0
    %4595 = vmatpush2.bf16.msra.mxu0 0
    %4596 = vmatprep.subr.bf16.mxu0 0
    %4597 = vmatpush2.bf16.msra.mxu0 0
    %4598 = vmatprep.subr.bf16.mxu0 0
    %4599 = vmatpush2.bf16.msra.mxu0 0
    %4600 = vmatprep.subr.bf16.mxu0 0
    %4601 = vmatpush2.bf16.msra.mxu0 0
    %4602 = vmatprep.subr.bf16.mxu0 0
    %4603 = vmatpush2.bf16.msra.mxu0 0
    %4604 = vmatprep.subr.bf16.mxu0 0
    %4605 = vmatpush2.bf16.msra.mxu0 0
    %4606 = vmatprep.subr.bf16.mxu0 0
    %4607 = vmatpush2.bf16.msra.mxu0 0
    %4608 = vmatprep.subr.bf16.mxu0 0
    %4609 = vmatpush2.bf16.msra.mxu0 0
    %4610 = vmatprep.mubr.bf16.mxu0 0
    %4611 = vmatmul.mubr.bf16.gmra.mxu0 %v4576
    %v4612 = vpop.f32.mrf.mxu0
    %v4613 = vadd.f32 0.0, %v4612
    %v4614 = vpop.f32.mrf.mxu0
    %v4615 = vadd.f32 0.0, %v4614
    %v4616 = vpop.f32.mrf.mxu0
    %v4617 = vadd.f32 0.0, %v4616
    %v4618 = vpop.f32.mrf.mxu0
    %v4619 = vadd.f32 0.0, %v4618
    %4620 = vdwg.mxu0
    %v4621 = vpack.c.bf16 %v4617, %v4613
    %v4622 = vpack.c.bf16 %v4619, %v4615
    %s4623 = scalar_lea.vmem %s12, 768
    %v4624 = vld [vmem:[%s4623] sm:$0xff]
    %v4625 = vld [vmem:[%s4623 + $0x8] sm:$0xff]
    %v4626 = vld [vmem:[%s4623 + $0x10] sm:$0xff]
    %v4627 = vld [vmem:[%s4623 + $0x18] sm:$0xff]
    %v4628 = vld [vmem:[%s4623 + $0x20] sm:$0xff]
    %v4629 = vld [vmem:[%s4623 + $0x28] sm:$0xff]
    %v4630 = vld [vmem:[%s4623 + $0x30] sm:$0xff]
    %v4631 = vld [vmem:[%s4623 + $0x38] sm:$0xff]
    %v4632 = vld [vmem:[%s4623 + $0x40] sm:$0xff]
    %v4633 = vld [vmem:[%s4623 + $0x48] sm:$0xff]
    %v4634 = vld [vmem:[%s4623 + $0x50] sm:$0xff]
    %v4635 = vld [vmem:[%s4623 + $0x58] sm:$0xff]
    %v4636 = vld [vmem:[%s4623 + $0x60] sm:$0xff]
    %v4637 = vld [vmem:[%s4623 + $0x68] sm:$0xff]
    %v4638 = vld [vmem:[%s4623 + $0x70] sm:$0xff]
    %v4639 = vld [vmem:[%s4623 + $0x78] sm:$0xff]
    %v4640 = vld [vmem:[%s4623 + $0x80] sm:$0xff]
    %v4641 = vld [vmem:[%s4623 + $0x88] sm:$0xff]
    %v4642 = vld [vmem:[%s4623 + $0x90] sm:$0xff]
    %v4643 = vld [vmem:[%s4623 + $0x98] sm:$0xff]
    %v4644 = vld [vmem:[%s4623 + $0xa0] sm:$0xff]
    %v4645 = vld [vmem:[%s4623 + $0xa8] sm:$0xff]
    %v4646 = vld [vmem:[%s4623 + $0xb0] sm:$0xff]
    %v4647 = vld [vmem:[%s4623 + $0xb8] sm:$0xff]
    %v4648 = vld [vmem:[%s4623 + $0xc0] sm:$0xff]
    %v4649 = vld [vmem:[%s4623 + $0xc8] sm:$0xff]
    %v4650 = vld [vmem:[%s4623 + $0xd0] sm:$0xff]
    %v4651 = vld [vmem:[%s4623 + $0xd8] sm:$0xff]
    %v4652 = vld [vmem:[%s4623 + $0xe0] sm:$0xff]
    %v4653 = vld [vmem:[%s4623 + $0xe8] sm:$0xff]
    %v4654 = vld [vmem:[%s4623 + $0xf0] sm:$0xff]
    %v4655 = vld [vmem:[%s4623 + $0xf8] sm:$0xff]
    %v4688 = vunpack.c.l.b16 %v4624
    %v4689 = vunpack.c.h.b16 %v4624
    %v4690 = vunpack.c.l.b16 %v4625
    %v4691 = vunpack.c.h.b16 %v4625
    %v4692 = vunpack.c.l.b16 %v4626
    %v4693 = vunpack.c.h.b16 %v4626
    %v4694 = vunpack.c.l.b16 %v4627
    %v4695 = vunpack.c.h.b16 %v4627
    %v4696 = vunpack.c.l.b16 %v4628
    %v4697 = vunpack.c.h.b16 %v4628
    %v4698 = vunpack.c.l.b16 %v4629
    %v4699 = vunpack.c.h.b16 %v4629
    %v4700 = vunpack.c.l.b16 %v4630
    %v4701 = vunpack.c.h.b16 %v4630
    %v4702 = vunpack.c.l.b16 %v4631
    %v4703 = vunpack.c.h.b16 %v4631
    %v4704 = vunpack.c.l.b16 %v4632
    %v4705 = vunpack.c.h.b16 %v4632
    %v4706 = vunpack.c.l.b16 %v4633
    %v4707 = vunpack.c.h.b16 %v4633
    %v4708 = vunpack.c.l.b16 %v4634
    %v4709 = vunpack.c.h.b16 %v4634
    %v4710 = vunpack.c.l.b16 %v4635
    %v4711 = vunpack.c.h.b16 %v4635
    %v4712 = vunpack.c.l.b16 %v4636
    %v4713 = vunpack.c.h.b16 %v4636
    %v4714 = vunpack.c.l.b16 %v4637
    %v4715 = vunpack.c.h.b16 %v4637
    %v4716 = vunpack.c.l.b16 %v4638
    %v4717 = vunpack.c.h.b16 %v4638
    %v4718 = vunpack.c.l.b16 %v4639
    %v4719 = vunpack.c.h.b16 %v4639
    %v4720 = vunpack.c.l.b16 %v4640
    %v4721 = vunpack.c.h.b16 %v4640
    %v4722 = vunpack.c.l.b16 %v4641
    %v4723 = vunpack.c.h.b16 %v4641
    %v4724 = vunpack.c.l.b16 %v4642
    %v4725 = vunpack.c.h.b16 %v4642
    %v4726 = vunpack.c.l.b16 %v4643
    %v4727 = vunpack.c.h.b16 %v4643
    %v4728 = vunpack.c.l.b16 %v4644
    %v4729 = vunpack.c.h.b16 %v4644
    %v4730 = vunpack.c.l.b16 %v4645
    %v4731 = vunpack.c.h.b16 %v4645
    %v4732 = vunpack.c.l.b16 %v4646
    %v4733 = vunpack.c.h.b16 %v4646
    %v4734 = vunpack.c.l.b16 %v4647
    %v4735 = vunpack.c.h.b16 %v4647
    %v4736 = vunpack.c.l.b16 %v4648
    %v4737 = vunpack.c.h.b16 %v4648
    %v4738 = vunpack.c.l.b16 %v4649
    %v4739 = vunpack.c.h.b16 %v4649
    %v4740 = vunpack.c.l.b16 %v4650
    %v4741 = vunpack.c.h.b16 %v4650
    %v4742 = vunpack.c.l.b16 %v4651
    %v4743 = vunpack.c.h.b16 %v4651
    %v4744 = vunpack.c.l.b16 %v4652
    %v4745 = vunpack.c.h.b16 %v4652
    %v4746 = vunpack.c.l.b16 %v4653
    %v4747 = vunpack.c.h.b16 %v4653
    %v4748 = vunpack.c.l.b16 %v4654
    %v4749 = vunpack.c.h.b16 %v4654
    %v4750 = vunpack.c.l.b16 %v4655
    %v4751 = vunpack.c.h.b16 %v4655
    %v4752 = vpack.c.b16 %v4690, %v4688
    %v4753 = vpack.c.b16 %v4691, %v4689
    %v4754 = vpack.c.b16 %v4694, %v4692
    %v4755 = vpack.c.b16 %v4695, %v4693
    %v4756 = vpack.c.b16 %v4698, %v4696
    %v4757 = vpack.c.b16 %v4699, %v4697
    %v4758 = vpack.c.b16 %v4702, %v4700
    %v4759 = vpack.c.b16 %v4703, %v4701
    %v4760 = vpack.c.b16 %v4706, %v4704
    %v4761 = vpack.c.b16 %v4707, %v4705
    %v4762 = vpack.c.b16 %v4710, %v4708
    %v4763 = vpack.c.b16 %v4711, %v4709
    %v4764 = vpack.c.b16 %v4714, %v4712
    %v4765 = vpack.c.b16 %v4715, %v4713
    %v4766 = vpack.c.b16 %v4718, %v4716
    %v4767 = vpack.c.b16 %v4719, %v4717
    %v4768 = vpack.c.b16 %v4722, %v4720
    %v4769 = vpack.c.b16 %v4723, %v4721
    %v4770 = vpack.c.b16 %v4726, %v4724
    %v4771 = vpack.c.b16 %v4727, %v4725
    %v4772 = vpack.c.b16 %v4730, %v4728
    %v4773 = vpack.c.b16 %v4731, %v4729
    %v4774 = vpack.c.b16 %v4734, %v4732
    %v4775 = vpack.c.b16 %v4735, %v4733
    %v4776 = vpack.c.b16 %v4738, %v4736
    %v4777 = vpack.c.b16 %v4739, %v4737
    %v4778 = vpack.c.b16 %v4742, %v4740
    %v4779 = vpack.c.b16 %v4743, %v4741
    %v4780 = vpack.c.b16 %v4746, %v4744
    %v4781 = vpack.c.b16 %v4747, %v4745
    %v4782 = vpack.c.b16 %v4750, %v4748
    %v4783 = vpack.c.b16 %v4751, %v4749
    %4816 = vmatprep.subr.bf16.mxu0 %v4767
    %4817 = vmatpush1.bf16.msra.mxu0 %v4766
    %4818 = vmatprep.subr.bf16.mxu0 %v4765
    %4819 = vmatpush1.bf16.msra.mxu0 %v4764
    %4820 = vmatprep.subr.bf16.mxu0 %v4763
    %4821 = vmatpush1.bf16.msra.mxu0 %v4762
    %4822 = vmatprep.subr.bf16.mxu0 %v4761
    %4823 = vmatpush1.bf16.msra.mxu0 %v4760
    %4824 = vmatprep.subr.bf16.mxu0 %v4759
    %4825 = vmatpush1.bf16.msra.mxu0 %v4758
    %4826 = vmatprep.subr.bf16.mxu0 %v4757
    %4827 = vmatpush1.bf16.msra.mxu0 %v4756
    %4828 = vmatprep.subr.bf16.mxu0 %v4755
    %4829 = vmatpush1.bf16.msra.mxu0 %v4754
    %4830 = vmatprep.subr.bf16.mxu0 %v4753
    %4831 = vmatpush1.bf16.msra.mxu0 %v4752
    %4832 = vmatprep.subr.bf16.mxu0 %v4783
    %4833 = vmatpush2.bf16.msra.mxu0 %v4782
    %4834 = vmatprep.subr.bf16.mxu0 %v4781
    %4835 = vmatpush2.bf16.msra.mxu0 %v4780
    %4836 = vmatprep.subr.bf16.mxu0 %v4779
    %4837 = vmatpush2.bf16.msra.mxu0 %v4778
    %4838 = vmatprep.subr.bf16.mxu0 %v4777
    %4839 = vmatpush2.bf16.msra.mxu0 %v4776
    %4840 = vmatprep.subr.bf16.mxu0 %v4775
    %4841 = vmatpush2.bf16.msra.mxu0 %v4774
    %4842 = vmatprep.subr.bf16.mxu0 %v4773
    %4843 = vmatpush2.bf16.msra.mxu0 %v4772
    %4844 = vmatprep.subr.bf16.mxu0 %v4771
    %4845 = vmatpush2.bf16.msra.mxu0 %v4770
    %4846 = vmatprep.subr.bf16.mxu0 %v4769
    %4847 = vmatpush2.bf16.msra.mxu0 %v4768
    %4848 = vmatprep.mubr.bf16.mxu0 %v4622
    %4849 = vmatmul.mubr.bf16.gmra.mxu0 %v4621
    %v4850 = vpop.f32.mrf.mxu0
    %v4851 = vadd.f32 0.0, %v4850
    %v4852 = vpop.f32.mrf.mxu0
    %v4853 = vadd.f32 0.0, %v4852
    %v4854 = vpop.f32.mrf.mxu0
    %v4855 = vadd.f32 0.0, %v4854
    %v4856 = vpop.f32.mrf.mxu0
    %v4857 = vadd.f32 0.0, %v4856
    %4858 = vdwg.mxu0
    %v4859 = vadd.f32 %v4563, %v4851
    %v4860 = vadd.f32 %v4564, %v4853
    %v4861 = vadd.f32 %v4565, %v4855
    %v4862 = vadd.f32 %v4566, %v4857
    %v4863 = vld [vmem:[#allocation16] sm:$0x3]
    %v4865 = vlaneseq
    %v4866 = vshrl.u32 %v4865, 7
    %v4867 = vsub.s32 0, %v4866
    %v4868 = vrot.slane %v4863, %v4867
    %v4869 = vlaneseq
    %v4870 = vshrl.u32 %v4869, 7
    %v4871 = vsub.s32 1, %v4870
    %v4872 = vrot.slane %v4863, %v4871
    %v4875 = vadd.f32 %v4859, %v4868
    %v4876 = vadd.f32 %v4860, %v4872
    %v4877 = vadd.f32 %v4861, %v4868
    %v4878 = vadd.f32 %v4862, %v4872
    %v4879 = vld [vmem:[%s16] sm:$0xff]
    %v4880 = vld [vmem:[%s16 + $0x8] sm:$0xff]
    %v4881 = vld [vmem:[%s16 + $0x10] sm:$0xff]
    %v4882 = vld [vmem:[%s16 + $0x18] sm:$0xff]
    %v4883 = vld [vmem:[%s16 + $0x20] sm:$0xff]
    %v4884 = vld [vmem:[%s16 + $0x28] sm:$0xff]
    %v4885 = vld [vmem:[%s16 + $0x30] sm:$0xff]
    %v4886 = vld [vmem:[%s16 + $0x38] sm:$0xff]
    %v4887 = vld [vmem:[%s16 + $0x40] sm:$0xff]
    %v4888 = vld [vmem:[%s16 + $0x48] sm:$0xff]
    %v4889 = vld [vmem:[%s16 + $0x50] sm:$0xff]
    %v4890 = vld [vmem:[%s16 + $0x58] sm:$0xff]
    %v4891 = vld [vmem:[%s16 + $0x60] sm:$0xff]
    %v4892 = vld [vmem:[%s16 + $0x68] sm:$0xff]
    %v4893 = vld [vmem:[%s16 + $0x70] sm:$0xff]
    %v4894 = vld [vmem:[%s16 + $0x78] sm:$0xff]
    %v4895 = vld [vmem:[%s16 + $0x80] sm:$0xff]
    %v4896 = vld [vmem:[%s16 + $0x88] sm:$0xff]
    %v4897 = vld [vmem:[%s16 + $0x90] sm:$0xff]
    %v4898 = vld [vmem:[%s16 + $0x98] sm:$0xff]
    %v4899 = vld [vmem:[%s16 + $0xa0] sm:$0xff]
    %v4900 = vld [vmem:[%s16 + $0xa8] sm:$0xff]
    %v4901 = vld [vmem:[%s16 + $0xb0] sm:$0xff]
    %v4902 = vld [vmem:[%s16 + $0xb8] sm:$0xff]
    %v4903 = vld [vmem:[%s16 + $0xc0] sm:$0xff]
    %v4904 = vld [vmem:[%s16 + $0xc8] sm:$0xff]
    %v4905 = vld [vmem:[%s16 + $0xd0] sm:$0xff]
    %v4906 = vld [vmem:[%s16 + $0xd8] sm:$0xff]
    %v4907 = vld [vmem:[%s16 + $0xe0] sm:$0xff]
    %v4908 = vld [vmem:[%s16 + $0xe8] sm:$0xff]
    %v4909 = vld [vmem:[%s16 + $0xf0] sm:$0xff]
    %v4910 = vld [vmem:[%s16 + $0xf8] sm:$0xff]
    %v4911 = vld [vmem:[#allocation20] sm:$0xff]
    %v4912 = vld [vmem:[#allocation20 + $0x8] sm:$0xff]
    %v4913 = vld [vmem:[#allocation20 + $0x10] sm:$0xff]
    %v4914 = vld [vmem:[#allocation20 + $0x18] sm:$0xff]
    %v4915 = vld [vmem:[#allocation20 + $0x20] sm:$0xff]
    %v4916 = vld [vmem:[#allocation20 + $0x28] sm:$0xff]
    %v4917 = vld [vmem:[#allocation20 + $0x30] sm:$0xff]
    %v4918 = vld [vmem:[#allocation20 + $0x38] sm:$0xff]
    %v4919 = vadd.f32 %v4875, %v4877
    %v4920 = vrot.slane %v4919, 4
    %v4921 = vadd.f32 %v4919, %v4920
    %v4922 = vrot.slane %v4921, 2
    %v4923 = vadd.f32 %v4921, %v4922
    %v4924 = vrot.slane %v4923, 1
    %v4925 = vadd.f32 %v4923, %v4924
    %v4926 = vadd.f32 %v4876, %v4878
    %v4927 = vrot.slane %v4926, 4
    %v4928 = vadd.f32 %v4926, %v4927
    %v4929 = vrot.slane %v4928, 2
    %v4930 = vadd.f32 %v4928, %v4929
    %v4931 = vrot.slane %v4930, 1
    %v4932 = vadd.f32 %v4930, %v4931
    %4933 = vmatprep.subr.mxu0 0.0
    %4934 = vmatpush1.msra.mxu0 %v4894
    %4935 = vmatprep.subr.mxu0 0.0
    %4936 = vmatpush1.msra.mxu0 %v4893
    %4937 = vmatprep.subr.mxu0 0.0
    %4938 = vmatpush1.msra.mxu0 %v4892
    %4939 = vmatprep.subr.mxu0 0.0
    %4940 = vmatpush1.msra.mxu0 %v4891
    %4941 = vmatprep.subr.mxu0 0.0
    %4942 = vmatpush1.msra.mxu0 %v4890
    %4943 = vmatprep.subr.mxu0 0.0
    %4944 = vmatpush1.msra.mxu0 %v4889
    %4945 = vmatprep.subr.mxu0 0.0
    %4946 = vmatpush1.msra.mxu0 %v4888
    %4947 = vmatprep.subr.mxu0 0.0
    %4948 = vmatpush1.msra.mxu0 %v4887
    %4949 = vmatprep.subr.mxu0 0.0
    %4950 = vmatpush1.msra.mxu0 %v4886
    %4951 = vmatprep.subr.mxu0 0.0
    %4952 = vmatpush1.msra.mxu0 %v4885
    %4953 = vmatprep.subr.mxu0 0.0
    %4954 = vmatpush1.msra.mxu0 %v4884
    %4955 = vmatprep.subr.mxu0 0.0
    %4956 = vmatpush1.msra.mxu0 %v4883
    %4957 = vmatprep.subr.mxu0 0.0
    %4958 = vmatpush1.msra.mxu0 %v4882
    %4959 = vmatprep.subr.mxu0 0.0
    %4960 = vmatpush1.msra.mxu0 %v4881
    %4961 = vmatprep.subr.mxu0 0.0
    %4962 = vmatpush1.msra.mxu0 %v4880
    %4963 = vmatprep.subr.mxu0 0.0
    %4964 = vmatpush1.msra.mxu0 %v4879
    %4965 = vmatprep.subr.mxu0 0.0
    %4966 = vmatpush2.msra.mxu0 %v4910
    %4967 = vmatprep.subr.mxu0 0.0
    %4968 = vmatpush2.msra.mxu0 %v4909
    %4969 = vmatprep.subr.mxu0 0.0
    %4970 = vmatpush2.msra.mxu0 %v4908
    %4971 = vmatprep.subr.mxu0 0.0
    %4972 = vmatpush2.msra.mxu0 %v4907
    %4973 = vmatprep.subr.mxu0 0.0
    %4974 = vmatpush2.msra.mxu0 %v4906
    %4975 = vmatprep.subr.mxu0 0.0
    %4976 = vmatpush2.msra.mxu0 %v4905
    %4977 = vmatprep.subr.mxu0 0.0
    %4978 = vmatpush2.msra.mxu0 %v4904
    %4979 = vmatprep.subr.mxu0 0.0
    %4980 = vmatpush2.msra.mxu0 %v4903
    %4981 = vmatprep.subr.mxu0 0.0
    %4982 = vmatpush2.msra.mxu0 %v4902
    %4983 = vmatprep.subr.mxu0 0.0
    %4984 = vmatpush2.msra.mxu0 %v4901
    %4985 = vmatprep.subr.mxu0 0.0
    %4986 = vmatpush2.msra.mxu0 %v4900
    %4987 = vmatprep.subr.mxu0 0.0
    %4988 = vmatpush2.msra.mxu0 %v4899
    %4989 = vmatprep.subr.mxu0 0.0
    %4990 = vmatpush2.msra.mxu0 %v4898
    %4991 = vmatprep.subr.mxu0 0.0
    %4992 = vmatpush2.msra.mxu0 %v4897
    %4993 = vmatprep.subr.mxu0 0.0
    %4994 = vmatpush2.msra.mxu0 %v4896
    %4995 = vmatprep.subr.mxu0 0.0
    %4996 = vmatpush2.msra.mxu0 %v4895
    %4997 = vmatprep.mubr.f32.mxu0 %v4932
    %4998 = vmatmul.mubr.f32.gmra.mxu0 %v4925
    %v4999 = vpop.f32.mrf.mxu0
    %v5000 = vadd.f32 0.0, %v4999
    %v5001 = vpop.f32.mrf.mxu0
    %5002 = vdwg.mxu0
    %v5003 = vmul.f32 %v5000, 0.0078125
    %v5005 = vsel %vm3695, %v5003, 0
    %5007 = vmatprep.subr.mxu0 0.0
    %5008 = vmatpush1.msra.mxu0 0.0
    %5009 = vmatprep.subr.mxu0 0.0
    %5010 = vmatpush1.msra.mxu0 0.0
    %5011 = vmatprep.subr.mxu0 0.0
    %5012 = vmatpush1.msra.mxu0 0.0
    %5013 = vmatprep.subr.mxu0 0.0
    %5014 = vmatpush1.msra.mxu0 0.0
    %5015 = vmatprep.subr.mxu0 0.0
    %5016 = vmatpush1.msra.mxu0 0.0
    %5017 = vmatprep.subr.mxu0 0.0
    %5018 = vmatpush1.msra.mxu0 0.0
    %5019 = vmatprep.subr.mxu0 0.0
    %5020 = vmatpush1.msra.mxu0 0.0
    %5021 = vmatprep.subr.mxu0 0.0
    %5022 = vmatpush1.msra.mxu0 0.0
    %5023 = vmatprep.subr.mxu0 0.0
    %5024 = vmatpush1.msra.mxu0 0.0
    %5025 = vmatprep.subr.mxu0 0.0
    %5026 = vmatpush1.msra.mxu0 0.0
    %5027 = vmatprep.subr.mxu0 0.0
    %5028 = vmatpush1.msra.mxu0 0.0
    %5029 = vmatprep.subr.mxu0 0.0
    %5030 = vmatpush1.msra.mxu0 0.0
    %5031 = vmatprep.subr.mxu0 %v4918
    %5032 = vmatpush1.msra.mxu0 %v4917
    %5033 = vmatprep.subr.mxu0 %v4916
    %5034 = vmatpush1.msra.mxu0 %v4915
    %5035 = vmatprep.subr.mxu0 %v4914
    %5036 = vmatpush1.msra.mxu0 %v4913
    %5037 = vmatprep.subr.mxu0 %v4912
    %5038 = vmatpush1.msra.mxu0 %v4911
    %5039 = vmatprep.subr.mxu0 0.0
    %5040 = vmatpush2.msra.mxu0 0.0
    %5041 = vmatprep.subr.mxu0 0.0
    %5042 = vmatpush2.msra.mxu0 0.0
    %5043 = vmatprep.subr.mxu0 0.0
    %5044 = vmatpush2.msra.mxu0 0.0
    %5045 = vmatprep.subr.mxu0 0.0
    %5046 = vmatpush2.msra.mxu0 0.0
    %5047 = vmatprep.subr.mxu0 0.0
    %5048 = vmatpush2.msra.mxu0 0.0
    %5049 = vmatprep.subr.mxu0 0.0
    %5050 = vmatpush2.msra.mxu0 0.0
    %5051 = vmatprep.subr.mxu0 0.0
    %5052 = vmatpush2.msra.mxu0 0.0
    %5053 = vmatprep.subr.mxu0 0.0
    %5054 = vmatpush2.msra.mxu0 0.0
    %5055 = vmatprep.subr.mxu0 0.0
    %5056 = vmatpush2.msra.mxu0 0.0
    %5057 = vmatprep.subr.mxu0 0.0
    %5058 = vmatpush2.msra.mxu0 0.0
    %5059 = vmatprep.subr.mxu0 0.0
    %5060 = vmatpush2.msra.mxu0 0.0
    %5061 = vmatprep.subr.mxu0 0.0
    %5062 = vmatpush2.msra.mxu0 0.0
    %5063 = vmatprep.subr.mxu0 0.0
    %5064 = vmatpush2.msra.mxu0 0.0
    %5065 = vmatprep.subr.mxu0 0.0
    %5066 = vmatpush2.msra.mxu0 0.0
    %5067 = vmatprep.subr.mxu0 0.0
    %5068 = vmatpush2.msra.mxu0 0.0
    %5069 = vmatprep.subr.mxu0 0.0
    %5070 = vmatpush2.msra.mxu0 0.0
    %5071 = vmatprep.mubr.f32.mxu0 0.0
    %5072 = vmatmul.mubr.f32.gmra.mxu0 %v5005
    %v5073 = vpop.f32.mrf.mxu0
    %v5074 = vadd.f32 0.0, %v5073
    %v5075 = vpop.f32.mrf.mxu0
    %v5076 = vadd.f32 0.0, %v5075
    %5077 = vdwg.mxu0
    %v5078 = vlaneseq
    %v5079 = vshrl.u32 %v5078, 7
    %v5080 = vsub.s32 0, %v5079
    %v5081 = vrot.slane %v5074, %v5080
    %v5082 = vlaneseq
    %v5083 = vshrl.u32 %v5082, 7
    %v5084 = vsub.s32 0, %v5083
    %v5085 = vrot.slane %v5076, %v5084
    %v5086 = vsub.f32 %v4875, %v5081
    %v5087 = vsub.f32 %v4876, %v5085
    %v5088 = vsub.f32 %v4877, %v5081
    %v5089 = vsub.f32 %v4878, %v5085
    %v5090 = vmul.f32 %v5086, %v5086
    %v5091 = vmul.f32 %v5087, %v5087
    %v5092 = vmul.f32 %v5088, %v5088
    %v5093 = vmul.f32 %v5089, %v5089
    %v5094 = vadd.f32 %v5090, %v5092
    %v5095 = vrot.slane %v5094, 4
    %v5096 = vadd.f32 %v5094, %v5095
    %v5097 = vrot.slane %v5096, 2
    %v5098 = vadd.f32 %v5096, %v5097
    %v5099 = vrot.slane %v5098, 1
    %v5100 = vadd.f32 %v5098, %v5099
    %v5101 = vadd.f32 %v5091, %v5093
    %v5102 = vrot.slane %v5101, 4
    %v5103 = vadd.f32 %v5101, %v5102
    %v5104 = vrot.slane %v5103, 2
    %v5105 = vadd.f32 %v5103, %v5104
    %v5106 = vrot.slane %v5105, 1
    %v5107 = vadd.f32 %v5105, %v5106
    %5108 = vmatprep.subr.mxu0 0.0
    %5109 = vmatpush1.msra.mxu0 %v4894
    %5110 = vmatprep.subr.mxu0 0.0
    %5111 = vmatpush1.msra.mxu0 %v4893
    %5112 = vmatprep.subr.mxu0 0.0
    %5113 = vmatpush1.msra.mxu0 %v4892
    %5114 = vmatprep.subr.mxu0 0.0
    %5115 = vmatpush1.msra.mxu0 %v4891
    %5116 = vmatprep.subr.mxu0 0.0
    %5117 = vmatpush1.msra.mxu0 %v4890
    %5118 = vmatprep.subr.mxu0 0.0
    %5119 = vmatpush1.msra.mxu0 %v4889
    %5120 = vmatprep.subr.mxu0 0.0
    %5121 = vmatpush1.msra.mxu0 %v4888
    %5122 = vmatprep.subr.mxu0 0.0
    %5123 = vmatpush1.msra.mxu0 %v4887
    %5124 = vmatprep.subr.mxu0 0.0
    %5125 = vmatpush1.msra.mxu0 %v4886
    %5126 = vmatprep.subr.mxu0 0.0
    %5127 = vmatpush1.msra.mxu0 %v4885
    %5128 = vmatprep.subr.mxu0 0.0
    %5129 = vmatpush1.msra.mxu0 %v4884
    %5130 = vmatprep.subr.mxu0 0.0
    %5131 = vmatpush1.msra.mxu0 %v4883
    %5132 = vmatprep.subr.mxu0 0.0
    %5133 = vmatpush1.msra.mxu0 %v4882
    %5134 = vmatprep.subr.mxu0 0.0
    %5135 = vmatpush1.msra.mxu0 %v4881
    %5136 = vmatprep.subr.mxu0 0.0
    %5137 = vmatpush1.msra.mxu0 %v4880
    %5138 = vmatprep.subr.mxu0 0.0
    %5139 = vmatpush1.msra.mxu0 %v4879
    %5140 = vmatprep.subr.mxu0 0.0
    %5141 = vmatpush2.msra.mxu0 %v4910
    %5142 = vmatprep.subr.mxu0 0.0
    %5143 = vmatpush2.msra.mxu0 %v4909
    %5144 = vmatprep.subr.mxu0 0.0
    %5145 = vmatpush2.msra.mxu0 %v4908
    %5146 = vmatprep.subr.mxu0 0.0
    %5147 = vmatpush2.msra.mxu0 %v4907
    %5148 = vmatprep.subr.mxu0 0.0
    %5149 = vmatpush2.msra.mxu0 %v4906
    %5150 = vmatprep.subr.mxu0 0.0
    %5151 = vmatpush2.msra.mxu0 %v4905
    %5152 = vmatprep.subr.mxu0 0.0
    %5153 = vmatpush2.msra.mxu0 %v4904
    %5154 = vmatprep.subr.mxu0 0.0
    %5155 = vmatpush2.msra.mxu0 %v4903
    %5156 = vmatprep.subr.mxu0 0.0
    %5157 = vmatpush2.msra.mxu0 %v4902
    %5158 = vmatprep.subr.mxu0 0.0
    %5159 = vmatpush2.msra.mxu0 %v4901
    %5160 = vmatprep.subr.mxu0 0.0
    %5161 = vmatpush2.msra.mxu0 %v4900
    %5162 = vmatprep.subr.mxu0 0.0
    %5163 = vmatpush2.msra.mxu0 %v4899
    %5164 = vmatprep.subr.mxu0 0.0
    %5165 = vmatpush2.msra.mxu0 %v4898
    %5166 = vmatprep.subr.mxu0 0.0
    %5167 = vmatpush2.msra.mxu0 %v4897
    %5168 = vmatprep.subr.mxu0 0.0
    %5169 = vmatpush2.msra.mxu0 %v4896
    %5170 = vmatprep.subr.mxu0 0.0
    %5171 = vmatpush2.msra.mxu0 %v4895
    %5172 = vmatprep.mubr.f32.mxu0 %v5107
    %5173 = vmatmul.mubr.f32.gmra.mxu0 %v5100
    %v5174 = vpop.f32.mrf.mxu0
    %v5175 = vadd.f32 0.0, %v5174
    %v5176 = vpop.f32.mrf.mxu0
    %5177 = vdwg.mxu0
    %v5178 = vmul.f32 %v5175, 0.0078125
    %v5179 = vld [vmem:[#allocation17] sm:$0x1]
    %v5180 = vadd.f32 %v5178, 1e-05
    %v5181 = vrsqrt.pop %v5180
    %v5182 = vmul.f32 %v5179, %v5181
    %v5184 = vsel %vm3695, %v5182, 0
    %5186 = vmatprep.subr.mxu0 0.0
    %5187 = vmatpush1.msra.mxu0 0.0
    %5188 = vmatprep.subr.mxu0 0.0
    %5189 = vmatpush1.msra.mxu0 0.0
    %5190 = vmatprep.subr.mxu0 0.0
    %5191 = vmatpush1.msra.mxu0 0.0
    %5192 = vmatprep.subr.mxu0 0.0
    %5193 = vmatpush1.msra.mxu0 0.0
    %5194 = vmatprep.subr.mxu0 0.0
    %5195 = vmatpush1.msra.mxu0 0.0
    %5196 = vmatprep.subr.mxu0 0.0
    %5197 = vmatpush1.msra.mxu0 0.0
    %5198 = vmatprep.subr.mxu0 0.0
    %5199 = vmatpush1.msra.mxu0 0.0
    %5200 = vmatprep.subr.mxu0 0.0
    %5201 = vmatpush1.msra.mxu0 0.0
    %5202 = vmatprep.subr.mxu0 0.0
    %5203 = vmatpush1.msra.mxu0 0.0
    %5204 = vmatprep.subr.mxu0 0.0
    %5205 = vmatpush1.msra.mxu0 0.0
    %5206 = vmatprep.subr.mxu0 0.0
    %5207 = vmatpush1.msra.mxu0 0.0
    %5208 = vmatprep.subr.mxu0 0.0
    %5209 = vmatpush1.msra.mxu0 0.0
    %5210 = vmatprep.subr.mxu0 %v4918
    %5211 = vmatpush1.msra.mxu0 %v4917
    %5212 = vmatprep.subr.mxu0 %v4916
    %5213 = vmatpush1.msra.mxu0 %v4915
    %5214 = vmatprep.subr.mxu0 %v4914
    %5215 = vmatpush1.msra.mxu0 %v4913
    %5216 = vmatprep.subr.mxu0 %v4912
    %5217 = vmatpush1.msra.mxu0 %v4911
    %5218 = vmatprep.subr.mxu0 0.0
    %5219 = vmatpush2.msra.mxu0 0.0
    %5220 = vmatprep.subr.mxu0 0.0
    %5221 = vmatpush2.msra.mxu0 0.0
    %5222 = vmatprep.subr.mxu0 0.0
    %5223 = vmatpush2.msra.mxu0 0.0
    %5224 = vmatprep.subr.mxu0 0.0
    %5225 = vmatpush2.msra.mxu0 0.0
    %5226 = vmatprep.subr.mxu0 0.0
    %5227 = vmatpush2.msra.mxu0 0.0
    %5228 = vmatprep.subr.mxu0 0.0
    %5229 = vmatpush2.msra.mxu0 0.0
    %5230 = vmatprep.subr.mxu0 0.0
    %5231 = vmatpush2.msra.mxu0 0.0
    %5232 = vmatprep.subr.mxu0 0.0
    %5233 = vmatpush2.msra.mxu0 0.0
    %5234 = vmatprep.subr.mxu0 0.0
    %5235 = vmatpush2.msra.mxu0 0.0
    %5236 = vmatprep.subr.mxu0 0.0
    %5237 = vmatpush2.msra.mxu0 0.0
    %5238 = vmatprep.subr.mxu0 0.0
    %5239 = vmatpush2.msra.mxu0 0.0
    %5240 = vmatprep.subr.mxu0 0.0
    %5241 = vmatpush2.msra.mxu0 0.0
    %5242 = vmatprep.subr.mxu0 0.0
    %5243 = vmatpush2.msra.mxu0 0.0
    %5244 = vmatprep.subr.mxu0 0.0
    %5245 = vmatpush2.msra.mxu0 0.0
    %5246 = vmatprep.subr.mxu0 0.0
    %5247 = vmatpush2.msra.mxu0 0.0
    %5248 = vmatprep.subr.mxu0 0.0
    %5249 = vmatpush2.msra.mxu0 0.0
    %5250 = vmatprep.mubr.f32.mxu0 0.0
    %5251 = vmatmul.mubr.f32.gmra.mxu0 %v5184
    %v5252 = vpop.f32.mrf.mxu0
    %v5253 = vadd.f32 0.0, %v5252
    %v5254 = vpop.f32.mrf.mxu0
    %v5255 = vadd.f32 0.0, %v5254
    %5256 = vdwg.mxu0
    %v5257 = vlaneseq
    %v5258 = vshrl.u32 %v5257, 7
    %v5259 = vsub.s32 0, %v5258
    %v5260 = vrot.slane %v5253, %v5259
    %v5261 = vlaneseq
    %v5262 = vshrl.u32 %v5261, 7
    %v5263 = vsub.s32 0, %v5262
    %v5264 = vrot.slane %v5255, %v5263
    %v5265 = vmul.f32 %v5086, %v5260
    %v5266 = vmul.f32 %v5087, %v5264
    %v5267 = vmul.f32 %v5088, %v5260
    %v5268 = vmul.f32 %v5089, %v5264
    %v5269 = vld [vmem:[#allocation19] sm:$0x3]
    %v5271 = vlaneseq
    %v5272 = vshrl.u32 %v5271, 7
    %v5273 = vsub.s32 0, %v5272
    %v5274 = vrot.slane %v5269, %v5273
    %v5275 = vlaneseq
    %v5276 = vshrl.u32 %v5275, 7
    %v5277 = vsub.s32 1, %v5276
    %v5278 = vrot.slane %v5269, %v5277
    %v5281 = vadd.f32 %v5265, %v5274
    %v5282 = vadd.f32 %v5266, %v5278
    %v5283 = vadd.f32 %v5267, %v5274
    %v5284 = vadd.f32 %v5268, %v5278
    %vm5285 = vcmp.ge.f32.partialorder %v5281, 0.0
    %vm5286 = vcmp.ge.f32.partialorder %v5282, 0.0
    %vm5287 = vcmp.ge.f32.partialorder %v5283, 0.0
    %vm5288 = vcmp.ge.f32.partialorder %v5284, 0.0
    %v5289 = vmul.f32 %v5281, 0.2
    %v5290 = vmul.f32 %v5282, 0.2
    %v5291 = vmul.f32 %v5283, 0.2
    %v5292 = vmul.f32 %v5284, 0.2
    %v5293 = vsel %vm5285, %v5281, %v5289
    %v5294 = vsel %vm5286, %v5282, %v5290
    %v5295 = vsel %vm5287, %v5283, %v5291
    %v5296 = vsel %vm5288, %v5284, %v5292
    %v5297 = vpack.c.bf16 %v5295, %v5293
    %v5298 = vpack.c.bf16 %v5296, %v5294
    %v5299 = vld [vmem:[%s18] sm:$0xf]
    %v5301 = vsel %vm3358, %v5299, 0
    %5303 = vmatprep.subr.bf16.mxu0 0
    %5304 = vmatpush1.bf16.msra.mxu0 0
    %5305 = vmatprep.subr.bf16.mxu0 0
    %5306 = vmatpush1.bf16.msra.mxu0 0
    %5307 = vmatprep.subr.bf16.mxu0 0
    %5308 = vmatpush1.bf16.msra.mxu0 0
    %5309 = vmatprep.subr.bf16.mxu0 0
    %5310 = vmatpush1.bf16.msra.mxu0 0
    %5311 = vmatprep.subr.bf16.mxu0 0
    %5312 = vmatpush1.bf16.msra.mxu0 0
    %5313 = vmatprep.subr.bf16.mxu0 0
    %5314 = vmatpush1.bf16.msra.mxu0 0
    %5315 = vmatprep.subr.bf16.mxu0 0
    %5316 = vmatpush1.bf16.msra.mxu0 0
    %5317 = vmatprep.subr.bf16.mxu0 %v5298
    %5318 = vmatpush1.bf16.msra.mxu0 %v5297
    %5319 = vmatprep.subr.bf16.mxu0 0
    %5320 = vmatpush2.bf16.msra.mxu0 0
    %5321 = vmatprep.subr.bf16.mxu0 0
    %5322 = vmatpush2.bf16.msra.mxu0 0
    %5323 = vmatprep.subr.bf16.mxu0 0
    %5324 = vmatpush2.bf16.msra.mxu0 0
    %5325 = vmatprep.subr.bf16.mxu0 0
    %5326 = vmatpush2.bf16.msra.mxu0 0
    %5327 = vmatprep.subr.bf16.mxu0 0
    %5328 = vmatpush2.bf16.msra.mxu0 0
    %5329 = vmatprep.subr.bf16.mxu0 0
    %5330 = vmatpush2.bf16.msra.mxu0 0
    %5331 = vmatprep.subr.bf16.mxu0 0
    %5332 = vmatpush2.bf16.msra.mxu0 0
    %5333 = vmatprep.subr.bf16.mxu0 0
    %5334 = vmatpush2.bf16.msra.mxu0 0
    %5335 = vmatprep.mubr.bf16.mxu0 0
    %5336 = vmatmul.mubr.bf16.gmra.mxu0 %v5301
    %v5337 = vpop.f32.mrf.mxu0
    %v5338 = vadd.f32 0.0, %v5337
    %v5339 = vpop.f32.mrf.mxu0
    %v5340 = vadd.f32 0.0, %v5339
    %v5341 = vpop.f32.mrf.mxu0
    %v5342 = vpop.f32.mrf.mxu0
    %5343 = vdwg.mxu0
    %v5344 = vpack.c.bf16 %v5338, %v5338
    %v5345 = vpack.c.bf16 %v5340, %v5340
    %v5346 = vld [vmem:[#allocation22] sm:$0xff]
    %v5347 = vld [vmem:[#allocation22 + $0x8] sm:$0xff]
    %v5348 = vld [vmem:[#allocation22 + $0x10] sm:$0xff]
    %v5349 = vld [vmem:[#allocation22 + $0x18] sm:$0xff]
    %v5350 = vld [vmem:[#allocation22 + $0x20] sm:$0xff]
    %v5351 = vld [vmem:[#allocation22 + $0x28] sm:$0xff]
    %v5352 = vld [vmem:[#allocation22 + $0x30] sm:$0xff]
    %v5353 = vld [vmem:[#allocation22 + $0x38] sm:$0xff]
    %v5354 = vld [vmem:[#allocation22 + $0x40] sm:$0xff]
    %v5355 = vld [vmem:[#allocation22 + $0x48] sm:$0xff]
    %v5356 = vld [vmem:[#allocation22 + $0x50] sm:$0xff]
    %v5357 = vld [vmem:[#allocation22 + $0x58] sm:$0xff]
    %v5358 = vld [vmem:[#allocation22 + $0x60] sm:$0xff]
    %v5359 = vld [vmem:[#allocation22 + $0x68] sm:$0xff]
    %v5360 = vld [vmem:[#allocation22 + $0x70] sm:$0xff]
    %v5361 = vld [vmem:[#allocation22 + $0x78] sm:$0xff]
    %v5362 = vld [vmem:[#allocation22 + $0x80] sm:$0xff]
    %v5363 = vld [vmem:[#allocation22 + $0x88] sm:$0xff]
    %v5364 = vld [vmem:[#allocation22 + $0x90] sm:$0xff]
    %v5365 = vld [vmem:[#allocation22 + $0x98] sm:$0xff]
    %v5366 = vld [vmem:[#allocation22 + $0xa0] sm:$0xff]
    %v5367 = vld [vmem:[#allocation22 + $0xa8] sm:$0xff]
    %v5368 = vld [vmem:[#allocation22 + $0xb0] sm:$0xff]
    %v5369 = vld [vmem:[#allocation22 + $0xb8] sm:$0xff]
    %v5370 = vld [vmem:[#allocation22 + $0xc0] sm:$0xff]
    %v5371 = vld [vmem:[#allocation22 + $0xc8] sm:$0xff]
    %v5372 = vld [vmem:[#allocation22 + $0xd0] sm:$0xff]
    %v5373 = vld [vmem:[#allocation22 + $0xd8] sm:$0xff]
    %v5374 = vld [vmem:[#allocation22 + $0xe0] sm:$0xff]
    %v5375 = vld [vmem:[#allocation22 + $0xe8] sm:$0xff]
    %v5376 = vld [vmem:[#allocation22 + $0xf0] sm:$0xff]
    %v5377 = vld [vmem:[#allocation22 + $0xf8] sm:$0xff]
    %s5378 = scalar_lea.vmem %s18, 4
    %v5379 = vld [vmem:[%s5378] sm:$0xf]
    %v5381 = vsel %vm3358, %v5379, 0
    %5383 = vmatprep.subr.bf16.mxu0 0
    %5384 = vmatpush1.bf16.msra.mxu0 0
    %5385 = vmatprep.subr.bf16.mxu0 0
    %5386 = vmatpush1.bf16.msra.mxu0 0
    %5387 = vmatprep.subr.bf16.mxu0 0
    %5388 = vmatpush1.bf16.msra.mxu0 0
    %5389 = vmatprep.subr.bf16.mxu0 0
    %5390 = vmatpush1.bf16.msra.mxu0 0
    %5391 = vmatprep.subr.bf16.mxu0 0
    %5392 = vmatpush1.bf16.msra.mxu0 0
    %5393 = vmatprep.subr.bf16.mxu0 0
    %5394 = vmatpush1.bf16.msra.mxu0 0
    %5395 = vmatprep.subr.bf16.mxu0 0
    %5396 = vmatpush1.bf16.msra.mxu0 0
    %5397 = vmatprep.subr.bf16.mxu0 %v5298
    %5398 = vmatpush1.bf16.msra.mxu0 %v5297
    %5399 = vmatprep.subr.bf16.mxu0 0
    %5400 = vmatpush2.bf16.msra.mxu0 0
    %5401 = vmatprep.subr.bf16.mxu0 0
    %5402 = vmatpush2.bf16.msra.mxu0 0
    %5403 = vmatprep.subr.bf16.mxu0 0
    %5404 = vmatpush2.bf16.msra.mxu0 0
    %5405 = vmatprep.subr.bf16.mxu0 0
    %5406 = vmatpush2.bf16.msra.mxu0 0
    %5407 = vmatprep.subr.bf16.mxu0 0
    %5408 = vmatpush2.bf16.msra.mxu0 0
    %5409 = vmatprep.subr.bf16.mxu0 0
    %5410 = vmatpush2.bf16.msra.mxu0 0
    %5411 = vmatprep.subr.bf16.mxu0 0
    %5412 = vmatpush2.bf16.msra.mxu0 0
    %5413 = vmatprep.subr.bf16.mxu0 0
    %5414 = vmatpush2.bf16.msra.mxu0 0
    %5415 = vmatprep.mubr.bf16.mxu0 0
    %5416 = vmatmul.mubr.bf16.gmra.mxu0 %v5381
    %v5417 = vpop.f32.mrf.mxu0
    %v5418 = vadd.f32 0.0, %v5417
    %v5419 = vpop.f32.mrf.mxu0
    %v5420 = vadd.f32 0.0, %v5419
    %v5421 = vpop.f32.mrf.mxu0
    %v5422 = vpop.f32.mrf.mxu0
    %5423 = vdwg.mxu0
    %v5424 = vpack.c.bf16 %v5418, %v5418
    %v5425 = vpack.c.bf16 %v5420, %v5420
    %s5426 = scalar_lea.vmem [#allocation22], 256
    %v5427 = vld [vmem:[%s5426] sm:$0xff]
    %v5428 = vld [vmem:[%s5426 + $0x8] sm:$0xff]
    %v5429 = vld [vmem:[%s5426 + $0x10] sm:$0xff]
    %v5430 = vld [vmem:[%s5426 + $0x18] sm:$0xff]
    %v5431 = vld [vmem:[%s5426 + $0x20] sm:$0xff]
    %v5432 = vld [vmem:[%s5426 + $0x28] sm:$0xff]
    %v5433 = vld [vmem:[%s5426 + $0x30] sm:$0xff]
    %v5434 = vld [vmem:[%s5426 + $0x38] sm:$0xff]
    %v5435 = vld [vmem:[%s5426 + $0x40] sm:$0xff]
    %v5436 = vld [vmem:[%s5426 + $0x48] sm:$0xff]
    %v5437 = vld [vmem:[%s5426 + $0x50] sm:$0xff]
    %v5438 = vld [vmem:[%s5426 + $0x58] sm:$0xff]
    %v5439 = vld [vmem:[%s5426 + $0x60] sm:$0xff]
    %v5440 = vld [vmem:[%s5426 + $0x68] sm:$0xff]
    %v5441 = vld [vmem:[%s5426 + $0x70] sm:$0xff]
    %v5442 = vld [vmem:[%s5426 + $0x78] sm:$0xff]
    %v5443 = vld [vmem:[%s5426 + $0x80] sm:$0xff]
    %v5444 = vld [vmem:[%s5426 + $0x88] sm:$0xff]
    %v5445 = vld [vmem:[%s5426 + $0x90] sm:$0xff]
    %v5446 = vld [vmem:[%s5426 + $0x98] sm:$0xff]
    %v5447 = vld [vmem:[%s5426 + $0xa0] sm:$0xff]
    %v5448 = vld [vmem:[%s5426 + $0xa8] sm:$0xff]
    %v5449 = vld [vmem:[%s5426 + $0xb0] sm:$0xff]
    %v5450 = vld [vmem:[%s5426 + $0xb8] sm:$0xff]
    %v5451 = vld [vmem:[%s5426 + $0xc0] sm:$0xff]
    %v5452 = vld [vmem:[%s5426 + $0xc8] sm:$0xff]
    %v5453 = vld [vmem:[%s5426 + $0xd0] sm:$0xff]
    %v5454 = vld [vmem:[%s5426 + $0xd8] sm:$0xff]
    %v5455 = vld [vmem:[%s5426 + $0xe0] sm:$0xff]
    %v5456 = vld [vmem:[%s5426 + $0xe8] sm:$0xff]
    %v5457 = vld [vmem:[%s5426 + $0xf0] sm:$0xff]
    %v5458 = vld [vmem:[%s5426 + $0xf8] sm:$0xff]
    %v5491 = vunpack.c.l.b16 %v5427
    %v5492 = vunpack.c.h.b16 %v5427
    %v5493 = vunpack.c.l.b16 %v5428
    %v5494 = vunpack.c.h.b16 %v5428
    %v5495 = vunpack.c.l.b16 %v5429
    %v5496 = vunpack.c.h.b16 %v5429
    %v5497 = vunpack.c.l.b16 %v5430
    %v5498 = vunpack.c.h.b16 %v5430
    %v5499 = vunpack.c.l.b16 %v5431
    %v5500 = vunpack.c.h.b16 %v5431
    %v5501 = vunpack.c.l.b16 %v5432
    %v5502 = vunpack.c.h.b16 %v5432
    %v5503 = vunpack.c.l.b16 %v5433
    %v5504 = vunpack.c.h.b16 %v5433
    %v5505 = vunpack.c.l.b16 %v5434
    %v5506 = vunpack.c.h.b16 %v5434
    %v5507 = vunpack.c.l.b16 %v5435
    %v5508 = vunpack.c.h.b16 %v5435
    %v5509 = vunpack.c.l.b16 %v5436
    %v5510 = vunpack.c.h.b16 %v5436
    %v5511 = vunpack.c.l.b16 %v5437
    %v5512 = vunpack.c.h.b16 %v5437
    %v5513 = vunpack.c.l.b16 %v5438
    %v5514 = vunpack.c.h.b16 %v5438
    %v5515 = vunpack.c.l.b16 %v5439
    %v5516 = vunpack.c.h.b16 %v5439
    %v5517 = vunpack.c.l.b16 %v5440
    %v5518 = vunpack.c.h.b16 %v5440
    %v5519 = vunpack.c.l.b16 %v5441
    %v5520 = vunpack.c.h.b16 %v5441
    %v5521 = vunpack.c.l.b16 %v5442
    %v5522 = vunpack.c.h.b16 %v5442
    %v5523 = vunpack.c.l.b16 %v5443
    %v5524 = vunpack.c.h.b16 %v5443
    %v5525 = vunpack.c.l.b16 %v5444
    %v5526 = vunpack.c.h.b16 %v5444
    %v5527 = vunpack.c.l.b16 %v5445
    %v5528 = vunpack.c.h.b16 %v5445
    %v5529 = vunpack.c.l.b16 %v5446
    %v5530 = vunpack.c.h.b16 %v5446
    %v5531 = vunpack.c.l.b16 %v5447
    %v5532 = vunpack.c.h.b16 %v5447
    %v5533 = vunpack.c.l.b16 %v5448
    %v5534 = vunpack.c.h.b16 %v5448
    %v5535 = vunpack.c.l.b16 %v5449
    %v5536 = vunpack.c.h.b16 %v5449
    %v5537 = vunpack.c.l.b16 %v5450
    %v5538 = vunpack.c.h.b16 %v5450
    %v5539 = vunpack.c.l.b16 %v5451
    %v5540 = vunpack.c.h.b16 %v5451
    %v5541 = vunpack.c.l.b16 %v5452
    %v5542 = vunpack.c.h.b16 %v5452
    %v5543 = vunpack.c.l.b16 %v5453
    %v5544 = vunpack.c.h.b16 %v5453
    %v5545 = vunpack.c.l.b16 %v5454
    %v5546 = vunpack.c.h.b16 %v5454
    %v5547 = vunpack.c.l.b16 %v5455
    %v5548 = vunpack.c.h.b16 %v5455
    %v5549 = vunpack.c.l.b16 %v5456
    %v5550 = vunpack.c.h.b16 %v5456
    %v5551 = vunpack.c.l.b16 %v5457
    %v5552 = vunpack.c.h.b16 %v5457
    %v5553 = vunpack.c.l.b16 %v5458
    %v5554 = vunpack.c.h.b16 %v5458
    %v5555 = vpack.c.b16 %v5493, %v5491
    %v5556 = vpack.c.b16 %v5494, %v5492
    %v5557 = vpack.c.b16 %v5497, %v5495
    %v5558 = vpack.c.b16 %v5498, %v5496
    %v5559 = vpack.c.b16 %v5501, %v5499
    %v5560 = vpack.c.b16 %v5502, %v5500
    %v5561 = vpack.c.b16 %v5505, %v5503
    %v5562 = vpack.c.b16 %v5506, %v5504
    %v5563 = vpack.c.b16 %v5509, %v5507
    %v5564 = vpack.c.b16 %v5510, %v5508
    %v5565 = vpack.c.b16 %v5513, %v5511
    %v5566 = vpack.c.b16 %v5514, %v5512
    %v5567 = vpack.c.b16 %v5517, %v5515
    %v5568 = vpack.c.b16 %v5518, %v5516
    %v5569 = vpack.c.b16 %v5521, %v5519
    %v5570 = vpack.c.b16 %v5522, %v5520
    %v5571 = vpack.c.b16 %v5525, %v5523
    %v5572 = vpack.c.b16 %v5526, %v5524
    %v5573 = vpack.c.b16 %v5529, %v5527
    %v5574 = vpack.c.b16 %v5530, %v5528
    %v5575 = vpack.c.b16 %v5533, %v5531
    %v5576 = vpack.c.b16 %v5534, %v5532
    %v5577 = vpack.c.b16 %v5537, %v5535
    %v5578 = vpack.c.b16 %v5538, %v5536
    %v5579 = vpack.c.b16 %v5541, %v5539
    %v5580 = vpack.c.b16 %v5542, %v5540
    %v5581 = vpack.c.b16 %v5545, %v5543
    %v5582 = vpack.c.b16 %v5546, %v5544
    %v5583 = vpack.c.b16 %v5549, %v5547
    %v5584 = vpack.c.b16 %v5550, %v5548
    %v5585 = vpack.c.b16 %v5553, %v5551
    %v5586 = vpack.c.b16 %v5554, %v5552
    %5619 = vmatprep.subr.bf16.mxu0 %v5570
    %5620 = vmatpush1.bf16.msra.mxu0 %v5569
    %5621 = vmatprep.subr.bf16.mxu0 %v5568
    %5622 = vmatpush1.bf16.msra.mxu0 %v5567
    %5623 = vmatprep.subr.bf16.mxu0 %v5566
    %5624 = vmatpush1.bf16.msra.mxu0 %v5565
    %5625 = vmatprep.subr.bf16.mxu0 %v5564
    %5626 = vmatpush1.bf16.msra.mxu0 %v5563
    %5627 = vmatprep.subr.bf16.mxu0 %v5562
    %5628 = vmatpush1.bf16.msra.mxu0 %v5561
    %5629 = vmatprep.subr.bf16.mxu0 %v5560
    %5630 = vmatpush1.bf16.msra.mxu0 %v5559
    %5631 = vmatprep.subr.bf16.mxu0 %v5558
    %5632 = vmatpush1.bf16.msra.mxu0 %v5557
    %5633 = vmatprep.subr.bf16.mxu0 %v5556
    %5634 = vmatpush1.bf16.msra.mxu0 %v5555
    %5635 = vmatprep.subr.bf16.mxu0 %v5586
    %5636 = vmatpush2.bf16.msra.mxu0 %v5585
    %5637 = vmatprep.subr.bf16.mxu0 %v5584
    %5638 = vmatpush2.bf16.msra.mxu0 %v5583
    %5639 = vmatprep.subr.bf16.mxu0 %v5582
    %5640 = vmatpush2.bf16.msra.mxu0 %v5581
    %5641 = vmatprep.subr.bf16.mxu0 %v5580
    %5642 = vmatpush2.bf16.msra.mxu0 %v5579
    %5643 = vmatprep.subr.bf16.mxu0 %v5578
    %5644 = vmatpush2.bf16.msra.mxu0 %v5577
    %5645 = vmatprep.subr.bf16.mxu0 %v5576
    %5646 = vmatpush2.bf16.msra.mxu0 %v5575
    %5647 = vmatprep.subr.bf16.mxu0 %v5574
    %5648 = vmatpush2.bf16.msra.mxu0 %v5573
    %5649 = vmatprep.subr.bf16.mxu0 %v5572
    %5650 = vmatpush2.bf16.msra.mxu0 %v5571
    %5651 = vmatprep.mubr.bf16.mxu0 %v5425
    %5652 = vmatmul.mubr.bf16.gmra.mxu0 %v5424
    %v5653 = vpop.f32.mrf.mxu0
    %v5654 = vadd.f32 0.0, %v5653
    %v5655 = vpop.f32.mrf.mxu0
    %v5656 = vadd.f32 0.0, %v5655
    %v5657 = vpop.f32.mrf.mxu0
    %v5658 = vpop.f32.mrf.mxu0
    %5659 = vdwg.mxu0
    %v5692 = vunpack.c.l.b16 %v5346
    %v5693 = vunpack.c.h.b16 %v5346
    %v5694 = vunpack.c.l.b16 %v5347
    %v5695 = vunpack.c.h.b16 %v5347
    %v5696 = vunpack.c.l.b16 %v5348
    %v5697 = vunpack.c.h.b16 %v5348
    %v5698 = vunpack.c.l.b16 %v5349
    %v5699 = vunpack.c.h.b16 %v5349
    %v5700 = vunpack.c.l.b16 %v5350
    %v5701 = vunpack.c.h.b16 %v5350
    %v5702 = vunpack.c.l.b16 %v5351
    %v5703 = vunpack.c.h.b16 %v5351
    %v5704 = vunpack.c.l.b16 %v5352
    %v5705 = vunpack.c.h.b16 %v5352
    %v5706 = vunpack.c.l.b16 %v5353
    %v5707 = vunpack.c.h.b16 %v5353
    %v5708 = vunpack.c.l.b16 %v5354
    %v5709 = vunpack.c.h.b16 %v5354
    %v5710 = vunpack.c.l.b16 %v5355
    %v5711 = vunpack.c.h.b16 %v5355
    %v5712 = vunpack.c.l.b16 %v5356
    %v5713 = vunpack.c.h.b16 %v5356
    %v5714 = vunpack.c.l.b16 %v5357
    %v5715 = vunpack.c.h.b16 %v5357
    %v5716 = vunpack.c.l.b16 %v5358
    %v5717 = vunpack.c.h.b16 %v5358
    %v5718 = vunpack.c.l.b16 %v5359
    %v5719 = vunpack.c.h.b16 %v5359
    %v5720 = vunpack.c.l.b16 %v5360
    %v5721 = vunpack.c.h.b16 %v5360
    %v5722 = vunpack.c.l.b16 %v5361
    %v5723 = vunpack.c.h.b16 %v5361
    %v5724 = vunpack.c.l.b16 %v5362
    %v5725 = vunpack.c.h.b16 %v5362
    %v5726 = vunpack.c.l.b16 %v5363
    %v5727 = vunpack.c.h.b16 %v5363
    %v5728 = vunpack.c.l.b16 %v5364
    %v5729 = vunpack.c.h.b16 %v5364
    %v5730 = vunpack.c.l.b16 %v5365
    %v5731 = vunpack.c.h.b16 %v5365
    %v5732 = vunpack.c.l.b16 %v5366
    %v5733 = vunpack.c.h.b16 %v5366
    %v5734 = vunpack.c.l.b16 %v5367
    %v5735 = vunpack.c.h.b16 %v5367
    %v5736 = vunpack.c.l.b16 %v5368
    %v5737 = vunpack.c.h.b16 %v5368
    %v5738 = vunpack.c.l.b16 %v5369
    %v5739 = vunpack.c.h.b16 %v5369
    %v5740 = vunpack.c.l.b16 %v5370
    %v5741 = vunpack.c.h.b16 %v5370
    %v5742 = vunpack.c.l.b16 %v5371
    %v5743 = vunpack.c.h.b16 %v5371
    %v5744 = vunpack.c.l.b16 %v5372
    %v5745 = vunpack.c.h.b16 %v5372
    %v5746 = vunpack.c.l.b16 %v5373
    %v5747 = vunpack.c.h.b16 %v5373
    %v5748 = vunpack.c.l.b16 %v5374
    %v5749 = vunpack.c.h.b16 %v5374
    %v5750 = vunpack.c.l.b16 %v5375
    %v5751 = vunpack.c.h.b16 %v5375
    %v5752 = vunpack.c.l.b16 %v5376
    %v5753 = vunpack.c.h.b16 %v5376
    %v5754 = vunpack.c.l.b16 %v5377
    %v5755 = vunpack.c.h.b16 %v5377
    %v5756 = vpack.c.b16 %v5694, %v5692
    %v5757 = vpack.c.b16 %v5695, %v5693
    %v5758 = vpack.c.b16 %v5698, %v5696
    %v5759 = vpack.c.b16 %v5699, %v5697
    %v5760 = vpack.c.b16 %v5702, %v5700
    %v5761 = vpack.c.b16 %v5703, %v5701
    %v5762 = vpack.c.b16 %v5706, %v5704
    %v5763 = vpack.c.b16 %v5707, %v5705
    %v5764 = vpack.c.b16 %v5710, %v5708
    %v5765 = vpack.c.b16 %v5711, %v5709
    %v5766 = vpack.c.b16 %v5714, %v5712
    %v5767 = vpack.c.b16 %v5715, %v5713
    %v5768 = vpack.c.b16 %v5718, %v5716
    %v5769 = vpack.c.b16 %v5719, %v5717
    %v5770 = vpack.c.b16 %v5722, %v5720
    %v5771 = vpack.c.b16 %v5723, %v5721
    %v5772 = vpack.c.b16 %v5726, %v5724
    %v5773 = vpack.c.b16 %v5727, %v5725
    %v5774 = vpack.c.b16 %v5730, %v5728
    %v5775 = vpack.c.b16 %v5731, %v5729
    %v5776 = vpack.c.b16 %v5734, %v5732
    %v5777 = vpack.c.b16 %v5735, %v5733
    %v5778 = vpack.c.b16 %v5738, %v5736
    %v5779 = vpack.c.b16 %v5739, %v5737
    %v5780 = vpack.c.b16 %v5742, %v5740
    %v5781 = vpack.c.b16 %v5743, %v5741
    %v5782 = vpack.c.b16 %v5746, %v5744
    %v5783 = vpack.c.b16 %v5747, %v5745
    %v5784 = vpack.c.b16 %v5750, %v5748
    %v5785 = vpack.c.b16 %v5751, %v5749
    %v5786 = vpack.c.b16 %v5754, %v5752
    %v5787 = vpack.c.b16 %v5755, %v5753
    %5820 = vmatprep.subr.bf16.mxu0 %v5771
    %5821 = vmatpush1.bf16.msra.mxu0 %v5770
    %5822 = vmatprep.subr.bf16.mxu0 %v5769
    %5823 = vmatpush1.bf16.msra.mxu0 %v5768
    %5824 = vmatprep.subr.bf16.mxu0 %v5767
    %5825 = vmatpush1.bf16.msra.mxu0 %v5766
    %5826 = vmatprep.subr.bf16.mxu0 %v5765
    %5827 = vmatpush1.bf16.msra.mxu0 %v5764
    %5828 = vmatprep.subr.bf16.mxu0 %v5763
    %5829 = vmatpush1.bf16.msra.mxu0 %v5762
    %5830 = vmatprep.subr.bf16.mxu0 %v5761
    %5831 = vmatpush1.bf16.msra.mxu0 %v5760
    %5832 = vmatprep.subr.bf16.mxu0 %v5759
    %5833 = vmatpush1.bf16.msra.mxu0 %v5758
    %5834 = vmatprep.subr.bf16.mxu0 %v5757
    %5835 = vmatpush1.bf16.msra.mxu0 %v5756
    %5836 = vmatprep.subr.bf16.mxu0 %v5787
    %5837 = vmatpush2.bf16.msra.mxu0 %v5786
    %5838 = vmatprep.subr.bf16.mxu0 %v5785
    %5839 = vmatpush2.bf16.msra.mxu0 %v5784
    %5840 = vmatprep.subr.bf16.mxu0 %v5783
    %5841 = vmatpush2.bf16.msra.mxu0 %v5782
    %5842 = vmatprep.subr.bf16.mxu0 %v5781
    %5843 = vmatpush2.bf16.msra.mxu0 %v5780
    %5844 = vmatprep.subr.bf16.mxu0 %v5779
    %5845 = vmatpush2.bf16.msra.mxu0 %v5778
    %5846 = vmatprep.subr.bf16.mxu0 %v5777
    %5847 = vmatpush2.bf16.msra.mxu0 %v5776
    %5848 = vmatprep.subr.bf16.mxu0 %v5775
    %5849 = vmatpush2.bf16.msra.mxu0 %v5774
    %5850 = vmatprep.subr.bf16.mxu0 %v5773
    %5851 = vmatpush2.bf16.msra.mxu0 %v5772
    %5852 = vmatprep.mubr.bf16.mxu0 %v5345
    %5853 = vmatmul.mubr.bf16.gmra.mxu0 %v5344
    %v5854 = vpop.f32.mrf.mxu0
    %v5855 = vadd.f32 %v5654, %v5854
    %v5856 = vpop.f32.mrf.mxu0
    %v5857 = vadd.f32 %v5656, %v5856
    %v5858 = vpop.f32.mrf.mxu0
    %v5859 = vpop.f32.mrf.mxu0
    %5860 = vdwg.mxu0
    %s5861 = scalar_lea.vmem %s18, 8
    %v5862 = vld [vmem:[%s5861] sm:$0xf]
    %v5864 = vsel %vm3358, %v5862, 0
    %5866 = vmatprep.subr.bf16.mxu0 0
    %5867 = vmatpush1.bf16.msra.mxu0 0
    %5868 = vmatprep.subr.bf16.mxu0 0
    %5869 = vmatpush1.bf16.msra.mxu0 0
    %5870 = vmatprep.subr.bf16.mxu0 0
    %5871 = vmatpush1.bf16.msra.mxu0 0
    %5872 = vmatprep.subr.bf16.mxu0 0
    %5873 = vmatpush1.bf16.msra.mxu0 0
    %5874 = vmatprep.subr.bf16.mxu0 0
    %5875 = vmatpush1.bf16.msra.mxu0 0
    %5876 = vmatprep.subr.bf16.mxu0 0
    %5877 = vmatpush1.bf16.msra.mxu0 0
    %5878 = vmatprep.subr.bf16.mxu0 0
    %5879 = vmatpush1.bf16.msra.mxu0 0
    %5880 = vmatprep.subr.bf16.mxu0 %v5298
    %5881 = vmatpush1.bf16.msra.mxu0 %v5297
    %5882 = vmatprep.subr.bf16.mxu0 0
    %5883 = vmatpush2.bf16.msra.mxu0 0
    %5884 = vmatprep.subr.bf16.mxu0 0
    %5885 = vmatpush2.bf16.msra.mxu0 0
    %5886 = vmatprep.subr.bf16.mxu0 0
    %5887 = vmatpush2.bf16.msra.mxu0 0
    %5888 = vmatprep.subr.bf16.mxu0 0
    %5889 = vmatpush2.bf16.msra.mxu0 0
    %5890 = vmatprep.subr.bf16.mxu0 0
    %5891 = vmatpush2.bf16.msra.mxu0 0
    %5892 = vmatprep.subr.bf16.mxu0 0
    %5893 = vmatpush2.bf16.msra.mxu0 0
    %5894 = vmatprep.subr.bf16.mxu0 0
    %5895 = vmatpush2.bf16.msra.mxu0 0
    %5896 = vmatprep.subr.bf16.mxu0 0
    %5897 = vmatpush2.bf16.msra.mxu0 0
    %5898 = vmatprep.mubr.bf16.mxu0 0
    %5899 = vmatmul.mubr.bf16.gmra.mxu0 %v5864
    %v5900 = vpop.f32.mrf.mxu0
    %v5901 = vadd.f32 0.0, %v5900
    %v5902 = vpop.f32.mrf.mxu0
    %v5903 = vadd.f32 0.0, %v5902
    %v5904 = vpop.f32.mrf.mxu0
    %v5905 = vpop.f32.mrf.mxu0
    %5906 = vdwg.mxu0
    %v5907 = vpack.c.bf16 %v5901, %v5901
    %v5908 = vpack.c.bf16 %v5903, %v5903
    %s5909 = scalar_lea.vmem [#allocation22], 512
    %v5910 = vld [vmem:[%s5909] sm:$0xff]
    %v5911 = vld [vmem:[%s5909 + $0x8] sm:$0xff]
    %v5912 = vld [vmem:[%s5909 + $0x10] sm:$0xff]
    %v5913 = vld [vmem:[%s5909 + $0x18] sm:$0xff]
    %v5914 = vld [vmem:[%s5909 + $0x20] sm:$0xff]
    %v5915 = vld [vmem:[%s5909 + $0x28] sm:$0xff]
    %v5916 = vld [vmem:[%s5909 + $0x30] sm:$0xff]
    %v5917 = vld [vmem:[%s5909 + $0x38] sm:$0xff]
    %v5918 = vld [vmem:[%s5909 + $0x40] sm:$0xff]
    %v5919 = vld [vmem:[%s5909 + $0x48] sm:$0xff]
    %v5920 = vld [vmem:[%s5909 + $0x50] sm:$0xff]
    %v5921 = vld [vmem:[%s5909 + $0x58] sm:$0xff]
    %v5922 = vld [vmem:[%s5909 + $0x60] sm:$0xff]
    %v5923 = vld [vmem:[%s5909 + $0x68] sm:$0xff]
    %v5924 = vld [vmem:[%s5909 + $0x70] sm:$0xff]
    %v5925 = vld [vmem:[%s5909 + $0x78] sm:$0xff]
    %v5926 = vld [vmem:[%s5909 + $0x80] sm:$0xff]
    %v5927 = vld [vmem:[%s5909 + $0x88] sm:$0xff]
    %v5928 = vld [vmem:[%s5909 + $0x90] sm:$0xff]
    %v5929 = vld [vmem:[%s5909 + $0x98] sm:$0xff]
    %v5930 = vld [vmem:[%s5909 + $0xa0] sm:$0xff]
    %v5931 = vld [vmem:[%s5909 + $0xa8] sm:$0xff]
    %v5932 = vld [vmem:[%s5909 + $0xb0] sm:$0xff]
    %v5933 = vld [vmem:[%s5909 + $0xb8] sm:$0xff]
    %v5934 = vld [vmem:[%s5909 + $0xc0] sm:$0xff]
    %v5935 = vld [vmem:[%s5909 + $0xc8] sm:$0xff]
    %v5936 = vld [vmem:[%s5909 + $0xd0] sm:$0xff]
    %v5937 = vld [vmem:[%s5909 + $0xd8] sm:$0xff]
    %v5938 = vld [vmem:[%s5909 + $0xe0] sm:$0xff]
    %v5939 = vld [vmem:[%s5909 + $0xe8] sm:$0xff]
    %v5940 = vld [vmem:[%s5909 + $0xf0] sm:$0xff]
    %v5941 = vld [vmem:[%s5909 + $0xf8] sm:$0xff]
    %v5974 = vunpack.c.l.b16 %v5910
    %v5975 = vunpack.c.h.b16 %v5910
    %v5976 = vunpack.c.l.b16 %v5911
    %v5977 = vunpack.c.h.b16 %v5911
    %v5978 = vunpack.c.l.b16 %v5912
    %v5979 = vunpack.c.h.b16 %v5912
    %v5980 = vunpack.c.l.b16 %v5913
    %v5981 = vunpack.c.h.b16 %v5913
    %v5982 = vunpack.c.l.b16 %v5914
    %v5983 = vunpack.c.h.b16 %v5914
    %v5984 = vunpack.c.l.b16 %v5915
    %v5985 = vunpack.c.h.b16 %v5915
    %v5986 = vunpack.c.l.b16 %v5916
    %v5987 = vunpack.c.h.b16 %v5916
    %v5988 = vunpack.c.l.b16 %v5917
    %v5989 = vunpack.c.h.b16 %v5917
    %v5990 = vunpack.c.l.b16 %v5918
    %v5991 = vunpack.c.h.b16 %v5918
    %v5992 = vunpack.c.l.b16 %v5919
    %v5993 = vunpack.c.h.b16 %v5919
    %v5994 = vunpack.c.l.b16 %v5920
    %v5995 = vunpack.c.h.b16 %v5920
    %v5996 = vunpack.c.l.b16 %v5921
    %v5997 = vunpack.c.h.b16 %v5921
    %v5998 = vunpack.c.l.b16 %v5922
    %v5999 = vunpack.c.h.b16 %v5922
    %v6000 = vunpack.c.l.b16 %v5923
    %v6001 = vunpack.c.h.b16 %v5923
    %v6002 = vunpack.c.l.b16 %v5924
    %v6003 = vunpack.c.h.b16 %v5924
    %v6004 = vunpack.c.l.b16 %v5925
    %v6005 = vunpack.c.h.b16 %v5925
    %v6006 = vunpack.c.l.b16 %v5926
    %v6007 = vunpack.c.h.b16 %v5926
    %v6008 = vunpack.c.l.b16 %v5927
    %v6009 = vunpack.c.h.b16 %v5927
    %v6010 = vunpack.c.l.b16 %v5928
    %v6011 = vunpack.c.h.b16 %v5928
    %v6012 = vunpack.c.l.b16 %v5929
    %v6013 = vunpack.c.h.b16 %v5929
    %v6014 = vunpack.c.l.b16 %v5930
    %v6015 = vunpack.c.h.b16 %v5930
    %v6016 = vunpack.c.l.b16 %v5931
    %v6017 = vunpack.c.h.b16 %v5931
    %v6018 = vunpack.c.l.b16 %v5932
    %v6019 = vunpack.c.h.b16 %v5932
    %v6020 = vunpack.c.l.b16 %v5933
    %v6021 = vunpack.c.h.b16 %v5933
    %v6022 = vunpack.c.l.b16 %v5934
    %v6023 = vunpack.c.h.b16 %v5934
    %v6024 = vunpack.c.l.b16 %v5935
    %v6025 = vunpack.c.h.b16 %v5935
    %v6026 = vunpack.c.l.b16 %v5936
    %v6027 = vunpack.c.h.b16 %v5936
    %v6028 = vunpack.c.l.b16 %v5937
    %v6029 = vunpack.c.h.b16 %v5937
    %v6030 = vunpack.c.l.b16 %v5938
    %v6031 = vunpack.c.h.b16 %v5938
    %v6032 = vunpack.c.l.b16 %v5939
    %v6033 = vunpack.c.h.b16 %v5939
    %v6034 = vunpack.c.l.b16 %v5940
    %v6035 = vunpack.c.h.b16 %v5940
    %v6036 = vunpack.c.l.b16 %v5941
    %v6037 = vunpack.c.h.b16 %v5941
    %v6038 = vpack.c.b16 %v5976, %v5974
    %v6039 = vpack.c.b16 %v5977, %v5975
    %v6040 = vpack.c.b16 %v5980, %v5978
    %v6041 = vpack.c.b16 %v5981, %v5979
    %v6042 = vpack.c.b16 %v5984, %v5982
    %v6043 = vpack.c.b16 %v5985, %v5983
    %v6044 = vpack.c.b16 %v5988, %v5986
    %v6045 = vpack.c.b16 %v5989, %v5987
    %v6046 = vpack.c.b16 %v5992, %v5990
    %v6047 = vpack.c.b16 %v5993, %v5991
    %v6048 = vpack.c.b16 %v5996, %v5994
    %v6049 = vpack.c.b16 %v5997, %v5995
    %v6050 = vpack.c.b16 %v6000, %v5998
    %v6051 = vpack.c.b16 %v6001, %v5999
    %v6052 = vpack.c.b16 %v6004, %v6002
    %v6053 = vpack.c.b16 %v6005, %v6003
    %v6054 = vpack.c.b16 %v6008, %v6006
    %v6055 = vpack.c.b16 %v6009, %v6007
    %v6056 = vpack.c.b16 %v6012, %v6010
    %v6057 = vpack.c.b16 %v6013, %v6011
    %v6058 = vpack.c.b16 %v6016, %v6014
    %v6059 = vpack.c.b16 %v6017, %v6015
    %v6060 = vpack.c.b16 %v6020, %v6018
    %v6061 = vpack.c.b16 %v6021, %v6019
    %v6062 = vpack.c.b16 %v6024, %v6022
    %v6063 = vpack.c.b16 %v6025, %v6023
    %v6064 = vpack.c.b16 %v6028, %v6026
    %v6065 = vpack.c.b16 %v6029, %v6027
    %v6066 = vpack.c.b16 %v6032, %v6030
    %v6067 = vpack.c.b16 %v6033, %v6031
    %v6068 = vpack.c.b16 %v6036, %v6034
    %v6069 = vpack.c.b16 %v6037, %v6035
    %6102 = vmatprep.subr.bf16.mxu0 %v6053
    %6103 = vmatpush1.bf16.msra.mxu0 %v6052
    %6104 = vmatprep.subr.bf16.mxu0 %v6051
    %6105 = vmatpush1.bf16.msra.mxu0 %v6050
    %6106 = vmatprep.subr.bf16.mxu0 %v6049
    %6107 = vmatpush1.bf16.msra.mxu0 %v6048
    %6108 = vmatprep.subr.bf16.mxu0 %v6047
    %6109 = vmatpush1.bf16.msra.mxu0 %v6046
    %6110 = vmatprep.subr.bf16.mxu0 %v6045
    %6111 = vmatpush1.bf16.msra.mxu0 %v6044
    %6112 = vmatprep.subr.bf16.mxu0 %v6043
    %6113 = vmatpush1.bf16.msra.mxu0 %v6042
    %6114 = vmatprep.subr.bf16.mxu0 %v6041
    %6115 = vmatpush1.bf16.msra.mxu0 %v6040
    %6116 = vmatprep.subr.bf16.mxu0 %v6039
    %6117 = vmatpush1.bf16.msra.mxu0 %v6038
    %6118 = vmatprep.subr.bf16.mxu0 %v6069
    %6119 = vmatpush2.bf16.msra.mxu0 %v6068
    %6120 = vmatprep.subr.bf16.mxu0 %v6067
    %6121 = vmatpush2.bf16.msra.mxu0 %v6066
    %6122 = vmatprep.subr.bf16.mxu0 %v6065
    %6123 = vmatpush2.bf16.msra.mxu0 %v6064
    %6124 = vmatprep.subr.bf16.mxu0 %v6063
    %6125 = vmatpush2.bf16.msra.mxu0 %v6062
    %6126 = vmatprep.subr.bf16.mxu0 %v6061
    %6127 = vmatpush2.bf16.msra.mxu0 %v6060
    %6128 = vmatprep.subr.bf16.mxu0 %v6059
    %6129 = vmatpush2.bf16.msra.mxu0 %v6058
    %6130 = vmatprep.subr.bf16.mxu0 %v6057
    %6131 = vmatpush2.bf16.msra.mxu0 %v6056
    %6132 = vmatprep.subr.bf16.mxu0 %v6055
    %6133 = vmatpush2.bf16.msra.mxu0 %v6054
    %6134 = vmatprep.mubr.bf16.mxu0 %v5908
    %6135 = vmatmul.mubr.bf16.gmra.mxu0 %v5907
    %v6136 = vpop.f32.mrf.mxu0
    %v6137 = vadd.f32 0.0, %v6136
    %v6138 = vpop.f32.mrf.mxu0
    %v6139 = vadd.f32 0.0, %v6138
    %v6140 = vpop.f32.mrf.mxu0
    %v6141 = vpop.f32.mrf.mxu0
    %6142 = vdwg.mxu0
    %v6143 = vadd.f32 %v5855, %v6137
    %v6144 = vadd.f32 %v5857, %v6139
    %s6145 = scalar_lea.vmem %s18, 12
    %v6146 = vld [vmem:[%s6145] sm:$0xf]
    %v6148 = vsel %vm3358, %v6146, 0
    %6150 = vmatprep.subr.bf16.mxu0 0
    %6151 = vmatpush1.bf16.msra.mxu0 0
    %6152 = vmatprep.subr.bf16.mxu0 0
    %6153 = vmatpush1.bf16.msra.mxu0 0
    %6154 = vmatprep.subr.bf16.mxu0 0
    %6155 = vmatpush1.bf16.msra.mxu0 0
    %6156 = vmatprep.subr.bf16.mxu0 0
    %6157 = vmatpush1.bf16.msra.mxu0 0
    %6158 = vmatprep.subr.bf16.mxu0 0
    %6159 = vmatpush1.bf16.msra.mxu0 0
    %6160 = vmatprep.subr.bf16.mxu0 0
    %6161 = vmatpush1.bf16.msra.mxu0 0
    %6162 = vmatprep.subr.bf16.mxu0 0
    %6163 = vmatpush1.bf16.msra.mxu0 0
    %6164 = vmatprep.subr.bf16.mxu0 %v5298
    %6165 = vmatpush1.bf16.msra.mxu0 %v5297
    %6166 = vmatprep.subr.bf16.mxu0 0
    %6167 = vmatpush2.bf16.msra.mxu0 0
    %6168 = vmatprep.subr.bf16.mxu0 0
    %6169 = vmatpush2.bf16.msra.mxu0 0
    %6170 = vmatprep.subr.bf16.mxu0 0
    %6171 = vmatpush2.bf16.msra.mxu0 0
    %6172 = vmatprep.subr.bf16.mxu0 0
    %6173 = vmatpush2.bf16.msra.mxu0 0
    %6174 = vmatprep.subr.bf16.mxu0 0
    %6175 = vmatpush2.bf16.msra.mxu0 0
    %6176 = vmatprep.subr.bf16.mxu0 0
    %6177 = vmatpush2.bf16.msra.mxu0 0
    %6178 = vmatprep.subr.bf16.mxu0 0
    %6179 = vmatpush2.bf16.msra.mxu0 0
    %6180 = vmatprep.subr.bf16.mxu0 0
    %6181 = vmatpush2.bf16.msra.mxu0 0
    %6182 = vmatprep.mubr.bf16.mxu0 0
    %6183 = vmatmul.mubr.bf16.gmra.mxu0 %v6148
    %v6184 = vpop.f32.mrf.mxu0
    %v6185 = vadd.f32 0.0, %v6184
    %v6186 = vpop.f32.mrf.mxu0
    %v6187 = vadd.f32 0.0, %v6186
    %v6188 = vpop.f32.mrf.mxu0
    %v6189 = vpop.f32.mrf.mxu0
    %6190 = vdwg.mxu0
    %v6191 = vpack.c.bf16 %v6185, %v6185
    %v6192 = vpack.c.bf16 %v6187, %v6187
    %s6193 = scalar_lea.vmem [#allocation22], 768
    %v6194 = vld [vmem:[%s6193] sm:$0xff]
    %v6195 = vld [vmem:[%s6193 + $0x8] sm:$0xff]
    %v6196 = vld [vmem:[%s6193 + $0x10] sm:$0xff]
    %v6197 = vld [vmem:[%s6193 + $0x18] sm:$0xff]
    %v6198 = vld [vmem:[%s6193 + $0x20] sm:$0xff]
    %v6199 = vld [vmem:[%s6193 + $0x28] sm:$0xff]
    %v6200 = vld [vmem:[%s6193 + $0x30] sm:$0xff]
    %v6201 = vld [vmem:[%s6193 + $0x38] sm:$0xff]
    %v6202 = vld [vmem:[%s6193 + $0x40] sm:$0xff]
    %v6203 = vld [vmem:[%s6193 + $0x48] sm:$0xff]
    %v6204 = vld [vmem:[%s6193 + $0x50] sm:$0xff]
    %v6205 = vld [vmem:[%s6193 + $0x58] sm:$0xff]
    %v6206 = vld [vmem:[%s6193 + $0x60] sm:$0xff]
    %v6207 = vld [vmem:[%s6193 + $0x68] sm:$0xff]
    %v6208 = vld [vmem:[%s6193 + $0x70] sm:$0xff]
    %v6209 = vld [vmem:[%s6193 + $0x78] sm:$0xff]
    %v6210 = vld [vmem:[%s6193 + $0x80] sm:$0xff]
    %v6211 = vld [vmem:[%s6193 + $0x88] sm:$0xff]
    %v6212 = vld [vmem:[%s6193 + $0x90] sm:$0xff]
    %v6213 = vld [vmem:[%s6193 + $0x98] sm:$0xff]
    %v6214 = vld [vmem:[%s6193 + $0xa0] sm:$0xff]
    %v6215 = vld [vmem:[%s6193 + $0xa8] sm:$0xff]
    %v6216 = vld [vmem:[%s6193 + $0xb0] sm:$0xff]
    %v6217 = vld [vmem:[%s6193 + $0xb8] sm:$0xff]
    %v6218 = vld [vmem:[%s6193 + $0xc0] sm:$0xff]
    %v6219 = vld [vmem:[%s6193 + $0xc8] sm:$0xff]
    %v6220 = vld [vmem:[%s6193 + $0xd0] sm:$0xff]
    %v6221 = vld [vmem:[%s6193 + $0xd8] sm:$0xff]
    %v6222 = vld [vmem:[%s6193 + $0xe0] sm:$0xff]
    %v6223 = vld [vmem:[%s6193 + $0xe8] sm:$0xff]
    %v6224 = vld [vmem:[%s6193 + $0xf0] sm:$0xff]
    %v6225 = vld [vmem:[%s6193 + $0xf8] sm:$0xff]
    %v6258 = vunpack.c.l.b16 %v6194
    %v6259 = vunpack.c.h.b16 %v6194
    %v6260 = vunpack.c.l.b16 %v6195
    %v6261 = vunpack.c.h.b16 %v6195
    %v6262 = vunpack.c.l.b16 %v6196
    %v6263 = vunpack.c.h.b16 %v6196
    %v6264 = vunpack.c.l.b16 %v6197
    %v6265 = vunpack.c.h.b16 %v6197
    %v6266 = vunpack.c.l.b16 %v6198
    %v6267 = vunpack.c.h.b16 %v6198
    %v6268 = vunpack.c.l.b16 %v6199
    %v6269 = vunpack.c.h.b16 %v6199
    %v6270 = vunpack.c.l.b16 %v6200
    %v6271 = vunpack.c.h.b16 %v6200
    %v6272 = vunpack.c.l.b16 %v6201
    %v6273 = vunpack.c.h.b16 %v6201
    %v6274 = vunpack.c.l.b16 %v6202
    %v6275 = vunpack.c.h.b16 %v6202
    %v6276 = vunpack.c.l.b16 %v6203
    %v6277 = vunpack.c.h.b16 %v6203
    %v6278 = vunpack.c.l.b16 %v6204
    %v6279 = vunpack.c.h.b16 %v6204
    %v6280 = vunpack.c.l.b16 %v6205
    %v6281 = vunpack.c.h.b16 %v6205
    %v6282 = vunpack.c.l.b16 %v6206
    %v6283 = vunpack.c.h.b16 %v6206
    %v6284 = vunpack.c.l.b16 %v6207
    %v6285 = vunpack.c.h.b16 %v6207
    %v6286 = vunpack.c.l.b16 %v6208
    %v6287 = vunpack.c.h.b16 %v6208
    %v6288 = vunpack.c.l.b16 %v6209
    %v6289 = vunpack.c.h.b16 %v6209
    %v6290 = vunpack.c.l.b16 %v6210
    %v6291 = vunpack.c.h.b16 %v6210
    %v6292 = vunpack.c.l.b16 %v6211
    %v6293 = vunpack.c.h.b16 %v6211
    %v6294 = vunpack.c.l.b16 %v6212
    %v6295 = vunpack.c.h.b16 %v6212
    %v6296 = vunpack.c.l.b16 %v6213
    %v6297 = vunpack.c.h.b16 %v6213
    %v6298 = vunpack.c.l.b16 %v6214
    %v6299 = vunpack.c.h.b16 %v6214
    %v6300 = vunpack.c.l.b16 %v6215
    %v6301 = vunpack.c.h.b16 %v6215
    %v6302 = vunpack.c.l.b16 %v6216
    %v6303 = vunpack.c.h.b16 %v6216
    %v6304 = vunpack.c.l.b16 %v6217
    %v6305 = vunpack.c.h.b16 %v6217
    %v6306 = vunpack.c.l.b16 %v6218
    %v6307 = vunpack.c.h.b16 %v6218
    %v6308 = vunpack.c.l.b16 %v6219
    %v6309 = vunpack.c.h.b16 %v6219
    %v6310 = vunpack.c.l.b16 %v6220
    %v6311 = vunpack.c.h.b16 %v6220
    %v6312 = vunpack.c.l.b16 %v6221
    %v6313 = vunpack.c.h.b16 %v6221
    %v6314 = vunpack.c.l.b16 %v6222
    %v6315 = vunpack.c.h.b16 %v6222
    %v6316 = vunpack.c.l.b16 %v6223
    %v6317 = vunpack.c.h.b16 %v6223
    %v6318 = vunpack.c.l.b16 %v6224
    %v6319 = vunpack.c.h.b16 %v6224
    %v6320 = vunpack.c.l.b16 %v6225
    %v6321 = vunpack.c.h.b16 %v6225
    %v6322 = vpack.c.b16 %v6260, %v6258
    %v6323 = vpack.c.b16 %v6261, %v6259
    %v6324 = vpack.c.b16 %v6264, %v6262
    %v6325 = vpack.c.b16 %v6265, %v6263
    %v6326 = vpack.c.b16 %v6268, %v6266
    %v6327 = vpack.c.b16 %v6269, %v6267
    %v6328 = vpack.c.b16 %v6272, %v6270
    %v6329 = vpack.c.b16 %v6273, %v6271
    %v6330 = vpack.c.b16 %v6276, %v6274
    %v6331 = vpack.c.b16 %v6277, %v6275
    %v6332 = vpack.c.b16 %v6280, %v6278
    %v6333 = vpack.c.b16 %v6281, %v6279
    %v6334 = vpack.c.b16 %v6284, %v6282
    %v6335 = vpack.c.b16 %v6285, %v6283
    %v6336 = vpack.c.b16 %v6288, %v6286
    %v6337 = vpack.c.b16 %v6289, %v6287
    %v6338 = vpack.c.b16 %v6292, %v6290
    %v6339 = vpack.c.b16 %v6293, %v6291
    %v6340 = vpack.c.b16 %v6296, %v6294
    %v6341 = vpack.c.b16 %v6297, %v6295
    %v6342 = vpack.c.b16 %v6300, %v6298
    %v6343 = vpack.c.b16 %v6301, %v6299
    %v6344 = vpack.c.b16 %v6304, %v6302
    %v6345 = vpack.c.b16 %v6305, %v6303
    %v6346 = vpack.c.b16 %v6308, %v6306
    %v6347 = vpack.c.b16 %v6309, %v6307
    %v6348 = vpack.c.b16 %v6312, %v6310
    %v6349 = vpack.c.b16 %v6313, %v6311
    %v6350 = vpack.c.b16 %v6316, %v6314
    %v6351 = vpack.c.b16 %v6317, %v6315
    %v6352 = vpack.c.b16 %v6320, %v6318
    %v6353 = vpack.c.b16 %v6321, %v6319
    %6386 = vmatprep.subr.bf16.mxu0 %v6337
    %6387 = vmatpush1.bf16.msra.mxu0 %v6336
    %6388 = vmatprep.subr.bf16.mxu0 %v6335
    %6389 = vmatpush1.bf16.msra.mxu0 %v6334
    %6390 = vmatprep.subr.bf16.mxu0 %v6333
    %6391 = vmatpush1.bf16.msra.mxu0 %v6332
    %6392 = vmatprep.subr.bf16.mxu0 %v6331
    %6393 = vmatpush1.bf16.msra.mxu0 %v6330
    %6394 = vmatprep.subr.bf16.mxu0 %v6329
    %6395 = vmatpush1.bf16.msra.mxu0 %v6328
    %6396 = vmatprep.subr.bf16.mxu0 %v6327
    %6397 = vmatpush1.bf16.msra.mxu0 %v6326
    %6398 = vmatprep.subr.bf16.mxu0 %v6325
    %6399 = vmatpush1.bf16.msra.mxu0 %v6324
    %6400 = vmatprep.subr.bf16.mxu0 %v6323
    %6401 = vmatpush1.bf16.msra.mxu0 %v6322
    %6402 = vmatprep.subr.bf16.mxu0 %v6353
    %6403 = vmatpush2.bf16.msra.mxu0 %v6352
    %6404 = vmatprep.subr.bf16.mxu0 %v6351
    %6405 = vmatpush2.bf16.msra.mxu0 %v6350
    %6406 = vmatprep.subr.bf16.mxu0 %v6349
    %6407 = vmatpush2.bf16.msra.mxu0 %v6348
    %6408 = vmatprep.subr.bf16.mxu0 %v6347
    %6409 = vmatpush2.bf16.msra.mxu0 %v6346
    %6410 = vmatprep.subr.bf16.mxu0 %v6345
    %6411 = vmatpush2.bf16.msra.mxu0 %v6344
    %6412 = vmatprep.subr.bf16.mxu0 %v6343
    %6413 = vmatpush2.bf16.msra.mxu0 %v6342
    %6414 = vmatprep.subr.bf16.mxu0 %v6341
    %6415 = vmatpush2.bf16.msra.mxu0 %v6340
    %6416 = vmatprep.subr.bf16.mxu0 %v6339
    %6417 = vmatpush2.bf16.msra.mxu0 %v6338
    %6418 = vmatprep.mubr.bf16.mxu0 %v6192
    %6419 = vmatmul.mubr.bf16.gmra.mxu0 %v6191
    %v6420 = vpop.f32.mrf.mxu0
    %v6421 = vadd.f32 0.0, %v6420
    %v6422 = vpop.f32.mrf.mxu0
    %v6423 = vadd.f32 0.0, %v6422
    %v6424 = vpop.f32.mrf.mxu0
    %v6425 = vpop.f32.mrf.mxu0
    %6426 = vdwg.mxu0
    %v6427 = vadd.f32 %v6143, %v6421
    %v6428 = vadd.f32 %v6144, %v6423
    %v6429 = vld [vmem:[#allocation23] sm:$0x3]
    %v6431 = vlaneseq
    %v6432 = vshrl.u32 %v6431, 7
    %v6433 = vsub.s32 0, %v6432
    %v6434 = vrot.slane %v6429, %v6433
    %v6435 = vlaneseq
    %v6436 = vshrl.u32 %v6435, 7
    %v6437 = vsub.s32 1, %v6436
    %v6438 = vrot.slane %v6429, %v6437
    %v6441 = vadd.f32 %v6427, %v6434
    %v6442 = vadd.f32 %v6428, %v6438
    %v6443 = vld [vmem:[%s23] sm:$0xff]
    %v6444 = vld [vmem:[%s23 + $0x8] sm:$0xff]
    %v6445 = vld [vmem:[%s23 + $0x10] sm:$0xff]
    %v6446 = vld [vmem:[%s23 + $0x18] sm:$0xff]
    %v6447 = vld [vmem:[%s23 + $0x20] sm:$0xff]
    %v6448 = vld [vmem:[%s23 + $0x28] sm:$0xff]
    %v6449 = vld [vmem:[%s23 + $0x30] sm:$0xff]
    %v6450 = vld [vmem:[%s23 + $0x38] sm:$0xff]
    %v6451 = vld [vmem:[%s23 + $0x40] sm:$0xff]
    %v6452 = vld [vmem:[%s23 + $0x48] sm:$0xff]
    %v6453 = vld [vmem:[%s23 + $0x50] sm:$0xff]
    %v6454 = vld [vmem:[%s23 + $0x58] sm:$0xff]
    %v6455 = vld [vmem:[%s23 + $0x60] sm:$0xff]
    %v6456 = vld [vmem:[%s23 + $0x68] sm:$0xff]
    %v6457 = vld [vmem:[%s23 + $0x70] sm:$0xff]
    %v6458 = vld [vmem:[%s23 + $0x78] sm:$0xff]
    %v6459 = vld [vmem:[%s23 + $0x80] sm:$0xff]
    %v6460 = vld [vmem:[%s23 + $0x88] sm:$0xff]
    %v6461 = vld [vmem:[%s23 + $0x90] sm:$0xff]
    %v6462 = vld [vmem:[%s23 + $0x98] sm:$0xff]
    %v6463 = vld [vmem:[%s23 + $0xa0] sm:$0xff]
    %v6464 = vld [vmem:[%s23 + $0xa8] sm:$0xff]
    %v6465 = vld [vmem:[%s23 + $0xb0] sm:$0xff]
    %v6466 = vld [vmem:[%s23 + $0xb8] sm:$0xff]
    %v6467 = vld [vmem:[%s23 + $0xc0] sm:$0xff]
    %v6468 = vld [vmem:[%s23 + $0xc8] sm:$0xff]
    %v6469 = vld [vmem:[%s23 + $0xd0] sm:$0xff]
    %v6470 = vld [vmem:[%s23 + $0xd8] sm:$0xff]
    %v6471 = vld [vmem:[%s23 + $0xe0] sm:$0xff]
    %v6472 = vld [vmem:[%s23 + $0xe8] sm:$0xff]
    %v6473 = vld [vmem:[%s23 + $0xf0] sm:$0xff]
    %v6474 = vld [vmem:[%s23 + $0xf8] sm:$0xff]
    %v6475 = vld [vmem:[#allocation28] sm:$0xff]
    %v6476 = vld [vmem:[#allocation28 + $0x8] sm:$0xff]
    %v6477 = vld [vmem:[#allocation28 + $0x10] sm:$0xff]
    %v6478 = vld [vmem:[#allocation28 + $0x18] sm:$0xff]
    %v6479 = vld [vmem:[#allocation28 + $0x20] sm:$0xff]
    %v6480 = vld [vmem:[#allocation28 + $0x28] sm:$0xff]
    %v6481 = vld [vmem:[#allocation28 + $0x30] sm:$0xff]
    %v6482 = vld [vmem:[#allocation28 + $0x38] sm:$0xff]
    %v6483 = vld [vmem:[#allocation28 + $0x40] sm:$0xff]
    %v6484 = vld [vmem:[#allocation28 + $0x48] sm:$0xff]
    %v6485 = vld [vmem:[#allocation28 + $0x50] sm:$0xff]
    %v6486 = vld [vmem:[#allocation28 + $0x58] sm:$0xff]
    %v6487 = vld [vmem:[#allocation28 + $0x60] sm:$0xff]
    %v6488 = vld [vmem:[#allocation28 + $0x68] sm:$0xff]
    %v6489 = vld [vmem:[#allocation28 + $0x70] sm:$0xff]
    %v6490 = vld [vmem:[#allocation28 + $0x78] sm:$0xff]
    %v6491 = vrot.slane %v6441, 4
    %v6492 = vadd.f32 %v6441, %v6491
    %v6493 = vrot.slane %v6492, 2
    %v6494 = vadd.f32 %v6492, %v6493
    %v6495 = vrot.slane %v6494, 1
    %v6496 = vadd.f32 %v6494, %v6495
    %v6497 = vrot.slane %v6442, 4
    %v6498 = vadd.f32 %v6442, %v6497
    %v6499 = vrot.slane %v6498, 2
    %v6500 = vadd.f32 %v6498, %v6499
    %v6501 = vrot.slane %v6500, 1
    %v6502 = vadd.f32 %v6500, %v6501
    %6503 = vmatprep.subr.mxu0 0.0
    %6504 = vmatpush1.msra.mxu0 %v6458
    %6505 = vmatprep.subr.mxu0 0.0
    %6506 = vmatpush1.msra.mxu0 %v6457
    %6507 = vmatprep.subr.mxu0 0.0
    %6508 = vmatpush1.msra.mxu0 %v6456
    %6509 = vmatprep.subr.mxu0 0.0
    %6510 = vmatpush1.msra.mxu0 %v6455
    %6511 = vmatprep.subr.mxu0 0.0
    %6512 = vmatpush1.msra.mxu0 %v6454
    %6513 = vmatprep.subr.mxu0 0.0
    %6514 = vmatpush1.msra.mxu0 %v6453
    %6515 = vmatprep.subr.mxu0 0.0
    %6516 = vmatpush1.msra.mxu0 %v6452
    %6517 = vmatprep.subr.mxu0 0.0
    %6518 = vmatpush1.msra.mxu0 %v6451
    %6519 = vmatprep.subr.mxu0 0.0
    %6520 = vmatpush1.msra.mxu0 %v6450
    %6521 = vmatprep.subr.mxu0 0.0
    %6522 = vmatpush1.msra.mxu0 %v6449
    %6523 = vmatprep.subr.mxu0 0.0
    %6524 = vmatpush1.msra.mxu0 %v6448
    %6525 = vmatprep.subr.mxu0 0.0
    %6526 = vmatpush1.msra.mxu0 %v6447
    %6527 = vmatprep.subr.mxu0 0.0
    %6528 = vmatpush1.msra.mxu0 %v6446
    %6529 = vmatprep.subr.mxu0 0.0
    %6530 = vmatpush1.msra.mxu0 %v6445
    %6531 = vmatprep.subr.mxu0 0.0
    %6532 = vmatpush1.msra.mxu0 %v6444
    %6533 = vmatprep.subr.mxu0 0.0
    %6534 = vmatpush1.msra.mxu0 %v6443
    %6535 = vmatprep.subr.mxu0 0.0
    %6536 = vmatpush2.msra.mxu0 %v6474
    %6537 = vmatprep.subr.mxu0 0.0
    %6538 = vmatpush2.msra.mxu0 %v6473
    %6539 = vmatprep.subr.mxu0 0.0
    %6540 = vmatpush2.msra.mxu0 %v6472
    %6541 = vmatprep.subr.mxu0 0.0
    %6542 = vmatpush2.msra.mxu0 %v6471
    %6543 = vmatprep.subr.mxu0 0.0
    %6544 = vmatpush2.msra.mxu0 %v6470
    %6545 = vmatprep.subr.mxu0 0.0
    %6546 = vmatpush2.msra.mxu0 %v6469
    %6547 = vmatprep.subr.mxu0 0.0
    %6548 = vmatpush2.msra.mxu0 %v6468
    %6549 = vmatprep.subr.mxu0 0.0
    %6550 = vmatpush2.msra.mxu0 %v6467
    %6551 = vmatprep.subr.mxu0 0.0
    %6552 = vmatpush2.msra.mxu0 %v6466
    %6553 = vmatprep.subr.mxu0 0.0
    %6554 = vmatpush2.msra.mxu0 %v6465
    %6555 = vmatprep.subr.mxu0 0.0
    %6556 = vmatpush2.msra.mxu0 %v6464
    %6557 = vmatprep.subr.mxu0 0.0
    %6558 = vmatpush2.msra.mxu0 %v6463
    %6559 = vmatprep.subr.mxu0 0.0
    %6560 = vmatpush2.msra.mxu0 %v6462
    %6561 = vmatprep.subr.mxu0 0.0
    %6562 = vmatpush2.msra.mxu0 %v6461
    %6563 = vmatprep.subr.mxu0 0.0
    %6564 = vmatpush2.msra.mxu0 %v6460
    %6565 = vmatprep.subr.mxu0 0.0
    %6566 = vmatpush2.msra.mxu0 %v6459
    %6567 = vmatprep.mubr.f32.mxu0 %v6502
    %6568 = vmatmul.mubr.f32.gmra.mxu0 %v6496
    %v6569 = vpop.f32.mrf.mxu0
    %v6570 = vadd.f32 0.0, %v6569
    %v6571 = vpop.f32.mrf.mxu0
    %6572 = vdwg.mxu0
    %v6573 = vmul.f32 %v6570, 0.03125
    %v6575 = vsel %vm808, %v6573, 0
    %6577 = vmatprep.subr.mxu0 0.0
    %6578 = vmatpush1.msra.mxu0 0.0
    %6579 = vmatprep.subr.mxu0 0.0
    %6580 = vmatpush1.msra.mxu0 0.0
    %6581 = vmatprep.subr.mxu0 0.0
    %6582 = vmatpush1.msra.mxu0 0.0
    %6583 = vmatprep.subr.mxu0 0.0
    %6584 = vmatpush1.msra.mxu0 0.0
    %6585 = vmatprep.subr.mxu0 0.0
    %6586 = vmatpush1.msra.mxu0 0.0
    %6587 = vmatprep.subr.mxu0 0.0
    %6588 = vmatpush1.msra.mxu0 0.0
    %6589 = vmatprep.subr.mxu0 0.0
    %6590 = vmatpush1.msra.mxu0 0.0
    %6591 = vmatprep.subr.mxu0 0.0
    %6592 = vmatpush1.msra.mxu0 0.0
    %6593 = vmatprep.subr.mxu0 %v6490
    %6594 = vmatpush1.msra.mxu0 %v6489
    %6595 = vmatprep.subr.mxu0 %v6488
    %6596 = vmatpush1.msra.mxu0 %v6487
    %6597 = vmatprep.subr.mxu0 %v6486
    %6598 = vmatpush1.msra.mxu0 %v6485
    %6599 = vmatprep.subr.mxu0 %v6484
    %6600 = vmatpush1.msra.mxu0 %v6483
    %6601 = vmatprep.subr.mxu0 %v6482
    %6602 = vmatpush1.msra.mxu0 %v6481
    %6603 = vmatprep.subr.mxu0 %v6480
    %6604 = vmatpush1.msra.mxu0 %v6479
    %6605 = vmatprep.subr.mxu0 %v6478
    %6606 = vmatpush1.msra.mxu0 %v6477
    %6607 = vmatprep.subr.mxu0 %v6476
    %6608 = vmatpush1.msra.mxu0 %v6475
    %6609 = vmatprep.subr.mxu0 0.0
    %6610 = vmatpush2.msra.mxu0 0.0
    %6611 = vmatprep.subr.mxu0 0.0
    %6612 = vmatpush2.msra.mxu0 0.0
    %6613 = vmatprep.subr.mxu0 0.0
    %6614 = vmatpush2.msra.mxu0 0.0
    %6615 = vmatprep.subr.mxu0 0.0
    %6616 = vmatpush2.msra.mxu0 0.0
    %6617 = vmatprep.subr.mxu0 0.0
    %6618 = vmatpush2.msra.mxu0 0.0
    %6619 = vmatprep.subr.mxu0 0.0
    %6620 = vmatpush2.msra.mxu0 0.0
    %6621 = vmatprep.subr.mxu0 0.0
    %6622 = vmatpush2.msra.mxu0 0.0
    %6623 = vmatprep.subr.mxu0 0.0
    %6624 = vmatpush2.msra.mxu0 0.0
    %6625 = vmatprep.subr.mxu0 0.0
    %6626 = vmatpush2.msra.mxu0 0.0
    %6627 = vmatprep.subr.mxu0 0.0
    %6628 = vmatpush2.msra.mxu0 0.0
    %6629 = vmatprep.subr.mxu0 0.0
    %6630 = vmatpush2.msra.mxu0 0.0
    %6631 = vmatprep.subr.mxu0 0.0
    %6632 = vmatpush2.msra.mxu0 0.0
    %6633 = vmatprep.subr.mxu0 0.0
    %6634 = vmatpush2.msra.mxu0 0.0
    %6635 = vmatprep.subr.mxu0 0.0
    %6636 = vmatpush2.msra.mxu0 0.0
    %6637 = vmatprep.subr.mxu0 0.0
    %6638 = vmatpush2.msra.mxu0 0.0
    %6639 = vmatprep.subr.mxu0 0.0
    %6640 = vmatpush2.msra.mxu0 0.0
    %6641 = vmatprep.mubr.f32.mxu0 0.0
    %6642 = vmatmul.mubr.f32.gmra.mxu0 %v6575
    %v6643 = vpop.f32.mrf.mxu0
    %v6644 = vadd.f32 0.0, %v6643
    %v6645 = vpop.f32.mrf.mxu0
    %v6646 = vadd.f32 0.0, %v6645
    %6647 = vdwg.mxu0
    %v6648 = vlaneseq
    %v6649 = vshrl.u32 %v6648, 7
    %v6650 = vsub.s32 0, %v6649
    %v6651 = vrot.slane %v6644, %v6650
    %v6652 = vlaneseq
    %v6653 = vshrl.u32 %v6652, 7
    %v6654 = vsub.s32 0, %v6653
    %v6655 = vrot.slane %v6646, %v6654
    %v6656 = vsub.f32 %v6441, %v6651
    %v6657 = vsub.f32 %v6442, %v6655
    %v6658 = vmul.f32 %v6656, %v6656
    %v6659 = vmul.f32 %v6657, %v6657
    %v6660 = vrot.slane %v6658, 4
    %v6661 = vadd.f32 %v6658, %v6660
    %v6662 = vrot.slane %v6661, 2
    %v6663 = vadd.f32 %v6661, %v6662
    %v6664 = vrot.slane %v6663, 1
    %v6665 = vadd.f32 %v6663, %v6664
    %v6666 = vrot.slane %v6659, 4
    %v6667 = vadd.f32 %v6659, %v6666
    %v6668 = vrot.slane %v6667, 2
    %v6669 = vadd.f32 %v6667, %v6668
    %v6670 = vrot.slane %v6669, 1
    %v6671 = vadd.f32 %v6669, %v6670
    %6672 = vmatprep.subr.mxu0 0.0
    %6673 = vmatpush1.msra.mxu0 %v6458
    %6674 = vmatprep.subr.mxu0 0.0
    %6675 = vmatpush1.msra.mxu0 %v6457
    %6676 = vmatprep.subr.mxu0 0.0
    %6677 = vmatpush1.msra.mxu0 %v6456
    %6678 = vmatprep.subr.mxu0 0.0
    %6679 = vmatpush1.msra.mxu0 %v6455
    %6680 = vmatprep.subr.mxu0 0.0
    %6681 = vmatpush1.msra.mxu0 %v6454
    %6682 = vmatprep.subr.mxu0 0.0
    %6683 = vmatpush1.msra.mxu0 %v6453
    %6684 = vmatprep.subr.mxu0 0.0
    %6685 = vmatpush1.msra.mxu0 %v6452
    %6686 = vmatprep.subr.mxu0 0.0
    %6687 = vmatpush1.msra.mxu0 %v6451
    %6688 = vmatprep.subr.mxu0 0.0
    %6689 = vmatpush1.msra.mxu0 %v6450
    %6690 = vmatprep.subr.mxu0 0.0
    %6691 = vmatpush1.msra.mxu0 %v6449
    %6692 = vmatprep.subr.mxu0 0.0
    %6693 = vmatpush1.msra.mxu0 %v6448
    %6694 = vmatprep.subr.mxu0 0.0
    %6695 = vmatpush1.msra.mxu0 %v6447
    %6696 = vmatprep.subr.mxu0 0.0
    %6697 = vmatpush1.msra.mxu0 %v6446
    %6698 = vmatprep.subr.mxu0 0.0
    %6699 = vmatpush1.msra.mxu0 %v6445
    %6700 = vmatprep.subr.mxu0 0.0
    %6701 = vmatpush1.msra.mxu0 %v6444
    %6702 = vmatprep.subr.mxu0 0.0
    %6703 = vmatpush1.msra.mxu0 %v6443
    %6704 = vmatprep.subr.mxu0 0.0
    %6705 = vmatpush2.msra.mxu0 %v6474
    %6706 = vmatprep.subr.mxu0 0.0
    %6707 = vmatpush2.msra.mxu0 %v6473
    %6708 = vmatprep.subr.mxu0 0.0
    %6709 = vmatpush2.msra.mxu0 %v6472
    %6710 = vmatprep.subr.mxu0 0.0
    %6711 = vmatpush2.msra.mxu0 %v6471
    %6712 = vmatprep.subr.mxu0 0.0
    %6713 = vmatpush2.msra.mxu0 %v6470
    %6714 = vmatprep.subr.mxu0 0.0
    %6715 = vmatpush2.msra.mxu0 %v6469
    %6716 = vmatprep.subr.mxu0 0.0
    %6717 = vmatpush2.msra.mxu0 %v6468
    %6718 = vmatprep.subr.mxu0 0.0
    %6719 = vmatpush2.msra.mxu0 %v6467
    %6720 = vmatprep.subr.mxu0 0.0
    %6721 = vmatpush2.msra.mxu0 %v6466
    %6722 = vmatprep.subr.mxu0 0.0
    %6723 = vmatpush2.msra.mxu0 %v6465
    %6724 = vmatprep.subr.mxu0 0.0
    %6725 = vmatpush2.msra.mxu0 %v6464
    %6726 = vmatprep.subr.mxu0 0.0
    %6727 = vmatpush2.msra.mxu0 %v6463
    %6728 = vmatprep.subr.mxu0 0.0
    %6729 = vmatpush2.msra.mxu0 %v6462
    %6730 = vmatprep.subr.mxu0 0.0
    %6731 = vmatpush2.msra.mxu0 %v6461
    %6732 = vmatprep.subr.mxu0 0.0
    %6733 = vmatpush2.msra.mxu0 %v6460
    %6734 = vmatprep.subr.mxu0 0.0
    %6735 = vmatpush2.msra.mxu0 %v6459
    %6736 = vmatprep.mubr.f32.mxu0 %v6671
    %6737 = vmatmul.mubr.f32.gmra.mxu0 %v6665
    %v6738 = vpop.f32.mrf.mxu0
    %v6739 = vadd.f32 0.0, %v6738
    %v6740 = vpop.f32.mrf.mxu0
    %6741 = vdwg.mxu0
    %v6742 = vmul.f32 %v6739, 0.03125
    %v6743 = vld [vmem:[#allocation25] sm:$0x1]
    %v6744 = vadd.f32 %v6742, 1e-05
    %v6745 = vrsqrt.pop %v6744
    %v6746 = vmul.f32 %v6743, %v6745
    %v6748 = vsel %vm808, %v6746, 0
    %6750 = vmatprep.subr.mxu0 0.0
    %6751 = vmatpush1.msra.mxu0 0.0
    %6752 = vmatprep.subr.mxu0 0.0
    %6753 = vmatpush1.msra.mxu0 0.0
    %6754 = vmatprep.subr.mxu0 0.0
    %6755 = vmatpush1.msra.mxu0 0.0
    %6756 = vmatprep.subr.mxu0 0.0
    %6757 = vmatpush1.msra.mxu0 0.0
    %6758 = vmatprep.subr.mxu0 0.0
    %6759 = vmatpush1.msra.mxu0 0.0
    %6760 = vmatprep.subr.mxu0 0.0
    %6761 = vmatpush1.msra.mxu0 0.0
    %6762 = vmatprep.subr.mxu0 0.0
    %6763 = vmatpush1.msra.mxu0 0.0
    %6764 = vmatprep.subr.mxu0 0.0
    %6765 = vmatpush1.msra.mxu0 0.0
    %6766 = vmatprep.subr.mxu0 %v6490
    %6767 = vmatpush1.msra.mxu0 %v6489
    %6768 = vmatprep.subr.mxu0 %v6488
    %6769 = vmatpush1.msra.mxu0 %v6487
    %6770 = vmatprep.subr.mxu0 %v6486
    %6771 = vmatpush1.msra.mxu0 %v6485
    %6772 = vmatprep.subr.mxu0 %v6484
    %6773 = vmatpush1.msra.mxu0 %v6483
    %6774 = vmatprep.subr.mxu0 %v6482
    %6775 = vmatpush1.msra.mxu0 %v6481
    %6776 = vmatprep.subr.mxu0 %v6480
    %6777 = vmatpush1.msra.mxu0 %v6479
    %6778 = vmatprep.subr.mxu0 %v6478
    %6779 = vmatpush1.msra.mxu0 %v6477
    %6780 = vmatprep.subr.mxu0 %v6476
    %6781 = vmatpush1.msra.mxu0 %v6475
    %6782 = vmatprep.subr.mxu0 0.0
    %6783 = vmatpush2.msra.mxu0 0.0
    %6784 = vmatprep.subr.mxu0 0.0
    %6785 = vmatpush2.msra.mxu0 0.0
    %6786 = vmatprep.subr.mxu0 0.0
    %6787 = vmatpush2.msra.mxu0 0.0
    %6788 = vmatprep.subr.mxu0 0.0
    %6789 = vmatpush2.msra.mxu0 0.0
    %6790 = vmatprep.subr.mxu0 0.0
    %6791 = vmatpush2.msra.mxu0 0.0
    %6792 = vmatprep.subr.mxu0 0.0
    %6793 = vmatpush2.msra.mxu0 0.0
    %6794 = vmatprep.subr.mxu0 0.0
    %6795 = vmatpush2.msra.mxu0 0.0
    %6796 = vmatprep.subr.mxu0 0.0
    %6797 = vmatpush2.msra.mxu0 0.0
    %6798 = vmatprep.subr.mxu0 0.0
    %6799 = vmatpush2.msra.mxu0 0.0
    %6800 = vmatprep.subr.mxu0 0.0
    %6801 = vmatpush2.msra.mxu0 0.0
    %6802 = vmatprep.subr.mxu0 0.0
    %6803 = vmatpush2.msra.mxu0 0.0
    %6804 = vmatprep.subr.mxu0 0.0
    %6805 = vmatpush2.msra.mxu0 0.0
    %6806 = vmatprep.subr.mxu0 0.0
    %6807 = vmatpush2.msra.mxu0 0.0
    %6808 = vmatprep.subr.mxu0 0.0
    %6809 = vmatpush2.msra.mxu0 0.0
    %6810 = vmatprep.subr.mxu0 0.0
    %6811 = vmatpush2.msra.mxu0 0.0
    %6812 = vmatprep.subr.mxu0 0.0
    %6813 = vmatpush2.msra.mxu0 0.0
    %6814 = vmatprep.mubr.f32.mxu0 0.0
    %6815 = vmatmul.mubr.f32.gmra.mxu0 %v6748
    %v6816 = vpop.f32.mrf.mxu0
    %v6817 = vadd.f32 0.0, %v6816
    %v6818 = vpop.f32.mrf.mxu0
    %v6819 = vadd.f32 0.0, %v6818
    %6820 = vdwg.mxu0
    %v6821 = vlaneseq
    %v6822 = vshrl.u32 %v6821, 7
    %v6823 = vsub.s32 0, %v6822
    %v6824 = vrot.slane %v6817, %v6823
    %v6825 = vlaneseq
    %v6826 = vshrl.u32 %v6825, 7
    %v6827 = vsub.s32 0, %v6826
    %v6828 = vrot.slane %v6819, %v6827
    %v6829 = vmul.f32 %v6656, %v6824
    %v6830 = vmul.f32 %v6657, %v6828
    %v6831 = vld [vmem:[#allocation26] sm:$0x3]
    %v6833 = vlaneseq
    %v6834 = vshrl.u32 %v6833, 7
    %v6835 = vsub.s32 0, %v6834
    %v6836 = vrot.slane %v6831, %v6835
    %v6837 = vlaneseq
    %v6838 = vshrl.u32 %v6837, 7
    %v6839 = vsub.s32 1, %v6838
    %v6840 = vrot.slane %v6831, %v6839
    %v6843 = vadd.f32 %v6829, %v6836
    %v6844 = vadd.f32 %v6830, %v6840
    %vm6845 = vcmp.ge.f32.partialorder %v6843, 0.0
    %vm6846 = vcmp.ge.f32.partialorder %v6844, 0.0
    %v6847 = vmul.f32 %v6843, 0.2
    %v6848 = vmul.f32 %v6844, 0.2
    %v6849 = vsel %vm6845, %v6843, %v6847
    %v6850 = vsel %vm6846, %v6844, %v6848
    %v6851 = vpack.c.bf16 %v6849, %v6849
    %v6852 = vpack.c.bf16 %v6850, %v6850
    %v6853 = vld [vmem:[#allocation29] sm:$0x1]
    %vm6854 = vcmask 64512
    %v6856 = vsel %vm6854, %v6853, 0
    %vm6858 = vcmask 1043456
    %v6860 = vsel %vm6858, %v6851, 0
    %v6863 = vsel %vm6858, %v6852, 0
    %6865 = vmatprep.subr.bf16.mxu0 0
    %6866 = vmatpush1.bf16.msra.mxu0 0
    %6867 = vmatprep.subr.bf16.mxu0 0
    %6868 = vmatpush1.bf16.msra.mxu0 0
    %6869 = vmatprep.subr.bf16.mxu0 0
    %6870 = vmatpush1.bf16.msra.mxu0 0
    %6871 = vmatprep.subr.bf16.mxu0 0
    %6872 = vmatpush1.bf16.msra.mxu0 0
    %6873 = vmatprep.subr.bf16.mxu0 0
    %6874 = vmatpush1.bf16.msra.mxu0 0
    %6875 = vmatprep.subr.bf16.mxu0 0
    %6876 = vmatpush1.bf16.msra.mxu0 0
    %6877 = vmatprep.subr.bf16.mxu0 0
    %6878 = vmatpush1.bf16.msra.mxu0 0
    %6879 = vmatprep.subr.bf16.mxu0 %v6863
    %6880 = vmatpush1.bf16.msra.mxu0 %v6860
    %6881 = vmatprep.subr.bf16.mxu0 0
    %6882 = vmatpush2.bf16.msra.mxu0 0
    %6883 = vmatprep.subr.bf16.mxu0 0
    %6884 = vmatpush2.bf16.msra.mxu0 0
    %6885 = vmatprep.subr.bf16.mxu0 0
    %6886 = vmatpush2.bf16.msra.mxu0 0
    %6887 = vmatprep.subr.bf16.mxu0 0
    %6888 = vmatpush2.bf16.msra.mxu0 0
    %6889 = vmatprep.subr.bf16.mxu0 0
    %6890 = vmatpush2.bf16.msra.mxu0 0
    %6891 = vmatprep.subr.bf16.mxu0 0
    %6892 = vmatpush2.bf16.msra.mxu0 0
    %6893 = vmatprep.subr.bf16.mxu0 0
    %6894 = vmatpush2.bf16.msra.mxu0 0
    %6895 = vmatprep.subr.bf16.mxu0 0
    %6896 = vmatpush2.bf16.msra.mxu0 0
    %6897 = vmatprep.mubr.bf16.mxu0 0
    %6898 = vmatmul.mubr.bf16.gmra.mxu0 %v6856
    %v6899 = vpop.f32.mrf.mxu0
    %v6900 = vadd.f32 0.0, %v6899
    %v6901 = vpop.f32.mrf.mxu0
    %v6902 = vadd.f32 0.0, %v6901
    %v6903 = vpop.f32.mrf.mxu0
    %v6904 = vpop.f32.mrf.mxu0
    %6905 = vdwg.mxu0
    %v6906 = vpack.c.bf16 %v6900, %v6900
    %v6907 = vpack.c.bf16 %v6902, %v6902
    %v6908 = vld [vmem:[%s26] sm:$0xf]
    %v6909 = vld [vmem:[%s26 + $0x4] sm:$0xf]
    %v6910 = vld [vmem:[%s26 + $0x8] sm:$0xf]
    %v6911 = vld [vmem:[%s26 + $0xc] sm:$0xf]
    %v6912 = vld [vmem:[%s26 + $0x10] sm:$0xf]
    %v6913 = vld [vmem:[%s26 + $0x14] sm:$0xf]
    %v6914 = vld [vmem:[%s26 + $0x18] sm:$0xf]
    %v6915 = vld [vmem:[%s26 + $0x1c] sm:$0xf]
    %v6916 = vld [vmem:[%s26 + $0x20] sm:$0xf]
    %v6917 = vld [vmem:[%s26 + $0x24] sm:$0xf]
    %v6918 = vld [vmem:[%s26 + $0x28] sm:$0xf]
    %v6919 = vld [vmem:[%s26 + $0x2c] sm:$0xf]
    %v6920 = vld [vmem:[%s26 + $0x30] sm:$0xf]
    %v6921 = vld [vmem:[%s26 + $0x34] sm:$0xf]
    %v6922 = vld [vmem:[%s26 + $0x38] sm:$0xf]
    %v6923 = vld [vmem:[%s26 + $0x3c] sm:$0xf]
    %v6924 = vld [vmem:[%s26 + $0x40] sm:$0xf]
    %v6925 = vld [vmem:[%s26 + $0x44] sm:$0xf]
    %v6926 = vld [vmem:[%s26 + $0x48] sm:$0xf]
    %v6927 = vld [vmem:[%s26 + $0x4c] sm:$0xf]
    %v6928 = vld [vmem:[%s26 + $0x50] sm:$0xf]
    %v6929 = vld [vmem:[%s26 + $0x54] sm:$0xf]
    %v6930 = vld [vmem:[%s26 + $0x58] sm:$0xf]
    %v6931 = vld [vmem:[%s26 + $0x5c] sm:$0xf]
    %v6932 = vld [vmem:[%s26 + $0x60] sm:$0xf]
    %v6933 = vld [vmem:[%s26 + $0x64] sm:$0xf]
    %v6934 = vld [vmem:[%s26 + $0x68] sm:$0xf]
    %v6935 = vld [vmem:[%s26 + $0x6c] sm:$0xf]
    %v6936 = vld [vmem:[%s26 + $0x70] sm:$0xf]
    %v6937 = vld [vmem:[%s26 + $0x74] sm:$0xf]
    %v6938 = vld [vmem:[%s26 + $0x78] sm:$0xf]
    %v6939 = vld [vmem:[%s26 + $0x7c] sm:$0xf]
    %s6940 = scalar_lea.vmem [#allocation29], 1
    %v6941 = vld [vmem:[%s6940] sm:$0x1]
    %v6943 = vsel %vm6854, %v6941, 0
    %6945 = vmatprep.subr.bf16.mxu0 0
    %6946 = vmatpush1.bf16.msra.mxu0 0
    %6947 = vmatprep.subr.bf16.mxu0 0
    %6948 = vmatpush1.bf16.msra.mxu0 0
    %6949 = vmatprep.subr.bf16.mxu0 0
    %6950 = vmatpush1.bf16.msra.mxu0 0
    %6951 = vmatprep.subr.bf16.mxu0 0
    %6952 = vmatpush1.bf16.msra.mxu0 0
    %6953 = vmatprep.subr.bf16.mxu0 0
    %6954 = vmatpush1.bf16.msra.mxu0 0
    %6955 = vmatprep.subr.bf16.mxu0 0
    %6956 = vmatpush1.bf16.msra.mxu0 0
    %6957 = vmatprep.subr.bf16.mxu0 0
    %6958 = vmatpush1.bf16.msra.mxu0 0
    %6959 = vmatprep.subr.bf16.mxu0 %v6863
    %6960 = vmatpush1.bf16.msra.mxu0 %v6860
    %6961 = vmatprep.subr.bf16.mxu0 0
    %6962 = vmatpush2.bf16.msra.mxu0 0
    %6963 = vmatprep.subr.bf16.mxu0 0
    %6964 = vmatpush2.bf16.msra.mxu0 0
    %6965 = vmatprep.subr.bf16.mxu0 0
    %6966 = vmatpush2.bf16.msra.mxu0 0
    %6967 = vmatprep.subr.bf16.mxu0 0
    %6968 = vmatpush2.bf16.msra.mxu0 0
    %6969 = vmatprep.subr.bf16.mxu0 0
    %6970 = vmatpush2.bf16.msra.mxu0 0
    %6971 = vmatprep.subr.bf16.mxu0 0
    %6972 = vmatpush2.bf16.msra.mxu0 0
    %6973 = vmatprep.subr.bf16.mxu0 0
    %6974 = vmatpush2.bf16.msra.mxu0 0
    %6975 = vmatprep.subr.bf16.mxu0 0
    %6976 = vmatpush2.bf16.msra.mxu0 0
    %6977 = vmatprep.mubr.bf16.mxu0 0
    %6978 = vmatmul.mubr.bf16.gmra.mxu0 %v6943
    %v6979 = vpop.f32.mrf.mxu0
    %v6980 = vadd.f32 0.0, %v6979
    %v6981 = vpop.f32.mrf.mxu0
    %v6982 = vadd.f32 0.0, %v6981
    %v6983 = vpop.f32.mrf.mxu0
    %v6984 = vpop.f32.mrf.mxu0
    %6985 = vdwg.mxu0
    %v6986 = vpack.c.bf16 %v6980, %v6980
    %v6987 = vpack.c.bf16 %v6982, %v6982
    %s6988 = scalar_lea.vmem %s26, 128
    %v6989 = vld [vmem:[%s6988] sm:$0xf]
    %v6990 = vld [vmem:[%s6988 + $0x4] sm:$0xf]
    %v6991 = vld [vmem:[%s6988 + $0x8] sm:$0xf]
    %v6992 = vld [vmem:[%s6988 + $0xc] sm:$0xf]
    %v6993 = vld [vmem:[%s6988 + $0x10] sm:$0xf]
    %v6994 = vld [vmem:[%s6988 + $0x14] sm:$0xf]
    %v6995 = vld [vmem:[%s6988 + $0x18] sm:$0xf]
    %v6996 = vld [vmem:[%s6988 + $0x1c] sm:$0xf]
    %v6997 = vld [vmem:[%s6988 + $0x20] sm:$0xf]
    %v6998 = vld [vmem:[%s6988 + $0x24] sm:$0xf]
    %v6999 = vld [vmem:[%s6988 + $0x28] sm:$0xf]
    %v7000 = vld [vmem:[%s6988 + $0x2c] sm:$0xf]
    %v7001 = vld [vmem:[%s6988 + $0x30] sm:$0xf]
    %v7002 = vld [vmem:[%s6988 + $0x34] sm:$0xf]
    %v7003 = vld [vmem:[%s6988 + $0x38] sm:$0xf]
    %v7004 = vld [vmem:[%s6988 + $0x3c] sm:$0xf]
    %v7005 = vld [vmem:[%s6988 + $0x40] sm:$0xf]
    %v7006 = vld [vmem:[%s6988 + $0x44] sm:$0xf]
    %v7007 = vld [vmem:[%s6988 + $0x48] sm:$0xf]
    %v7008 = vld [vmem:[%s6988 + $0x4c] sm:$0xf]
    %v7009 = vld [vmem:[%s6988 + $0x50] sm:$0xf]
    %v7010 = vld [vmem:[%s6988 + $0x54] sm:$0xf]
    %v7011 = vld [vmem:[%s6988 + $0x58] sm:$0xf]
    %v7012 = vld [vmem:[%s6988 + $0x5c] sm:$0xf]
    %v7013 = vld [vmem:[%s6988 + $0x60] sm:$0xf]
    %v7014 = vld [vmem:[%s6988 + $0x64] sm:$0xf]
    %v7015 = vld [vmem:[%s6988 + $0x68] sm:$0xf]
    %v7016 = vld [vmem:[%s6988 + $0x6c] sm:$0xf]
    %v7017 = vld [vmem:[%s6988 + $0x70] sm:$0xf]
    %v7018 = vld [vmem:[%s6988 + $0x74] sm:$0xf]
    %v7019 = vld [vmem:[%s6988 + $0x78] sm:$0xf]
    %v7020 = vld [vmem:[%s6988 + $0x7c] sm:$0xf]
    %v7053 = vunpack.c.l.b16 %v6989
    %v7054 = vunpack.c.l.b16 %v6990
    %v7055 = vunpack.c.l.b16 %v6991
    %v7056 = vunpack.c.l.b16 %v6992
    %v7057 = vunpack.c.l.b16 %v6993
    %v7058 = vunpack.c.l.b16 %v6994
    %v7059 = vunpack.c.l.b16 %v6995
    %v7060 = vunpack.c.l.b16 %v6996
    %v7061 = vunpack.c.l.b16 %v6997
    %v7062 = vunpack.c.l.b16 %v6998
    %v7063 = vunpack.c.l.b16 %v6999
    %v7064 = vunpack.c.l.b16 %v7000
    %v7065 = vunpack.c.l.b16 %v7001
    %v7066 = vunpack.c.l.b16 %v7002
    %v7067 = vunpack.c.l.b16 %v7003
    %v7068 = vunpack.c.l.b16 %v7004
    %v7069 = vunpack.c.l.b16 %v7005
    %v7070 = vunpack.c.l.b16 %v7006
    %v7071 = vunpack.c.l.b16 %v7007
    %v7072 = vunpack.c.l.b16 %v7008
    %v7073 = vunpack.c.l.b16 %v7009
    %v7074 = vunpack.c.l.b16 %v7010
    %v7075 = vunpack.c.l.b16 %v7011
    %v7076 = vunpack.c.l.b16 %v7012
    %v7077 = vunpack.c.l.b16 %v7013
    %v7078 = vunpack.c.l.b16 %v7014
    %v7079 = vunpack.c.l.b16 %v7015
    %v7080 = vunpack.c.l.b16 %v7016
    %v7081 = vunpack.c.l.b16 %v7017
    %v7082 = vunpack.c.l.b16 %v7018
    %v7083 = vunpack.c.l.b16 %v7019
    %v7084 = vunpack.c.l.b16 %v7020
    %v7085 = vpack.c.b16 %v7054, %v7053
    %v7086 = vpack.c.b16 %v7056, %v7055
    %v7087 = vpack.c.b16 %v7058, %v7057
    %v7088 = vpack.c.b16 %v7060, %v7059
    %v7089 = vpack.c.b16 %v7062, %v7061
    %v7090 = vpack.c.b16 %v7064, %v7063
    %v7091 = vpack.c.b16 %v7066, %v7065
    %v7092 = vpack.c.b16 %v7068, %v7067
    %v7093 = vpack.c.b16 %v7070, %v7069
    %v7094 = vpack.c.b16 %v7072, %v7071
    %v7095 = vpack.c.b16 %v7074, %v7073
    %v7096 = vpack.c.b16 %v7076, %v7075
    %v7097 = vpack.c.b16 %v7078, %v7077
    %v7098 = vpack.c.b16 %v7080, %v7079
    %v7099 = vpack.c.b16 %v7082, %v7081
    %v7100 = vpack.c.b16 %v7084, %v7083
    %7117 = vmatprep.subr.bf16.mxu0 0
    %7118 = vmatpush1.bf16.msra.mxu0 %v7092
    %7119 = vmatprep.subr.bf16.mxu0 0
    %7120 = vmatpush1.bf16.msra.mxu0 %v7091
    %7121 = vmatprep.subr.bf16.mxu0 0
    %7122 = vmatpush1.bf16.msra.mxu0 %v7090
    %7123 = vmatprep.subr.bf16.mxu0 0
    %7124 = vmatpush1.bf16.msra.mxu0 %v7089
    %7125 = vmatprep.subr.bf16.mxu0 0
    %7126 = vmatpush1.bf16.msra.mxu0 %v7088
    %7127 = vmatprep.subr.bf16.mxu0 0
    %7128 = vmatpush1.bf16.msra.mxu0 %v7087
    %7129 = vmatprep.subr.bf16.mxu0 0
    %7130 = vmatpush1.bf16.msra.mxu0 %v7086
    %7131 = vmatprep.subr.bf16.mxu0 0
    %7132 = vmatpush1.bf16.msra.mxu0 %v7085
    %7133 = vmatprep.subr.bf16.mxu0 0
    %7134 = vmatpush2.bf16.msra.mxu0 %v7100
    %7135 = vmatprep.subr.bf16.mxu0 0
    %7136 = vmatpush2.bf16.msra.mxu0 %v7099
    %7137 = vmatprep.subr.bf16.mxu0 0
    %7138 = vmatpush2.bf16.msra.mxu0 %v7098
    %7139 = vmatprep.subr.bf16.mxu0 0
    %7140 = vmatpush2.bf16.msra.mxu0 %v7097
    %7141 = vmatprep.subr.bf16.mxu0 0
    %7142 = vmatpush2.bf16.msra.mxu0 %v7096
    %7143 = vmatprep.subr.bf16.mxu0 0
    %7144 = vmatpush2.bf16.msra.mxu0 %v7095
    %7145 = vmatprep.subr.bf16.mxu0 0
    %7146 = vmatpush2.bf16.msra.mxu0 %v7094
    %7147 = vmatprep.subr.bf16.mxu0 0
    %7148 = vmatpush2.bf16.msra.mxu0 %v7093
    %7149 = vmatprep.mubr.bf16.mxu0 %v6987
    %7150 = vmatmul.mubr.bf16.gmra.mxu0 %v6986
    %v7151 = vpop.f32.mrf.mxu0
    %v7152 = vadd.f32 0.0, %v7151
    %v7153 = vpop.f32.mrf.mxu0
    %v7154 = vpop.f32.mrf.mxu0
    %v7155 = vpop.f32.mrf.mxu0
    %7156 = vdwg.mxu0
    %v7189 = vunpack.c.l.b16 %v6908
    %v7190 = vunpack.c.l.b16 %v6909
    %v7191 = vunpack.c.l.b16 %v6910
    %v7192 = vunpack.c.l.b16 %v6911
    %v7193 = vunpack.c.l.b16 %v6912
    %v7194 = vunpack.c.l.b16 %v6913
    %v7195 = vunpack.c.l.b16 %v6914
    %v7196 = vunpack.c.l.b16 %v6915
    %v7197 = vunpack.c.l.b16 %v6916
    %v7198 = vunpack.c.l.b16 %v6917
    %v7199 = vunpack.c.l.b16 %v6918
    %v7200 = vunpack.c.l.b16 %v6919
    %v7201 = vunpack.c.l.b16 %v6920
    %v7202 = vunpack.c.l.b16 %v6921
    %v7203 = vunpack.c.l.b16 %v6922
    %v7204 = vunpack.c.l.b16 %v6923
    %v7205 = vunpack.c.l.b16 %v6924
    %v7206 = vunpack.c.l.b16 %v6925
    %v7207 = vunpack.c.l.b16 %v6926
    %v7208 = vunpack.c.l.b16 %v6927
    %v7209 = vunpack.c.l.b16 %v6928
    %v7210 = vunpack.c.l.b16 %v6929
    %v7211 = vunpack.c.l.b16 %v6930
    %v7212 = vunpack.c.l.b16 %v6931
    %v7213 = vunpack.c.l.b16 %v6932
    %v7214 = vunpack.c.l.b16 %v6933
    %v7215 = vunpack.c.l.b16 %v6934
    %v7216 = vunpack.c.l.b16 %v6935
    %v7217 = vunpack.c.l.b16 %v6936
    %v7218 = vunpack.c.l.b16 %v6937
    %v7219 = vunpack.c.l.b16 %v6938
    %v7220 = vunpack.c.l.b16 %v6939
    %v7221 = vpack.c.b16 %v7190, %v7189
    %v7222 = vpack.c.b16 %v7192, %v7191
    %v7223 = vpack.c.b16 %v7194, %v7193
    %v7224 = vpack.c.b16 %v7196, %v7195
    %v7225 = vpack.c.b16 %v7198, %v7197
    %v7226 = vpack.c.b16 %v7200, %v7199
    %v7227 = vpack.c.b16 %v7202, %v7201
    %v7228 = vpack.c.b16 %v7204, %v7203
    %v7229 = vpack.c.b16 %v7206, %v7205
    %v7230 = vpack.c.b16 %v7208, %v7207
    %v7231 = vpack.c.b16 %v7210, %v7209
    %v7232 = vpack.c.b16 %v7212, %v7211
    %v7233 = vpack.c.b16 %v7214, %v7213
    %v7234 = vpack.c.b16 %v7216, %v7215
    %v7235 = vpack.c.b16 %v7218, %v7217
    %v7236 = vpack.c.b16 %v7220, %v7219
    %7253 = vmatprep.subr.bf16.mxu0 0
    %7254 = vmatpush1.bf16.msra.mxu0 %v7228
    %7255 = vmatprep.subr.bf16.mxu0 0
    %7256 = vmatpush1.bf16.msra.mxu0 %v7227
    %7257 = vmatprep.subr.bf16.mxu0 0
    %7258 = vmatpush1.bf16.msra.mxu0 %v7226
    %7259 = vmatprep.subr.bf16.mxu0 0
    %7260 = vmatpush1.bf16.msra.mxu0 %v7225
    %7261 = vmatprep.subr.bf16.mxu0 0
    %7262 = vmatpush1.bf16.msra.mxu0 %v7224
    %7263 = vmatprep.subr.bf16.mxu0 0
    %7264 = vmatpush1.bf16.msra.mxu0 %v7223
    %7265 = vmatprep.subr.bf16.mxu0 0
    %7266 = vmatpush1.bf16.msra.mxu0 %v7222
    %7267 = vmatprep.subr.bf16.mxu0 0
    %7268 = vmatpush1.bf16.msra.mxu0 %v7221
    %7269 = vmatprep.subr.bf16.mxu0 0
    %7270 = vmatpush2.bf16.msra.mxu0 %v7236
    %7271 = vmatprep.subr.bf16.mxu0 0
    %7272 = vmatpush2.bf16.msra.mxu0 %v7235
    %7273 = vmatprep.subr.bf16.mxu0 0
    %7274 = vmatpush2.bf16.msra.mxu0 %v7234
    %7275 = vmatprep.subr.bf16.mxu0 0
    %7276 = vmatpush2.bf16.msra.mxu0 %v7233
    %7277 = vmatprep.subr.bf16.mxu0 0
    %7278 = vmatpush2.bf16.msra.mxu0 %v7232
    %7279 = vmatprep.subr.bf16.mxu0 0
    %7280 = vmatpush2.bf16.msra.mxu0 %v7231
    %7281 = vmatprep.subr.bf16.mxu0 0
    %7282 = vmatpush2.bf16.msra.mxu0 %v7230
    %7283 = vmatprep.subr.bf16.mxu0 0
    %7284 = vmatpush2.bf16.msra.mxu0 %v7229
    %7285 = vmatprep.mubr.bf16.mxu0 %v6907
    %7286 = vmatmul.mubr.bf16.gmra.mxu0 %v6906
    %v7287 = vpop.f32.mrf.mxu0
    %v7288 = vadd.f32 %v7152, %v7287
    %v7289 = vpop.f32.mrf.mxu0
    %v7290 = vpop.f32.mrf.mxu0
    %v7291 = vpop.f32.mrf.mxu0
    %7292 = vdwg.mxu0
    %s7293 = scalar_lea.vmem [#allocation29], 2
    %v7294 = vld [vmem:[%s7293] sm:$0x1]
    %v7296 = vsel %vm6854, %v7294, 0
    %7298 = vmatprep.subr.bf16.mxu0 0
    %7299 = vmatpush1.bf16.msra.mxu0 0
    %7300 = vmatprep.subr.bf16.mxu0 0
    %7301 = vmatpush1.bf16.msra.mxu0 0
    %7302 = vmatprep.subr.bf16.mxu0 0
    %7303 = vmatpush1.bf16.msra.mxu0 0
    %7304 = vmatprep.subr.bf16.mxu0 0
    %7305 = vmatpush1.bf16.msra.mxu0 0
    %7306 = vmatprep.subr.bf16.mxu0 0
    %7307 = vmatpush1.bf16.msra.mxu0 0
    %7308 = vmatprep.subr.bf16.mxu0 0
    %7309 = vmatpush1.bf16.msra.mxu0 0
    %7310 = vmatprep.subr.bf16.mxu0 0
    %7311 = vmatpush1.bf16.msra.mxu0 0
    %7312 = vmatprep.subr.bf16.mxu0 %v6863
    %7313 = vmatpush1.bf16.msra.mxu0 %v6860
    %7314 = vmatprep.subr.bf16.mxu0 0
    %7315 = vmatpush2.bf16.msra.mxu0 0
    %7316 = vmatprep.subr.bf16.mxu0 0
    %7317 = vmatpush2.bf16.msra.mxu0 0
    %7318 = vmatprep.subr.bf16.mxu0 0
    %7319 = vmatpush2.bf16.msra.mxu0 0
    %7320 = vmatprep.subr.bf16.mxu0 0
    %7321 = vmatpush2.bf16.msra.mxu0 0
    %7322 = vmatprep.subr.bf16.mxu0 0
    %7323 = vmatpush2.bf16.msra.mxu0 0
    %7324 = vmatprep.subr.bf16.mxu0 0
    %7325 = vmatpush2.bf16.msra.mxu0 0
    %7326 = vmatprep.subr.bf16.mxu0 0
    %7327 = vmatpush2.bf16.msra.mxu0 0
    %7328 = vmatprep.subr.bf16.mxu0 0
    %7329 = vmatpush2.bf16.msra.mxu0 0
    %7330 = vmatprep.mubr.bf16.mxu0 0
    %7331 = vmatmul.mubr.bf16.gmra.mxu0 %v7296
    %v7332 = vpop.f32.mrf.mxu0
    %v7333 = vadd.f32 0.0, %v7332
    %v7334 = vpop.f32.mrf.mxu0
    %v7335 = vadd.f32 0.0, %v7334
    %v7336 = vpop.f32.mrf.mxu0
    %v7337 = vpop.f32.mrf.mxu0
    %7338 = vdwg.mxu0
    %v7339 = vpack.c.bf16 %v7333, %v7333
    %v7340 = vpack.c.bf16 %v7335, %v7335
    %s7341 = scalar_lea.vmem %s26, 256
    %v7342 = vld [vmem:[%s7341] sm:$0xf]
    %v7343 = vld [vmem:[%s7341 + $0x4] sm:$0xf]
    %v7344 = vld [vmem:[%s7341 + $0x8] sm:$0xf]
    %v7345 = vld [vmem:[%s7341 + $0xc] sm:$0xf]
    %v7346 = vld [vmem:[%s7341 + $0x10] sm:$0xf]
    %v7347 = vld [vmem:[%s7341 + $0x14] sm:$0xf]
    %v7348 = vld [vmem:[%s7341 + $0x18] sm:$0xf]
    %v7349 = vld [vmem:[%s7341 + $0x1c] sm:$0xf]
    %v7350 = vld [vmem:[%s7341 + $0x20] sm:$0xf]
    %v7351 = vld [vmem:[%s7341 + $0x24] sm:$0xf]
    %v7352 = vld [vmem:[%s7341 + $0x28] sm:$0xf]
    %v7353 = vld [vmem:[%s7341 + $0x2c] sm:$0xf]
    %v7354 = vld [vmem:[%s7341 + $0x30] sm:$0xf]
    %v7355 = vld [vmem:[%s7341 + $0x34] sm:$0xf]
    %v7356 = vld [vmem:[%s7341 + $0x38] sm:$0xf]
    %v7357 = vld [vmem:[%s7341 + $0x3c] sm:$0xf]
    %v7358 = vld [vmem:[%s7341 + $0x40] sm:$0xf]
    %v7359 = vld [vmem:[%s7341 + $0x44] sm:$0xf]
    %v7360 = vld [vmem:[%s7341 + $0x48] sm:$0xf]
    %v7361 = vld [vmem:[%s7341 + $0x4c] sm:$0xf]
    %v7362 = vld [vmem:[%s7341 + $0x50] sm:$0xf]
    %v7363 = vld [vmem:[%s7341 + $0x54] sm:$0xf]
    %v7364 = vld [vmem:[%s7341 + $0x58] sm:$0xf]
    %v7365 = vld [vmem:[%s7341 + $0x5c] sm:$0xf]
    %v7366 = vld [vmem:[%s7341 + $0x60] sm:$0xf]
    %v7367 = vld [vmem:[%s7341 + $0x64] sm:$0xf]
    %v7368 = vld [vmem:[%s7341 + $0x68] sm:$0xf]
    %v7369 = vld [vmem:[%s7341 + $0x6c] sm:$0xf]
    %v7370 = vld [vmem:[%s7341 + $0x70] sm:$0xf]
    %v7371 = vld [vmem:[%s7341 + $0x74] sm:$0xf]
    %v7372 = vld [vmem:[%s7341 + $0x78] sm:$0xf]
    %v7373 = vld [vmem:[%s7341 + $0x7c] sm:$0xf]
    %v7406 = vunpack.c.l.b16 %v7342
    %v7407 = vunpack.c.l.b16 %v7343
    %v7408 = vunpack.c.l.b16 %v7344
    %v7409 = vunpack.c.l.b16 %v7345
    %v7410 = vunpack.c.l.b16 %v7346
    %v7411 = vunpack.c.l.b16 %v7347
    %v7412 = vunpack.c.l.b16 %v7348
    %v7413 = vunpack.c.l.b16 %v7349
    %v7414 = vunpack.c.l.b16 %v7350
    %v7415 = vunpack.c.l.b16 %v7351
    %v7416 = vunpack.c.l.b16 %v7352
    %v7417 = vunpack.c.l.b16 %v7353
    %v7418 = vunpack.c.l.b16 %v7354
    %v7419 = vunpack.c.l.b16 %v7355
    %v7420 = vunpack.c.l.b16 %v7356
    %v7421 = vunpack.c.l.b16 %v7357
    %v7422 = vunpack.c.l.b16 %v7358
    %v7423 = vunpack.c.l.b16 %v7359
    %v7424 = vunpack.c.l.b16 %v7360
    %v7425 = vunpack.c.l.b16 %v7361
    %v7426 = vunpack.c.l.b16 %v7362
    %v7427 = vunpack.c.l.b16 %v7363
    %v7428 = vunpack.c.l.b16 %v7364
    %v7429 = vunpack.c.l.b16 %v7365
    %v7430 = vunpack.c.l.b16 %v7366
    %v7431 = vunpack.c.l.b16 %v7367
    %v7432 = vunpack.c.l.b16 %v7368
    %v7433 = vunpack.c.l.b16 %v7369
    %v7434 = vunpack.c.l.b16 %v7370
    %v7435 = vunpack.c.l.b16 %v7371
    %v7436 = vunpack.c.l.b16 %v7372
    %v7437 = vunpack.c.l.b16 %v7373
    %v7438 = vpack.c.b16 %v7407, %v7406
    %v7439 = vpack.c.b16 %v7409, %v7408
    %v7440 = vpack.c.b16 %v7411, %v7410
    %v7441 = vpack.c.b16 %v7413, %v7412
    %v7442 = vpack.c.b16 %v7415, %v7414
    %v7443 = vpack.c.b16 %v7417, %v7416
    %v7444 = vpack.c.b16 %v7419, %v7418
    %v7445 = vpack.c.b16 %v7421, %v7420
    %v7446 = vpack.c.b16 %v7423, %v7422
    %v7447 = vpack.c.b16 %v7425, %v7424
    %v7448 = vpack.c.b16 %v7427, %v7426
    %v7449 = vpack.c.b16 %v7429, %v7428
    %v7450 = vpack.c.b16 %v7431, %v7430
    %v7451 = vpack.c.b16 %v7433, %v7432
    %v7452 = vpack.c.b16 %v7435, %v7434
    %v7453 = vpack.c.b16 %v7437, %v7436
    %7470 = vmatprep.subr.bf16.mxu0 0
    %7471 = vmatpush1.bf16.msra.mxu0 %v7445
    %7472 = vmatprep.subr.bf16.mxu0 0
    %7473 = vmatpush1.bf16.msra.mxu0 %v7444
    %7474 = vmatprep.subr.bf16.mxu0 0
    %7475 = vmatpush1.bf16.msra.mxu0 %v7443
    %7476 = vmatprep.subr.bf16.mxu0 0
    %7477 = vmatpush1.bf16.msra.mxu0 %v7442
    %7478 = vmatprep.subr.bf16.mxu0 0
    %7479 = vmatpush1.bf16.msra.mxu0 %v7441
    %7480 = vmatprep.subr.bf16.mxu0 0
    %7481 = vmatpush1.bf16.msra.mxu0 %v7440
    %7482 = vmatprep.subr.bf16.mxu0 0
    %7483 = vmatpush1.bf16.msra.mxu0 %v7439
    %7484 = vmatprep.subr.bf16.mxu0 0
    %7485 = vmatpush1.bf16.msra.mxu0 %v7438
    %7486 = vmatprep.subr.bf16.mxu0 0
    %7487 = vmatpush2.bf16.msra.mxu0 %v7453
    %7488 = vmatprep.subr.bf16.mxu0 0
    %7489 = vmatpush2.bf16.msra.mxu0 %v7452
    %7490 = vmatprep.subr.bf16.mxu0 0
    %7491 = vmatpush2.bf16.msra.mxu0 %v7451
    %7492 = vmatprep.subr.bf16.mxu0 0
    %7493 = vmatpush2.bf16.msra.mxu0 %v7450
    %7494 = vmatprep.subr.bf16.mxu0 0
    %7495 = vmatpush2.bf16.msra.mxu0 %v7449
    %7496 = vmatprep.subr.bf16.mxu0 0
    %7497 = vmatpush2.bf16.msra.mxu0 %v7448
    %7498 = vmatprep.subr.bf16.mxu0 0
    %7499 = vmatpush2.bf16.msra.mxu0 %v7447
    %7500 = vmatprep.subr.bf16.mxu0 0
    %7501 = vmatpush2.bf16.msra.mxu0 %v7446
    %7502 = vmatprep.mubr.bf16.mxu0 %v7340
    %7503 = vmatmul.mubr.bf16.gmra.mxu0 %v7339
    %v7504 = vpop.f32.mrf.mxu0
    %v7505 = vadd.f32 0.0, %v7504
    %v7506 = vpop.f32.mrf.mxu0
    %v7507 = vpop.f32.mrf.mxu0
    %v7508 = vpop.f32.mrf.mxu0
    %7509 = vdwg.mxu0
    %v7510 = vadd.f32 %v7288, %v7505
    %s7511 = scalar_lea.vmem [#allocation29], 3
    %v7512 = vld [vmem:[%s7511] sm:$0x1]
    %v7514 = vsel %vm6854, %v7512, 0
    %7516 = vmatprep.subr.bf16.mxu0 0
    %7517 = vmatpush1.bf16.msra.mxu0 0
    %7518 = vmatprep.subr.bf16.mxu0 0
    %7519 = vmatpush1.bf16.msra.mxu0 0
    %7520 = vmatprep.subr.bf16.mxu0 0
    %7521 = vmatpush1.bf16.msra.mxu0 0
    %7522 = vmatprep.subr.bf16.mxu0 0
    %7523 = vmatpush1.bf16.msra.mxu0 0
    %7524 = vmatprep.subr.bf16.mxu0 0
    %7525 = vmatpush1.bf16.msra.mxu0 0
    %7526 = vmatprep.subr.bf16.mxu0 0
    %7527 = vmatpush1.bf16.msra.mxu0 0
    %7528 = vmatprep.subr.bf16.mxu0 0
    %7529 = vmatpush1.bf16.msra.mxu0 0
    %7530 = vmatprep.subr.bf16.mxu0 %v6863
    %7531 = vmatpush1.bf16.msra.mxu0 %v6860
    %7532 = vmatprep.subr.bf16.mxu0 0
    %7533 = vmatpush2.bf16.msra.mxu0 0
    %7534 = vmatprep.subr.bf16.mxu0 0
    %7535 = vmatpush2.bf16.msra.mxu0 0
    %7536 = vmatprep.subr.bf16.mxu0 0
    %7537 = vmatpush2.bf16.msra.mxu0 0
    %7538 = vmatprep.subr.bf16.mxu0 0
    %7539 = vmatpush2.bf16.msra.mxu0 0
    %7540 = vmatprep.subr.bf16.mxu0 0
    %7541 = vmatpush2.bf16.msra.mxu0 0
    %7542 = vmatprep.subr.bf16.mxu0 0
    %7543 = vmatpush2.bf16.msra.mxu0 0
    %7544 = vmatprep.subr.bf16.mxu0 0
    %7545 = vmatpush2.bf16.msra.mxu0 0
    %7546 = vmatprep.subr.bf16.mxu0 0
    %7547 = vmatpush2.bf16.msra.mxu0 0
    %7548 = vmatprep.mubr.bf16.mxu0 0
    %7549 = vmatmul.mubr.bf16.gmra.mxu0 %v7514
    %v7550 = vpop.f32.mrf.mxu0
    %v7551 = vadd.f32 0.0, %v7550
    %v7552 = vpop.f32.mrf.mxu0
    %v7553 = vadd.f32 0.0, %v7552
    %v7554 = vpop.f32.mrf.mxu0
    %v7555 = vpop.f32.mrf.mxu0
    %7556 = vdwg.mxu0
    %v7557 = vpack.c.bf16 %v7551, %v7551
    %v7558 = vpack.c.bf16 %v7553, %v7553
    %s7559 = scalar_lea.vmem %s26, 384
    %v7560 = vld [vmem:[%s7559] sm:$0xf]
    %v7561 = vld [vmem:[%s7559 + $0x4] sm:$0xf]
    %v7562 = vld [vmem:[%s7559 + $0x8] sm:$0xf]
    %v7563 = vld [vmem:[%s7559 + $0xc] sm:$0xf]
    %v7564 = vld [vmem:[%s7559 + $0x10] sm:$0xf]
    %v7565 = vld [vmem:[%s7559 + $0x14] sm:$0xf]
    %v7566 = vld [vmem:[%s7559 + $0x18] sm:$0xf]
    %v7567 = vld [vmem:[%s7559 + $0x1c] sm:$0xf]
    %v7568 = vld [vmem:[%s7559 + $0x20] sm:$0xf]
    %v7569 = vld [vmem:[%s7559 + $0x24] sm:$0xf]
    %v7570 = vld [vmem:[%s7559 + $0x28] sm:$0xf]
    %v7571 = vld [vmem:[%s7559 + $0x2c] sm:$0xf]
    %v7572 = vld [vmem:[%s7559 + $0x30] sm:$0xf]
    %v7573 = vld [vmem:[%s7559 + $0x34] sm:$0xf]
    %v7574 = vld [vmem:[%s7559 + $0x38] sm:$0xf]
    %v7575 = vld [vmem:[%s7559 + $0x3c] sm:$0xf]
    %v7576 = vld [vmem:[%s7559 + $0x40] sm:$0xf]
    %v7577 = vld [vmem:[%s7559 + $0x44] sm:$0xf]
    %v7578 = vld [vmem:[%s7559 + $0x48] sm:$0xf]
    %v7579 = vld [vmem:[%s7559 + $0x4c] sm:$0xf]
    %v7580 = vld [vmem:[%s7559 + $0x50] sm:$0xf]
    %v7581 = vld [vmem:[%s7559 + $0x54] sm:$0xf]
    %v7582 = vld [vmem:[%s7559 + $0x58] sm:$0xf]
    %v7583 = vld [vmem:[%s7559 + $0x5c] sm:$0xf]
    %v7584 = vld [vmem:[%s7559 + $0x60] sm:$0xf]
    %v7585 = vld [vmem:[%s7559 + $0x64] sm:$0xf]
    %v7586 = vld [vmem:[%s7559 + $0x68] sm:$0xf]
    %v7587 = vld [vmem:[%s7559 + $0x6c] sm:$0xf]
    %v7588 = vld [vmem:[%s7559 + $0x70] sm:$0xf]
    %v7589 = vld [vmem:[%s7559 + $0x74] sm:$0xf]
    %v7590 = vld [vmem:[%s7559 + $0x78] sm:$0xf]
    %v7591 = vld [vmem:[%s7559 + $0x7c] sm:$0xf]
    %v7624 = vunpack.c.l.b16 %v7560
    %v7625 = vunpack.c.l.b16 %v7561
    %v7626 = vunpack.c.l.b16 %v7562
    %v7627 = vunpack.c.l.b16 %v7563
    %v7628 = vunpack.c.l.b16 %v7564
    %v7629 = vunpack.c.l.b16 %v7565
    %v7630 = vunpack.c.l.b16 %v7566
    %v7631 = vunpack.c.l.b16 %v7567
    %v7632 = vunpack.c.l.b16 %v7568
    %v7633 = vunpack.c.l.b16 %v7569
    %v7634 = vunpack.c.l.b16 %v7570
    %v7635 = vunpack.c.l.b16 %v7571
    %v7636 = vunpack.c.l.b16 %v7572
    %v7637 = vunpack.c.l.b16 %v7573
    %v7638 = vunpack.c.l.b16 %v7574
    %v7639 = vunpack.c.l.b16 %v7575
    %v7640 = vunpack.c.l.b16 %v7576
    %v7641 = vunpack.c.l.b16 %v7577
    %v7642 = vunpack.c.l.b16 %v7578
    %v7643 = vunpack.c.l.b16 %v7579
    %v7644 = vunpack.c.l.b16 %v7580
    %v7645 = vunpack.c.l.b16 %v7581
    %v7646 = vunpack.c.l.b16 %v7582
    %v7647 = vunpack.c.l.b16 %v7583
    %v7648 = vunpack.c.l.b16 %v7584
    %v7649 = vunpack.c.l.b16 %v7585
    %v7650 = vunpack.c.l.b16 %v7586
    %v7651 = vunpack.c.l.b16 %v7587
    %v7652 = vunpack.c.l.b16 %v7588
    %v7653 = vunpack.c.l.b16 %v7589
    %v7654 = vunpack.c.l.b16 %v7590
    %v7655 = vunpack.c.l.b16 %v7591
    %v7656 = vpack.c.b16 %v7625, %v7624
    %v7657 = vpack.c.b16 %v7627, %v7626
    %v7658 = vpack.c.b16 %v7629, %v7628
    %v7659 = vpack.c.b16 %v7631, %v7630
    %v7660 = vpack.c.b16 %v7633, %v7632
    %v7661 = vpack.c.b16 %v7635, %v7634
    %v7662 = vpack.c.b16 %v7637, %v7636
    %v7663 = vpack.c.b16 %v7639, %v7638
    %v7664 = vpack.c.b16 %v7641, %v7640
    %v7665 = vpack.c.b16 %v7643, %v7642
    %v7666 = vpack.c.b16 %v7645, %v7644
    %v7667 = vpack.c.b16 %v7647, %v7646
    %v7668 = vpack.c.b16 %v7649, %v7648
    %v7669 = vpack.c.b16 %v7651, %v7650
    %v7670 = vpack.c.b16 %v7653, %v7652
    %v7671 = vpack.c.b16 %v7655, %v7654
    %7688 = vmatprep.subr.bf16.mxu0 0
    %7689 = vmatpush1.bf16.msra.mxu0 %v7663
    %7690 = vmatprep.subr.bf16.mxu0 0
    %7691 = vmatpush1.bf16.msra.mxu0 %v7662
    %7692 = vmatprep.subr.bf16.mxu0 0
    %7693 = vmatpush1.bf16.msra.mxu0 %v7661
    %7694 = vmatprep.subr.bf16.mxu0 0
    %7695 = vmatpush1.bf16.msra.mxu0 %v7660
    %7696 = vmatprep.subr.bf16.mxu0 0
    %7697 = vmatpush1.bf16.msra.mxu0 %v7659
    %7698 = vmatprep.subr.bf16.mxu0 0
    %7699 = vmatpush1.bf16.msra.mxu0 %v7658
    %7700 = vmatprep.subr.bf16.mxu0 0
    %7701 = vmatpush1.bf16.msra.mxu0 %v7657
    %7702 = vmatprep.subr.bf16.mxu0 0
    %7703 = vmatpush1.bf16.msra.mxu0 %v7656
    %7704 = vmatprep.subr.bf16.mxu0 0
    %7705 = vmatpush2.bf16.msra.mxu0 %v7671
    %7706 = vmatprep.subr.bf16.mxu0 0
    %7707 = vmatpush2.bf16.msra.mxu0 %v7670
    %7708 = vmatprep.subr.bf16.mxu0 0
    %7709 = vmatpush2.bf16.msra.mxu0 %v7669
    %7710 = vmatprep.subr.bf16.mxu0 0
    %7711 = vmatpush2.bf16.msra.mxu0 %v7668
    %7712 = vmatprep.subr.bf16.mxu0 0
    %7713 = vmatpush2.bf16.msra.mxu0 %v7667
    %7714 = vmatprep.subr.bf16.mxu0 0
    %7715 = vmatpush2.bf16.msra.mxu0 %v7666
    %7716 = vmatprep.subr.bf16.mxu0 0
    %7717 = vmatpush2.bf16.msra.mxu0 %v7665
    %7718 = vmatprep.subr.bf16.mxu0 0
    %7719 = vmatpush2.bf16.msra.mxu0 %v7664
    %7720 = vmatprep.mubr.bf16.mxu0 %v7558
    %7721 = vmatmul.mubr.bf16.gmra.mxu0 %v7557
    %v7722 = vpop.f32.mrf.mxu0
    %v7723 = vadd.f32 0.0, %v7722
    %v7724 = vpop.f32.mrf.mxu0
    %v7725 = vpop.f32.mrf.mxu0
    %v7726 = vpop.f32.mrf.mxu0
    %7727 = vdwg.mxu0
    %v7728 = vadd.f32 %v7510, %v7723
    %v7729 = vld [vmem:[#allocation2] sm:$0x1]
    %v7731 = vlaneseq
    %v7732 = vshrl.u32 %v7731, 7
    %v7733 = vsub.s32 0, %v7732
    %v7734 = vrot.slane %v7729, %v7733
    %v7736 = vadd.f32 %v7728, %v7734
    %v7737 = vsub.f32 0.0, %v7736
    %v7738 = vmul.f32 %v7737, 1.442695
    %v7739 = vpow.pop %v7738
    %v7740 = vadd.f32 %v7739, 1.0
    %v7741 = vrcp.pop %v7740
    %v7742 = vmul.f32 1.0, %v7741
    %vm7743 = vcmask 1024
    %7744 = vst.msk [vmem:[%s28] sm:$0x3] %vm7743, %v7742
    // Predicated region
    $region186: #{forward.1} parent=1 // pred_check
      _
    $region187: #{forward.1} parent=1 // pred_check_branch
      %7746 = sbr.rel (0) target = $region189
    $region188: #{forward.1} parent=1 // pred_region
      _
    $region189: #{forward.1} parent=1 // pred_fallthru
      _
    // Predicated region
    $region190: #{forward.1} parent=1 // pred_check
      _
    $region191: #{forward.1} parent=1 // pred_check_branch
      %7748 = sbr.rel (0) target = $region193
    $region192: #{forward.1} parent=1 // pred_region
      _
    $region193: #{forward.1} parent=1 // pred_fallthru
      _
    %7749 = vsyncpa [#allocation4], 1
    %7750 = vsyncpa [#allocation6], 1
    %7751 = vsyncpa [#allocation9], 1
    %7752 = vsyncpa [#allocation12], 1
    %7753 = vsyncpa [#allocation15], 1
    %7754 = vsyncpa [#allocation18], 1
    %7755 = vsyncpa [#allocation21], 1
    %7756 = vsyncpa [#allocation24], 1
    %7757 = vsyncpa [#allocation27], 1
    %7758 = vsyncpa [#allocation30], 1

</llo_original>
